<compile_context>
chip_gen: v7x
topology: tpu7x:2x2x1
jax: 0.10.0
libtpu: 0.0.40
codegen_flags: <defaults>
</compile_context>

<pallas_src>
import functools

import jax
import jax.numpy as jnp
from jax.experimental import pallas as pl
from jax.experimental.pallas import tpu as pltpu

EPS = 1e-5


def _ln(x, w, b):
    """LayerNorm over the last axis (biased variance, matches nn.LayerNorm)."""
    mu = jnp.mean(x, axis=-1, keepdims=True)
    var = jnp.mean(jnp.square(x - mu), axis=-1, keepdims=True)
    return (x - mu) * jax.lax.rsqrt(var + EPS) * w + b


# ----------------------------------------------------------------------------
# fused kernel: [cross-attention + MLP] x depth + final LayerNorm
# ----------------------------------------------------------------------------
def fused_resampler_kernel(
    lat0_ref, ctx_ref,
    cln_w, cln_b, lln_w, lln_b, qln_w, qln_b, kln_w, kln_b,
    wq, wk, wv, wo,
    mln_w, mln_b, w_fc, w_cp,
    fln_w, fln_b,
    out_ref,
    lat_acc,
    *, n_heads, head_dim, qk_layer_norms):
    d = pl.program_id(1)
    Bb, L, D = lat_acc.shape
    S = ctx_ref.shape[1]
    H, hd = n_heads, head_dim
    inner = H * hd

    @pl.when(d == 0)
    def _init():
        lat_acc[...] = jnp.broadcast_to(
            lat0_ref[...].astype(jnp.float32)[None], (Bb, L, D))

    lat = lat_acc[...]                               # (Bb, L, D) f32 (resident)
    ctx = ctx_ref[...].astype(jnp.float32)           # (Bb, S, D)

    # ------------------ perceiver cross-attention block ------------------
    ctx_n = _ln(ctx, cln_w[...], cln_b[...])
    lat_n = _ln(lat, lln_w[...], lln_b[...])

    # fold batch into the matmul M dimension; bf16 operands for the MXU
    ctx2 = ctx_n.reshape(Bb * S, D).astype(jnp.bfloat16)
    lat2 = lat_n.reshape(Bb * L, D).astype(jnp.bfloat16)

    wq_v, wk_v, wv_v = wq[...], wk[...], wv[...]      # (D, inner) bf16
    q = jnp.dot(lat2, wq_v, preferred_element_type=jnp.float32)   # (Bb*L, inner)
    k_c = jnp.dot(ctx2, wk_v, preferred_element_type=jnp.float32)  # (Bb*S, inner)
    k_l = jnp.dot(lat2, wk_v, preferred_element_type=jnp.float32)  # (Bb*L, inner)
    v_c = jnp.dot(ctx2, wv_v, preferred_element_type=jnp.float32)
    v_l = jnp.dot(lat2, wv_v, preferred_element_type=jnp.float32)

    q4 = q.reshape(Bb, L, H, hd)
    kc4 = k_c.reshape(Bb, S, H, hd)
    kl4 = k_l.reshape(Bb, L, H, hd)

    if qk_layer_norms:
        # qln_w / qln_b already carry the qk_scale (folded at pack time);
        # weight reads / broadcasts hoisted out of all loops.
        qg, qbeta, kg, kbeta = qln_w[...], qln_b[...], kln_w[...], kln_b[...]
        q4 = _ln(q4, qg, qbeta)
        kc4 = _ln(kc4, kg, kbeta)
        kl4 = _ln(kl4, kg, kbeta)
    # else: qk_scale was folded into wq at pack time.

    # head-major (batch dim of the dot_general leading), bf16 for the MXU
    q4 = jnp.swapaxes(q4.astype(jnp.bfloat16), 1, 2)                  # (Bb,H,L,hd)
    kc4 = jnp.swapaxes(kc4.astype(jnp.bfloat16), 1, 2)                # (Bb,H,S,hd)
    kl4 = jnp.swapaxes(kl4.astype(jnp.bfloat16), 1, 2)                # (Bb,H,L,hd)
    vc4 = jnp.swapaxes(v_c.reshape(Bb, S, H, hd).astype(jnp.bfloat16), 1, 2)
    vl4 = jnp.swapaxes(v_l.reshape(Bb, L, H, hd).astype(jnp.bfloat16), 1, 2)

    head_outs = []
    for b in range(Bb):                               # small static unroll
        # head-batched score matmuls; joint softmax over [context | latents]
        s_c = jnp.einsum('hid,hjd->hij', q4[b], kc4[b],
                         preferred_element_type=jnp.float32)      # (H, L, S)
        s_l = jnp.einsum('hid,hjd->hij', q4[b], kl4[b],
                         preferred_element_type=jnp.float32)      # (H, L, L)
        m = jnp.maximum(jnp.max(s_c, axis=-1, keepdims=True),
                        jnp.max(s_l, axis=-1, keepdims=True))
        p_c = jnp.exp(s_c - m)
        p_l = jnp.exp(s_l - m)
        inv = pl.reciprocal(jnp.sum(p_c, axis=-1, keepdims=True)
                            + jnp.sum(p_l, axis=-1, keepdims=True),
                            approx=True)                          # EUP slot
        p_c = (p_c * inv).astype(jnp.bfloat16)
        p_l = (p_l * inv).astype(jnp.bfloat16)

        ob = jnp.einsum('hij,hjd->hid', p_c, vc4[b],
                        preferred_element_type=jnp.float32)
        ob = ob + jnp.einsum('hij,hjd->hid', p_l, vl4[b],
                             preferred_element_type=jnp.float32)  # (H, L, hd)
        head_outs.append(ob)

    res = jnp.stack(head_outs, axis=0)                            # (Bb, H, L, hd)
    resampled = jnp.swapaxes(res, 1, 2).reshape(Bb * L, inner)    # (Bb*L, H*hd)
    attn_out = jnp.dot(resampled.astype(jnp.bfloat16), wo[...],
                       preferred_element_type=jnp.float32)        # (Bb*L, D)
    lat = lat + attn_out.reshape(Bb, L, D)            # residual add

    # ------------------------------ MLP block ------------------------------
    h = _ln(lat, mln_w[...], mln_b[...]).reshape(Bb * L, D).astype(jnp.bfloat16)
    h = jnp.dot(h, w_fc[...], preferred_element_type=jnp.float32)
    h = jnp.maximum(h, 0.0).astype(jnp.bfloat16)
    h = jnp.dot(h, w_cp[...], preferred_element_type=jnp.float32)
    lat = lat + h.reshape(Bb, L, D)                   # residual add

    lat_acc[...] = lat                                # keep resident in VMEM

    # --------------- final LayerNorm on the last depth step ---------------
    @pl.when(d == pl.num_programs(1) - 1)
    def _final():
        # TODO(synk): for embed_dim < 128 a lane-dense (..., 128) output slab
        # would avoid masked partial stores; moot at production embed_dim.
        out_ref[...] = _ln(lat, fln_w[...], fln_b[...]).astype(out_ref.dtype)


# ----------------------------------------------------------------------------
# wrapper: one fused pallas_call over grid = (batch_blocks, depth)
# ----------------------------------------------------------------------------
def _pick_block_b(batch, n_latents):
    """Largest divisor of `batch` keeping block_b * n_latents <= 256 rows.

    Note: on v7x (2 TensorCores) a smaller block (keeping >= 2 blocks on the
    parallel batch axis) can be preferable; irrelevant at these test shapes.
    """
    best = 1
    for cand in range(1, batch + 1):
        if batch % cand == 0 and cand * n_latents <= 256:
            best = cand
    return best


def perceiver_resampler_forward(context, packed, *, n_heads, head_dim,
                                qk_layer_norms, block_b=None):
    B, S, D = context.shape
    L = packed["latents"].shape[0]
    depth = packed["wq"].shape[0]
    inner = n_heads * head_dim
    inter = packed["w_fc"].shape[-1]

    if block_b is None:
        block_b = _pick_block_b(B, L)
    assert B % block_b == 0, "batch must be divisible by block_b"
    nb = B // block_b

    kern = functools.partial(fused_resampler_kernel, n_heads=n_heads,
                             head_dim=head_dim, qk_layer_norms=qk_layer_norms)

    def per_layer(shape):
        # stacked (depth, *shape) parameter; the depth dim is squeezed away
        return pl.BlockSpec((None,) + shape,
                            lambda b, d: (d,) + (0,) * len(shape))

    def shared(shape):
        return pl.BlockSpec(shape, lambda b, d: (0,) * len(shape))

    in_specs = [
        shared((L, D)),                                           # latents init
        pl.BlockSpec((block_b, S, D), lambda b, d: (b, 0, 0)),    # context
        per_layer((1, D)), per_layer((1, D)),                     # context LN
        per_layer((1, D)), per_layer((1, D)),                     # latents LN
        per_layer((1, head_dim)), per_layer((1, head_dim)),       # q LN
        per_layer((1, head_dim)), per_layer((1, head_dim)),       # k LN
        per_layer((D, inner)), per_layer((D, inner)),             # wq, wk
        per_layer((D, inner)), per_layer((inner, D)),             # wv, wo
        per_layer((1, D)), per_layer((1, D)),                     # MLP LN
        per_layer((D, inter)), per_layer((inter, D)),             # fc, c_proj
        shared((1, D)), shared((1, D)),                           # final LN
    ]
    out_spec = pl.BlockSpec((block_b, L, D), lambda b, d: (b, 0, 0))

    # ---- VMEM budget & advisory cost estimate ----
    def nbytes(a):
        return a.size * a.dtype.itemsize

    stacked = ("cln_w", "cln_b", "lln_w", "lln_b", "qln_w", "qln_b",
               "kln_w", "kln_b", "wq", "wk", "wv", "wo",
               "mln_w", "mln_b", "w_fc", "w_cp")
    per_step_bytes = sum(nbytes(packed[n]) // depth for n in stacked)
    per_step_bytes += block_b * S * D * context.dtype.itemsize          # ctx
    shared_bytes = (nbytes(packed["latents"]) + nbytes(packed["fln_w"])
                    + nbytes(packed["fln_b"]))
    out_bytes = block_b * L * D * context.dtype.itemsize
    act_bytes = 6 * 4 * block_b * (S + L) * max(D, inner, inter)
    vmem_needed = (2 * (per_step_bytes + out_bytes) + shared_bytes
                   + block_b * L * D * 4 + act_bytes + (2 << 20))
    vmem_limit = int(min(96 << 20, max(32 << 20, vmem_needed)))

    T = S + L
    flops = 2 * B * depth * (L * D * inner + 2 * T * D * inner
                             + 2 * L * T * inner + L * inner * D
                             + 2 * L * D * inter)
    transcendentals = B * depth * (n_heads * L * T + 4 * L + 2 * S) + B * L
    bytes_accessed = (B * S * D * context.dtype.itemsize
                      + B * L * D * context.dtype.itemsize
                      + nb * sum(nbytes(packed[n]) for n in stacked)
                      + shared_bytes)
    cost = pl.CostEstimate(flops=int(flops),
                           transcendentals=int(transcendentals),
                           bytes_accessed=int(bytes_accessed))

    return pl.pallas_call(
        kern,
        out_shape=jax.ShapeDtypeStruct((B, L, D), context.dtype),
        grid=(nb, depth),
        in_specs=in_specs,
        out_specs=out_spec,
        scratch_shapes=[pltpu.VMEM((block_b, L, D), jnp.float32)],
        compiler_params=pltpu.CompilerParams(
            dimension_semantics=("parallel", "arbitrary"),
            vmem_limit_bytes=vmem_limit),
        cost_estimate=cost,
    )(packed["latents"], context,
      packed["cln_w"], packed["cln_b"], packed["lln_w"], packed["lln_b"],
      packed["qln_w"], packed["qln_b"], packed["kln_w"], packed["kln_b"],
      packed["wq"], packed["wk"], packed["wv"], packed["wo"],
      packed["mln_w"], packed["mln_b"], packed["w_fc"], packed["w_cp"],
      packed["fln_w"], packed["fln_b"])


# ----------------------------------------------------------------------------
# parameter construction + packing for the fused kernel
# ----------------------------------------------------------------------------
def make_params(key, *, embed_dim, n_heads, head_dim, n_latents, depth,
                intermediate_dim):
    inner = n_heads * head_dim
    ks = iter(jax.random.split(key, 4 + depth * 8))

    def nrm(shape, scale=0.02):
        return (scale * jax.random.normal(next(ks), shape)).astype(jnp.float32)

    params = {
        "latents": nrm((n_latents, embed_dim), 1.0),
        "final_ln_w": jnp.ones((1, embed_dim), jnp.float32),
        "final_ln_b": jnp.zeros((1, embed_dim), jnp.float32),
        "blocks": [],
    }
    for _ in range(depth):
        attn = {
            "cln_w": jnp.ones((1, embed_dim), jnp.float32),
            "cln_b": jnp.zeros((1, embed_dim), jnp.float32),
            "lln_w": jnp.ones((1, embed_dim), jnp.float32),
            "lln_b": jnp.zeros((1, embed_dim), jnp.float32),
            "qln_w": jnp.ones((1, head_dim), jnp.float32),
            "qln_b": jnp.zeros((1, head_dim), jnp.float32),
            "kln_w": jnp.ones((1, head_dim), jnp.float32),
            "kln_b": jnp.zeros((1, head_dim), jnp.float32),
            "wq": nrm((embed_dim, inner)),
            "wk": nrm((embed_dim, inner)),
            "wv": nrm((embed_dim, inner)),
            "wo": nrm((inner, embed_dim)),
        }
        mlp = {
            "ln_w": jnp.ones((1, embed_dim), jnp.float32),
            "ln_b": jnp.zeros((1, embed_dim), jnp.float32),
            "w_fc": nrm((embed_dim, intermediate_dim)),
            "w_cp": nrm((intermediate_dim, embed_dim)),
        }
        params["blocks"].append({"attn": attn, "mlp": mlp})
    return params


def pack_params(params, *, n_heads, head_dim, qk_layer_norms,
                weight_dtype=jnp.bfloat16):
    """Stack per-layer weights along depth, fold qk_scale, cast matmul weights."""
    del n_heads  # shapes already fused
    blocks = params["blocks"]
    scale = jnp.asarray(head_dim ** -0.5, jnp.float32)

    def stack_attn(name):
        return jnp.stack([blk["attn"][name] for blk in blocks], axis=0)

    def stack_mlp(name):
        return jnp.stack([blk["mlp"][name] for blk in blocks], axis=0)

    wq = stack_attn("wq")
    qln_w = stack_attn("qln_w")
    qln_b = stack_attn("qln_b")
    if qk_layer_norms:
        qln_w = qln_w * scale        # fold qk_scale into the static q LN affine
        qln_b = qln_b * scale
    else:
        wq = wq * scale              # fold qk_scale into the static q weights

    return {
        "latents": params["latents"].astype(jnp.float32),
        "cln_w": stack_attn("cln_w"), "cln_b": stack_attn("cln_b"),
        "lln_w": stack_attn("lln_w"), "lln_b": stack_attn("lln_b"),
        "qln_w": qln_w, "qln_b": qln_b,
        "kln_w": stack_attn("kln_w"), "kln_b": stack_attn("kln_b"),
        "wq": wq.astype(weight_dtype),
        "wk": stack_attn("wk").astype(weight_dtype),
        "wv": stack_attn("wv").astype(weight_dtype),
        "wo": stack_attn("wo").astype(weight_dtype),
        "mln_w": stack_mlp("ln_w"), "mln_b": stack_mlp("ln_b"),
        "w_fc": stack_mlp("w_fc").astype(weight_dtype),
        "w_cp": stack_mlp("w_cp").astype(weight_dtype),
        "fln_w": params["final_ln_w"], "fln_b": params["final_ln_b"],
    }


# ----------------------------------------------------------------------------
# pure-JAX reference (mirrors the PyTorch module exactly) for validation
# ----------------------------------------------------------------------------
def reference_forward(context, params, *, n_heads, head_dim, qk_layer_norms):
    B = context.shape[0]
    latents = jnp.broadcast_to(params["latents"][None],
                               (B,) + params["latents"].shape)
    scale = head_dim ** -0.5
    for blk in params["blocks"]:
        a = blk["attn"]
        ctx_n = _ln(context, a["cln_w"], a["cln_b"])
        lat_n = _ln(latents, a["lln_w"], a["lln_b"])
        kv_in = jnp.concatenate([ctx_n, lat_n], axis=1)
        q = lat_n @ a["wq"]
        k = kv_in @ a["wk"]
        v = kv_in @ a["wv"]

        def split(x):
            b, t, _ = x.shape
            return x.reshape(b, t, n_heads, head_dim).transpose(0, 2, 1, 3)

        q, k, v = split(q), split(k), split(v)
        if qk_layer_norms:
            q = _ln(q, a["qln_w"][0], a["qln_b"][0])
            k = _ln(k, a["kln_w"][0], a["kln_b"][0])
        s = jnp.einsum("bhid,bhjd->bhij", q * scale, k)
        s = s - jnp.max(s, axis=-1, keepdims=True)
        attn = jax.nn.softmax(s, axis=-1)
        res = jnp.einsum("bhij,bhjd->bhid", attn, v)
        res = res.transpose(0, 2, 1, 3).reshape(B, latents.shape[1], -1)
        latents = res @ a["wo"] + latents
        m = blk["mlp"]
        h = _ln(latents, m["ln_w"], m["ln_b"])
        h = jnp.maximum(h @ m["w_fc"], 0.0) @ m["w_cp"]
        latents = h + latents
    return _ln(latents, params["final_ln_w"], params["final_ln_b"])


# ----------------------------------------------------------------------------
if __name__ == "__main__":
    # small, module-consistent shapes
    B, S = 2, 32                  # batch, context sequence length
    EMBED_DIM = 64
    N_HEADS, HEAD_DIM = 4, 16
    N_LATENTS = 16
    DEPTH = 2
    INTERMEDIATE = 4 * EMBED_DIM
    QK_LAYER_NORMS = True

    key = jax.random.PRNGKey(0)
    pkey, xkey = jax.random.split(key)
    params = make_params(pkey, embed_dim=EMBED_DIM, n_heads=N_HEADS,
                         head_dim=HEAD_DIM, n_latents=N_LATENTS, depth=DEPTH,
                         intermediate_dim=INTERMEDIATE)
    packed = pack_params(params, n_heads=N_HEADS, head_dim=HEAD_DIM,
                         qk_layer_norms=QK_LAYER_NORMS)
    context = jax.random.normal(xkey, (B, S, EMBED_DIM), dtype=jnp.float32)

    out = perceiver_resampler_forward(context, packed, n_heads=N_HEADS,
                                      head_dim=HEAD_DIM,
                                      qk_layer_norms=QK_LAYER_NORMS)
    out = jax.block_until_ready(out)

    ref = reference_forward(context, params, n_heads=N_HEADS,
                            head_dim=HEAD_DIM, qk_layer_norms=QK_LAYER_NORMS)
    assert out.shape == (B, N_LATENTS, EMBED_DIM)
    err = float(jnp.max(jnp.abs(out - ref)))
    # bf16 matmul operands + approximate reciprocal -> small, bounded error
    assert err < 2e-2, f"mismatch vs reference, max abs err = {err}"

    print("KERNEL_OK")
</pallas_src>

<mosaic_0001>
module attributes {stable_mosaic.version = 11 : i64} {
  func.func @fused_resampler_kernel(%arg0: i32, %arg1: i32, %arg2: memref<16x64xf32, #tpu.memory_space<vmem>>, %arg3: memref<2x32x64xf32, #tpu.memory_space<vmem>>, %arg4: memref<1x1x64xf32, #tpu.memory_space<vmem>>, %arg5: memref<1x1x64xf32, #tpu.memory_space<vmem>>, %arg6: memref<1x1x64xf32, #tpu.memory_space<vmem>>, %arg7: memref<1x1x64xf32, #tpu.memory_space<vmem>>, %arg8: memref<1x1x16xf32, #tpu.memory_space<vmem>>, %arg9: memref<1x1x16xf32, #tpu.memory_space<vmem>>, %arg10: memref<1x1x16xf32, #tpu.memory_space<vmem>>, %arg11: memref<1x1x16xf32, #tpu.memory_space<vmem>>, %arg12: memref<1x64x64xbf16, #tpu.memory_space<vmem>>, %arg13: memref<1x64x64xbf16, #tpu.memory_space<vmem>>, %arg14: memref<1x64x64xbf16, #tpu.memory_space<vmem>>, %arg15: memref<1x64x64xbf16, #tpu.memory_space<vmem>>, %arg16: memref<1x1x64xf32, #tpu.memory_space<vmem>>, %arg17: memref<1x1x64xf32, #tpu.memory_space<vmem>>, %arg18: memref<1x64x256xbf16, #tpu.memory_space<vmem>>, %arg19: memref<1x256x64xbf16, #tpu.memory_space<vmem>>, %arg20: memref<1x64xf32, #tpu.memory_space<vmem>>, %arg21: memref<1x64xf32, #tpu.memory_space<vmem>>, %arg22: memref<2x16x64xf32, #tpu.memory_space<vmem>>, %arg23: memref<2x16x64xf32, #tpu.memory_space<vmem>>) attributes {dimension_semantics = [#tpu.dimension_semantics<parallel>, #tpu.dimension_semantics<arbitrary>], iteration_bounds = array<i64: 1, 2>, scalar_prefetch = 0 : i64, scratch_operands = 1 : i64, tpu.core_type = #tpu.core_type<tc>, window_params = [{pipeline_mode = #tpu.pipeline_mode<synchronous>, transform_indices = @transform_0, window_bounds = array<i64: 16, 64>}, {transform_indices = @transform_1, window_bounds = array<i64: 2, 32, 64>}, {transform_indices = @transform_2, window_bounds = array<i64: 1, 1, 64>}, {transform_indices = @transform_3, window_bounds = array<i64: 1, 1, 64>}, {transform_indices = @transform_4, window_bounds = array<i64: 1, 1, 64>}, {transform_indices = @transform_5, window_bounds = array<i64: 1, 1, 64>}, {transform_indices = @transform_6, window_bounds = array<i64: 1, 1, 16>}, {transform_indices = @transform_7, window_bounds = array<i64: 1, 1, 16>}, {transform_indices = @transform_8, window_bounds = array<i64: 1, 1, 16>}, {transform_indices = @transform_9, window_bounds = array<i64: 1, 1, 16>}, {transform_indices = @transform_10, window_bounds = array<i64: 1, 64, 64>}, {transform_indices = @transform_11, window_bounds = array<i64: 1, 64, 64>}, {transform_indices = @transform_12, window_bounds = array<i64: 1, 64, 64>}, {transform_indices = @transform_13, window_bounds = array<i64: 1, 64, 64>}, {transform_indices = @transform_14, window_bounds = array<i64: 1, 1, 64>}, {transform_indices = @transform_15, window_bounds = array<i64: 1, 1, 64>}, {transform_indices = @transform_16, window_bounds = array<i64: 1, 64, 256>}, {transform_indices = @transform_17, window_bounds = array<i64: 1, 256, 64>}, {pipeline_mode = #tpu.pipeline_mode<synchronous>, transform_indices = @transform_18, window_bounds = array<i64: 1, 64>}, {pipeline_mode = #tpu.pipeline_mode<synchronous>, transform_indices = @transform_19, window_bounds = array<i64: 1, 64>}, {transform_indices = @transform_20, window_bounds = array<i64: 2, 16, 64>}]} {
    %c0_i32 = arith.constant 0 : i32
    %0 = arith.cmpi eq, %arg1, %c0_i32 : i32
    %1 = arith.extui %0 : i1 to i32
    %c0_i32_0 = arith.constant 0 : i32
    %2 = arith.cmpi ne, %1, %c0_i32_0 : i32
    scf.if %2 {
      %c0_112 = arith.constant 0 : index
      %c0_113 = arith.constant 0 : index
      %307 = vector.load %arg2[%c0_112, %c0_113] : memref<16x64xf32, #tpu.memory_space<vmem>>, vector<16x64xf32>
      %308 = vector.shape_cast %307 : vector<16x64xf32> to vector<1x16x64xf32>
      %309 = vector.shape_cast %308 : vector<1x16x64xf32> to vector<1x16x64xf32>
      %310 = vector.broadcast %309 : vector<1x16x64xf32> to vector<2x16x64xf32>
      %c0_114 = arith.constant 0 : index
      %c0_115 = arith.constant 0 : index
      %c0_116 = arith.constant 0 : index
      %311 = vector.load %arg23[%c0_114, %c0_115, %c0_116] : memref<2x16x64xf32, #tpu.memory_space<vmem>>, vector<2x16x64xf32>
      tpu.vector_store %arg23[%c0_114, %c0_115, %c0_116], %310 {strides = array<i32>} : memref<2x16x64xf32, #tpu.memory_space<vmem>>, vector<2x16x64xf32>,
    } else {
    }
    %c0 = arith.constant 0 : index
    %c0_1 = arith.constant 0 : index
    %c0_2 = arith.constant 0 : index
    %3 = vector.load %arg23[%c0, %c0_1, %c0_2] : memref<2x16x64xf32, #tpu.memory_space<vmem>>, vector<2x16x64xf32>
    %c0_3 = arith.constant 0 : index
    %c0_4 = arith.constant 0 : index
    %c0_5 = arith.constant 0 : index
    %4 = vector.load %arg3[%c0_3, %c0_4, %c0_5] : memref<2x32x64xf32, #tpu.memory_space<vmem>>, vector<2x32x64xf32>
    %c0_6 = arith.constant 0 : index
    %c0_7 = arith.constant 0 : index
    %c0_8 = arith.constant 0 : index
    %5 = vector.load %arg4[%c0_6, %c0_7, %c0_8] : memref<1x1x64xf32, #tpu.memory_space<vmem>>, vector<1x1x64xf32>
    %6 = vector.shape_cast %5 : vector<1x1x64xf32> to vector<1x64xf32>
    %c0_9 = arith.constant 0 : index
    %c0_10 = arith.constant 0 : index
    %c0_11 = arith.constant 0 : index
    %7 = vector.load %arg5[%c0_9, %c0_10, %c0_11] : memref<1x1x64xf32, #tpu.memory_space<vmem>>, vector<1x1x64xf32>
    %8 = vector.shape_cast %7 : vector<1x1x64xf32> to vector<1x64xf32>
    %cst = arith.constant dense<0.000000e+00> : vector<2x32xf32>
    %9 = vector.multi_reduction <add>, %4, %cst [2] : vector<2x32x64xf32> to vector<2x32xf32>
    %10 = vector.shape_cast %9 : vector<2x32xf32> to vector<2x32x1xf32>
    %cst_12 = arith.constant 6.400000e+01 : f32
    %11 = vector.broadcast %cst_12 : f32 to vector<2x32x1xf32>
    %12 = arith.divf %10, %11 : vector<2x32x1xf32>
    %13 = vector.broadcast %12 : vector<2x32x1xf32> to vector<2x32x64xf32>
    %14 = arith.subf %4, %13 : vector<2x32x64xf32>
    %15 = arith.mulf %14, %14 : vector<2x32x64xf32>
    %cst_13 = arith.constant dense<0.000000e+00> : vector<2x32xf32>
    %16 = vector.multi_reduction <add>, %15, %cst_13 [2] : vector<2x32x64xf32> to vector<2x32xf32>
    %17 = vector.shape_cast %16 : vector<2x32xf32> to vector<2x32x1xf32>
    %cst_14 = arith.constant 6.400000e+01 : f32
    %18 = vector.broadcast %cst_14 : f32 to vector<2x32x1xf32>
    %19 = arith.divf %17, %18 : vector<2x32x1xf32>
    %20 = vector.broadcast %12 : vector<2x32x1xf32> to vector<2x32x64xf32>
    %21 = arith.subf %4, %20 : vector<2x32x64xf32>
    %cst_15 = arith.constant 9.99999974E-6 : f32
    %22 = vector.broadcast %cst_15 : f32 to vector<2x32x1xf32>
    %23 = arith.addf %19, %22 : vector<2x32x1xf32>
    %24 = math.rsqrt %23 : vector<2x32x1xf32>
    %25 = vector.broadcast %24 : vector<2x32x1xf32> to vector<2x32x64xf32>
    %26 = arith.mulf %21, %25 : vector<2x32x64xf32>
    %27 = vector.shape_cast %6 : vector<1x64xf32> to vector<1x1x64xf32>
    %28 = vector.broadcast %27 : vector<1x1x64xf32> to vector<2x32x64xf32>
    %29 = arith.mulf %26, %28 : vector<2x32x64xf32>
    %30 = vector.shape_cast %8 : vector<1x64xf32> to vector<1x1x64xf32>
    %31 = vector.broadcast %30 : vector<1x1x64xf32> to vector<2x32x64xf32>
    %32 = arith.addf %29, %31 : vector<2x32x64xf32>
    %c0_16 = arith.constant 0 : index
    %c0_17 = arith.constant 0 : index
    %c0_18 = arith.constant 0 : index
    %33 = vector.load %arg6[%c0_16, %c0_17, %c0_18] : memref<1x1x64xf32, #tpu.memory_space<vmem>>, vector<1x1x64xf32>
    %34 = vector.shape_cast %33 : vector<1x1x64xf32> to vector<1x64xf32>
    %c0_19 = arith.constant 0 : index
    %c0_20 = arith.constant 0 : index
    %c0_21 = arith.constant 0 : index
    %35 = vector.load %arg7[%c0_19, %c0_20, %c0_21] : memref<1x1x64xf32, #tpu.memory_space<vmem>>, vector<1x1x64xf32>
    %36 = vector.shape_cast %35 : vector<1x1x64xf32> to vector<1x64xf32>
    %cst_22 = arith.constant dense<0.000000e+00> : vector<2x16xf32>
    %37 = vector.multi_reduction <add>, %3, %cst_22 [2] : vector<2x16x64xf32> to vector<2x16xf32>
    %38 = vector.shape_cast %37 : vector<2x16xf32> to vector<2x16x1xf32>
    %cst_23 = arith.constant 6.400000e+01 : f32
    %39 = vector.broadcast %cst_23 : f32 to vector<2x16x1xf32>
    %40 = arith.divf %38, %39 : vector<2x16x1xf32>
    %41 = vector.broadcast %40 : vector<2x16x1xf32> to vector<2x16x64xf32>
    %42 = arith.subf %3, %41 : vector<2x16x64xf32>
    %43 = arith.mulf %42, %42 : vector<2x16x64xf32>
    %cst_24 = arith.constant dense<0.000000e+00> : vector<2x16xf32>
    %44 = vector.multi_reduction <add>, %43, %cst_24 [2] : vector<2x16x64xf32> to vector<2x16xf32>
    %45 = vector.shape_cast %44 : vector<2x16xf32> to vector<2x16x1xf32>
    %cst_25 = arith.constant 6.400000e+01 : f32
    %46 = vector.broadcast %cst_25 : f32 to vector<2x16x1xf32>
    %47 = arith.divf %45, %46 : vector<2x16x1xf32>
    %48 = vector.broadcast %40 : vector<2x16x1xf32> to vector<2x16x64xf32>
    %49 = arith.subf %3, %48 : vector<2x16x64xf32>
    %cst_26 = arith.constant 9.99999974E-6 : f32
    %50 = vector.broadcast %cst_26 : f32 to vector<2x16x1xf32>
    %51 = arith.addf %47, %50 : vector<2x16x1xf32>
    %52 = math.rsqrt %51 : vector<2x16x1xf32>
    %53 = vector.broadcast %52 : vector<2x16x1xf32> to vector<2x16x64xf32>
    %54 = arith.mulf %49, %53 : vector<2x16x64xf32>
    %55 = vector.shape_cast %34 : vector<1x64xf32> to vector<1x1x64xf32>
    %56 = vector.broadcast %55 : vector<1x1x64xf32> to vector<2x16x64xf32>
    %57 = arith.mulf %54, %56 : vector<2x16x64xf32>
    %58 = vector.shape_cast %36 : vector<1x64xf32> to vector<1x1x64xf32>
    %59 = vector.broadcast %58 : vector<1x1x64xf32> to vector<2x16x64xf32>
    %60 = arith.addf %57, %59 : vector<2x16x64xf32>
    %61 = vector.shape_cast %32 : vector<2x32x64xf32> to vector<64x64xf32>
    %62 = arith.truncf %61 : vector<64x64xf32> to vector<64x64xbf16>
    %63 = vector.shape_cast %60 : vector<2x16x64xf32> to vector<32x64xf32>
    %64 = arith.truncf %63 : vector<32x64xf32> to vector<32x64xbf16>
    %c0_27 = arith.constant 0 : index
    %c0_28 = arith.constant 0 : index
    %c0_29 = arith.constant 0 : index
    %65 = vector.load %arg12[%c0_27, %c0_28, %c0_29] : memref<1x64x64xbf16, #tpu.memory_space<vmem>>, vector<1x64x64xbf16>
    %66 = vector.shape_cast %65 : vector<1x64x64xbf16> to vector<64x64xbf16>
    %c0_30 = arith.constant 0 : index
    %c0_31 = arith.constant 0 : index
    %c0_32 = arith.constant 0 : index
    %67 = vector.load %arg13[%c0_30, %c0_31, %c0_32] : memref<1x64x64xbf16, #tpu.memory_space<vmem>>, vector<1x64x64xbf16>
    %68 = vector.shape_cast %67 : vector<1x64x64xbf16> to vector<64x64xbf16>
    %c0_33 = arith.constant 0 : index
    %c0_34 = arith.constant 0 : index
    %c0_35 = arith.constant 0 : index
    %69 = vector.load %arg14[%c0_33, %c0_34, %c0_35] : memref<1x64x64xbf16, #tpu.memory_space<vmem>>, vector<1x64x64xbf16>
    %70 = vector.shape_cast %69 : vector<1x64x64xbf16> to vector<64x64xbf16>
    %cst_36 = arith.constant dense<0.000000e+00> : vector<32x64xf32>
    %71 = tpu.matmul %64, %66, %cst_36 {dimension_numbers = #tpu.dot_dimension_numbers<[1], [0], [0], [1], [0, 0, 1, 1], [], []>} : vector<32x64xbf16>, vector<64x64xbf16>, vector<32x64xf32> -> vector<32x64xf32>
    %cst_37 = arith.constant dense<0.000000e+00> : vector<64x64xf32>
    %72 = tpu.matmul %62, %68, %cst_37 {dimension_numbers = #tpu.dot_dimension_numbers<[1], [0], [0], [1], [0, 0, 1, 1], [], []>} : vector<64x64xbf16>, vector<64x64xbf16>, vector<64x64xf32> -> vector<64x64xf32>
    %cst_38 = arith.constant dense<0.000000e+00> : vector<32x64xf32>
    %73 = tpu.matmul %64, %68, %cst_38 {dimension_numbers = #tpu.dot_dimension_numbers<[1], [0], [0], [1], [0, 0, 1, 1], [], []>} : vector<32x64xbf16>, vector<64x64xbf16>, vector<32x64xf32> -> vector<32x64xf32>
    %cst_39 = arith.constant dense<0.000000e+00> : vector<64x64xf32>
    %74 = tpu.matmul %62, %70, %cst_39 {dimension_numbers = #tpu.dot_dimension_numbers<[1], [0], [0], [1], [0, 0, 1, 1], [], []>} : vector<64x64xbf16>, vector<64x64xbf16>, vector<64x64xf32> -> vector<64x64xf32>
    %cst_40 = arith.constant dense<0.000000e+00> : vector<32x64xf32>
    %75 = tpu.matmul %64, %70, %cst_40 {dimension_numbers = #tpu.dot_dimension_numbers<[1], [0], [0], [1], [0, 0, 1, 1], [], []>} : vector<32x64xbf16>, vector<64x64xbf16>, vector<32x64xf32> -> vector<32x64xf32>
    %76 = vector.shape_cast %71 : vector<32x64xf32> to vector<2x16x4x16xf32>
    %77 = vector.shape_cast %72 : vector<64x64xf32> to vector<2x32x4x16xf32>
    %78 = vector.shape_cast %73 : vector<32x64xf32> to vector<2x16x4x16xf32>
    %c0_41 = arith.constant 0 : index
    %c0_42 = arith.constant 0 : index
    %c0_43 = arith.constant 0 : index
    %79 = vector.load %arg8[%c0_41, %c0_42, %c0_43] : memref<1x1x16xf32, #tpu.memory_space<vmem>>, vector<1x1x16xf32>
    %80 = vector.shape_cast %79 : vector<1x1x16xf32> to vector<1x16xf32>
    %c0_44 = arith.constant 0 : index
    %c0_45 = arith.constant 0 : index
    %c0_46 = arith.constant 0 : index
    %81 = vector.load %arg9[%c0_44, %c0_45, %c0_46] : memref<1x1x16xf32, #tpu.memory_space<vmem>>, vector<1x1x16xf32>
    %82 = vector.shape_cast %81 : vector<1x1x16xf32> to vector<1x16xf32>
    %c0_47 = arith.constant 0 : index
    %c0_48 = arith.constant 0 : index
    %c0_49 = arith.constant 0 : index
    %83 = vector.load %arg10[%c0_47, %c0_48, %c0_49] : memref<1x1x16xf32, #tpu.memory_space<vmem>>, vector<1x1x16xf32>
    %84 = vector.shape_cast %83 : vector<1x1x16xf32> to vector<1x16xf32>
    %c0_50 = arith.constant 0 : index
    %c0_51 = arith.constant 0 : index
    %c0_52 = arith.constant 0 : index
    %85 = vector.load %arg11[%c0_50, %c0_51, %c0_52] : memref<1x1x16xf32, #tpu.memory_space<vmem>>, vector<1x1x16xf32>
    %86 = vector.shape_cast %85 : vector<1x1x16xf32> to vector<1x16xf32>
    %cst_53 = arith.constant dense<0.000000e+00> : vector<2x16x4xf32>
    %87 = vector.multi_reduction <add>, %76, %cst_53 [3] : vector<2x16x4x16xf32> to vector<2x16x4xf32>
    %88 = vector.shape_cast %87 : vector<2x16x4xf32> to vector<2x16x4x1xf32>
    %cst_54 = arith.constant 1.600000e+01 : f32
    %89 = vector.broadcast %cst_54 : f32 to vector<2x16x4x1xf32>
    %90 = arith.divf %88, %89 : vector<2x16x4x1xf32>
    %91 = vector.broadcast %90 : vector<2x16x4x1xf32> to vector<2x16x4x16xf32>
    %92 = arith.subf %76, %91 : vector<2x16x4x16xf32>
    %93 = arith.mulf %92, %92 : vector<2x16x4x16xf32>
    %cst_55 = arith.constant dense<0.000000e+00> : vector<2x16x4xf32>
    %94 = vector.multi_reduction <add>, %93, %cst_55 [3] : vector<2x16x4x16xf32> to vector<2x16x4xf32>
    %95 = vector.shape_cast %94 : vector<2x16x4xf32> to vector<2x16x4x1xf32>
    %cst_56 = arith.constant 1.600000e+01 : f32
    %96 = vector.broadcast %cst_56 : f32 to vector<2x16x4x1xf32>
    %97 = arith.divf %95, %96 : vector<2x16x4x1xf32>
    %98 = vector.broadcast %90 : vector<2x16x4x1xf32> to vector<2x16x4x16xf32>
    %99 = arith.subf %76, %98 : vector<2x16x4x16xf32>
    %cst_57 = arith.constant 9.99999974E-6 : f32
    %100 = vector.broadcast %cst_57 : f32 to vector<2x16x4x1xf32>
    %101 = arith.addf %97, %100 : vector<2x16x4x1xf32>
    %102 = math.rsqrt %101 : vector<2x16x4x1xf32>
    %103 = vector.broadcast %102 : vector<2x16x4x1xf32> to vector<2x16x4x16xf32>
    %104 = arith.mulf %99, %103 : vector<2x16x4x16xf32>
    %105 = vector.shape_cast %80 : vector<1x16xf32> to vector<1x1x1x16xf32>
    %106 = vector.broadcast %105 : vector<1x1x1x16xf32> to vector<2x16x4x16xf32>
    %107 = arith.mulf %104, %106 : vector<2x16x4x16xf32>
    %108 = vector.shape_cast %82 : vector<1x16xf32> to vector<1x1x1x16xf32>
    %109 = vector.broadcast %108 : vector<1x1x1x16xf32> to vector<2x16x4x16xf32>
    %110 = arith.addf %107, %109 : vector<2x16x4x16xf32>
    %cst_58 = arith.constant dense<0.000000e+00> : vector<2x32x4xf32>
    %111 = vector.multi_reduction <add>, %77, %cst_58 [3] : vector<2x32x4x16xf32> to vector<2x32x4xf32>
    %112 = vector.shape_cast %111 : vector<2x32x4xf32> to vector<2x32x4x1xf32>
    %cst_59 = arith.constant 1.600000e+01 : f32
    %113 = vector.broadcast %cst_59 : f32 to vector<2x32x4x1xf32>
    %114 = arith.divf %112, %113 : vector<2x32x4x1xf32>
    %115 = vector.broadcast %114 : vector<2x32x4x1xf32> to vector<2x32x4x16xf32>
    %116 = arith.subf %77, %115 : vector<2x32x4x16xf32>
    %117 = arith.mulf %116, %116 : vector<2x32x4x16xf32>
    %cst_60 = arith.constant dense<0.000000e+00> : vector<2x32x4xf32>
    %118 = vector.multi_reduction <add>, %117, %cst_60 [3] : vector<2x32x4x16xf32> to vector<2x32x4xf32>
    %119 = vector.shape_cast %118 : vector<2x32x4xf32> to vector<2x32x4x1xf32>
    %cst_61 = arith.constant 1.600000e+01 : f32
    %120 = vector.broadcast %cst_61 : f32 to vector<2x32x4x1xf32>
    %121 = arith.divf %119, %120 : vector<2x32x4x1xf32>
    %122 = vector.broadcast %114 : vector<2x32x4x1xf32> to vector<2x32x4x16xf32>
    %123 = arith.subf %77, %122 : vector<2x32x4x16xf32>
    %cst_62 = arith.constant 9.99999974E-6 : f32
    %124 = vector.broadcast %cst_62 : f32 to vector<2x32x4x1xf32>
    %125 = arith.addf %121, %124 : vector<2x32x4x1xf32>
    %126 = math.rsqrt %125 : vector<2x32x4x1xf32>
    %127 = vector.broadcast %126 : vector<2x32x4x1xf32> to vector<2x32x4x16xf32>
    %128 = arith.mulf %123, %127 : vector<2x32x4x16xf32>
    %129 = vector.shape_cast %84 : vector<1x16xf32> to vector<1x1x1x16xf32>
    %130 = vector.broadcast %129 : vector<1x1x1x16xf32> to vector<2x32x4x16xf32>
    %131 = arith.mulf %128, %130 : vector<2x32x4x16xf32>
    %132 = vector.shape_cast %86 : vector<1x16xf32> to vector<1x1x1x16xf32>
    %133 = vector.broadcast %132 : vector<1x1x1x16xf32> to vector<2x32x4x16xf32>
    %134 = arith.addf %131, %133 : vector<2x32x4x16xf32>
    %cst_63 = arith.constant dense<0.000000e+00> : vector<2x16x4xf32>
    %135 = vector.multi_reduction <add>, %78, %cst_63 [3] : vector<2x16x4x16xf32> to vector<2x16x4xf32>
    %136 = vector.shape_cast %135 : vector<2x16x4xf32> to vector<2x16x4x1xf32>
    %cst_64 = arith.constant 1.600000e+01 : f32
    %137 = vector.broadcast %cst_64 : f32 to vector<2x16x4x1xf32>
    %138 = arith.divf %136, %137 : vector<2x16x4x1xf32>
    %139 = vector.broadcast %138 : vector<2x16x4x1xf32> to vector<2x16x4x16xf32>
    %140 = arith.subf %78, %139 : vector<2x16x4x16xf32>
    %141 = arith.mulf %140, %140 : vector<2x16x4x16xf32>
    %cst_65 = arith.constant dense<0.000000e+00> : vector<2x16x4xf32>
    %142 = vector.multi_reduction <add>, %141, %cst_65 [3] : vector<2x16x4x16xf32> to vector<2x16x4xf32>
    %143 = vector.shape_cast %142 : vector<2x16x4xf32> to vector<2x16x4x1xf32>
    %cst_66 = arith.constant 1.600000e+01 : f32
    %144 = vector.broadcast %cst_66 : f32 to vector<2x16x4x1xf32>
    %145 = arith.divf %143, %144 : vector<2x16x4x1xf32>
    %146 = vector.broadcast %138 : vector<2x16x4x1xf32> to vector<2x16x4x16xf32>
    %147 = arith.subf %78, %146 : vector<2x16x4x16xf32>
    %cst_67 = arith.constant 9.99999974E-6 : f32
    %148 = vector.broadcast %cst_67 : f32 to vector<2x16x4x1xf32>
    %149 = arith.addf %145, %148 : vector<2x16x4x1xf32>
    %150 = math.rsqrt %149 : vector<2x16x4x1xf32>
    %151 = vector.broadcast %150 : vector<2x16x4x1xf32> to vector<2x16x4x16xf32>
    %152 = arith.mulf %147, %151 : vector<2x16x4x16xf32>
    %153 = vector.shape_cast %84 : vector<1x16xf32> to vector<1x1x1x16xf32>
    %154 = vector.broadcast %153 : vector<1x1x1x16xf32> to vector<2x16x4x16xf32>
    %155 = arith.mulf %152, %154 : vector<2x16x4x16xf32>
    %156 = vector.shape_cast %86 : vector<1x16xf32> to vector<1x1x1x16xf32>
    %157 = vector.broadcast %156 : vector<1x1x1x16xf32> to vector<2x16x4x16xf32>
    %158 = arith.addf %155, %157 : vector<2x16x4x16xf32>
    %159 = arith.truncf %110 : vector<2x16x4x16xf32> to vector<2x16x4x16xbf16>
    %160 = tpu.transpose %159, [0, 2, 1, 3] : vector<2x16x4x16xbf16> -> vector<2x4x16x16xbf16>
    %161 = arith.truncf %134 : vector<2x32x4x16xf32> to vector<2x32x4x16xbf16>
    %162 = tpu.transpose %161, [0, 2, 1, 3] : vector<2x32x4x16xbf16> -> vector<2x4x32x16xbf16>
    %163 = arith.truncf %158 : vector<2x16x4x16xf32> to vector<2x16x4x16xbf16>
    %164 = tpu.transpose %163, [0, 2, 1, 3] : vector<2x16x4x16xbf16> -> vector<2x4x16x16xbf16>
    %165 = vector.shape_cast %74 : vector<64x64xf32> to vector<2x32x4x16xf32>
    %166 = arith.truncf %165 : vector<2x32x4x16xf32> to vector<2x32x4x16xbf16>
    %167 = tpu.transpose %166, [0, 2, 1, 3] : vector<2x32x4x16xbf16> -> vector<2x4x32x16xbf16>
    %168 = vector.shape_cast %75 : vector<32x64xf32> to vector<2x16x4x16xf32>
    %169 = arith.truncf %168 : vector<2x16x4x16xf32> to vector<2x16x4x16xbf16>
    %170 = tpu.transpose %169, [0, 2, 1, 3] : vector<2x16x4x16xbf16> -> vector<2x4x16x16xbf16>
    %171 = vector.extract_strided_slice %160 {offsets = [0, 0, 0, 0], sizes = [1, 4, 16, 16], strides = [1, 1, 1, 1]} : vector<2x4x16x16xbf16> to vector<1x4x16x16xbf16>
    %172 = vector.shape_cast %171 : vector<1x4x16x16xbf16> to vector<4x16x16xbf16>
    %173 = vector.extract_strided_slice %162 {offsets = [0, 0, 0, 0], sizes = [1, 4, 32, 16], strides = [1, 1, 1, 1]} : vector<2x4x32x16xbf16> to vector<1x4x32x16xbf16>
    %174 = vector.shape_cast %173 : vector<1x4x32x16xbf16> to vector<4x32x16xbf16>
    "tpu.trace_start"() <{level = 10 : i32, message = "hid,hjd->hij"}> : () -> ()
    %cst_68 = arith.constant dense<0.000000e+00> : vector<4x16x32xf32>
    %175 = tpu.matmul %172, %174, %cst_68 {dimension_numbers = #tpu.dot_dimension_numbers<[2], [2], [1], [1], [0, 0, 0, 1, 1, 1], [0], [0]>} : vector<4x16x16xbf16>, vector<4x32x16xbf16>, vector<4x16x32xf32> -> vector<4x16x32xf32>
    "tpu.trace_stop"() : () -> ()
    %176 = vector.extract_strided_slice %160 {offsets = [0, 0, 0, 0], sizes = [1, 4, 16, 16], strides = [1, 1, 1, 1]} : vector<2x4x16x16xbf16> to vector<1x4x16x16xbf16>
    %177 = vector.shape_cast %176 : vector<1x4x16x16xbf16> to vector<4x16x16xbf16>
    %178 = vector.extract_strided_slice %164 {offsets = [0, 0, 0, 0], sizes = [1, 4, 16, 16], strides = [1, 1, 1, 1]} : vector<2x4x16x16xbf16> to vector<1x4x16x16xbf16>
    %179 = vector.shape_cast %178 : vector<1x4x16x16xbf16> to vector<4x16x16xbf16>
    "tpu.trace_start"() <{level = 10 : i32, message = "hid,hjd->hij"}> : () -> ()
    %cst_69 = arith.constant dense<0.000000e+00> : vector<4x16x16xf32>
    %180 = tpu.matmul %177, %179, %cst_69 {dimension_numbers = #tpu.dot_dimension_numbers<[2], [2], [1], [1], [0, 0, 0, 1, 1, 1], [0], [0]>} : vector<4x16x16xbf16>, vector<4x16x16xbf16>, vector<4x16x16xf32> -> vector<4x16x16xf32>
    "tpu.trace_stop"() : () -> ()
    %cst_70 = arith.constant dense<0xFF800000> : vector<4x16xf32>
    %181 = vector.multi_reduction <maximumf>, %175, %cst_70 [2] : vector<4x16x32xf32> to vector<4x16xf32>
    %182 = vector.shape_cast %181 : vector<4x16xf32> to vector<4x16x1xf32>
    %cst_71 = arith.constant dense<0xFF800000> : vector<4x16xf32>
    %183 = vector.multi_reduction <maximumf>, %180, %cst_71 [2] : vector<4x16x16xf32> to vector<4x16xf32>
    %184 = vector.shape_cast %183 : vector<4x16xf32> to vector<4x16x1xf32>
    %185 = arith.maximumf %182, %184 : vector<4x16x1xf32>
    %186 = vector.broadcast %185 : vector<4x16x1xf32> to vector<4x16x32xf32>
    %187 = arith.subf %175, %186 : vector<4x16x32xf32>
    %188 = math.exp %187 : vector<4x16x32xf32>
    %189 = vector.broadcast %185 : vector<4x16x1xf32> to vector<4x16x16xf32>
    %190 = arith.subf %180, %189 : vector<4x16x16xf32>
    %191 = math.exp %190 : vector<4x16x16xf32>
    %cst_72 = arith.constant dense<0.000000e+00> : vector<4x16xf32>
    %192 = vector.multi_reduction <add>, %188, %cst_72 [2] : vector<4x16x32xf32> to vector<4x16xf32>
    %193 = vector.shape_cast %192 : vector<4x16xf32> to vector<4x16x1xf32>
    %cst_73 = arith.constant dense<0.000000e+00> : vector<4x16xf32>
    %194 = vector.multi_reduction <add>, %191, %cst_73 [2] : vector<4x16x16xf32> to vector<4x16xf32>
    %195 = vector.shape_cast %194 : vector<4x16xf32> to vector<4x16x1xf32>
    %196 = arith.addf %193, %195 : vector<4x16x1xf32>
    %197 = tpu.reciprocal %196 {approx = true} : vector<4x16x1xf32> -> vector<4x16x1xf32>
    %198 = vector.broadcast %197 : vector<4x16x1xf32> to vector<4x16x32xf32>
    %199 = arith.mulf %188, %198 : vector<4x16x32xf32>
    %200 = arith.truncf %199 : vector<4x16x32xf32> to vector<4x16x32xbf16>
    %201 = vector.broadcast %197 : vector<4x16x1xf32> to vector<4x16x16xf32>
    %202 = arith.mulf %191, %201 : vector<4x16x16xf32>
    %203 = arith.truncf %202 : vector<4x16x16xf32> to vector<4x16x16xbf16>
    %204 = vector.extract_strided_slice %167 {offsets = [0, 0, 0, 0], sizes = [1, 4, 32, 16], strides = [1, 1, 1, 1]} : vector<2x4x32x16xbf16> to vector<1x4x32x16xbf16>
    %205 = vector.shape_cast %204 : vector<1x4x32x16xbf16> to vector<4x32x16xbf16>
    "tpu.trace_start"() <{level = 10 : i32, message = "hij,hjd->hid"}> : () -> ()
    %cst_74 = arith.constant dense<0.000000e+00> : vector<4x16x16xf32>
    %206 = tpu.matmul %200, %205, %cst_74 {dimension_numbers = #tpu.dot_dimension_numbers<[2], [1], [1], [2], [0, 0, 0, 1, 1, 2], [0], [0]>} : vector<4x16x32xbf16>, vector<4x32x16xbf16>, vector<4x16x16xf32> -> vector<4x16x16xf32>
    "tpu.trace_stop"() : () -> ()
    %207 = vector.extract_strided_slice %170 {offsets = [0, 0, 0, 0], sizes = [1, 4, 16, 16], strides = [1, 1, 1, 1]} : vector<2x4x16x16xbf16> to vector<1x4x16x16xbf16>
    %208 = vector.shape_cast %207 : vector<1x4x16x16xbf16> to vector<4x16x16xbf16>
    "tpu.trace_start"() <{level = 10 : i32, message = "hij,hjd->hid"}> : () -> ()
    %cst_75 = arith.constant dense<0.000000e+00> : vector<4x16x16xf32>
    %209 = tpu.matmul %203, %208, %cst_75 {dimension_numbers = #tpu.dot_dimension_numbers<[2], [1], [1], [2], [0, 0, 0, 1, 1, 2], [0], [0]>} : vector<4x16x16xbf16>, vector<4x16x16xbf16>, vector<4x16x16xf32> -> vector<4x16x16xf32>
    "tpu.trace_stop"() : () -> ()
    %210 = arith.addf %206, %209 : vector<4x16x16xf32>
    %211 = vector.extract_strided_slice %160 {offsets = [1, 0, 0, 0], sizes = [1, 4, 16, 16], strides = [1, 1, 1, 1]} : vector<2x4x16x16xbf16> to vector<1x4x16x16xbf16>
    %212 = vector.shape_cast %211 : vector<1x4x16x16xbf16> to vector<4x16x16xbf16>
    %213 = vector.extract_strided_slice %162 {offsets = [1, 0, 0, 0], sizes = [1, 4, 32, 16], strides = [1, 1, 1, 1]} : vector<2x4x32x16xbf16> to vector<1x4x32x16xbf16>
    %214 = vector.shape_cast %213 : vector<1x4x32x16xbf16> to vector<4x32x16xbf16>
    "tpu.trace_start"() <{level = 10 : i32, message = "hid,hjd->hij"}> : () -> ()
    %cst_76 = arith.constant dense<0.000000e+00> : vector<4x16x32xf32>
    %215 = tpu.matmul %212, %214, %cst_76 {dimension_numbers = #tpu.dot_dimension_numbers<[2], [2], [1], [1], [0, 0, 0, 1, 1, 1], [0], [0]>} : vector<4x16x16xbf16>, vector<4x32x16xbf16>, vector<4x16x32xf32> -> vector<4x16x32xf32>
    "tpu.trace_stop"() : () -> ()
    %216 = vector.extract_strided_slice %160 {offsets = [1, 0, 0, 0], sizes = [1, 4, 16, 16], strides = [1, 1, 1, 1]} : vector<2x4x16x16xbf16> to vector<1x4x16x16xbf16>
    %217 = vector.shape_cast %216 : vector<1x4x16x16xbf16> to vector<4x16x16xbf16>
    %218 = vector.extract_strided_slice %164 {offsets = [1, 0, 0, 0], sizes = [1, 4, 16, 16], strides = [1, 1, 1, 1]} : vector<2x4x16x16xbf16> to vector<1x4x16x16xbf16>
    %219 = vector.shape_cast %218 : vector<1x4x16x16xbf16> to vector<4x16x16xbf16>
    "tpu.trace_start"() <{level = 10 : i32, message = "hid,hjd->hij"}> : () -> ()
    %cst_77 = arith.constant dense<0.000000e+00> : vector<4x16x16xf32>
    %220 = tpu.matmul %217, %219, %cst_77 {dimension_numbers = #tpu.dot_dimension_numbers<[2], [2], [1], [1], [0, 0, 0, 1, 1, 1], [0], [0]>} : vector<4x16x16xbf16>, vector<4x16x16xbf16>, vector<4x16x16xf32> -> vector<4x16x16xf32>
    "tpu.trace_stop"() : () -> ()
    %cst_78 = arith.constant dense<0xFF800000> : vector<4x16xf32>
    %221 = vector.multi_reduction <maximumf>, %215, %cst_78 [2] : vector<4x16x32xf32> to vector<4x16xf32>
    %222 = vector.shape_cast %221 : vector<4x16xf32> to vector<4x16x1xf32>
    %cst_79 = arith.constant dense<0xFF800000> : vector<4x16xf32>
    %223 = vector.multi_reduction <maximumf>, %220, %cst_79 [2] : vector<4x16x16xf32> to vector<4x16xf32>
    %224 = vector.shape_cast %223 : vector<4x16xf32> to vector<4x16x1xf32>
    %225 = arith.maximumf %222, %224 : vector<4x16x1xf32>
    %226 = vector.broadcast %225 : vector<4x16x1xf32> to vector<4x16x32xf32>
    %227 = arith.subf %215, %226 : vector<4x16x32xf32>
    %228 = math.exp %227 : vector<4x16x32xf32>
    %229 = vector.broadcast %225 : vector<4x16x1xf32> to vector<4x16x16xf32>
    %230 = arith.subf %220, %229 : vector<4x16x16xf32>
    %231 = math.exp %230 : vector<4x16x16xf32>
    %cst_80 = arith.constant dense<0.000000e+00> : vector<4x16xf32>
    %232 = vector.multi_reduction <add>, %228, %cst_80 [2] : vector<4x16x32xf32> to vector<4x16xf32>
    %233 = vector.shape_cast %232 : vector<4x16xf32> to vector<4x16x1xf32>
    %cst_81 = arith.constant dense<0.000000e+00> : vector<4x16xf32>
    %234 = vector.multi_reduction <add>, %231, %cst_81 [2] : vector<4x16x16xf32> to vector<4x16xf32>
    %235 = vector.shape_cast %234 : vector<4x16xf32> to vector<4x16x1xf32>
    %236 = arith.addf %233, %235 : vector<4x16x1xf32>
    %237 = tpu.reciprocal %236 {approx = true} : vector<4x16x1xf32> -> vector<4x16x1xf32>
    %238 = vector.broadcast %237 : vector<4x16x1xf32> to vector<4x16x32xf32>
    %239 = arith.mulf %228, %238 : vector<4x16x32xf32>
    %240 = arith.truncf %239 : vector<4x16x32xf32> to vector<4x16x32xbf16>
    %241 = vector.broadcast %237 : vector<4x16x1xf32> to vector<4x16x16xf32>
    %242 = arith.mulf %231, %241 : vector<4x16x16xf32>
    %243 = arith.truncf %242 : vector<4x16x16xf32> to vector<4x16x16xbf16>
    %244 = vector.extract_strided_slice %167 {offsets = [1, 0, 0, 0], sizes = [1, 4, 32, 16], strides = [1, 1, 1, 1]} : vector<2x4x32x16xbf16> to vector<1x4x32x16xbf16>
    %245 = vector.shape_cast %244 : vector<1x4x32x16xbf16> to vector<4x32x16xbf16>
    "tpu.trace_start"() <{level = 10 : i32, message = "hij,hjd->hid"}> : () -> ()
    %cst_82 = arith.constant dense<0.000000e+00> : vector<4x16x16xf32>
    %246 = tpu.matmul %240, %245, %cst_82 {dimension_numbers = #tpu.dot_dimension_numbers<[2], [1], [1], [2], [0, 0, 0, 1, 1, 2], [0], [0]>} : vector<4x16x32xbf16>, vector<4x32x16xbf16>, vector<4x16x16xf32> -> vector<4x16x16xf32>
    "tpu.trace_stop"() : () -> ()
    %247 = vector.extract_strided_slice %170 {offsets = [1, 0, 0, 0], sizes = [1, 4, 16, 16], strides = [1, 1, 1, 1]} : vector<2x4x16x16xbf16> to vector<1x4x16x16xbf16>
    %248 = vector.shape_cast %247 : vector<1x4x16x16xbf16> to vector<4x16x16xbf16>
    "tpu.trace_start"() <{level = 10 : i32, message = "hij,hjd->hid"}> : () -> ()
    %cst_83 = arith.constant dense<0.000000e+00> : vector<4x16x16xf32>
    %249 = tpu.matmul %243, %248, %cst_83 {dimension_numbers = #tpu.dot_dimension_numbers<[2], [1], [1], [2], [0, 0, 0, 1, 1, 2], [0], [0]>} : vector<4x16x16xbf16>, vector<4x16x16xbf16>, vector<4x16x16xf32> -> vector<4x16x16xf32>
    "tpu.trace_stop"() : () -> ()
    %250 = arith.addf %246, %249 : vector<4x16x16xf32>
    %251 = vector.shape_cast %210 : vector<4x16x16xf32> to vector<1x4x16x16xf32>
    %252 = vector.shape_cast %250 : vector<4x16x16xf32> to vector<1x4x16x16xf32>
    %253 = tpu.concatenate %251, %252 in 0 : vector<1x4x16x16xf32>, vector<1x4x16x16xf32> -> vector<2x4x16x16xf32>
    %254 = tpu.transpose %253, [0, 2, 1, 3] : vector<2x4x16x16xf32> -> vector<2x16x4x16xf32>
    %255 = vector.shape_cast %254 : vector<2x16x4x16xf32> to vector<32x64xf32>
    %256 = arith.truncf %255 : vector<32x64xf32> to vector<32x64xbf16>
    %c0_84 = arith.constant 0 : index
    %c0_85 = arith.constant 0 : index
    %c0_86 = arith.constant 0 : index
    %257 = vector.load %arg15[%c0_84, %c0_85, %c0_86] : memref<1x64x64xbf16, #tpu.memory_space<vmem>>, vector<1x64x64xbf16>
    %258 = vector.shape_cast %257 : vector<1x64x64xbf16> to vector<64x64xbf16>
    %cst_87 = arith.constant dense<0.000000e+00> : vector<32x64xf32>
    %259 = tpu.matmul %256, %258, %cst_87 {dimension_numbers = #tpu.dot_dimension_numbers<[1], [0], [0], [1], [0, 0, 1, 1], [], []>} : vector<32x64xbf16>, vector<64x64xbf16>, vector<32x64xf32> -> vector<32x64xf32>
    %260 = vector.shape_cast %259 : vector<32x64xf32> to vector<2x16x64xf32>
    %261 = arith.addf %3, %260 : vector<2x16x64xf32>
    %c0_88 = arith.constant 0 : index
    %c0_89 = arith.constant 0 : index
    %c0_90 = arith.constant 0 : index
    %262 = vector.load %arg16[%c0_88, %c0_89, %c0_90] : memref<1x1x64xf32, #tpu.memory_space<vmem>>, vector<1x1x64xf32>
    %263 = vector.shape_cast %262 : vector<1x1x64xf32> to vector<1x64xf32>
    %c0_91 = arith.constant 0 : index
    %c0_92 = arith.constant 0 : index
    %c0_93 = arith.constant 0 : index
    %264 = vector.load %arg17[%c0_91, %c0_92, %c0_93] : memref<1x1x64xf32, #tpu.memory_space<vmem>>, vector<1x1x64xf32>
    %265 = vector.shape_cast %264 : vector<1x1x64xf32> to vector<1x64xf32>
    %cst_94 = arith.constant dense<0.000000e+00> : vector<2x16xf32>
    %266 = vector.multi_reduction <add>, %261, %cst_94 [2] : vector<2x16x64xf32> to vector<2x16xf32>
    %267 = vector.shape_cast %266 : vector<2x16xf32> to vector<2x16x1xf32>
    %cst_95 = arith.constant 6.400000e+01 : f32
    %268 = vector.broadcast %cst_95 : f32 to vector<2x16x1xf32>
    %269 = arith.divf %267, %268 : vector<2x16x1xf32>
    %270 = vector.broadcast %269 : vector<2x16x1xf32> to vector<2x16x64xf32>
    %271 = arith.subf %261, %270 : vector<2x16x64xf32>
    %272 = arith.mulf %271, %271 : vector<2x16x64xf32>
    %cst_96 = arith.constant dense<0.000000e+00> : vector<2x16xf32>
    %273 = vector.multi_reduction <add>, %272, %cst_96 [2] : vector<2x16x64xf32> to vector<2x16xf32>
    %274 = vector.shape_cast %273 : vector<2x16xf32> to vector<2x16x1xf32>
    %cst_97 = arith.constant 6.400000e+01 : f32
    %275 = vector.broadcast %cst_97 : f32 to vector<2x16x1xf32>
    %276 = arith.divf %274, %275 : vector<2x16x1xf32>
    %277 = vector.broadcast %269 : vector<2x16x1xf32> to vector<2x16x64xf32>
    %278 = arith.subf %261, %277 : vector<2x16x64xf32>
    %cst_98 = arith.constant 9.99999974E-6 : f32
    %279 = vector.broadcast %cst_98 : f32 to vector<2x16x1xf32>
    %280 = arith.addf %276, %279 : vector<2x16x1xf32>
    %281 = math.rsqrt %280 : vector<2x16x1xf32>
    %282 = vector.broadcast %281 : vector<2x16x1xf32> to vector<2x16x64xf32>
    %283 = arith.mulf %278, %282 : vector<2x16x64xf32>
    %284 = vector.shape_cast %263 : vector<1x64xf32> to vector<1x1x64xf32>
    %285 = vector.broadcast %284 : vector<1x1x64xf32> to vector<2x16x64xf32>
    %286 = arith.mulf %283, %285 : vector<2x16x64xf32>
    %287 = vector.shape_cast %265 : vector<1x64xf32> to vector<1x1x64xf32>
    %288 = vector.broadcast %287 : vector<1x1x64xf32> to vector<2x16x64xf32>
    %289 = arith.addf %286, %288 : vector<2x16x64xf32>
    %290 = vector.shape_cast %289 : vector<2x16x64xf32> to vector<32x64xf32>
    %291 = arith.truncf %290 : vector<32x64xf32> to vector<32x64xbf16>
    %c0_99 = arith.constant 0 : index
    %c0_100 = arith.constant 0 : index
    %c0_101 = arith.constant 0 : index
    %292 = vector.load %arg18[%c0_99, %c0_100, %c0_101] : memref<1x64x256xbf16, #tpu.memory_space<vmem>>, vector<1x64x256xbf16>
    %293 = vector.shape_cast %292 : vector<1x64x256xbf16> to vector<64x256xbf16>
    %cst_102 = arith.constant dense<0.000000e+00> : vector<32x256xf32>
    %294 = tpu.matmul %291, %293, %cst_102 {dimension_numbers = #tpu.dot_dimension_numbers<[1], [0], [0], [1], [0, 0, 1, 1], [], []>} : vector<32x64xbf16>, vector<64x256xbf16>, vector<32x256xf32> -> vector<32x256xf32>
    %cst_103 = arith.constant 0.000000e+00 : f32
    %295 = vector.broadcast %cst_103 : f32 to vector<32x256xf32>
    %296 = arith.maximumf %294, %295 : vector<32x256xf32>
    %297 = arith.truncf %296 : vector<32x256xf32> to vector<32x256xbf16>
    %c0_104 = arith.constant 0 : index
    %c0_105 = arith.constant 0 : index
    %c0_106 = arith.constant 0 : index
    %298 = vector.load %arg19[%c0_104, %c0_105, %c0_106] : memref<1x256x64xbf16, #tpu.memory_space<vmem>>, vector<1x256x64xbf16>
    %299 = vector.shape_cast %298 : vector<1x256x64xbf16> to vector<256x64xbf16>
    %cst_107 = arith.constant dense<0.000000e+00> : vector<32x64xf32>
    %300 = tpu.matmul %297, %299, %cst_107 {dimension_numbers = #tpu.dot_dimension_numbers<[1], [0], [0], [1], [0, 0, 1, 1], [], []>} : vector<32x256xbf16>, vector<256x64xbf16>, vector<32x64xf32> -> vector<32x64xf32>
    %301 = vector.shape_cast %300 : vector<32x64xf32> to vector<2x16x64xf32>
    %302 = arith.addf %261, %301 : vector<2x16x64xf32>
    %c0_108 = arith.constant 0 : index
    %c0_109 = arith.constant 0 : index
    %c0_110 = arith.constant 0 : index
    %303 = vector.load %arg23[%c0_108, %c0_109, %c0_110] : memref<2x16x64xf32, #tpu.memory_space<vmem>>, vector<2x16x64xf32>
    tpu.vector_store %arg23[%c0_108, %c0_109, %c0_110], %302 {strides = array<i32>} : memref<2x16x64xf32, #tpu.memory_space<vmem>>, vector<2x16x64xf32>,
    %c1_i32 = arith.constant 1 : i32
    %304 = arith.cmpi eq, %arg1, %c1_i32 : i32
    %305 = arith.extui %304 : i1 to i32
    %c0_i32_111 = arith.constant 0 : i32
    %306 = arith.cmpi ne, %305, %c0_i32_111 : i32
    scf.if %306 {
      %c0_112 = arith.constant 0 : index
      %c0_113 = arith.constant 0 : index
      %307 = vector.load %arg20[%c0_112, %c0_113] : memref<1x64xf32, #tpu.memory_space<vmem>>, vector<1x64xf32>
      %c0_114 = arith.constant 0 : index
      %c0_115 = arith.constant 0 : index
      %308 = vector.load %arg21[%c0_114, %c0_115] : memref<1x64xf32, #tpu.memory_space<vmem>>, vector<1x64xf32>
      %cst_116 = arith.constant dense<0.000000e+00> : vector<2x16xf32>
      %309 = vector.multi_reduction <add>, %302, %cst_116 [2] : vector<2x16x64xf32> to vector<2x16xf32>
      %310 = vector.shape_cast %309 : vector<2x16xf32> to vector<2x16x1xf32>
      %cst_117 = arith.constant 6.400000e+01 : f32
      %311 = vector.broadcast %cst_117 : f32 to vector<2x16x1xf32>
      %312 = arith.divf %310, %311 : vector<2x16x1xf32>
      %313 = vector.broadcast %312 : vector<2x16x1xf32> to vector<2x16x64xf32>
      %314 = arith.subf %302, %313 : vector<2x16x64xf32>
      %315 = arith.mulf %314, %314 : vector<2x16x64xf32>
      %cst_118 = arith.constant dense<0.000000e+00> : vector<2x16xf32>
      %316 = vector.multi_reduction <add>, %315, %cst_118 [2] : vector<2x16x64xf32> to vector<2x16xf32>
      %317 = vector.shape_cast %316 : vector<2x16xf32> to vector<2x16x1xf32>
      %cst_119 = arith.constant 6.400000e+01 : f32
      %318 = vector.broadcast %cst_119 : f32 to vector<2x16x1xf32>
      %319 = arith.divf %317, %318 : vector<2x16x1xf32>
      %320 = vector.broadcast %312 : vector<2x16x1xf32> to vector<2x16x64xf32>
      %321 = arith.subf %302, %320 : vector<2x16x64xf32>
      %cst_120 = arith.constant 9.99999974E-6 : f32
      %322 = vector.broadcast %cst_120 : f32 to vector<2x16x1xf32>
      %323 = arith.addf %319, %322 : vector<2x16x1xf32>
      %324 = math.rsqrt %323 : vector<2x16x1xf32>
      %325 = vector.broadcast %324 : vector<2x16x1xf32> to vector<2x16x64xf32>
      %326 = arith.mulf %321, %325 : vector<2x16x64xf32>
      %327 = vector.shape_cast %307 : vector<1x64xf32> to vector<1x1x64xf32>
      %328 = vector.broadcast %327 : vector<1x1x64xf32> to vector<2x16x64xf32>
      %329 = arith.mulf %326, %328 : vector<2x16x64xf32>
      %330 = vector.shape_cast %308 : vector<1x64xf32> to vector<1x1x64xf32>
      %331 = vector.broadcast %330 : vector<1x1x64xf32> to vector<2x16x64xf32>
      %332 = arith.addf %329, %331 : vector<2x16x64xf32>
      %c0_121 = arith.constant 0 : index
      %c0_122 = arith.constant 0 : index
      %c0_123 = arith.constant 0 : index
      %333 = vector.load %arg22[%c0_121, %c0_122, %c0_123] : memref<2x16x64xf32, #tpu.memory_space<vmem>>, vector<2x16x64xf32>
      tpu.vector_store %arg22[%c0_121, %c0_122, %c0_123], %332 {strides = array<i32>} : memref<2x16x64xf32, #tpu.memory_space<vmem>>, vector<2x16x64xf32>,
    } else {
    }
    return
  }
  func.func @transform_0(%arg0: i32, %arg1: i32) -> (i32, i32) {
    %c0_i32 = arith.constant 0 : i32
    %c0_i32_0 = arith.constant 0 : i32
    %c0_i32_1 = arith.constant 0 : i32
    return %c0_i32, %c0_i32_0 : i32, i32
  }
  func.func @transform_1(%arg0: i32, %arg1: i32) -> (i32, i32, i32) {
    %c0_i32 = arith.constant 0 : i32
    %c0_i32_0 = arith.constant 0 : i32
    %c0_i32_1 = arith.constant 0 : i32
    return %arg0, %c0_i32, %c0_i32_0 : i32, i32, i32
  }
  func.func @transform_2(%arg0: i32, %arg1: i32) -> (i32, i32, i32) {
    %c0_i32 = arith.constant 0 : i32
    %c0_i32_0 = arith.constant 0 : i32
    %c0_i32_1 = arith.constant 0 : i32
    return %arg1, %c0_i32, %c0_i32_0 : i32, i32, i32
  }
  func.func @transform_3(%arg0: i32, %arg1: i32) -> (i32, i32, i32) {
    %c0_i32 = arith.constant 0 : i32
    %c0_i32_0 = arith.constant 0 : i32
    %c0_i32_1 = arith.constant 0 : i32
    return %arg1, %c0_i32, %c0_i32_0 : i32, i32, i32
  }
  func.func @transform_4(%arg0: i32, %arg1: i32) -> (i32, i32, i32) {
    %c0_i32 = arith.constant 0 : i32
    %c0_i32_0 = arith.constant 0 : i32
    %c0_i32_1 = arith.constant 0 : i32
    return %arg1, %c0_i32, %c0_i32_0 : i32, i32, i32
  }
  func.func @transform_5(%arg0: i32, %arg1: i32) -> (i32, i32, i32) {
    %c0_i32 = arith.constant 0 : i32
    %c0_i32_0 = arith.constant 0 : i32
    %c0_i32_1 = arith.constant 0 : i32
    return %arg1, %c0_i32, %c0_i32_0 : i32, i32, i32
  }
  func.func @transform_6(%arg0: i32, %arg1: i32) -> (i32, i32, i32) {
    %c0_i32 = arith.constant 0 : i32
    %c0_i32_0 = arith.constant 0 : i32
    %c0_i32_1 = arith.constant 0 : i32
    return %arg1, %c0_i32, %c0_i32_0 : i32, i32, i32
  }
  func.func @transform_7(%arg0: i32, %arg1: i32) -> (i32, i32, i32) {
    %c0_i32 = arith.constant 0 : i32
    %c0_i32_0 = arith.constant 0 : i32
    %c0_i32_1 = arith.constant 0 : i32
    return %arg1, %c0_i32, %c0_i32_0 : i32, i32, i32
  }
  func.func @transform_8(%arg0: i32, %arg1: i32) -> (i32, i32, i32) {
    %c0_i32 = arith.constant 0 : i32
    %c0_i32_0 = arith.constant 0 : i32
    %c0_i32_1 = arith.constant 0 : i32
    return %arg1, %c0_i32, %c0_i32_0 : i32, i32, i32
  }
  func.func @transform_9(%arg0: i32, %arg1: i32) -> (i32, i32, i32) {
    %c0_i32 = arith.constant 0 : i32
    %c0_i32_0 = arith.constant 0 : i32
    %c0_i32_1 = arith.constant 0 : i32
    return %arg1, %c0_i32, %c0_i32_0 : i32, i32, i32
  }
  func.func @transform_10(%arg0: i32, %arg1: i32) -> (i32, i32, i32) {
    %c0_i32 = arith.constant 0 : i32
    %c0_i32_0 = arith.constant 0 : i32
    %c0_i32_1 = arith.constant 0 : i32
    return %arg1, %c0_i32, %c0_i32_0 : i32, i32, i32
  }
  func.func @transform_11(%arg0: i32, %arg1: i32) -> (i32, i32, i32) {
    %c0_i32 = arith.constant 0 : i32
    %c0_i32_0 = arith.constant 0 : i32
    %c0_i32_1 = arith.constant 0 : i32
    return %arg1, %c0_i32, %c0_i32_0 : i32, i32, i32
  }
  func.func @transform_12(%arg0: i32, %arg1: i32) -> (i32, i32, i32) {
    %c0_i32 = arith.constant 0 : i32
    %c0_i32_0 = arith.constant 0 : i32
    %c0_i32_1 = arith.constant 0 : i32
    return %arg1, %c0_i32, %c0_i32_0 : i32, i32, i32
  }
  func.func @transform_13(%arg0: i32, %arg1: i32) -> (i32, i32, i32) {
    %c0_i32 = arith.constant 0 : i32
    %c0_i32_0 = arith.constant 0 : i32
    %c0_i32_1 = arith.constant 0 : i32
    return %arg1, %c0_i32, %c0_i32_0 : i32, i32, i32
  }
  func.func @transform_14(%arg0: i32, %arg1: i32) -> (i32, i32, i32) {
    %c0_i32 = arith.constant 0 : i32
    %c0_i32_0 = arith.constant 0 : i32
    %c0_i32_1 = arith.constant 0 : i32
    return %arg1, %c0_i32, %c0_i32_0 : i32, i32, i32
  }
  func.func @transform_15(%arg0: i32, %arg1: i32) -> (i32, i32, i32) {
    %c0_i32 = arith.constant 0 : i32
    %c0_i32_0 = arith.constant 0 : i32
    %c0_i32_1 = arith.constant 0 : i32
    return %arg1, %c0_i32, %c0_i32_0 : i32, i32, i32
  }
  func.func @transform_16(%arg0: i32, %arg1: i32) -> (i32, i32, i32) {
    %c0_i32 = arith.constant 0 : i32
    %c0_i32_0 = arith.constant 0 : i32
    %c0_i32_1 = arith.constant 0 : i32
    return %arg1, %c0_i32, %c0_i32_0 : i32, i32, i32
  }
  func.func @transform_17(%arg0: i32, %arg1: i32) -> (i32, i32, i32) {
    %c0_i32 = arith.constant 0 : i32
    %c0_i32_0 = arith.constant 0 : i32
    %c0_i32_1 = arith.constant 0 : i32
    return %arg1, %c0_i32, %c0_i32_0 : i32, i32, i32
  }
  func.func @transform_18(%arg0: i32, %arg1: i32) -> (i32, i32) {
    %c0_i32 = arith.constant 0 : i32
    %c0_i32_0 = arith.constant 0 : i32
    %c0_i32_1 = arith.constant 0 : i32
    return %c0_i32, %c0_i32_0 : i32, i32
  }
  func.func @transform_19(%arg0: i32, %arg1: i32) -> (i32, i32) {
    %c0_i32 = arith.constant 0 : i32
    %c0_i32_0 = arith.constant 0 : i32
    %c0_i32_1 = arith.constant 0 : i32
    return %c0_i32, %c0_i32_0 : i32, i32
  }
  func.func @transform_20(%arg0: i32, %arg1: i32) -> (i32, i32, i32) {
    %c0_i32 = arith.constant 0 : i32
    %c0_i32_0 = arith.constant 0 : i32
    %c0_i32_1 = arith.constant 0 : i32
    return %arg0, %c0_i32, %c0_i32_0 : i32, i32, i32
  }
}

</mosaic_0001>

<llo_original>
// kernel: tpu_custom_call.1
$region0: #{tpu_custom_call.1}
  #allocation0 [shape = 'u32[]', space=smem, size = 0x4, offset = 0x4, fixed_abs, tag = 'smem constant byte address 0x4 - core index']
  #allocation1 [shape = 'u32[144,128]{1,0:T(1,128)}', space=vmem, size = 0x12000, scoped, tag = 'internal scratch']
  #allocation2 [shape = 'f32[2,16,64]{2,1,0:T(8,128)}', space=vmem, size = 0x4000, scoped, tag = 'scratch operand']
  %s0 = inlined_call_operand.hbm [shape: f32[16,64], index: 0, kind: input, shape index: {}]
  %s1 = inlined_call_operand.vmem [shape: f32[2,32,64], index: 1, kind: input, shape index: {}]
  %s2 = inlined_call_operand.vmem [shape: f32[2,1,64], index: 2, kind: input, shape index: {}]
  %s3 = inlined_call_operand.vmem [shape: f32[2,1,64], index: 3, kind: input, shape index: {}]
  %s4 = inlined_call_operand.vmem [shape: f32[2,1,64], index: 4, kind: input, shape index: {}]
  %s5 = inlined_call_operand.vmem [shape: f32[2,1,64], index: 5, kind: input, shape index: {}]
  %s6 = inlined_call_operand.vmem [shape: f32[2,1,16], index: 6, kind: input, shape index: {}]
  %s7 = inlined_call_operand.vmem [shape: f32[2,1,16], index: 7, kind: input, shape index: {}]
  %s8 = inlined_call_operand.vmem [shape: f32[2,1,16], index: 8, kind: input, shape index: {}]
  %s9 = inlined_call_operand.vmem [shape: f32[2,1,16], index: 9, kind: input, shape index: {}]
  %s10 = inlined_call_operand.vmem [shape: bf16[2,64,64], index: 10, kind: input, shape index: {}]
  %s11 = inlined_call_operand.vmem [shape: bf16[2,64,64], index: 11, kind: input, shape index: {}]
  %s12 = inlined_call_operand.vmem [shape: bf16[2,64,64], index: 12, kind: input, shape index: {}]
  %s13 = inlined_call_operand.hbm [shape: bf16[2,64,64], index: 13, kind: input, shape index: {}]
  %s14 = inlined_call_operand.vmem [shape: f32[2,1,64], index: 14, kind: input, shape index: {}]
  %s15 = inlined_call_operand.vmem [shape: f32[2,1,64], index: 15, kind: input, shape index: {}]
  %s16 = inlined_call_operand.vmem [shape: bf16[2,64,256], index: 16, kind: input, shape index: {}]
  %s17 = inlined_call_operand.vmem [shape: bf16[2,256,64], index: 17, kind: input, shape index: {}]
  %s18 = inlined_call_operand.vmem [shape: f32[1,64], index: 18, kind: input, shape index: {}]
  %s19 = inlined_call_operand.vmem [shape: f32[1,64], index: 19, kind: input, shape index: {}]
  %s20 = inlined_call_operand.hbm [shape: f32[2,16,64], index: 20, kind: output, shape index: {}]
  %s21 = sld [smem:[#allocation0]]
  $region129: #{tpu_custom_call.1} parent=0
    _
  %s23 = ssub.s32 1, %s21
  %s24 = scalar_select 0, %s23, %s21
  $region1: #{tpu_custom_call.1} parent=0
    #allocation3 [shape = 'u8[8192]{0}', space=vmem, size = 0x2000, scoped, tag = 'input window, operand 0, single buffered']
    #allocation4 [shape = 's32[2]{0}', space=sflag, size = 0x8, scoped, tag = 'scoped memory for tpu_custom_call.1']
    #allocation5 [shape = 's32[2]{0}', space=sflag, size = 0x8, scoped, tag = 'scoped memory for tpu_custom_call.1']
    #allocation6 [shape = 'u8[32768]{0}', space=vmem, size = 0x8000, scoped, tag = 'input window, operand 13']
    #allocation7 [shape = 's32[2]{0}', space=sflag, size = 0x8, scoped, tag = 'scoped memory for tpu_custom_call.1']
    #allocation8 [shape = 'u8[16384]{0}', space=vmem, size = 0x4000, scoped, tag = 'output window, operand 0, single buffered']
    %25 = vsyncpa [#allocation4], 0
    %26 = vsyncpa [#allocation7], 0
    %s27 = scalar_lea.sflag [#allocation7], 1
    %28 = vsyncpa %s27, 0
    %29 = vsyncpa [#allocation5], 0
    loop: start=0, step=1, limit=4
    $region2: #{tpu_custom_call.1} parent=1 // loop_pre_header
      _
    $region3: #{tpu_custom_call.1} parent=1 // loop_header
      %s31 = sphi 0, %s35
      %p32 = scmp.ge.s32.totalorder %s31, 4
      %s38 = sphi 0, %s50
      %s39 = sphi 0, %s46
      %s40 = sphi 0, %s38
      %s41 = sphi 0, %s39
      %s42 = sphi 0, %s40
      %s43 = sphi 0, %s41
      %s51 = sphi 0, %s51
      %s53 = sphi 0, %s51
      %s54 = sphi 0, %s53
      %s68 = sphi 0, %s54
      %s74 = sphi 0, %s76
      %s77 = sphi 0, %s74
      %s78 = sphi 0, %s77
      %s94 = sphi 0, %s78
      %s100 = sphi 0, %s102
      %s103 = sphi 0, %s100
      %s104 = sphi 0, %s103
      %s120 = sphi 0, %s104
      %s126 = sphi 0, %s128
      %s129 = sphi 0, %s126
      %s130 = sphi 0, %s129
      %s146 = sphi 0, %s130
      %s152 = sphi 0, %s154
      %s155 = sphi 0, %s152
      %s156 = sphi 0, %s155
      %s172 = sphi 0, %s156
      %s178 = sphi 0, %s180
      %s181 = sphi 0, %s178
      %s182 = sphi 0, %s181
      %s198 = sphi 0, %s182
      %s204 = sphi 0, %s206
      %s207 = sphi 0, %s204
      %s208 = sphi 0, %s207
      %s224 = sphi 0, %s208
      %s230 = sphi 0, %s232
      %s233 = sphi 0, %s230
      %s234 = sphi 0, %s233
      %s250 = sphi 0, %s234
      %s256 = sphi 0, %s258
      %s259 = sphi 0, %s256
      %s260 = sphi 0, %s259
      %s276 = sphi 0, %s260
      %s282 = sphi 0, %s284
      %s285 = sphi 0, %s282
      %s286 = sphi 0, %s285
      %s302 = sphi 0, %s286
      %s308 = sphi 0, %s310
      %s311 = sphi 0, %s308
      %s312 = sphi 0, %s311
      %s328 = sphi 0, %s312
      %s334 = sphi 0, %s336
      %s337 = sphi 0, %s334
      %s338 = sphi 0, %s337
      %s354 = sphi 0, %s338
      %s360 = sphi 0, %s362
      %s363 = sphi 0, %s360
      %s364 = sphi 0, %s363
      %s380 = sphi 0, %s364
      %s386 = sphi 0, %s388
      %s389 = sphi 0, %s386
      %s390 = sphi 0, %s389
      %s406 = sphi 0, %s390
      %s412 = sphi 0, %s414
      %s415 = sphi 0, %s412
      %s416 = sphi 0, %s415
      %s432 = sphi 0, %s416
      %s438 = sphi 0, %s440
      %s441 = sphi 0, %s438
      %s442 = sphi 0, %s441
      %s458 = sphi 0, %s442
      %s464 = sphi 0, %s466
      %s467 = sphi 0, %s464
      %s468 = sphi 0, %s467
      %s484 = sphi 0, %s468
      %s490 = sphi 0, %s492
      %s493 = sphi 0, %s490
      %s494 = sphi 0, %s493
      %s510 = sphi 0, %s494
      %s514 = sphi 0, %s514
      %s516 = sphi 0, %s514
      %s517 = sphi 0, %s516
      %s531 = sphi 0, %s517
      %s535 = sphi 0, %s535
      %s537 = sphi 0, %s535
      %s538 = sphi 0, %s537
      %s552 = sphi 0, %s538
      %s558 = sphi 0, %s560
      %s561 = sphi 0, %s558
      %s562 = sphi 0, %s561
      %s578 = sphi 0, %s562
    $region4: #{tpu_custom_call.1} parent=1 // loop_header_branch
      %34 = sbr.rel (%p32) target = $region8
    $region5: #{tpu_custom_call.1} parent=1 // loop_body
      %s36 = ssub.s32 %s31, 1
      %s37 = ssub.s32 %s31, 2
      %s44 = sadd.s32 1, %s39
      %p45 = scmp.ge.s32.totalorder %s44, 2
      %s46 = scalar_select %p45, 0, %s44
      %s47 = sadd.s32 1, %s38
      %s48 = scalar_select %p45, %s47, %s38
      %p49 = scmp.ge.s32.totalorder %s48, 1
      %s50 = scalar_select %p49, 0, %s48
      %s52 = sadd.s32 %s51, 1
      %p55 = scmp.eq.s32.totalorder %s31, 1
      %p56 = scmp.ne.s32.totalorder %s51, %s53
      %p57 = scmp.eq.s32.totalorder %s31, 0
      %p58 = por %p56, %p57
      %p59 = scmp.ne.s32.totalorder %s51, %s53
      %p60 = scmp.eq.s32.totalorder %s36, 1
      %p61 = por %p59, %p60
      %p62 = scmp.ne.s32.totalorder %s53, %s54
      %p63 = scmp.eq.s32.totalorder %s36, 0
      %p64 = por %p62, %p63
      %p65 = scmp.ne.s32.totalorder %s53, %s54
      %p66 = scmp.eq.s32.totalorder %s37, 1
      %p67 = por %p65, %p66
      %p69 = scmp.ne.s32.totalorder %s54, %s68
      %p70 = scmp.eq.s32.totalorder %s37, 0
      %p71 = por %p69, %p70
      %s72 = ssub.s32 %s38, %s50
      %p73 = scmp.eq.s32.totalorder %s72, 0
      %s75 = sadd.s32 %s74, 1
      %s76 = scalar_select %p73, %s74, %s75
      %p79 = pneg %p73
      %p80 = scmp.eq.s32.totalorder %s31, 1
      %p81 = por %p79, %p80
      %p82 = scmp.ne.s32.totalorder %s74, %s77
      %p83 = scmp.eq.s32.totalorder %s31, 0
      %p84 = por %p82, %p83
      %p85 = scmp.ne.s32.totalorder %s74, %s77
      %p86 = scmp.eq.s32.totalorder %s36, 1
      %p87 = por %p85, %p86
      %p88 = scmp.ne.s32.totalorder %s77, %s78
      %p89 = scmp.eq.s32.totalorder %s36, 0
      %p90 = por %p88, %p89
      %p91 = scmp.ne.s32.totalorder %s77, %s78
      %p92 = scmp.eq.s32.totalorder %s37, 1
      %p93 = por %p91, %p92
      %p95 = scmp.ne.s32.totalorder %s78, %s94
      %p96 = scmp.eq.s32.totalorder %s37, 0
      %p97 = por %p95, %p96
      %s98 = ssub.s32 %s39, %s46
      %p99 = scmp.eq.s32.totalorder %s98, 0
      %s101 = sadd.s32 %s100, 1
      %s102 = scalar_select %p99, %s100, %s101
      %p105 = pneg %p99
      %p106 = scmp.eq.s32.totalorder %s31, 1
      %p107 = por %p105, %p106
      %p108 = scmp.ne.s32.totalorder %s100, %s103
      %p109 = scmp.eq.s32.totalorder %s31, 0
      %p110 = por %p108, %p109
      %p111 = scmp.ne.s32.totalorder %s100, %s103
      %p112 = scmp.eq.s32.totalorder %s36, 1
      %p113 = por %p111, %p112
      %p114 = scmp.ne.s32.totalorder %s103, %s104
      %p115 = scmp.eq.s32.totalorder %s36, 0
      %p116 = por %p114, %p115
      %p117 = scmp.ne.s32.totalorder %s103, %s104
      %p118 = scmp.eq.s32.totalorder %s37, 1
      %p119 = por %p117, %p118
      %p121 = scmp.ne.s32.totalorder %s104, %s120
      %p122 = scmp.eq.s32.totalorder %s37, 0
      %p123 = por %p121, %p122
      %s124 = ssub.s32 %s39, %s46
      %p125 = scmp.eq.s32.totalorder %s124, 0
      %s127 = sadd.s32 %s126, 1
      %s128 = scalar_select %p125, %s126, %s127
      %p131 = pneg %p125
      %p132 = scmp.eq.s32.totalorder %s31, 1
      %p133 = por %p131, %p132
      %p134 = scmp.ne.s32.totalorder %s126, %s129
      %p135 = scmp.eq.s32.totalorder %s31, 0
      %p136 = por %p134, %p135
      %p137 = scmp.ne.s32.totalorder %s126, %s129
      %p138 = scmp.eq.s32.totalorder %s36, 1
      %p139 = por %p137, %p138
      %p140 = scmp.ne.s32.totalorder %s129, %s130
      %p141 = scmp.eq.s32.totalorder %s36, 0
      %p142 = por %p140, %p141
      %p143 = scmp.ne.s32.totalorder %s129, %s130
      %p144 = scmp.eq.s32.totalorder %s37, 1
      %p145 = por %p143, %p144
      %p147 = scmp.ne.s32.totalorder %s130, %s146
      %p148 = scmp.eq.s32.totalorder %s37, 0
      %p149 = por %p147, %p148
      %s150 = ssub.s32 %s39, %s46
      %p151 = scmp.eq.s32.totalorder %s150, 0
      %s153 = sadd.s32 %s152, 1
      %s154 = scalar_select %p151, %s152, %s153
      %p157 = pneg %p151
      %p158 = scmp.eq.s32.totalorder %s31, 1
      %p159 = por %p157, %p158
      %p160 = scmp.ne.s32.totalorder %s152, %s155
      %p161 = scmp.eq.s32.totalorder %s31, 0
      %p162 = por %p160, %p161
      %p163 = scmp.ne.s32.totalorder %s152, %s155
      %p164 = scmp.eq.s32.totalorder %s36, 1
      %p165 = por %p163, %p164
      %p166 = scmp.ne.s32.totalorder %s155, %s156
      %p167 = scmp.eq.s32.totalorder %s36, 0
      %p168 = por %p166, %p167
      %p169 = scmp.ne.s32.totalorder %s155, %s156
      %p170 = scmp.eq.s32.totalorder %s37, 1
      %p171 = por %p169, %p170
      %p173 = scmp.ne.s32.totalorder %s156, %s172
      %p174 = scmp.eq.s32.totalorder %s37, 0
      %p175 = por %p173, %p174
      %s176 = ssub.s32 %s39, %s46
      %p177 = scmp.eq.s32.totalorder %s176, 0
      %s179 = sadd.s32 %s178, 1
      %s180 = scalar_select %p177, %s178, %s179
      %p183 = pneg %p177
      %p184 = scmp.eq.s32.totalorder %s31, 1
      %p185 = por %p183, %p184
      %p186 = scmp.ne.s32.totalorder %s178, %s181
      %p187 = scmp.eq.s32.totalorder %s31, 0
      %p188 = por %p186, %p187
      %p189 = scmp.ne.s32.totalorder %s178, %s181
      %p190 = scmp.eq.s32.totalorder %s36, 1
      %p191 = por %p189, %p190
      %p192 = scmp.ne.s32.totalorder %s181, %s182
      %p193 = scmp.eq.s32.totalorder %s36, 0
      %p194 = por %p192, %p193
      %p195 = scmp.ne.s32.totalorder %s181, %s182
      %p196 = scmp.eq.s32.totalorder %s37, 1
      %p197 = por %p195, %p196
      %p199 = scmp.ne.s32.totalorder %s182, %s198
      %p200 = scmp.eq.s32.totalorder %s37, 0
      %p201 = por %p199, %p200
      %s202 = ssub.s32 %s39, %s46
      %p203 = scmp.eq.s32.totalorder %s202, 0
      %s205 = sadd.s32 %s204, 1
      %s206 = scalar_select %p203, %s204, %s205
      %p209 = pneg %p203
      %p210 = scmp.eq.s32.totalorder %s31, 1
      %p211 = por %p209, %p210
      %p212 = scmp.ne.s32.totalorder %s204, %s207
      %p213 = scmp.eq.s32.totalorder %s31, 0
      %p214 = por %p212, %p213
      %p215 = scmp.ne.s32.totalorder %s204, %s207
      %p216 = scmp.eq.s32.totalorder %s36, 1
      %p217 = por %p215, %p216
      %p218 = scmp.ne.s32.totalorder %s207, %s208
      %p219 = scmp.eq.s32.totalorder %s36, 0
      %p220 = por %p218, %p219
      %p221 = scmp.ne.s32.totalorder %s207, %s208
      %p222 = scmp.eq.s32.totalorder %s37, 1
      %p223 = por %p221, %p222
      %p225 = scmp.ne.s32.totalorder %s208, %s224
      %p226 = scmp.eq.s32.totalorder %s37, 0
      %p227 = por %p225, %p226
      %s228 = ssub.s32 %s39, %s46
      %p229 = scmp.eq.s32.totalorder %s228, 0
      %s231 = sadd.s32 %s230, 1
      %s232 = scalar_select %p229, %s230, %s231
      %p235 = pneg %p229
      %p236 = scmp.eq.s32.totalorder %s31, 1
      %p237 = por %p235, %p236
      %p238 = scmp.ne.s32.totalorder %s230, %s233
      %p239 = scmp.eq.s32.totalorder %s31, 0
      %p240 = por %p238, %p239
      %p241 = scmp.ne.s32.totalorder %s230, %s233
      %p242 = scmp.eq.s32.totalorder %s36, 1
      %p243 = por %p241, %p242
      %p244 = scmp.ne.s32.totalorder %s233, %s234
      %p245 = scmp.eq.s32.totalorder %s36, 0
      %p246 = por %p244, %p245
      %p247 = scmp.ne.s32.totalorder %s233, %s234
      %p248 = scmp.eq.s32.totalorder %s37, 1
      %p249 = por %p247, %p248
      %p251 = scmp.ne.s32.totalorder %s234, %s250
      %p252 = scmp.eq.s32.totalorder %s37, 0
      %p253 = por %p251, %p252
      %s254 = ssub.s32 %s39, %s46
      %p255 = scmp.eq.s32.totalorder %s254, 0
      %s257 = sadd.s32 %s256, 1
      %s258 = scalar_select %p255, %s256, %s257
      %p261 = pneg %p255
      %p262 = scmp.eq.s32.totalorder %s31, 1
      %p263 = por %p261, %p262
      %p264 = scmp.ne.s32.totalorder %s256, %s259
      %p265 = scmp.eq.s32.totalorder %s31, 0
      %p266 = por %p264, %p265
      %p267 = scmp.ne.s32.totalorder %s256, %s259
      %p268 = scmp.eq.s32.totalorder %s36, 1
      %p269 = por %p267, %p268
      %p270 = scmp.ne.s32.totalorder %s259, %s260
      %p271 = scmp.eq.s32.totalorder %s36, 0
      %p272 = por %p270, %p271
      %p273 = scmp.ne.s32.totalorder %s259, %s260
      %p274 = scmp.eq.s32.totalorder %s37, 1
      %p275 = por %p273, %p274
      %p277 = scmp.ne.s32.totalorder %s260, %s276
      %p278 = scmp.eq.s32.totalorder %s37, 0
      %p279 = por %p277, %p278
      %s280 = ssub.s32 %s39, %s46
      %p281 = scmp.eq.s32.totalorder %s280, 0
      %s283 = sadd.s32 %s282, 1
      %s284 = scalar_select %p281, %s282, %s283
      %p287 = pneg %p281
      %p288 = scmp.eq.s32.totalorder %s31, 1
      %p289 = por %p287, %p288
      %p290 = scmp.ne.s32.totalorder %s282, %s285
      %p291 = scmp.eq.s32.totalorder %s31, 0
      %p292 = por %p290, %p291
      %p293 = scmp.ne.s32.totalorder %s282, %s285
      %p294 = scmp.eq.s32.totalorder %s36, 1
      %p295 = por %p293, %p294
      %p296 = scmp.ne.s32.totalorder %s285, %s286
      %p297 = scmp.eq.s32.totalorder %s36, 0
      %p298 = por %p296, %p297
      %p299 = scmp.ne.s32.totalorder %s285, %s286
      %p300 = scmp.eq.s32.totalorder %s37, 1
      %p301 = por %p299, %p300
      %p303 = scmp.ne.s32.totalorder %s286, %s302
      %p304 = scmp.eq.s32.totalorder %s37, 0
      %p305 = por %p303, %p304
      %s306 = ssub.s32 %s39, %s46
      %p307 = scmp.eq.s32.totalorder %s306, 0
      %s309 = sadd.s32 %s308, 1
      %s310 = scalar_select %p307, %s308, %s309
      %p313 = pneg %p307
      %p314 = scmp.eq.s32.totalorder %s31, 1
      %p315 = por %p313, %p314
      %p316 = scmp.ne.s32.totalorder %s308, %s311
      %p317 = scmp.eq.s32.totalorder %s31, 0
      %p318 = por %p316, %p317
      %p319 = scmp.ne.s32.totalorder %s308, %s311
      %p320 = scmp.eq.s32.totalorder %s36, 1
      %p321 = por %p319, %p320
      %p322 = scmp.ne.s32.totalorder %s311, %s312
      %p323 = scmp.eq.s32.totalorder %s36, 0
      %p324 = por %p322, %p323
      %p325 = scmp.ne.s32.totalorder %s311, %s312
      %p326 = scmp.eq.s32.totalorder %s37, 1
      %p327 = por %p325, %p326
      %p329 = scmp.ne.s32.totalorder %s312, %s328
      %p330 = scmp.eq.s32.totalorder %s37, 0
      %p331 = por %p329, %p330
      %s332 = ssub.s32 %s39, %s46
      %p333 = scmp.eq.s32.totalorder %s332, 0
      %s335 = sadd.s32 %s334, 1
      %s336 = scalar_select %p333, %s334, %s335
      %p339 = pneg %p333
      %p340 = scmp.eq.s32.totalorder %s31, 1
      %p341 = por %p339, %p340
      %p342 = scmp.ne.s32.totalorder %s334, %s337
      %p343 = scmp.eq.s32.totalorder %s31, 0
      %p344 = por %p342, %p343
      %p345 = scmp.ne.s32.totalorder %s334, %s337
      %p346 = scmp.eq.s32.totalorder %s36, 1
      %p347 = por %p345, %p346
      %p348 = scmp.ne.s32.totalorder %s337, %s338
      %p349 = scmp.eq.s32.totalorder %s36, 0
      %p350 = por %p348, %p349
      %p351 = scmp.ne.s32.totalorder %s337, %s338
      %p352 = scmp.eq.s32.totalorder %s37, 1
      %p353 = por %p351, %p352
      %p355 = scmp.ne.s32.totalorder %s338, %s354
      %p356 = scmp.eq.s32.totalorder %s37, 0
      %p357 = por %p355, %p356
      %s358 = ssub.s32 %s39, %s46
      %p359 = scmp.eq.s32.totalorder %s358, 0
      %s361 = sadd.s32 %s360, 1
      %s362 = scalar_select %p359, %s360, %s361
      %p365 = pneg %p359
      %p366 = scmp.eq.s32.totalorder %s31, 1
      %p367 = por %p365, %p366
      %p368 = scmp.ne.s32.totalorder %s360, %s363
      %p369 = scmp.eq.s32.totalorder %s31, 0
      %p370 = por %p368, %p369
      %p371 = scmp.ne.s32.totalorder %s360, %s363
      %p372 = scmp.eq.s32.totalorder %s36, 1
      %p373 = por %p371, %p372
      %p374 = scmp.ne.s32.totalorder %s363, %s364
      %p375 = scmp.eq.s32.totalorder %s36, 0
      %p376 = por %p374, %p375
      %p377 = scmp.ne.s32.totalorder %s363, %s364
      %p378 = scmp.eq.s32.totalorder %s37, 1
      %p379 = por %p377, %p378
      %p381 = scmp.ne.s32.totalorder %s364, %s380
      %p382 = scmp.eq.s32.totalorder %s37, 0
      %p383 = por %p381, %p382
      %s384 = ssub.s32 %s39, %s46
      %p385 = scmp.eq.s32.totalorder %s384, 0
      %s387 = sadd.s32 %s386, 1
      %s388 = scalar_select %p385, %s386, %s387
      %p391 = pneg %p385
      %p392 = scmp.eq.s32.totalorder %s31, 1
      %p393 = por %p391, %p392
      %p394 = scmp.ne.s32.totalorder %s386, %s389
      %p395 = scmp.eq.s32.totalorder %s31, 0
      %p396 = por %p394, %p395
      %p397 = scmp.ne.s32.totalorder %s386, %s389
      %p398 = scmp.eq.s32.totalorder %s36, 1
      %p399 = por %p397, %p398
      %p400 = scmp.ne.s32.totalorder %s389, %s390
      %p401 = scmp.eq.s32.totalorder %s36, 0
      %p402 = por %p400, %p401
      %p403 = scmp.ne.s32.totalorder %s389, %s390
      %p404 = scmp.eq.s32.totalorder %s37, 1
      %p405 = por %p403, %p404
      %p407 = scmp.ne.s32.totalorder %s390, %s406
      %p408 = scmp.eq.s32.totalorder %s37, 0
      %p409 = por %p407, %p408
      %s410 = ssub.s32 %s39, %s46
      %p411 = scmp.eq.s32.totalorder %s410, 0
      %s413 = sadd.s32 %s412, 1
      %s414 = scalar_select %p411, %s412, %s413
      %p417 = pneg %p411
      %p418 = scmp.eq.s32.totalorder %s31, 1
      %p419 = por %p417, %p418
      %p420 = scmp.ne.s32.totalorder %s412, %s415
      %p421 = scmp.eq.s32.totalorder %s31, 0
      %p422 = por %p420, %p421
      %p423 = scmp.ne.s32.totalorder %s412, %s415
      %p424 = scmp.eq.s32.totalorder %s36, 1
      %p425 = por %p423, %p424
      %p426 = scmp.ne.s32.totalorder %s415, %s416
      %p427 = scmp.eq.s32.totalorder %s36, 0
      %p428 = por %p426, %p427
      %p429 = scmp.ne.s32.totalorder %s415, %s416
      %p430 = scmp.eq.s32.totalorder %s37, 1
      %p431 = por %p429, %p430
      %p433 = scmp.ne.s32.totalorder %s416, %s432
      %p434 = scmp.eq.s32.totalorder %s37, 0
      %p435 = por %p433, %p434
      %s436 = ssub.s32 %s39, %s46
      %p437 = scmp.eq.s32.totalorder %s436, 0
      %s439 = sadd.s32 %s438, 1
      %s440 = scalar_select %p437, %s438, %s439
      %p443 = pneg %p437
      %p444 = scmp.eq.s32.totalorder %s31, 1
      %p445 = por %p443, %p444
      %p446 = scmp.ne.s32.totalorder %s438, %s441
      %p447 = scmp.eq.s32.totalorder %s31, 0
      %p448 = por %p446, %p447
      %p449 = scmp.ne.s32.totalorder %s438, %s441
      %p450 = scmp.eq.s32.totalorder %s36, 1
      %p451 = por %p449, %p450
      %p452 = scmp.ne.s32.totalorder %s441, %s442
      %p453 = scmp.eq.s32.totalorder %s36, 0
      %p454 = por %p452, %p453
      %p455 = scmp.ne.s32.totalorder %s441, %s442
      %p456 = scmp.eq.s32.totalorder %s37, 1
      %p457 = por %p455, %p456
      %p459 = scmp.ne.s32.totalorder %s442, %s458
      %p460 = scmp.eq.s32.totalorder %s37, 0
      %p461 = por %p459, %p460
      %s462 = ssub.s32 %s39, %s46
      %p463 = scmp.eq.s32.totalorder %s462, 0
      %s465 = sadd.s32 %s464, 1
      %s466 = scalar_select %p463, %s464, %s465
      %p469 = pneg %p463
      %p470 = scmp.eq.s32.totalorder %s31, 1
      %p471 = por %p469, %p470
      %p472 = scmp.ne.s32.totalorder %s464, %s467
      %p473 = scmp.eq.s32.totalorder %s31, 0
      %p474 = por %p472, %p473
      %p475 = scmp.ne.s32.totalorder %s464, %s467
      %p476 = scmp.eq.s32.totalorder %s36, 1
      %p477 = por %p475, %p476
      %p478 = scmp.ne.s32.totalorder %s467, %s468
      %p479 = scmp.eq.s32.totalorder %s36, 0
      %p480 = por %p478, %p479
      %p481 = scmp.ne.s32.totalorder %s467, %s468
      %p482 = scmp.eq.s32.totalorder %s37, 1
      %p483 = por %p481, %p482
      %p485 = scmp.ne.s32.totalorder %s468, %s484
      %p486 = scmp.eq.s32.totalorder %s37, 0
      %p487 = por %p485, %p486
      %s488 = ssub.s32 %s39, %s46
      %p489 = scmp.eq.s32.totalorder %s488, 0
      %s491 = sadd.s32 %s490, 1
      %s492 = scalar_select %p489, %s490, %s491
      %p495 = pneg %p489
      %p496 = scmp.eq.s32.totalorder %s31, 1
      %p497 = por %p495, %p496
      %p498 = scmp.ne.s32.totalorder %s490, %s493
      %p499 = scmp.eq.s32.totalorder %s31, 0
      %p500 = por %p498, %p499
      %p501 = scmp.ne.s32.totalorder %s490, %s493
      %p502 = scmp.eq.s32.totalorder %s36, 1
      %p503 = por %p501, %p502
      %p504 = scmp.ne.s32.totalorder %s493, %s494
      %p505 = scmp.eq.s32.totalorder %s36, 0
      %p506 = por %p504, %p505
      %p507 = scmp.ne.s32.totalorder %s493, %s494
      %p508 = scmp.eq.s32.totalorder %s37, 1
      %p509 = por %p507, %p508
      %p511 = scmp.ne.s32.totalorder %s494, %s510
      %p512 = scmp.eq.s32.totalorder %s37, 0
      %p513 = por %p511, %p512
      %s515 = sadd.s32 %s514, 1
      %p518 = scmp.eq.s32.totalorder %s31, 1
      %p519 = scmp.ne.s32.totalorder %s514, %s516
      %p520 = scmp.eq.s32.totalorder %s31, 0
      %p521 = por %p519, %p520
      %p522 = scmp.ne.s32.totalorder %s514, %s516
      %p523 = scmp.eq.s32.totalorder %s36, 1
      %p524 = por %p522, %p523
      %p525 = scmp.ne.s32.totalorder %s516, %s517
      %p526 = scmp.eq.s32.totalorder %s36, 0
      %p527 = por %p525, %p526
      %p528 = scmp.ne.s32.totalorder %s516, %s517
      %p529 = scmp.eq.s32.totalorder %s37, 1
      %p530 = por %p528, %p529
      %p532 = scmp.ne.s32.totalorder %s517, %s531
      %p533 = scmp.eq.s32.totalorder %s37, 0
      %p534 = por %p532, %p533
      %s536 = sadd.s32 %s535, 1
      %p539 = scmp.eq.s32.totalorder %s31, 1
      %p540 = scmp.ne.s32.totalorder %s535, %s537
      %p541 = scmp.eq.s32.totalorder %s31, 0
      %p542 = por %p540, %p541
      %p543 = scmp.ne.s32.totalorder %s535, %s537
      %p544 = scmp.eq.s32.totalorder %s36, 1
      %p545 = por %p543, %p544
      %p546 = scmp.ne.s32.totalorder %s537, %s538
      %p547 = scmp.eq.s32.totalorder %s36, 0
      %p548 = por %p546, %p547
      %p549 = scmp.ne.s32.totalorder %s537, %s538
      %p550 = scmp.eq.s32.totalorder %s37, 1
      %p551 = por %p549, %p550
      %p553 = scmp.ne.s32.totalorder %s538, %s552
      %p554 = scmp.eq.s32.totalorder %s37, 0
      %p555 = por %p553, %p554
      %s556 = ssub.s32 %s38, %s50
      %p557 = scmp.eq.s32.totalorder %s556, 0
      %s559 = sadd.s32 %s558, 1
      %s560 = scalar_select %p557, %s558, %s559
      %p563 = pneg %p557
      %p564 = scmp.eq.s32.totalorder %s31, 1
      %p565 = por %p563, %p564
      %p566 = scmp.ne.s32.totalorder %s558, %s561
      %p567 = scmp.eq.s32.totalorder %s31, 0
      %p568 = por %p566, %p567
      %p569 = scmp.ne.s32.totalorder %s558, %s561
      %p570 = scmp.eq.s32.totalorder %s36, 1
      %p571 = por %p569, %p570
      %p572 = scmp.ne.s32.totalorder %s561, %s562
      %p573 = scmp.eq.s32.totalorder %s36, 0
      %p574 = por %p572, %p573
      %p575 = scmp.ne.s32.totalorder %s561, %s562
      %p576 = scmp.eq.s32.totalorder %s37, 1
      %p577 = por %p575, %p576
      %p579 = scmp.ne.s32.totalorder %s562, %s578
      %p580 = scmp.eq.s32.totalorder %s37, 0
      %p581 = por %p579, %p580
      %p582 = scmp.le.s32.totalorder 1, %s31
      %p583 = scmp.lt.s32.totalorder %s31, 3
      %p584 = pnand %p582, %p583
      %p585 = pneg %p584
      // Predicated region
      $region9: #{tpu_custom_call.1} parent=5 // pred_check
        _
      $region10: #{tpu_custom_call.1} parent=5 // pred_check_branch
        %587 = sbr.rel (%p584) target = $region12
      $region11: #{tpu_custom_call.1} parent=5 // pred_region
        %s588 = ssub.s32 %s31, 1
        // Predicated region
        $region13: #{tpu_custom_call.1} parent=11 // pred_check
          %p589 = pneg %p64
        $region14: #{tpu_custom_call.1} parent=11 // pred_check_branch
          %591 = sbr.rel (%p589) target = $region16
        $region15: #{tpu_custom_call.1} parent=11 // pred_region
          %s593 = ssub.s32 256, 256
          %594 = vsyncadd [#allocation4], %s593
          %s595 = sshll.u32 [#allocation3], 4
          %s596 = int_to_ptr.vmem [resolvable:$true] %s595
          %601 = dma.hbm_to_vmem [thread:$0]  %s0, 256, %s596, [#allocation4], 128, 128, 8
        $region16: #{tpu_custom_call.1} parent=11 // pred_fallthru
          _
        // Predicated region
        $region17: #{tpu_custom_call.1} parent=11 // pred_check
          %p602 = pneg %p90
        $region18: #{tpu_custom_call.1} parent=11 // pred_check_branch
          %604 = sbr.rel (%p602) target = $region20
        $region19: #{tpu_custom_call.1} parent=11 // pred_region
          %s605 = smul.u32 2, %s40
          %p606 = scmp.lt.s32.totalorder %s605, 1
          %s607 = scalar_select %p606, %s605, 1
          %s608 = smul.addr %s607, 4
          %s609 = smul.addr %s608, 8
          %s610 = scalar_lea.vmem %s1, %s609
          %s611 = smul.u32 2, %s40
        $region20: #{tpu_custom_call.1} parent=11 // pred_fallthru
          _
        // Predicated region
        $region21: #{tpu_custom_call.1} parent=11 // pred_check
          %p612 = pneg %p527
        $region22: #{tpu_custom_call.1} parent=11 // pred_check_branch
          %614 = sbr.rel (%p612) target = $region24
        $region23: #{tpu_custom_call.1} parent=11 // pred_region
          _
        $region24: #{tpu_custom_call.1} parent=11 // pred_fallthru
          _
        // Predicated region
        $region25: #{tpu_custom_call.1} parent=11 // pred_check
          %p615 = pneg %p548
        $region26: #{tpu_custom_call.1} parent=11 // pred_check_branch
          %617 = sbr.rel (%p615) target = $region28
        $region27: #{tpu_custom_call.1} parent=11 // pred_region
          _
        $region28: #{tpu_custom_call.1} parent=11 // pred_fallthru
          _
      $region12: #{tpu_custom_call.1} parent=5 // pred_fallthru
        _
      %p618 = scmp.lt.s32.totalorder %s31, 2
      // Predicated region
      $region29: #{tpu_custom_call.1} parent=5 // pred_check
        %p619 = pneg %p618
      $region30: #{tpu_custom_call.1} parent=5 // pred_check_branch
        %621 = sbr.rel (%p619) target = $region32
      $region31: #{tpu_custom_call.1} parent=5 // pred_region
        // Predicated region
        $region33: #{tpu_custom_call.1} parent=31 // pred_check
          %p622 = pneg %p110
        $region34: #{tpu_custom_call.1} parent=31 // pred_check_branch
          %624 = sbr.rel (%p622) target = $region36
        $region35: #{tpu_custom_call.1} parent=31 // pred_region
          %p625 = scmp.lt.s32.totalorder %s39, 1
          %s626 = scalar_select %p625, %s39, 1
          %s627 = scalar_lea.vmem %s2, %s626
        $region36: #{tpu_custom_call.1} parent=31 // pred_fallthru
          _
        // Predicated region
        $region37: #{tpu_custom_call.1} parent=31 // pred_check
          %p628 = pneg %p136
        $region38: #{tpu_custom_call.1} parent=31 // pred_check_branch
          %630 = sbr.rel (%p628) target = $region40
        $region39: #{tpu_custom_call.1} parent=31 // pred_region
          %p631 = scmp.lt.s32.totalorder %s39, 1
          %s632 = scalar_select %p631, %s39, 1
          %s633 = scalar_lea.vmem %s3, %s632
        $region40: #{tpu_custom_call.1} parent=31 // pred_fallthru
          _
        // Predicated region
        $region41: #{tpu_custom_call.1} parent=31 // pred_check
          %p634 = pneg %p162
        $region42: #{tpu_custom_call.1} parent=31 // pred_check_branch
          %636 = sbr.rel (%p634) target = $region44
        $region43: #{tpu_custom_call.1} parent=31 // pred_region
          %p637 = scmp.lt.s32.totalorder %s39, 1
          %s638 = scalar_select %p637, %s39, 1
          %s639 = scalar_lea.vmem %s4, %s638
        $region44: #{tpu_custom_call.1} parent=31 // pred_fallthru
          _
        // Predicated region
        $region45: #{tpu_custom_call.1} parent=31 // pred_check
          %p640 = pneg %p188
        $region46: #{tpu_custom_call.1} parent=31 // pred_check_branch
          %642 = sbr.rel (%p640) target = $region48
        $region47: #{tpu_custom_call.1} parent=31 // pred_region
          %p643 = scmp.lt.s32.totalorder %s39, 1
          %s644 = scalar_select %p643, %s39, 1
          %s645 = scalar_lea.vmem %s5, %s644
        $region48: #{tpu_custom_call.1} parent=31 // pred_fallthru
          _
        // Predicated region
        $region49: #{tpu_custom_call.1} parent=31 // pred_check
          %p646 = pneg %p214
        $region50: #{tpu_custom_call.1} parent=31 // pred_check_branch
          %648 = sbr.rel (%p646) target = $region52
        $region51: #{tpu_custom_call.1} parent=31 // pred_region
          %p649 = scmp.lt.s32.totalorder %s39, 1
          %s650 = scalar_select %p649, %s39, 1
          %s651 = scalar_lea.vmem %s6, %s650
        $region52: #{tpu_custom_call.1} parent=31 // pred_fallthru
          _
        // Predicated region
        $region53: #{tpu_custom_call.1} parent=31 // pred_check
          %p652 = pneg %p240
        $region54: #{tpu_custom_call.1} parent=31 // pred_check_branch
          %654 = sbr.rel (%p652) target = $region56
        $region55: #{tpu_custom_call.1} parent=31 // pred_region
          %p655 = scmp.lt.s32.totalorder %s39, 1
          %s656 = scalar_select %p655, %s39, 1
          %s657 = scalar_lea.vmem %s7, %s656
        $region56: #{tpu_custom_call.1} parent=31 // pred_fallthru
          _
        // Predicated region
        $region57: #{tpu_custom_call.1} parent=31 // pred_check
          %p658 = pneg %p266
        $region58: #{tpu_custom_call.1} parent=31 // pred_check_branch
          %660 = sbr.rel (%p658) target = $region60
        $region59: #{tpu_custom_call.1} parent=31 // pred_region
          %p661 = scmp.lt.s32.totalorder %s39, 1
          %s662 = scalar_select %p661, %s39, 1
          %s663 = scalar_lea.vmem %s8, %s662
        $region60: #{tpu_custom_call.1} parent=31 // pred_fallthru
          _
        // Predicated region
        $region61: #{tpu_custom_call.1} parent=31 // pred_check
          %p664 = pneg %p292
        $region62: #{tpu_custom_call.1} parent=31 // pred_check_branch
          %666 = sbr.rel (%p664) target = $region64
        $region63: #{tpu_custom_call.1} parent=31 // pred_region
          %p667 = scmp.lt.s32.totalorder %s39, 1
          %s668 = scalar_select %p667, %s39, 1
          %s669 = scalar_lea.vmem %s9, %s668
        $region64: #{tpu_custom_call.1} parent=31 // pred_fallthru
          _
        // Predicated region
        $region65: #{tpu_custom_call.1} parent=31 // pred_check
          %p670 = pneg %p318
        $region66: #{tpu_custom_call.1} parent=31 // pred_check_branch
          %672 = sbr.rel (%p670) target = $region68
        $region67: #{tpu_custom_call.1} parent=31 // pred_region
          %p673 = scmp.lt.s32.totalorder %s39, 1
          %s674 = scalar_select %p673, %s39, 1
          %s675 = smul.addr %s674, 8
          %s676 = smul.addr %s675, 4
          %s677 = scalar_lea.vmem %s10, %s676
        $region68: #{tpu_custom_call.1} parent=31 // pred_fallthru
          _
        // Predicated region
        $region69: #{tpu_custom_call.1} parent=31 // pred_check
          %p678 = pneg %p344
        $region70: #{tpu_custom_call.1} parent=31 // pred_check_branch
          %680 = sbr.rel (%p678) target = $region72
        $region71: #{tpu_custom_call.1} parent=31 // pred_region
          %p681 = scmp.lt.s32.totalorder %s39, 1
          %s682 = scalar_select %p681, %s39, 1
          %s683 = smul.addr %s682, 8
          %s684 = smul.addr %s683, 4
          %s685 = scalar_lea.vmem %s11, %s684
        $region72: #{tpu_custom_call.1} parent=31 // pred_fallthru
          _
        // Predicated region
        $region73: #{tpu_custom_call.1} parent=31 // pred_check
          %p686 = pneg %p370
        $region74: #{tpu_custom_call.1} parent=31 // pred_check_branch
          %688 = sbr.rel (%p686) target = $region76
        $region75: #{tpu_custom_call.1} parent=31 // pred_region
          %p689 = scmp.lt.s32.totalorder %s39, 1
          %s690 = scalar_select %p689, %s39, 1
          %s691 = smul.addr %s690, 8
          %s692 = smul.addr %s691, 4
          %s693 = scalar_lea.vmem %s12, %s692
        $region76: #{tpu_custom_call.1} parent=31 // pred_fallthru
          _
        // Predicated region
        $region77: #{tpu_custom_call.1} parent=31 // pred_check
          %p694 = pneg %p396
        $region78: #{tpu_custom_call.1} parent=31 // pred_check_branch
          %696 = sbr.rel (%p694) target = $region80
        $region79: #{tpu_custom_call.1} parent=31 // pred_region
          %s697 = sand.u32 %s386, 1
          %s698 = scalar_lea.sflag [#allocation7], %s697
          %s699 = sand.u32 %s386, 1
          %s700 = smul.addr %s699, 32
          %s701 = scalar_lea.vmem [#allocation6], %s700
          %s703 = ssub.s32 512, 512
          %704 = vsyncadd %s698, %s703
          %s705 = smul.addr %s39, 8
          %s706 = smul.addr %s705, 64
          %s707 = scalar_lea.hbm %s13, %s706
          %s708 = sshll.u32 %s701, 4
          %s709 = int_to_ptr.vmem [resolvable:$true] %s708
          %714 = dma.hbm_to_vmem [thread:$0]  %s707, 512, %s709, %s698, 64, 64, 4
        $region80: #{tpu_custom_call.1} parent=31 // pred_fallthru
          _
        // Predicated region
        $region81: #{tpu_custom_call.1} parent=31 // pred_check
          %p715 = pneg %p422
        $region82: #{tpu_custom_call.1} parent=31 // pred_check_branch
          %717 = sbr.rel (%p715) target = $region84
        $region83: #{tpu_custom_call.1} parent=31 // pred_region
          %p718 = scmp.lt.s32.totalorder %s39, 1
          %s719 = scalar_select %p718, %s39, 1
          %s720 = scalar_lea.vmem %s14, %s719
        $region84: #{tpu_custom_call.1} parent=31 // pred_fallthru
          _
        // Predicated region
        $region85: #{tpu_custom_call.1} parent=31 // pred_check
          %p721 = pneg %p448
        $region86: #{tpu_custom_call.1} parent=31 // pred_check_branch
          %723 = sbr.rel (%p721) target = $region88
        $region87: #{tpu_custom_call.1} parent=31 // pred_region
          %p724 = scmp.lt.s32.totalorder %s39, 1
          %s725 = scalar_select %p724, %s39, 1
          %s726 = scalar_lea.vmem %s15, %s725
        $region88: #{tpu_custom_call.1} parent=31 // pred_fallthru
          _
        // Predicated region
        $region89: #{tpu_custom_call.1} parent=31 // pred_check
          %p727 = pneg %p474
        $region90: #{tpu_custom_call.1} parent=31 // pred_check_branch
          %729 = sbr.rel (%p727) target = $region92
        $region91: #{tpu_custom_call.1} parent=31 // pred_region
          %p730 = scmp.lt.s32.totalorder %s39, 1
          %s731 = scalar_select %p730, %s39, 1
          %s732 = smul.addr %s731, 16
          %s733 = smul.addr %s732, 4
          %s734 = scalar_lea.vmem %s16, %s733
        $region92: #{tpu_custom_call.1} parent=31 // pred_fallthru
          _
        // Predicated region
        $region93: #{tpu_custom_call.1} parent=31 // pred_check
          %p735 = pneg %p500
        $region94: #{tpu_custom_call.1} parent=31 // pred_check_branch
          %737 = sbr.rel (%p735) target = $region96
        $region95: #{tpu_custom_call.1} parent=31 // pred_region
          %p738 = scmp.lt.s32.totalorder %s39, 1
          %s739 = scalar_select %p738, %s39, 1
          %s740 = smul.addr %s739, 32
          %s741 = smul.addr %s740, 4
          %s742 = scalar_lea.vmem %s17, %s741
        $region96: #{tpu_custom_call.1} parent=31 // pred_fallthru
          _
      $region32: #{tpu_custom_call.1} parent=5 // pred_fallthru
        _
      %p743 = scmp.le.s32.totalorder 1, %s31
      %p744 = scmp.lt.s32.totalorder %s31, 3
      %p745 = pnand %p743, %p744
      %p746 = pneg %p745
      // Predicated region
      $region97: #{tpu_custom_call.1} parent=5 // pred_check
        _
      $region98: #{tpu_custom_call.1} parent=5 // pred_check_branch
        %748 = sbr.rel (%p745) target = $region100
      $region99: #{tpu_custom_call.1} parent=5 // pred_region
        %s749 = ssub.s32 %s31, 1
        // Predicated region
        $region101: #{tpu_custom_call.1} parent=99 // pred_check
          %p750 = pneg %p64
        $region102: #{tpu_custom_call.1} parent=99 // pred_check_branch
          %752 = sbr.rel (%p750) target = $region104
        $region103: #{tpu_custom_call.1} parent=99 // pred_region
          %753 = dma.done [#allocation4], 256
        $region104: #{tpu_custom_call.1} parent=99 // pred_fallthru
          _
        %s754 = sand.u32 %s389, 1
        %s755 = scalar_lea.sflag [#allocation7], %s754
        %s756 = sand.u32 %s389, 1
        %s757 = smul.addr %s756, 32
        %s758 = scalar_lea.vmem [#allocation6], %s757
        // Predicated region
        $region105: #{tpu_custom_call.1} parent=99 // pred_check
          %p759 = pneg %p402
        $region106: #{tpu_custom_call.1} parent=99 // pred_check_branch
          %761 = sbr.rel (%p759) target = $region108
        $region107: #{tpu_custom_call.1} parent=99 // pred_region
          %762 = dma.done %s755, 512
        $region108: #{tpu_custom_call.1} parent=99 // pred_fallthru
          _
        %p763 = pneg %p64
        %p764 = pneg %p61
        %s765 = smul.u32 2, %s40
        %p766 = scmp.lt.s32.totalorder %s765, 1
        %s767 = scalar_select %p766, %s765, 1
        %s768 = smul.addr %s767, 4
        %s769 = smul.addr %s768, 8
        %s770 = scalar_lea.vmem %s1, %s769
        %p771 = pneg %p90
        %p772 = pneg %p87
        %p773 = scmp.lt.s32.totalorder %s41, 1
        %s774 = scalar_select %p773, %s41, 1
        %s775 = scalar_lea.vmem %s2, %s774
        %p776 = pneg %p116
        %p777 = pneg %p113
        %p778 = scmp.lt.s32.totalorder %s41, 1
        %s779 = scalar_select %p778, %s41, 1
        %s780 = scalar_lea.vmem %s3, %s779
        %p781 = pneg %p142
        %p782 = pneg %p139
        %p783 = scmp.lt.s32.totalorder %s41, 1
        %s784 = scalar_select %p783, %s41, 1
        %s785 = scalar_lea.vmem %s4, %s784
        %p786 = pneg %p168
        %p787 = pneg %p165
        %p788 = scmp.lt.s32.totalorder %s41, 1
        %s789 = scalar_select %p788, %s41, 1
        %s790 = scalar_lea.vmem %s5, %s789
        %p791 = pneg %p194
        %p792 = pneg %p191
        %p793 = scmp.lt.s32.totalorder %s41, 1
        %s794 = scalar_select %p793, %s41, 1
        %s795 = scalar_lea.vmem %s6, %s794
        %p796 = pneg %p220
        %p797 = pneg %p217
        %p798 = scmp.lt.s32.totalorder %s41, 1
        %s799 = scalar_select %p798, %s41, 1
        %s800 = scalar_lea.vmem %s7, %s799
        %p801 = pneg %p246
        %p802 = pneg %p243
        %p803 = scmp.lt.s32.totalorder %s41, 1
        %s804 = scalar_select %p803, %s41, 1
        %s805 = scalar_lea.vmem %s8, %s804
        %p806 = pneg %p272
        %p807 = pneg %p269
        %p808 = scmp.lt.s32.totalorder %s41, 1
        %s809 = scalar_select %p808, %s41, 1
        %s810 = scalar_lea.vmem %s9, %s809
        %p811 = pneg %p298
        %p812 = pneg %p295
        %p813 = scmp.lt.s32.totalorder %s41, 1
        %s814 = scalar_select %p813, %s41, 1
        %s815 = smul.addr %s814, 8
        %s816 = smul.addr %s815, 4
        %s817 = scalar_lea.vmem %s10, %s816
        %p818 = pneg %p324
        %p819 = pneg %p321
        %p820 = scmp.lt.s32.totalorder %s41, 1
        %s821 = scalar_select %p820, %s41, 1
        %s822 = smul.addr %s821, 8
        %s823 = smul.addr %s822, 4
        %s824 = scalar_lea.vmem %s11, %s823
        %p825 = pneg %p350
        %p826 = pneg %p347
        %p827 = scmp.lt.s32.totalorder %s41, 1
        %s828 = scalar_select %p827, %s41, 1
        %s829 = smul.addr %s828, 8
        %s830 = smul.addr %s829, 4
        %s831 = scalar_lea.vmem %s12, %s830
        %p832 = pneg %p376
        %p833 = pneg %p373
        %s834 = sand.u32 %s389, 1
        %s835 = scalar_lea.sflag [#allocation7], %s834
        %s836 = sand.u32 %s389, 1
        %s837 = smul.addr %s836, 32
        %s838 = scalar_lea.vmem [#allocation6], %s837
        %p839 = pneg %p402
        %p840 = pneg %p399
        %p841 = scmp.lt.s32.totalorder %s41, 1
        %s842 = scalar_select %p841, %s41, 1
        %s843 = scalar_lea.vmem %s14, %s842
        %p844 = pneg %p428
        %p845 = pneg %p425
        %p846 = scmp.lt.s32.totalorder %s41, 1
        %s847 = scalar_select %p846, %s41, 1
        %s848 = scalar_lea.vmem %s15, %s847
        %p849 = pneg %p454
        %p850 = pneg %p451
        %p851 = scmp.lt.s32.totalorder %s41, 1
        %s852 = scalar_select %p851, %s41, 1
        %s853 = smul.addr %s852, 16
        %s854 = smul.addr %s853, 4
        %s855 = scalar_lea.vmem %s16, %s854
        %p856 = pneg %p480
        %p857 = pneg %p477
        %p858 = scmp.lt.s32.totalorder %s41, 1
        %s859 = scalar_select %p858, %s41, 1
        %s860 = smul.addr %s859, 32
        %s861 = smul.addr %s860, 4
        %s862 = scalar_lea.vmem %s17, %s861
        %p863 = pneg %p506
        %p864 = pneg %p503
        %p865 = pneg %p527
        %p866 = pneg %p524
        %p867 = pneg %p548
        %p868 = pneg %p545
        %p869 = pneg %p574
        %p870 = pneg %p571
        %s871 = smul.u32 2, %s40
        %p872 = scmp.lt.s32.totalorder %s871, 1
        %s873 = scalar_select %p872, %s871, 1
        %s874 = smul.addr %s873, 4
        %s875 = smul.addr %s874, 8
        %s876 = scalar_lea.vmem %s1, %s875
        %s877 = smul.u32 2, %s40
        %p878 = scmp.lt.s32.totalorder %s41, 1
        %s879 = scalar_select %p878, %s41, 1
        %s880 = scalar_lea.vmem %s2, %s879
        %p881 = scmp.lt.s32.totalorder %s41, 1
        %s882 = scalar_select %p881, %s41, 1
        %s883 = scalar_lea.vmem %s3, %s882
        %p884 = scmp.lt.s32.totalorder %s41, 1
        %s885 = scalar_select %p884, %s41, 1
        %s886 = scalar_lea.vmem %s4, %s885
        %p887 = scmp.lt.s32.totalorder %s41, 1
        %s888 = scalar_select %p887, %s41, 1
        %s889 = scalar_lea.vmem %s5, %s888
        %p890 = scmp.lt.s32.totalorder %s41, 1
        %s891 = scalar_select %p890, %s41, 1
        %s892 = scalar_lea.vmem %s6, %s891
        %p893 = scmp.lt.s32.totalorder %s41, 1
        %s894 = scalar_select %p893, %s41, 1
        %s895 = scalar_lea.vmem %s7, %s894
        %p896 = scmp.lt.s32.totalorder %s41, 1
        %s897 = scalar_select %p896, %s41, 1
        %s898 = scalar_lea.vmem %s8, %s897
        %p899 = scmp.lt.s32.totalorder %s41, 1
        %s900 = scalar_select %p899, %s41, 1
        %s901 = scalar_lea.vmem %s9, %s900
        %p902 = scmp.lt.s32.totalorder %s41, 1
        %s903 = scalar_select %p902, %s41, 1
        %s904 = smul.addr %s903, 8
        %s905 = smul.addr %s904, 4
        %s906 = scalar_lea.vmem %s10, %s905
        %p907 = scmp.lt.s32.totalorder %s41, 1
        %s908 = scalar_select %p907, %s41, 1
        %s909 = smul.addr %s908, 8
        %s910 = smul.addr %s909, 4
        %s911 = scalar_lea.vmem %s11, %s910
        %p912 = scmp.lt.s32.totalorder %s41, 1
        %s913 = scalar_select %p912, %s41, 1
        %s914 = smul.addr %s913, 8
        %s915 = smul.addr %s914, 4
        %s916 = scalar_lea.vmem %s12, %s915
        %p917 = scmp.lt.s32.totalorder %s41, 1
        %s918 = scalar_select %p917, %s41, 1
        %s919 = scalar_lea.vmem %s14, %s918
        %p920 = scmp.lt.s32.totalorder %s41, 1
        %s921 = scalar_select %p920, %s41, 1
        %s922 = scalar_lea.vmem %s15, %s921
        %p923 = scmp.lt.s32.totalorder %s41, 1
        %s924 = scalar_select %p923, %s41, 1
        %s925 = smul.addr %s924, 16
        %s926 = smul.addr %s925, 4
        %s927 = scalar_lea.vmem %s16, %s926
        %p928 = scmp.lt.s32.totalorder %s41, 1
        %s929 = scalar_select %p928, %s41, 1
        %s930 = smul.addr %s929, 32
        %s931 = smul.addr %s930, 4
        %s932 = scalar_lea.vmem %s17, %s931
        %s933 = smul.u32 2, %s40
        %p935 = scmp.eq.s32.totalorder %s41, 0
        // Predicated region
        $region109: #{tpu_custom_call.1} parent=99 // pred_check
          %p936 = pneg %p935
        $region110: #{tpu_custom_call.1} parent=99 // pred_check_branch
          %938 = sbr.rel (%p936) target = $region112
        $region111: #{tpu_custom_call.1} parent=99 // pred_region
          %v939 = vld [vmem:[#allocation3] sm:$0xff]
          %v940 = vld [vmem:[#allocation3 + $0x8] sm:$0xff]
          %vm941 = vcmask 523264
          %942 = vst.msk [vmem:[#allocation2] sm:$0xff] %vm941, %v939
          %943 = vst.msk [vmem:[#allocation2 + $0x8] sm:$0xff] %vm941, %v940
          %944 = vst.msk [vmem:[#allocation2 + $0x10] sm:$0xff] %vm941, %v939
          %945 = vst.msk [vmem:[#allocation2 + $0x18] sm:$0xff] %vm941, %v940
        $region112: #{tpu_custom_call.1} parent=99 // pred_fallthru
          _
        %v946 = vld [vmem:[#allocation2] sm:$0xff]
        %v947 = vld [vmem:[#allocation2 + $0x8] sm:$0xff]
        %v948 = vld [vmem:[#allocation2 + $0x10] sm:$0xff]
        %v949 = vld [vmem:[#allocation2 + $0x18] sm:$0xff]
        %v950 = vld [vmem:[%s876] sm:$0xff]
        %v951 = vld [vmem:[%s876 + $0x8] sm:$0xff]
        %v952 = vld [vmem:[%s876 + $0x10] sm:$0xff]
        %v953 = vld [vmem:[%s876 + $0x18] sm:$0xff]
        %v954 = vld [vmem:[%s876 + $0x20] sm:$0xff]
        %v955 = vld [vmem:[%s876 + $0x28] sm:$0xff]
        %v956 = vld [vmem:[%s876 + $0x30] sm:$0xff]
        %v957 = vld [vmem:[%s876 + $0x38] sm:$0xff]
        %v958 = vld [vmem:[%s880] sm:$0x1]
        %v959 = vld [vmem:[%s883] sm:$0x1]
        %vm960 = vcmask 523264
        %v961 = vsel %vm960, %v950, 0.0
        %962 = vadd.xlane.f32.xlu0 %v961
        %v963 = vpop.xlane.xlu0 %962
        %v964 = vsel %vm960, %v951, 0.0
        %965 = vadd.xlane.f32.xlu0 %v964
        %v966 = vpop.xlane.xlu0 %965
        %v967 = vsel %vm960, %v952, 0.0
        %968 = vadd.xlane.f32.xlu0 %v967
        %v969 = vpop.xlane.xlu0 %968
        %v970 = vsel %vm960, %v953, 0.0
        %971 = vadd.xlane.f32.xlu0 %v970
        %v972 = vpop.xlane.xlu0 %971
        %v973 = vsel %vm960, %v954, 0.0
        %974 = vadd.xlane.f32.xlu0 %v973
        %v975 = vpop.xlane.xlu0 %974
        %v976 = vsel %vm960, %v955, 0.0
        %977 = vadd.xlane.f32.xlu0 %v976
        %v978 = vpop.xlane.xlu0 %977
        %v979 = vsel %vm960, %v956, 0.0
        %980 = vadd.xlane.f32.xlu0 %v979
        %v981 = vpop.xlane.xlu0 %980
        %v982 = vsel %vm960, %v957, 0.0
        %983 = vadd.xlane.f32.xlu0 %v982
        %v984 = vpop.xlane.xlu0 %983
        %v985 = vrcp.pop 64.0
        %v986 = vmul.f32 %v963, %v985
        %v987 = vmul.f32 %v966, %v985
        %v988 = vmul.f32 %v969, %v985
        %v989 = vmul.f32 %v972, %v985
        %v990 = vmul.f32 %v975, %v985
        %v991 = vmul.f32 %v978, %v985
        %v992 = vmul.f32 %v981, %v985
        %v993 = vmul.f32 %v984, %v985
        %v994 = vsub.f32 %v950, %v986
        %v995 = vsub.f32 %v951, %v987
        %v996 = vsub.f32 %v952, %v988
        %v997 = vsub.f32 %v953, %v989
        %v998 = vsub.f32 %v954, %v990
        %v999 = vsub.f32 %v955, %v991
        %v1000 = vsub.f32 %v956, %v992
        %v1001 = vsub.f32 %v957, %v993
        %v1002 = vmul.f32 %v994, %v994
        %v1003 = vmul.f32 %v995, %v995
        %v1004 = vmul.f32 %v996, %v996
        %v1005 = vmul.f32 %v997, %v997
        %v1006 = vmul.f32 %v998, %v998
        %v1007 = vmul.f32 %v999, %v999
        %v1008 = vmul.f32 %v1000, %v1000
        %v1009 = vmul.f32 %v1001, %v1001
        %v1010 = vsel %vm960, %v1002, 0.0
        %1011 = vadd.xlane.f32.xlu0 %v1010
        %v1012 = vpop.xlane.xlu0 %1011
        %v1013 = vsel %vm960, %v1003, 0.0
        %1014 = vadd.xlane.f32.xlu0 %v1013
        %v1015 = vpop.xlane.xlu0 %1014
        %v1016 = vsel %vm960, %v1004, 0.0
        %1017 = vadd.xlane.f32.xlu0 %v1016
        %v1018 = vpop.xlane.xlu0 %1017
        %v1019 = vsel %vm960, %v1005, 0.0
        %1020 = vadd.xlane.f32.xlu0 %v1019
        %v1021 = vpop.xlane.xlu0 %1020
        %v1022 = vsel %vm960, %v1006, 0.0
        %1023 = vadd.xlane.f32.xlu0 %v1022
        %v1024 = vpop.xlane.xlu0 %1023
        %v1025 = vsel %vm960, %v1007, 0.0
        %1026 = vadd.xlane.f32.xlu0 %v1025
        %v1027 = vpop.xlane.xlu0 %1026
        %v1028 = vsel %vm960, %v1008, 0.0
        %1029 = vadd.xlane.f32.xlu0 %v1028
        %v1030 = vpop.xlane.xlu0 %1029
        %v1031 = vsel %vm960, %v1009, 0.0
        %1032 = vadd.xlane.f32.xlu0 %v1031
        %v1033 = vpop.xlane.xlu0 %1032
        %v1034 = vmul.f32 %v1012, %v985
        %v1035 = vmul.f32 %v1015, %v985
        %v1036 = vmul.f32 %v1018, %v985
        %v1037 = vmul.f32 %v1021, %v985
        %v1038 = vmul.f32 %v1024, %v985
        %v1039 = vmul.f32 %v1027, %v985
        %v1040 = vmul.f32 %v1030, %v985
        %v1041 = vmul.f32 %v1033, %v985
        %v1042 = vadd.f32 %v1034, 1e-05
        %v1043 = vadd.f32 %v1035, 1e-05
        %v1044 = vadd.f32 %v1036, 1e-05
        %v1045 = vadd.f32 %v1037, 1e-05
        %v1046 = vadd.f32 %v1038, 1e-05
        %v1047 = vadd.f32 %v1039, 1e-05
        %v1048 = vadd.f32 %v1040, 1e-05
        %v1049 = vadd.f32 %v1041, 1e-05
        %v1050 = vrsqrt.pop %v1042
        %v1051 = vrsqrt.pop %v1043
        %v1052 = vrsqrt.pop %v1044
        %v1053 = vrsqrt.pop %v1045
        %v1054 = vrsqrt.pop %v1046
        %v1055 = vrsqrt.pop %v1047
        %v1056 = vrsqrt.pop %v1048
        %v1057 = vrsqrt.pop %v1049
        %v1058 = vmul.f32 %v994, %v1050
        %v1059 = vmul.f32 %v995, %v1051
        %v1060 = vmul.f32 %v996, %v1052
        %v1061 = vmul.f32 %v997, %v1053
        %v1062 = vmul.f32 %v998, %v1054
        %v1063 = vmul.f32 %v999, %v1055
        %v1064 = vmul.f32 %v1000, %v1056
        %v1065 = vmul.f32 %v1001, %v1057
        %v1067 = vlaneseq
        %v1068 = vshrl.u32 %v1067, 7
        %v1069 = vsub.s32 0, %v1068
        %v1070 = vrot.slane %v958, %v1069
        %v1072 = vmul.f32 %v1058, %v1070
        %v1073 = vmul.f32 %v1059, %v1070
        %v1074 = vmul.f32 %v1060, %v1070
        %v1075 = vmul.f32 %v1061, %v1070
        %v1076 = vmul.f32 %v1062, %v1070
        %v1077 = vmul.f32 %v1063, %v1070
        %v1078 = vmul.f32 %v1064, %v1070
        %v1079 = vmul.f32 %v1065, %v1070
        %v1081 = vlaneseq
        %v1082 = vshrl.u32 %v1081, 7
        %v1083 = vsub.s32 0, %v1082
        %v1084 = vrot.slane %v959, %v1083
        %v1086 = vadd.f32 %v1072, %v1084
        %v1087 = vadd.f32 %v1073, %v1084
        %v1088 = vadd.f32 %v1074, %v1084
        %v1089 = vadd.f32 %v1075, %v1084
        %v1090 = vadd.f32 %v1076, %v1084
        %v1091 = vadd.f32 %v1077, %v1084
        %v1092 = vadd.f32 %v1078, %v1084
        %v1093 = vadd.f32 %v1079, %v1084
        %v1094 = vld [vmem:[%s886] sm:$0x1]
        %v1095 = vld [vmem:[%s889] sm:$0x1]
        %v1096 = vsel %vm960, %v946, 0.0
        %1097 = vadd.xlane.f32.xlu0 %v1096
        %v1098 = vpop.xlane.xlu0 %1097
        %v1099 = vsel %vm960, %v947, 0.0
        %1100 = vadd.xlane.f32.xlu0 %v1099
        %v1101 = vpop.xlane.xlu0 %1100
        %v1102 = vsel %vm960, %v948, 0.0
        %1103 = vadd.xlane.f32.xlu0 %v1102
        %v1104 = vpop.xlane.xlu0 %1103
        %v1105 = vsel %vm960, %v949, 0.0
        %1106 = vadd.xlane.f32.xlu0 %v1105
        %v1107 = vpop.xlane.xlu0 %1106
        %v1108 = vmul.f32 %v1098, %v985
        %v1109 = vmul.f32 %v1101, %v985
        %v1110 = vmul.f32 %v1104, %v985
        %v1111 = vmul.f32 %v1107, %v985
        %v1112 = vsub.f32 %v946, %v1108
        %v1113 = vsub.f32 %v947, %v1109
        %v1114 = vsub.f32 %v948, %v1110
        %v1115 = vsub.f32 %v949, %v1111
        %v1116 = vmul.f32 %v1112, %v1112
        %v1117 = vmul.f32 %v1113, %v1113
        %v1118 = vmul.f32 %v1114, %v1114
        %v1119 = vmul.f32 %v1115, %v1115
        %v1120 = vsel %vm960, %v1116, 0.0
        %1121 = vadd.xlane.f32.xlu0 %v1120
        %v1122 = vpop.xlane.xlu0 %1121
        %v1123 = vsel %vm960, %v1117, 0.0
        %1124 = vadd.xlane.f32.xlu0 %v1123
        %v1125 = vpop.xlane.xlu0 %1124
        %v1126 = vsel %vm960, %v1118, 0.0
        %1127 = vadd.xlane.f32.xlu0 %v1126
        %v1128 = vpop.xlane.xlu0 %1127
        %v1129 = vsel %vm960, %v1119, 0.0
        %1130 = vadd.xlane.f32.xlu0 %v1129
        %v1131 = vpop.xlane.xlu0 %1130
        %v1132 = vmul.f32 %v1122, %v985
        %v1133 = vmul.f32 %v1125, %v985
        %v1134 = vmul.f32 %v1128, %v985
        %v1135 = vmul.f32 %v1131, %v985
        %v1136 = vadd.f32 %v1132, 1e-05
        %v1137 = vadd.f32 %v1133, 1e-05
        %v1138 = vadd.f32 %v1134, 1e-05
        %v1139 = vadd.f32 %v1135, 1e-05
        %v1140 = vrsqrt.pop %v1136
        %v1141 = vrsqrt.pop %v1137
        %v1142 = vrsqrt.pop %v1138
        %v1143 = vrsqrt.pop %v1139
        %v1144 = vmul.f32 %v1112, %v1140
        %v1145 = vmul.f32 %v1113, %v1141
        %v1146 = vmul.f32 %v1114, %v1142
        %v1147 = vmul.f32 %v1115, %v1143
        %v1149 = vlaneseq
        %v1150 = vshrl.u32 %v1149, 7
        %v1151 = vsub.s32 0, %v1150
        %v1152 = vrot.slane %v1094, %v1151
        %v1154 = vmul.f32 %v1144, %v1152
        %v1155 = vmul.f32 %v1145, %v1152
        %v1156 = vmul.f32 %v1146, %v1152
        %v1157 = vmul.f32 %v1147, %v1152
        %v1159 = vlaneseq
        %v1160 = vshrl.u32 %v1159, 7
        %v1161 = vsub.s32 0, %v1160
        %v1162 = vrot.slane %v1095, %v1161
        %v1164 = vadd.f32 %v1154, %v1162
        %v1165 = vadd.f32 %v1155, %v1162
        %v1166 = vadd.f32 %v1156, %v1162
        %v1167 = vadd.f32 %v1157, %v1162
        %v1168 = vpack.c.bf16 %v1087, %v1086
        %v1169 = vpack.c.bf16 %v1089, %v1088
        %v1170 = vpack.c.bf16 %v1091, %v1090
        %v1171 = vpack.c.bf16 %v1093, %v1092
        %v1172 = vpack.c.bf16 %v1165, %v1164
        %v1173 = vpack.c.bf16 %v1167, %v1166
        %v1174 = vld [vmem:[%s906] sm:$0xf]
        %v1175 = vld [vmem:[%s906 + $0x4] sm:$0xf]
        %v1176 = vld [vmem:[%s906 + $0x8] sm:$0xf]
        %v1177 = vld [vmem:[%s906 + $0xc] sm:$0xf]
        %v1178 = vld [vmem:[%s906 + $0x10] sm:$0xf]
        %v1179 = vld [vmem:[%s906 + $0x14] sm:$0xf]
        %v1180 = vld [vmem:[%s906 + $0x18] sm:$0xf]
        %v1181 = vld [vmem:[%s906 + $0x1c] sm:$0xf]
        %v1182 = vld [vmem:[%s911] sm:$0xf]
        %v1183 = vld [vmem:[%s911 + $0x4] sm:$0xf]
        %v1184 = vld [vmem:[%s911 + $0x8] sm:$0xf]
        %v1185 = vld [vmem:[%s911 + $0xc] sm:$0xf]
        %v1186 = vld [vmem:[%s911 + $0x10] sm:$0xf]
        %v1187 = vld [vmem:[%s911 + $0x14] sm:$0xf]
        %v1188 = vld [vmem:[%s911 + $0x18] sm:$0xf]
        %v1189 = vld [vmem:[%s911 + $0x1c] sm:$0xf]
        %v1190 = vld [vmem:[%s916] sm:$0xf]
        %v1191 = vld [vmem:[%s916 + $0x4] sm:$0xf]
        %v1192 = vld [vmem:[%s916 + $0x8] sm:$0xf]
        %v1193 = vld [vmem:[%s916 + $0xc] sm:$0xf]
        %v1194 = vld [vmem:[%s916 + $0x10] sm:$0xf]
        %v1195 = vld [vmem:[%s916 + $0x14] sm:$0xf]
        %v1196 = vld [vmem:[%s916 + $0x18] sm:$0xf]
        %v1197 = vld [vmem:[%s916 + $0x1c] sm:$0xf]
        %v1206 = vunpack.c.l.b16 %v1174
        %v1207 = vunpack.c.l.b16 %v1175
        %v1208 = vunpack.c.l.b16 %v1176
        %v1209 = vunpack.c.l.b16 %v1177
        %v1210 = vunpack.c.l.b16 %v1178
        %v1211 = vunpack.c.l.b16 %v1179
        %v1212 = vunpack.c.l.b16 %v1180
        %v1213 = vunpack.c.l.b16 %v1181
        %v1214 = vpack.c.b16 %v1207, %v1206
        %v1215 = vpack.c.b16 %v1209, %v1208
        %v1216 = vpack.c.b16 %v1211, %v1210
        %v1217 = vpack.c.b16 %v1213, %v1212
        %v1223 = vsel %vm960, %v1172, 0
        %v1226 = vsel %vm960, %v1173, 0
        %1228 = vmatprep.subr.bf16.mxu0 0
        %1229 = vmatpush1.bf16.msra.mxu0 %v1214
        %1230 = vmatprep.subr.bf16.mxu0 0
        %1231 = vmatpush1.bf16.msra.mxu0 %v1215
        %1232 = vmatprep.subr.bf16.mxu0 0
        %1233 = vmatpush1.bf16.msra.mxu0 %v1216
        %1234 = vmatprep.subr.bf16.mxu0 0
        %1235 = vmatpush1.bf16.msra.mxu0 %v1217
        %1236 = vmatprep.subr.bf16.mxu0 0
        %1237 = vmatpush1.bf16.msra.mxu0 0
        %1238 = vmatprep.subr.bf16.mxu0 0
        %1239 = vmatpush1.bf16.msra.mxu0 0
        %1240 = vmatprep.subr.bf16.mxu0 0
        %1241 = vmatpush1.bf16.msra.mxu0 0
        %1242 = vmatprep.subr.bf16.mxu0 0
        %1243 = vmatpush1.bf16.msra.mxu0 0
        %1244 = vmatprep.subr.bf16.mxu0 0
        %1245 = vmatpush1.bf16.msra.mxu0 0
        %1246 = vmatprep.subr.bf16.mxu0 0
        %1247 = vmatpush1.bf16.msra.mxu0 0
        %1248 = vmatprep.subr.bf16.mxu0 0
        %1249 = vmatpush1.bf16.msra.mxu0 0
        %1250 = vmatprep.subr.bf16.mxu0 0
        %1251 = vmatpush1.bf16.msra.mxu0 0
        %1252 = vmatprep.subr.bf16.mxu0 0
        %1253 = vmatpush1.bf16.msra.mxu0 0
        %1254 = vmatprep.subr.bf16.mxu0 0
        %1255 = vmatpush1.bf16.msra.mxu0 0
        %1256 = vmatprep.subr.bf16.mxu0 0
        %1257 = vmatpush1.bf16.msra.mxu0 0
        %1258 = vmatprep.subr.bf16.mxu0 0
        %1259 = vmatpush1.bf16.msra.mxu0 0
        %1260 = vmatprep.mubr.bf16.mxu0 0
        %1261 = vmatmul.mubr.bf16.gmra.mrb[0].mxu0 %v1223
        %v1262 = vpop.f32.mrb[0].mxu0
        %v1263 = vadd.f32 0.0, %v1262
        %v1264 = vpop.f32.mrb[0].mxu0
        %v1265 = vpop.f32.mrb[0].mxu0
        %v1266 = vadd.f32 0.0, %v1265
        %v1267 = vpop.f32.mrb[0].mxu0
        %1268 = vmatprep.mubr.bf16.mxu0 0
        %1269 = vmatmul.mubr.bf16.gmra.mrb[0].mxu0 %v1226
        %v1270 = vpop.f32.mrb[0].mxu0
        %v1271 = vadd.f32 0.0, %v1270
        %v1272 = vpop.f32.mrb[0].mxu0
        %v1273 = vpop.f32.mrb[0].mxu0
        %v1274 = vadd.f32 0.0, %v1273
        %v1275 = vpop.f32.mrb[0].mxu0
        %1276 = vdwg.mxu0
        %v1285 = vunpack.c.l.b16 %v1182
        %v1286 = vunpack.c.l.b16 %v1183
        %v1287 = vunpack.c.l.b16 %v1184
        %v1288 = vunpack.c.l.b16 %v1185
        %v1289 = vunpack.c.l.b16 %v1186
        %v1290 = vunpack.c.l.b16 %v1187
        %v1291 = vunpack.c.l.b16 %v1188
        %v1292 = vunpack.c.l.b16 %v1189
        %v1293 = vpack.c.b16 %v1286, %v1285
        %v1294 = vpack.c.b16 %v1288, %v1287
        %v1295 = vpack.c.b16 %v1290, %v1289
        %v1296 = vpack.c.b16 %v1292, %v1291
        %v1302 = vsel %vm960, %v1168, 0
        %v1305 = vsel %vm960, %v1169, 0
        %v1308 = vsel %vm960, %v1170, 0
        %v1311 = vsel %vm960, %v1171, 0
        %1313 = vmatprep.subr.bf16.mxu0 0
        %1314 = vmatpush1.bf16.msra.mxu0 %v1293
        %1315 = vmatprep.subr.bf16.mxu0 0
        %1316 = vmatpush1.bf16.msra.mxu0 %v1294
        %1317 = vmatprep.subr.bf16.mxu0 0
        %1318 = vmatpush1.bf16.msra.mxu0 %v1295
        %1319 = vmatprep.subr.bf16.mxu0 0
        %1320 = vmatpush1.bf16.msra.mxu0 %v1296
        %1321 = vmatprep.subr.bf16.mxu0 0
        %1322 = vmatpush1.bf16.msra.mxu0 0
        %1323 = vmatprep.subr.bf16.mxu0 0
        %1324 = vmatpush1.bf16.msra.mxu0 0
        %1325 = vmatprep.subr.bf16.mxu0 0
        %1326 = vmatpush1.bf16.msra.mxu0 0
        %1327 = vmatprep.subr.bf16.mxu0 0
        %1328 = vmatpush1.bf16.msra.mxu0 0
        %1329 = vmatprep.subr.bf16.mxu0 0
        %1330 = vmatpush1.bf16.msra.mxu0 0
        %1331 = vmatprep.subr.bf16.mxu0 0
        %1332 = vmatpush1.bf16.msra.mxu0 0
        %1333 = vmatprep.subr.bf16.mxu0 0
        %1334 = vmatpush1.bf16.msra.mxu0 0
        %1335 = vmatprep.subr.bf16.mxu0 0
        %1336 = vmatpush1.bf16.msra.mxu0 0
        %1337 = vmatprep.subr.bf16.mxu0 0
        %1338 = vmatpush1.bf16.msra.mxu0 0
        %1339 = vmatprep.subr.bf16.mxu0 0
        %1340 = vmatpush1.bf16.msra.mxu0 0
        %1341 = vmatprep.subr.bf16.mxu0 0
        %1342 = vmatpush1.bf16.msra.mxu0 0
        %1343 = vmatprep.subr.bf16.mxu0 0
        %1344 = vmatpush1.bf16.msra.mxu0 0
        %1345 = vmatprep.mubr.bf16.mxu0 0
        %1346 = vmatmul.mubr.bf16.gmra.mrb[0].mxu0 %v1302
        %v1347 = vpop.f32.mrb[0].mxu0
        %v1348 = vadd.f32 0.0, %v1347
        %v1349 = vpop.f32.mrb[0].mxu0
        %v1350 = vpop.f32.mrb[0].mxu0
        %v1351 = vadd.f32 0.0, %v1350
        %v1352 = vpop.f32.mrb[0].mxu0
        %1353 = vmatprep.mubr.bf16.mxu0 0
        %1354 = vmatmul.mubr.bf16.gmra.mrb[0].mxu0 %v1305
        %v1355 = vpop.f32.mrb[0].mxu0
        %v1356 = vadd.f32 0.0, %v1355
        %v1357 = vpop.f32.mrb[0].mxu0
        %v1358 = vpop.f32.mrb[0].mxu0
        %v1359 = vadd.f32 0.0, %v1358
        %v1360 = vpop.f32.mrb[0].mxu0
        %1361 = vmatprep.mubr.bf16.mxu0 0
        %1362 = vmatmul.mubr.bf16.gmra.mrb[0].mxu0 %v1308
        %v1363 = vpop.f32.mrb[0].mxu0
        %v1364 = vadd.f32 0.0, %v1363
        %v1365 = vpop.f32.mrb[0].mxu0
        %v1366 = vpop.f32.mrb[0].mxu0
        %v1367 = vadd.f32 0.0, %v1366
        %v1368 = vpop.f32.mrb[0].mxu0
        %1369 = vmatprep.mubr.bf16.mxu0 0
        %1370 = vmatmul.mubr.bf16.gmra.mrb[0].mxu0 %v1311
        %v1371 = vpop.f32.mrb[0].mxu0
        %v1372 = vadd.f32 0.0, %v1371
        %v1373 = vpop.f32.mrb[0].mxu0
        %v1374 = vpop.f32.mrb[0].mxu0
        %v1375 = vadd.f32 0.0, %v1374
        %v1376 = vpop.f32.mrb[0].mxu0
        %1377 = vdwg.mxu0
        %1378 = vmatprep.subr.bf16.mxu0 0
        %1379 = vmatpush1.bf16.msra.mxu0 %v1293
        %1380 = vmatprep.subr.bf16.mxu0 0
        %1381 = vmatpush1.bf16.msra.mxu0 %v1294
        %1382 = vmatprep.subr.bf16.mxu0 0
        %1383 = vmatpush1.bf16.msra.mxu0 %v1295
        %1384 = vmatprep.subr.bf16.mxu0 0
        %1385 = vmatpush1.bf16.msra.mxu0 %v1296
        %1386 = vmatprep.subr.bf16.mxu0 0
        %1387 = vmatpush1.bf16.msra.mxu0 0
        %1388 = vmatprep.subr.bf16.mxu0 0
        %1389 = vmatpush1.bf16.msra.mxu0 0
        %1390 = vmatprep.subr.bf16.mxu0 0
        %1391 = vmatpush1.bf16.msra.mxu0 0
        %1392 = vmatprep.subr.bf16.mxu0 0
        %1393 = vmatpush1.bf16.msra.mxu0 0
        %1394 = vmatprep.subr.bf16.mxu0 0
        %1395 = vmatpush1.bf16.msra.mxu0 0
        %1396 = vmatprep.subr.bf16.mxu0 0
        %1397 = vmatpush1.bf16.msra.mxu0 0
        %1398 = vmatprep.subr.bf16.mxu0 0
        %1399 = vmatpush1.bf16.msra.mxu0 0
        %1400 = vmatprep.subr.bf16.mxu0 0
        %1401 = vmatpush1.bf16.msra.mxu0 0
        %1402 = vmatprep.subr.bf16.mxu0 0
        %1403 = vmatpush1.bf16.msra.mxu0 0
        %1404 = vmatprep.subr.bf16.mxu0 0
        %1405 = vmatpush1.bf16.msra.mxu0 0
        %1406 = vmatprep.subr.bf16.mxu0 0
        %1407 = vmatpush1.bf16.msra.mxu0 0
        %1408 = vmatprep.subr.bf16.mxu0 0
        %1409 = vmatpush1.bf16.msra.mxu0 0
        %1410 = vmatprep.mubr.bf16.mxu0 0
        %1411 = vmatmul.mubr.bf16.gmra.mrb[0].mxu0 %v1223
        %v1412 = vpop.f32.mrb[0].mxu0
        %v1413 = vadd.f32 0.0, %v1412
        %v1414 = vpop.f32.mrb[0].mxu0
        %v1415 = vpop.f32.mrb[0].mxu0
        %v1416 = vadd.f32 0.0, %v1415
        %v1417 = vpop.f32.mrb[0].mxu0
        %1418 = vmatprep.mubr.bf16.mxu0 0
        %1419 = vmatmul.mubr.bf16.gmra.mrb[0].mxu0 %v1226
        %v1420 = vpop.f32.mrb[0].mxu0
        %v1421 = vadd.f32 0.0, %v1420
        %v1422 = vpop.f32.mrb[0].mxu0
        %v1423 = vpop.f32.mrb[0].mxu0
        %v1424 = vadd.f32 0.0, %v1423
        %v1425 = vpop.f32.mrb[0].mxu0
        %1426 = vdwg.mxu0
        %v1435 = vunpack.c.l.b16 %v1190
        %v1436 = vunpack.c.l.b16 %v1191
        %v1437 = vunpack.c.l.b16 %v1192
        %v1438 = vunpack.c.l.b16 %v1193
        %v1439 = vunpack.c.l.b16 %v1194
        %v1440 = vunpack.c.l.b16 %v1195
        %v1441 = vunpack.c.l.b16 %v1196
        %v1442 = vunpack.c.l.b16 %v1197
        %v1443 = vpack.c.b16 %v1436, %v1435
        %v1444 = vpack.c.b16 %v1438, %v1437
        %v1445 = vpack.c.b16 %v1440, %v1439
        %v1446 = vpack.c.b16 %v1442, %v1441
        %1451 = vmatprep.subr.bf16.mxu0 0
        %1452 = vmatpush1.bf16.msra.mxu0 %v1443
        %1453 = vmatprep.subr.bf16.mxu0 0
        %1454 = vmatpush1.bf16.msra.mxu0 %v1444
        %1455 = vmatprep.subr.bf16.mxu0 0
        %1456 = vmatpush1.bf16.msra.mxu0 %v1445
        %1457 = vmatprep.subr.bf16.mxu0 0
        %1458 = vmatpush1.bf16.msra.mxu0 %v1446
        %1459 = vmatprep.subr.bf16.mxu0 0
        %1460 = vmatpush1.bf16.msra.mxu0 0
        %1461 = vmatprep.subr.bf16.mxu0 0
        %1462 = vmatpush1.bf16.msra.mxu0 0
        %1463 = vmatprep.subr.bf16.mxu0 0
        %1464 = vmatpush1.bf16.msra.mxu0 0
        %1465 = vmatprep.subr.bf16.mxu0 0
        %1466 = vmatpush1.bf16.msra.mxu0 0
        %1467 = vmatprep.subr.bf16.mxu0 0
        %1468 = vmatpush1.bf16.msra.mxu0 0
        %1469 = vmatprep.subr.bf16.mxu0 0
        %1470 = vmatpush1.bf16.msra.mxu0 0
        %1471 = vmatprep.subr.bf16.mxu0 0
        %1472 = vmatpush1.bf16.msra.mxu0 0
        %1473 = vmatprep.subr.bf16.mxu0 0
        %1474 = vmatpush1.bf16.msra.mxu0 0
        %1475 = vmatprep.subr.bf16.mxu0 0
        %1476 = vmatpush1.bf16.msra.mxu0 0
        %1477 = vmatprep.subr.bf16.mxu0 0
        %1478 = vmatpush1.bf16.msra.mxu0 0
        %1479 = vmatprep.subr.bf16.mxu0 0
        %1480 = vmatpush1.bf16.msra.mxu0 0
        %1481 = vmatprep.subr.bf16.mxu0 0
        %1482 = vmatpush1.bf16.msra.mxu0 0
        %1483 = vmatprep.mubr.bf16.mxu0 0
        %1484 = vmatmul.mubr.bf16.gmra.mrb[0].mxu0 %v1302
        %v1485 = vpop.f32.mrb[0].mxu0
        %v1486 = vadd.f32 0.0, %v1485
        %v1487 = vpop.f32.mrb[0].mxu0
        %v1488 = vpop.f32.mrb[0].mxu0
        %v1489 = vadd.f32 0.0, %v1488
        %v1490 = vpop.f32.mrb[0].mxu0
        %1491 = vmatprep.mubr.bf16.mxu0 0
        %1492 = vmatmul.mubr.bf16.gmra.mrb[0].mxu0 %v1305
        %v1493 = vpop.f32.mrb[0].mxu0
        %v1494 = vadd.f32 0.0, %v1493
        %v1495 = vpop.f32.mrb[0].mxu0
        %v1496 = vpop.f32.mrb[0].mxu0
        %v1497 = vadd.f32 0.0, %v1496
        %v1498 = vpop.f32.mrb[0].mxu0
        %1499 = vmatprep.mubr.bf16.mxu0 0
        %1500 = vmatmul.mubr.bf16.gmra.mrb[0].mxu0 %v1308
        %v1501 = vpop.f32.mrb[0].mxu0
        %v1502 = vadd.f32 0.0, %v1501
        %v1503 = vpop.f32.mrb[0].mxu0
        %v1504 = vpop.f32.mrb[0].mxu0
        %v1505 = vadd.f32 0.0, %v1504
        %v1506 = vpop.f32.mrb[0].mxu0
        %1507 = vmatprep.mubr.bf16.mxu0 0
        %1508 = vmatmul.mubr.bf16.gmra.mrb[0].mxu0 %v1311
        %v1509 = vpop.f32.mrb[0].mxu0
        %v1510 = vadd.f32 0.0, %v1509
        %v1511 = vpop.f32.mrb[0].mxu0
        %v1512 = vpop.f32.mrb[0].mxu0
        %v1513 = vadd.f32 0.0, %v1512
        %v1514 = vpop.f32.mrb[0].mxu0
        %1515 = vdwg.mxu0
        %1516 = vmatprep.subr.bf16.mxu0 0
        %1517 = vmatpush1.bf16.msra.mxu0 %v1443
        %1518 = vmatprep.subr.bf16.mxu0 0
        %1519 = vmatpush1.bf16.msra.mxu0 %v1444
        %1520 = vmatprep.subr.bf16.mxu0 0
        %1521 = vmatpush1.bf16.msra.mxu0 %v1445
        %1522 = vmatprep.subr.bf16.mxu0 0
        %1523 = vmatpush1.bf16.msra.mxu0 %v1446
        %1524 = vmatprep.subr.bf16.mxu0 0
        %1525 = vmatpush1.bf16.msra.mxu0 0
        %1526 = vmatprep.subr.bf16.mxu0 0
        %1527 = vmatpush1.bf16.msra.mxu0 0
        %1528 = vmatprep.subr.bf16.mxu0 0
        %1529 = vmatpush1.bf16.msra.mxu0 0
        %1530 = vmatprep.subr.bf16.mxu0 0
        %1531 = vmatpush1.bf16.msra.mxu0 0
        %1532 = vmatprep.subr.bf16.mxu0 0
        %1533 = vmatpush1.bf16.msra.mxu0 0
        %1534 = vmatprep.subr.bf16.mxu0 0
        %1535 = vmatpush1.bf16.msra.mxu0 0
        %1536 = vmatprep.subr.bf16.mxu0 0
        %1537 = vmatpush1.bf16.msra.mxu0 0
        %1538 = vmatprep.subr.bf16.mxu0 0
        %1539 = vmatpush1.bf16.msra.mxu0 0
        %1540 = vmatprep.subr.bf16.mxu0 0
        %1541 = vmatpush1.bf16.msra.mxu0 0
        %1542 = vmatprep.subr.bf16.mxu0 0
        %1543 = vmatpush1.bf16.msra.mxu0 0
        %1544 = vmatprep.subr.bf16.mxu0 0
        %1545 = vmatpush1.bf16.msra.mxu0 0
        %1546 = vmatprep.subr.bf16.mxu0 0
        %1547 = vmatpush1.bf16.msra.mxu0 0
        %1548 = vmatprep.mubr.bf16.mxu0 0
        %1549 = vmatmul.mubr.bf16.gmra.mrb[0].mxu0 %v1223
        %v1550 = vpop.f32.mrb[0].mxu0
        %v1551 = vadd.f32 0.0, %v1550
        %v1552 = vpop.f32.mrb[0].mxu0
        %v1553 = vpop.f32.mrb[0].mxu0
        %v1554 = vadd.f32 0.0, %v1553
        %v1555 = vpop.f32.mrb[0].mxu0
        %1556 = vmatprep.mubr.bf16.mxu0 0
        %1557 = vmatmul.mubr.bf16.gmra.mrb[0].mxu0 %v1226
        %v1558 = vpop.f32.mrb[0].mxu0
        %v1559 = vadd.f32 0.0, %v1558
        %v1560 = vpop.f32.mrb[0].mxu0
        %v1561 = vpop.f32.mrb[0].mxu0
        %v1562 = vadd.f32 0.0, %v1561
        %v1563 = vpop.f32.mrb[0].mxu0
        %1564 = vdwg.mxu0
        %1569 = vrot.lane.b32.xlu0 %v1263, 112
        %v1570 = vpop.permute.xlu0 %1569
        %1571 = vrot.lane.b32.xlu0 %v1266, 112
        %v1572 = vpop.permute.xlu0 %1571
        %1573 = vrot.lane.b32.xlu0 %v1271, 112
        %v1574 = vpop.permute.xlu0 %1573
        %1575 = vrot.lane.b32.xlu0 %v1274, 112
        %v1576 = vpop.permute.xlu0 %1575
        %1581 = vrot.lane.b32.xlu0 %v1263, 96
        %v1582 = vpop.permute.xlu0 %1581
        %1583 = vrot.lane.b32.xlu0 %v1266, 96
        %v1584 = vpop.permute.xlu0 %1583
        %1585 = vrot.lane.b32.xlu0 %v1271, 96
        %v1586 = vpop.permute.xlu0 %1585
        %1587 = vrot.lane.b32.xlu0 %v1274, 96
        %v1588 = vpop.permute.xlu0 %1587
        %1593 = vrot.lane.b32.xlu0 %v1263, 80
        %v1594 = vpop.permute.xlu0 %1593
        %1595 = vrot.lane.b32.xlu0 %v1266, 80
        %v1596 = vpop.permute.xlu0 %1595
        %1597 = vrot.lane.b32.xlu0 %v1271, 80
        %v1598 = vpop.permute.xlu0 %1597
        %1599 = vrot.lane.b32.xlu0 %v1274, 80
        %v1600 = vpop.permute.xlu0 %1599
        %v1605 = vcombine.low %v1263, %v1582
        %v1606 = vcombine.high %v1263, %v1582
        %v1608 = vunpack.c.l.s4 1983009808
        %v1609 = vunpack.c.0.s8 %v1608
        %v1610 = vlaneseq
        %v1611 = vshrl.u32 %v1610, 7
        %v1612 = vsub.s32 %v1609, %v1611
        %v1613 = vrot.slane %v1605, %v1612
        %v1615 = vunpack.c.l.s4 1983009808
        %v1616 = vunpack.c.0.s8 %v1615
        %v1617 = vlaneseq
        %v1618 = vshrl.u32 %v1617, 7
        %v1619 = vsub.s32 %v1616, %v1618
        %v1620 = vrot.slane %v1606, %v1619
        %v1621 = vcombine.low %v1570, %v1594
        %v1622 = vcombine.high %v1570, %v1594
        %v1624 = vunpack.c.l.s4 1983009808
        %v1625 = vunpack.c.0.s8 %v1624
        %v1626 = vlaneseq
        %v1627 = vshrl.u32 %v1626, 7
        %v1628 = vsub.s32 %v1625, %v1627
        %v1629 = vrot.slane %v1621, %v1628
        %v1631 = vunpack.c.l.s4 1983009808
        %v1632 = vunpack.c.0.s8 %v1631
        %v1633 = vlaneseq
        %v1634 = vshrl.u32 %v1633, 7
        %v1635 = vsub.s32 %v1632, %v1634
        %v1636 = vrot.slane %v1622, %v1635
        %v1637 = vcombine.low %v1613, %v1629
        %v1638 = vcombine.high %v1613, %v1629
        %v1640 = vunpack.c.l.s4 1934713408
        %v1641 = vunpack.c.0.s8 %v1640
        %v1642 = vlaneseq
        %v1643 = vshrl.u32 %v1642, 7
        %v1644 = vsub.s32 %v1641, %v1643
        %v1645 = vrot.slane %v1637, %v1644
        %v1647 = vunpack.c.l.s4 1934713408
        %v1648 = vunpack.c.0.s8 %v1647
        %v1649 = vlaneseq
        %v1650 = vshrl.u32 %v1649, 7
        %v1651 = vsub.s32 %v1648, %v1650
        %v1652 = vrot.slane %v1638, %v1651
        %v1653 = vcombine.low %v1620, %v1636
        %v1654 = vcombine.high %v1620, %v1636
        %v1656 = vunpack.c.l.s4 1934713408
        %v1657 = vunpack.c.0.s8 %v1656
        %v1658 = vlaneseq
        %v1659 = vshrl.u32 %v1658, 7
        %v1660 = vsub.s32 %v1657, %v1659
        %v1661 = vrot.slane %v1653, %v1660
        %v1663 = vunpack.c.l.s4 1934713408
        %v1664 = vunpack.c.0.s8 %v1663
        %v1665 = vlaneseq
        %v1666 = vshrl.u32 %v1665, 7
        %v1667 = vsub.s32 %v1664, %v1666
        %v1668 = vrot.slane %v1654, %v1667
        %v1669 = vcombine.high %v1645, 0.0
        %v1670 = vcombine.high %v1652, 0.0
        %v1671 = vcombine.high %v1661, 0.0
        %v1672 = vcombine.high %v1668, 0.0
        %v1673 = vcombine.low %v1266, %v1584
        %v1674 = vcombine.high %v1266, %v1584
        %v1676 = vunpack.c.l.s4 1983009808
        %v1677 = vunpack.c.0.s8 %v1676
        %v1678 = vlaneseq
        %v1679 = vshrl.u32 %v1678, 7
        %v1680 = vsub.s32 %v1677, %v1679
        %v1681 = vrot.slane %v1673, %v1680
        %v1683 = vunpack.c.l.s4 1983009808
        %v1684 = vunpack.c.0.s8 %v1683
        %v1685 = vlaneseq
        %v1686 = vshrl.u32 %v1685, 7
        %v1687 = vsub.s32 %v1684, %v1686
        %v1688 = vrot.slane %v1674, %v1687
        %v1689 = vcombine.low %v1572, %v1596
        %v1690 = vcombine.high %v1572, %v1596
        %v1692 = vunpack.c.l.s4 1983009808
        %v1693 = vunpack.c.0.s8 %v1692
        %v1694 = vlaneseq
        %v1695 = vshrl.u32 %v1694, 7
        %v1696 = vsub.s32 %v1693, %v1695
        %v1697 = vrot.slane %v1689, %v1696
        %v1699 = vunpack.c.l.s4 1983009808
        %v1700 = vunpack.c.0.s8 %v1699
        %v1701 = vlaneseq
        %v1702 = vshrl.u32 %v1701, 7
        %v1703 = vsub.s32 %v1700, %v1702
        %v1704 = vrot.slane %v1690, %v1703
        %v1705 = vcombine.low %v1681, %v1697
        %v1706 = vcombine.high %v1681, %v1697
        %v1708 = vunpack.c.l.s4 1934713408
        %v1709 = vunpack.c.0.s8 %v1708
        %v1710 = vlaneseq
        %v1711 = vshrl.u32 %v1710, 7
        %v1712 = vsub.s32 %v1709, %v1711
        %v1713 = vrot.slane %v1705, %v1712
        %v1715 = vunpack.c.l.s4 1934713408
        %v1716 = vunpack.c.0.s8 %v1715
        %v1717 = vlaneseq
        %v1718 = vshrl.u32 %v1717, 7
        %v1719 = vsub.s32 %v1716, %v1718
        %v1720 = vrot.slane %v1706, %v1719
        %v1721 = vcombine.low %v1688, %v1704
        %v1722 = vcombine.high %v1688, %v1704
        %v1724 = vunpack.c.l.s4 1934713408
        %v1725 = vunpack.c.0.s8 %v1724
        %v1726 = vlaneseq
        %v1727 = vshrl.u32 %v1726, 7
        %v1728 = vsub.s32 %v1725, %v1727
        %v1729 = vrot.slane %v1721, %v1728
        %v1731 = vunpack.c.l.s4 1934713408
        %v1732 = vunpack.c.0.s8 %v1731
        %v1733 = vlaneseq
        %v1734 = vshrl.u32 %v1733, 7
        %v1735 = vsub.s32 %v1732, %v1734
        %v1736 = vrot.slane %v1722, %v1735
        %v1737 = vcombine.high %v1713, 0.0
        %v1738 = vcombine.high %v1720, 0.0
        %v1739 = vcombine.high %v1729, 0.0
        %v1740 = vcombine.high %v1736, 0.0
        %v1741 = vcombine.low %v1271, %v1586
        %v1742 = vcombine.high %v1271, %v1586
        %v1744 = vunpack.c.l.s4 1983009808
        %v1745 = vunpack.c.0.s8 %v1744
        %v1746 = vlaneseq
        %v1747 = vshrl.u32 %v1746, 7
        %v1748 = vsub.s32 %v1745, %v1747
        %v1749 = vrot.slane %v1741, %v1748
        %v1751 = vunpack.c.l.s4 1983009808
        %v1752 = vunpack.c.0.s8 %v1751
        %v1753 = vlaneseq
        %v1754 = vshrl.u32 %v1753, 7
        %v1755 = vsub.s32 %v1752, %v1754
        %v1756 = vrot.slane %v1742, %v1755
        %v1757 = vcombine.low %v1574, %v1598
        %v1758 = vcombine.high %v1574, %v1598
        %v1760 = vunpack.c.l.s4 1983009808
        %v1761 = vunpack.c.0.s8 %v1760
        %v1762 = vlaneseq
        %v1763 = vshrl.u32 %v1762, 7
        %v1764 = vsub.s32 %v1761, %v1763
        %v1765 = vrot.slane %v1757, %v1764
        %v1767 = vunpack.c.l.s4 1983009808
        %v1768 = vunpack.c.0.s8 %v1767
        %v1769 = vlaneseq
        %v1770 = vshrl.u32 %v1769, 7
        %v1771 = vsub.s32 %v1768, %v1770
        %v1772 = vrot.slane %v1758, %v1771
        %v1773 = vcombine.low %v1749, %v1765
        %v1774 = vcombine.high %v1749, %v1765
        %v1776 = vunpack.c.l.s4 1934713408
        %v1777 = vunpack.c.0.s8 %v1776
        %v1778 = vlaneseq
        %v1779 = vshrl.u32 %v1778, 7
        %v1780 = vsub.s32 %v1777, %v1779
        %v1781 = vrot.slane %v1773, %v1780
        %v1783 = vunpack.c.l.s4 1934713408
        %v1784 = vunpack.c.0.s8 %v1783
        %v1785 = vlaneseq
        %v1786 = vshrl.u32 %v1785, 7
        %v1787 = vsub.s32 %v1784, %v1786
        %v1788 = vrot.slane %v1774, %v1787
        %v1789 = vcombine.low %v1756, %v1772
        %v1790 = vcombine.high %v1756, %v1772
        %v1792 = vunpack.c.l.s4 1934713408
        %v1793 = vunpack.c.0.s8 %v1792
        %v1794 = vlaneseq
        %v1795 = vshrl.u32 %v1794, 7
        %v1796 = vsub.s32 %v1793, %v1795
        %v1797 = vrot.slane %v1789, %v1796
        %v1799 = vunpack.c.l.s4 1934713408
        %v1800 = vunpack.c.0.s8 %v1799
        %v1801 = vlaneseq
        %v1802 = vshrl.u32 %v1801, 7
        %v1803 = vsub.s32 %v1800, %v1802
        %v1804 = vrot.slane %v1790, %v1803
        %v1805 = vcombine.high %v1781, 0.0
        %v1806 = vcombine.high %v1788, 0.0
        %v1807 = vcombine.high %v1797, 0.0
        %v1808 = vcombine.high %v1804, 0.0
        %v1809 = vcombine.low %v1274, %v1588
        %v1810 = vcombine.high %v1274, %v1588
        %v1812 = vunpack.c.l.s4 1983009808
        %v1813 = vunpack.c.0.s8 %v1812
        %v1814 = vlaneseq
        %v1815 = vshrl.u32 %v1814, 7
        %v1816 = vsub.s32 %v1813, %v1815
        %v1817 = vrot.slane %v1809, %v1816
        %v1819 = vunpack.c.l.s4 1983009808
        %v1820 = vunpack.c.0.s8 %v1819
        %v1821 = vlaneseq
        %v1822 = vshrl.u32 %v1821, 7
        %v1823 = vsub.s32 %v1820, %v1822
        %v1824 = vrot.slane %v1810, %v1823
        %v1825 = vcombine.low %v1576, %v1600
        %v1826 = vcombine.high %v1576, %v1600
        %v1828 = vunpack.c.l.s4 1983009808
        %v1829 = vunpack.c.0.s8 %v1828
        %v1830 = vlaneseq
        %v1831 = vshrl.u32 %v1830, 7
        %v1832 = vsub.s32 %v1829, %v1831
        %v1833 = vrot.slane %v1825, %v1832
        %v1835 = vunpack.c.l.s4 1983009808
        %v1836 = vunpack.c.0.s8 %v1835
        %v1837 = vlaneseq
        %v1838 = vshrl.u32 %v1837, 7
        %v1839 = vsub.s32 %v1836, %v1838
        %v1840 = vrot.slane %v1826, %v1839
        %v1841 = vcombine.low %v1817, %v1833
        %v1842 = vcombine.high %v1817, %v1833
        %v1844 = vunpack.c.l.s4 1934713408
        %v1845 = vunpack.c.0.s8 %v1844
        %v1846 = vlaneseq
        %v1847 = vshrl.u32 %v1846, 7
        %v1848 = vsub.s32 %v1845, %v1847
        %v1849 = vrot.slane %v1841, %v1848
        %v1851 = vunpack.c.l.s4 1934713408
        %v1852 = vunpack.c.0.s8 %v1851
        %v1853 = vlaneseq
        %v1854 = vshrl.u32 %v1853, 7
        %v1855 = vsub.s32 %v1852, %v1854
        %v1856 = vrot.slane %v1842, %v1855
        %v1857 = vcombine.low %v1824, %v1840
        %v1858 = vcombine.high %v1824, %v1840
        %v1860 = vunpack.c.l.s4 1934713408
        %v1861 = vunpack.c.0.s8 %v1860
        %v1862 = vlaneseq
        %v1863 = vshrl.u32 %v1862, 7
        %v1864 = vsub.s32 %v1861, %v1863
        %v1865 = vrot.slane %v1857, %v1864
        %v1867 = vunpack.c.l.s4 1934713408
        %v1868 = vunpack.c.0.s8 %v1867
        %v1869 = vlaneseq
        %v1870 = vshrl.u32 %v1869, 7
        %v1871 = vsub.s32 %v1868, %v1870
        %v1872 = vrot.slane %v1858, %v1871
        %v1873 = vcombine.high %v1849, 0.0
        %v1874 = vcombine.high %v1856, 0.0
        %v1875 = vcombine.high %v1865, 0.0
        %v1876 = vcombine.high %v1872, 0.0
        %1885 = vrot.lane.b32.xlu0 %v1348, 112
        %v1886 = vpop.permute.xlu0 %1885
        %1887 = vrot.lane.b32.xlu0 %v1351, 112
        %v1888 = vpop.permute.xlu0 %1887
        %1889 = vrot.lane.b32.xlu0 %v1356, 112
        %v1890 = vpop.permute.xlu0 %1889
        %1891 = vrot.lane.b32.xlu0 %v1359, 112
        %v1892 = vpop.permute.xlu0 %1891
        %1893 = vrot.lane.b32.xlu0 %v1364, 112
        %v1894 = vpop.permute.xlu0 %1893
        %1895 = vrot.lane.b32.xlu0 %v1367, 112
        %v1896 = vpop.permute.xlu0 %1895
        %1897 = vrot.lane.b32.xlu0 %v1372, 112
        %v1898 = vpop.permute.xlu0 %1897
        %1899 = vrot.lane.b32.xlu0 %v1375, 112
        %v1900 = vpop.permute.xlu0 %1899
        %1909 = vrot.lane.b32.xlu0 %v1348, 96
        %v1910 = vpop.permute.xlu0 %1909
        %1911 = vrot.lane.b32.xlu0 %v1351, 96
        %v1912 = vpop.permute.xlu0 %1911
        %1913 = vrot.lane.b32.xlu0 %v1356, 96
        %v1914 = vpop.permute.xlu0 %1913
        %1915 = vrot.lane.b32.xlu0 %v1359, 96
        %v1916 = vpop.permute.xlu0 %1915
        %1917 = vrot.lane.b32.xlu0 %v1364, 96
        %v1918 = vpop.permute.xlu0 %1917
        %1919 = vrot.lane.b32.xlu0 %v1367, 96
        %v1920 = vpop.permute.xlu0 %1919
        %1921 = vrot.lane.b32.xlu0 %v1372, 96
        %v1922 = vpop.permute.xlu0 %1921
        %1923 = vrot.lane.b32.xlu0 %v1375, 96
        %v1924 = vpop.permute.xlu0 %1923
        %1933 = vrot.lane.b32.xlu0 %v1348, 80
        %v1934 = vpop.permute.xlu0 %1933
        %1935 = vrot.lane.b32.xlu0 %v1351, 80
        %v1936 = vpop.permute.xlu0 %1935
        %1937 = vrot.lane.b32.xlu0 %v1356, 80
        %v1938 = vpop.permute.xlu0 %1937
        %1939 = vrot.lane.b32.xlu0 %v1359, 80
        %v1940 = vpop.permute.xlu0 %1939
        %1941 = vrot.lane.b32.xlu0 %v1364, 80
        %v1942 = vpop.permute.xlu0 %1941
        %1943 = vrot.lane.b32.xlu0 %v1367, 80
        %v1944 = vpop.permute.xlu0 %1943
        %1945 = vrot.lane.b32.xlu0 %v1372, 80
        %v1946 = vpop.permute.xlu0 %1945
        %1947 = vrot.lane.b32.xlu0 %v1375, 80
        %v1948 = vpop.permute.xlu0 %1947
        %v1957 = vcombine.low %v1348, %v1910
        %v1958 = vcombine.high %v1348, %v1910
        %v1960 = vunpack.c.l.s4 1983009808
        %v1961 = vunpack.c.0.s8 %v1960
        %v1962 = vlaneseq
        %v1963 = vshrl.u32 %v1962, 7
        %v1964 = vsub.s32 %v1961, %v1963
        %v1965 = vrot.slane %v1957, %v1964
        %v1967 = vunpack.c.l.s4 1983009808
        %v1968 = vunpack.c.0.s8 %v1967
        %v1969 = vlaneseq
        %v1970 = vshrl.u32 %v1969, 7
        %v1971 = vsub.s32 %v1968, %v1970
        %v1972 = vrot.slane %v1958, %v1971
        %v1973 = vcombine.low %v1886, %v1934
        %v1974 = vcombine.high %v1886, %v1934
        %v1976 = vunpack.c.l.s4 1983009808
        %v1977 = vunpack.c.0.s8 %v1976
        %v1978 = vlaneseq
        %v1979 = vshrl.u32 %v1978, 7
        %v1980 = vsub.s32 %v1977, %v1979
        %v1981 = vrot.slane %v1973, %v1980
        %v1983 = vunpack.c.l.s4 1983009808
        %v1984 = vunpack.c.0.s8 %v1983
        %v1985 = vlaneseq
        %v1986 = vshrl.u32 %v1985, 7
        %v1987 = vsub.s32 %v1984, %v1986
        %v1988 = vrot.slane %v1974, %v1987
        %v1989 = vcombine.low %v1965, %v1981
        %v1990 = vcombine.high %v1965, %v1981
        %v1992 = vunpack.c.l.s4 1934713408
        %v1993 = vunpack.c.0.s8 %v1992
        %v1994 = vlaneseq
        %v1995 = vshrl.u32 %v1994, 7
        %v1996 = vsub.s32 %v1993, %v1995
        %v1997 = vrot.slane %v1989, %v1996
        %v1999 = vunpack.c.l.s4 1934713408
        %v2000 = vunpack.c.0.s8 %v1999
        %v2001 = vlaneseq
        %v2002 = vshrl.u32 %v2001, 7
        %v2003 = vsub.s32 %v2000, %v2002
        %v2004 = vrot.slane %v1990, %v2003
        %v2005 = vcombine.low %v1972, %v1988
        %v2006 = vcombine.high %v1972, %v1988
        %v2008 = vunpack.c.l.s4 1934713408
        %v2009 = vunpack.c.0.s8 %v2008
        %v2010 = vlaneseq
        %v2011 = vshrl.u32 %v2010, 7
        %v2012 = vsub.s32 %v2009, %v2011
        %v2013 = vrot.slane %v2005, %v2012
        %v2015 = vunpack.c.l.s4 1934713408
        %v2016 = vunpack.c.0.s8 %v2015
        %v2017 = vlaneseq
        %v2018 = vshrl.u32 %v2017, 7
        %v2019 = vsub.s32 %v2016, %v2018
        %v2020 = vrot.slane %v2006, %v2019
        %v2021 = vcombine.high %v1997, 0.0
        %v2022 = vcombine.high %v2004, 0.0
        %v2023 = vcombine.high %v2013, 0.0
        %v2024 = vcombine.high %v2020, 0.0
        %v2025 = vcombine.low %v1351, %v1912
        %v2026 = vcombine.high %v1351, %v1912
        %v2028 = vunpack.c.l.s4 1983009808
        %v2029 = vunpack.c.0.s8 %v2028
        %v2030 = vlaneseq
        %v2031 = vshrl.u32 %v2030, 7
        %v2032 = vsub.s32 %v2029, %v2031
        %v2033 = vrot.slane %v2025, %v2032
        %v2035 = vunpack.c.l.s4 1983009808
        %v2036 = vunpack.c.0.s8 %v2035
        %v2037 = vlaneseq
        %v2038 = vshrl.u32 %v2037, 7
        %v2039 = vsub.s32 %v2036, %v2038
        %v2040 = vrot.slane %v2026, %v2039
        %v2041 = vcombine.low %v1888, %v1936
        %v2042 = vcombine.high %v1888, %v1936
        %v2044 = vunpack.c.l.s4 1983009808
        %v2045 = vunpack.c.0.s8 %v2044
        %v2046 = vlaneseq
        %v2047 = vshrl.u32 %v2046, 7
        %v2048 = vsub.s32 %v2045, %v2047
        %v2049 = vrot.slane %v2041, %v2048
        %v2051 = vunpack.c.l.s4 1983009808
        %v2052 = vunpack.c.0.s8 %v2051
        %v2053 = vlaneseq
        %v2054 = vshrl.u32 %v2053, 7
        %v2055 = vsub.s32 %v2052, %v2054
        %v2056 = vrot.slane %v2042, %v2055
        %v2057 = vcombine.low %v2033, %v2049
        %v2058 = vcombine.high %v2033, %v2049
        %v2060 = vunpack.c.l.s4 1934713408
        %v2061 = vunpack.c.0.s8 %v2060
        %v2062 = vlaneseq
        %v2063 = vshrl.u32 %v2062, 7
        %v2064 = vsub.s32 %v2061, %v2063
        %v2065 = vrot.slane %v2057, %v2064
        %v2067 = vunpack.c.l.s4 1934713408
        %v2068 = vunpack.c.0.s8 %v2067
        %v2069 = vlaneseq
        %v2070 = vshrl.u32 %v2069, 7
        %v2071 = vsub.s32 %v2068, %v2070
        %v2072 = vrot.slane %v2058, %v2071
        %v2073 = vcombine.low %v2040, %v2056
        %v2074 = vcombine.high %v2040, %v2056
        %v2076 = vunpack.c.l.s4 1934713408
        %v2077 = vunpack.c.0.s8 %v2076
        %v2078 = vlaneseq
        %v2079 = vshrl.u32 %v2078, 7
        %v2080 = vsub.s32 %v2077, %v2079
        %v2081 = vrot.slane %v2073, %v2080
        %v2083 = vunpack.c.l.s4 1934713408
        %v2084 = vunpack.c.0.s8 %v2083
        %v2085 = vlaneseq
        %v2086 = vshrl.u32 %v2085, 7
        %v2087 = vsub.s32 %v2084, %v2086
        %v2088 = vrot.slane %v2074, %v2087
        %v2089 = vcombine.high %v2065, 0.0
        %v2090 = vcombine.high %v2072, 0.0
        %v2091 = vcombine.high %v2081, 0.0
        %v2092 = vcombine.high %v2088, 0.0
        %v2093 = vcombine.low %v1356, %v1914
        %v2094 = vcombine.high %v1356, %v1914
        %v2096 = vunpack.c.l.s4 1983009808
        %v2097 = vunpack.c.0.s8 %v2096
        %v2098 = vlaneseq
        %v2099 = vshrl.u32 %v2098, 7
        %v2100 = vsub.s32 %v2097, %v2099
        %v2101 = vrot.slane %v2093, %v2100
        %v2103 = vunpack.c.l.s4 1983009808
        %v2104 = vunpack.c.0.s8 %v2103
        %v2105 = vlaneseq
        %v2106 = vshrl.u32 %v2105, 7
        %v2107 = vsub.s32 %v2104, %v2106
        %v2108 = vrot.slane %v2094, %v2107
        %v2109 = vcombine.low %v1890, %v1938
        %v2110 = vcombine.high %v1890, %v1938
        %v2112 = vunpack.c.l.s4 1983009808
        %v2113 = vunpack.c.0.s8 %v2112
        %v2114 = vlaneseq
        %v2115 = vshrl.u32 %v2114, 7
        %v2116 = vsub.s32 %v2113, %v2115
        %v2117 = vrot.slane %v2109, %v2116
        %v2119 = vunpack.c.l.s4 1983009808
        %v2120 = vunpack.c.0.s8 %v2119
        %v2121 = vlaneseq
        %v2122 = vshrl.u32 %v2121, 7
        %v2123 = vsub.s32 %v2120, %v2122
        %v2124 = vrot.slane %v2110, %v2123
        %v2125 = vcombine.low %v2101, %v2117
        %v2126 = vcombine.high %v2101, %v2117
        %v2128 = vunpack.c.l.s4 1934713408
        %v2129 = vunpack.c.0.s8 %v2128
        %v2130 = vlaneseq
        %v2131 = vshrl.u32 %v2130, 7
        %v2132 = vsub.s32 %v2129, %v2131
        %v2133 = vrot.slane %v2125, %v2132
        %v2135 = vunpack.c.l.s4 1934713408
        %v2136 = vunpack.c.0.s8 %v2135
        %v2137 = vlaneseq
        %v2138 = vshrl.u32 %v2137, 7
        %v2139 = vsub.s32 %v2136, %v2138
        %v2140 = vrot.slane %v2126, %v2139
        %v2141 = vcombine.low %v2108, %v2124
        %v2142 = vcombine.high %v2108, %v2124
        %v2144 = vunpack.c.l.s4 1934713408
        %v2145 = vunpack.c.0.s8 %v2144
        %v2146 = vlaneseq
        %v2147 = vshrl.u32 %v2146, 7
        %v2148 = vsub.s32 %v2145, %v2147
        %v2149 = vrot.slane %v2141, %v2148
        %v2151 = vunpack.c.l.s4 1934713408
        %v2152 = vunpack.c.0.s8 %v2151
        %v2153 = vlaneseq
        %v2154 = vshrl.u32 %v2153, 7
        %v2155 = vsub.s32 %v2152, %v2154
        %v2156 = vrot.slane %v2142, %v2155
        %v2157 = vcombine.high %v2133, 0.0
        %v2158 = vcombine.high %v2140, 0.0
        %v2159 = vcombine.high %v2149, 0.0
        %v2160 = vcombine.high %v2156, 0.0
        %v2161 = vcombine.low %v1359, %v1916
        %v2162 = vcombine.high %v1359, %v1916
        %v2164 = vunpack.c.l.s4 1983009808
        %v2165 = vunpack.c.0.s8 %v2164
        %v2166 = vlaneseq
        %v2167 = vshrl.u32 %v2166, 7
        %v2168 = vsub.s32 %v2165, %v2167
        %v2169 = vrot.slane %v2161, %v2168
        %v2171 = vunpack.c.l.s4 1983009808
        %v2172 = vunpack.c.0.s8 %v2171
        %v2173 = vlaneseq
        %v2174 = vshrl.u32 %v2173, 7
        %v2175 = vsub.s32 %v2172, %v2174
        %v2176 = vrot.slane %v2162, %v2175
        %v2177 = vcombine.low %v1892, %v1940
        %v2178 = vcombine.high %v1892, %v1940
        %v2180 = vunpack.c.l.s4 1983009808
        %v2181 = vunpack.c.0.s8 %v2180
        %v2182 = vlaneseq
        %v2183 = vshrl.u32 %v2182, 7
        %v2184 = vsub.s32 %v2181, %v2183
        %v2185 = vrot.slane %v2177, %v2184
        %v2187 = vunpack.c.l.s4 1983009808
        %v2188 = vunpack.c.0.s8 %v2187
        %v2189 = vlaneseq
        %v2190 = vshrl.u32 %v2189, 7
        %v2191 = vsub.s32 %v2188, %v2190
        %v2192 = vrot.slane %v2178, %v2191
        %v2193 = vcombine.low %v2169, %v2185
        %v2194 = vcombine.high %v2169, %v2185
        %v2196 = vunpack.c.l.s4 1934713408
        %v2197 = vunpack.c.0.s8 %v2196
        %v2198 = vlaneseq
        %v2199 = vshrl.u32 %v2198, 7
        %v2200 = vsub.s32 %v2197, %v2199
        %v2201 = vrot.slane %v2193, %v2200
        %v2203 = vunpack.c.l.s4 1934713408
        %v2204 = vunpack.c.0.s8 %v2203
        %v2205 = vlaneseq
        %v2206 = vshrl.u32 %v2205, 7
        %v2207 = vsub.s32 %v2204, %v2206
        %v2208 = vrot.slane %v2194, %v2207
        %v2209 = vcombine.low %v2176, %v2192
        %v2210 = vcombine.high %v2176, %v2192
        %v2212 = vunpack.c.l.s4 1934713408
        %v2213 = vunpack.c.0.s8 %v2212
        %v2214 = vlaneseq
        %v2215 = vshrl.u32 %v2214, 7
        %v2216 = vsub.s32 %v2213, %v2215
        %v2217 = vrot.slane %v2209, %v2216
        %v2219 = vunpack.c.l.s4 1934713408
        %v2220 = vunpack.c.0.s8 %v2219
        %v2221 = vlaneseq
        %v2222 = vshrl.u32 %v2221, 7
        %v2223 = vsub.s32 %v2220, %v2222
        %v2224 = vrot.slane %v2210, %v2223
        %v2225 = vcombine.high %v2201, 0.0
        %v2226 = vcombine.high %v2208, 0.0
        %v2227 = vcombine.high %v2217, 0.0
        %v2228 = vcombine.high %v2224, 0.0
        %v2229 = vcombine.low %v1364, %v1918
        %v2230 = vcombine.high %v1364, %v1918
        %v2232 = vunpack.c.l.s4 1983009808
        %v2233 = vunpack.c.0.s8 %v2232
        %v2234 = vlaneseq
        %v2235 = vshrl.u32 %v2234, 7
        %v2236 = vsub.s32 %v2233, %v2235
        %v2237 = vrot.slane %v2229, %v2236
        %v2239 = vunpack.c.l.s4 1983009808
        %v2240 = vunpack.c.0.s8 %v2239
        %v2241 = vlaneseq
        %v2242 = vshrl.u32 %v2241, 7
        %v2243 = vsub.s32 %v2240, %v2242
        %v2244 = vrot.slane %v2230, %v2243
        %v2245 = vcombine.low %v1894, %v1942
        %v2246 = vcombine.high %v1894, %v1942
        %v2248 = vunpack.c.l.s4 1983009808
        %v2249 = vunpack.c.0.s8 %v2248
        %v2250 = vlaneseq
        %v2251 = vshrl.u32 %v2250, 7
        %v2252 = vsub.s32 %v2249, %v2251
        %v2253 = vrot.slane %v2245, %v2252
        %v2255 = vunpack.c.l.s4 1983009808
        %v2256 = vunpack.c.0.s8 %v2255
        %v2257 = vlaneseq
        %v2258 = vshrl.u32 %v2257, 7
        %v2259 = vsub.s32 %v2256, %v2258
        %v2260 = vrot.slane %v2246, %v2259
        %v2261 = vcombine.low %v2237, %v2253
        %v2262 = vcombine.high %v2237, %v2253
        %v2264 = vunpack.c.l.s4 1934713408
        %v2265 = vunpack.c.0.s8 %v2264
        %v2266 = vlaneseq
        %v2267 = vshrl.u32 %v2266, 7
        %v2268 = vsub.s32 %v2265, %v2267
        %v2269 = vrot.slane %v2261, %v2268
        %v2271 = vunpack.c.l.s4 1934713408
        %v2272 = vunpack.c.0.s8 %v2271
        %v2273 = vlaneseq
        %v2274 = vshrl.u32 %v2273, 7
        %v2275 = vsub.s32 %v2272, %v2274
        %v2276 = vrot.slane %v2262, %v2275
        %v2277 = vcombine.low %v2244, %v2260
        %v2278 = vcombine.high %v2244, %v2260
        %v2280 = vunpack.c.l.s4 1934713408
        %v2281 = vunpack.c.0.s8 %v2280
        %v2282 = vlaneseq
        %v2283 = vshrl.u32 %v2282, 7
        %v2284 = vsub.s32 %v2281, %v2283
        %v2285 = vrot.slane %v2277, %v2284
        %v2287 = vunpack.c.l.s4 1934713408
        %v2288 = vunpack.c.0.s8 %v2287
        %v2289 = vlaneseq
        %v2290 = vshrl.u32 %v2289, 7
        %v2291 = vsub.s32 %v2288, %v2290
        %v2292 = vrot.slane %v2278, %v2291
        %v2293 = vcombine.high %v2269, 0.0
        %v2294 = vcombine.high %v2276, 0.0
        %v2295 = vcombine.high %v2285, 0.0
        %v2296 = vcombine.high %v2292, 0.0
        %v2297 = vcombine.low %v1367, %v1920
        %v2298 = vcombine.high %v1367, %v1920
        %v2300 = vunpack.c.l.s4 1983009808
        %v2301 = vunpack.c.0.s8 %v2300
        %v2302 = vlaneseq
        %v2303 = vshrl.u32 %v2302, 7
        %v2304 = vsub.s32 %v2301, %v2303
        %v2305 = vrot.slane %v2297, %v2304
        %v2307 = vunpack.c.l.s4 1983009808
        %v2308 = vunpack.c.0.s8 %v2307
        %v2309 = vlaneseq
        %v2310 = vshrl.u32 %v2309, 7
        %v2311 = vsub.s32 %v2308, %v2310
        %v2312 = vrot.slane %v2298, %v2311
        %v2313 = vcombine.low %v1896, %v1944
        %v2314 = vcombine.high %v1896, %v1944
        %v2316 = vunpack.c.l.s4 1983009808
        %v2317 = vunpack.c.0.s8 %v2316
        %v2318 = vlaneseq
        %v2319 = vshrl.u32 %v2318, 7
        %v2320 = vsub.s32 %v2317, %v2319
        %v2321 = vrot.slane %v2313, %v2320
        %v2323 = vunpack.c.l.s4 1983009808
        %v2324 = vunpack.c.0.s8 %v2323
        %v2325 = vlaneseq
        %v2326 = vshrl.u32 %v2325, 7
        %v2327 = vsub.s32 %v2324, %v2326
        %v2328 = vrot.slane %v2314, %v2327
        %v2329 = vcombine.low %v2305, %v2321
        %v2330 = vcombine.high %v2305, %v2321
        %v2332 = vunpack.c.l.s4 1934713408
        %v2333 = vunpack.c.0.s8 %v2332
        %v2334 = vlaneseq
        %v2335 = vshrl.u32 %v2334, 7
        %v2336 = vsub.s32 %v2333, %v2335
        %v2337 = vrot.slane %v2329, %v2336
        %v2339 = vunpack.c.l.s4 1934713408
        %v2340 = vunpack.c.0.s8 %v2339
        %v2341 = vlaneseq
        %v2342 = vshrl.u32 %v2341, 7
        %v2343 = vsub.s32 %v2340, %v2342
        %v2344 = vrot.slane %v2330, %v2343
        %v2345 = vcombine.low %v2312, %v2328
        %v2346 = vcombine.high %v2312, %v2328
        %v2348 = vunpack.c.l.s4 1934713408
        %v2349 = vunpack.c.0.s8 %v2348
        %v2350 = vlaneseq
        %v2351 = vshrl.u32 %v2350, 7
        %v2352 = vsub.s32 %v2349, %v2351
        %v2353 = vrot.slane %v2345, %v2352
        %v2355 = vunpack.c.l.s4 1934713408
        %v2356 = vunpack.c.0.s8 %v2355
        %v2357 = vlaneseq
        %v2358 = vshrl.u32 %v2357, 7
        %v2359 = vsub.s32 %v2356, %v2358
        %v2360 = vrot.slane %v2346, %v2359
        %v2361 = vcombine.high %v2337, 0.0
        %v2362 = vcombine.high %v2344, 0.0
        %v2363 = vcombine.high %v2353, 0.0
        %v2364 = vcombine.high %v2360, 0.0
        %v2365 = vcombine.low %v1372, %v1922
        %v2366 = vcombine.high %v1372, %v1922
        %v2368 = vunpack.c.l.s4 1983009808
        %v2369 = vunpack.c.0.s8 %v2368
        %v2370 = vlaneseq
        %v2371 = vshrl.u32 %v2370, 7
        %v2372 = vsub.s32 %v2369, %v2371
        %v2373 = vrot.slane %v2365, %v2372
        %v2375 = vunpack.c.l.s4 1983009808
        %v2376 = vunpack.c.0.s8 %v2375
        %v2377 = vlaneseq
        %v2378 = vshrl.u32 %v2377, 7
        %v2379 = vsub.s32 %v2376, %v2378
        %v2380 = vrot.slane %v2366, %v2379
        %v2381 = vcombine.low %v1898, %v1946
        %v2382 = vcombine.high %v1898, %v1946
        %v2384 = vunpack.c.l.s4 1983009808
        %v2385 = vunpack.c.0.s8 %v2384
        %v2386 = vlaneseq
        %v2387 = vshrl.u32 %v2386, 7
        %v2388 = vsub.s32 %v2385, %v2387
        %v2389 = vrot.slane %v2381, %v2388
        %v2391 = vunpack.c.l.s4 1983009808
        %v2392 = vunpack.c.0.s8 %v2391
        %v2393 = vlaneseq
        %v2394 = vshrl.u32 %v2393, 7
        %v2395 = vsub.s32 %v2392, %v2394
        %v2396 = vrot.slane %v2382, %v2395
        %v2397 = vcombine.low %v2373, %v2389
        %v2398 = vcombine.high %v2373, %v2389
        %v2400 = vunpack.c.l.s4 1934713408
        %v2401 = vunpack.c.0.s8 %v2400
        %v2402 = vlaneseq
        %v2403 = vshrl.u32 %v2402, 7
        %v2404 = vsub.s32 %v2401, %v2403
        %v2405 = vrot.slane %v2397, %v2404
        %v2407 = vunpack.c.l.s4 1934713408
        %v2408 = vunpack.c.0.s8 %v2407
        %v2409 = vlaneseq
        %v2410 = vshrl.u32 %v2409, 7
        %v2411 = vsub.s32 %v2408, %v2410
        %v2412 = vrot.slane %v2398, %v2411
        %v2413 = vcombine.low %v2380, %v2396
        %v2414 = vcombine.high %v2380, %v2396
        %v2416 = vunpack.c.l.s4 1934713408
        %v2417 = vunpack.c.0.s8 %v2416
        %v2418 = vlaneseq
        %v2419 = vshrl.u32 %v2418, 7
        %v2420 = vsub.s32 %v2417, %v2419
        %v2421 = vrot.slane %v2413, %v2420
        %v2423 = vunpack.c.l.s4 1934713408
        %v2424 = vunpack.c.0.s8 %v2423
        %v2425 = vlaneseq
        %v2426 = vshrl.u32 %v2425, 7
        %v2427 = vsub.s32 %v2424, %v2426
        %v2428 = vrot.slane %v2414, %v2427
        %v2429 = vcombine.high %v2405, 0.0
        %v2430 = vcombine.high %v2412, 0.0
        %v2431 = vcombine.high %v2421, 0.0
        %v2432 = vcombine.high %v2428, 0.0
        %v2433 = vcombine.low %v1375, %v1924
        %v2434 = vcombine.high %v1375, %v1924
        %v2436 = vunpack.c.l.s4 1983009808
        %v2437 = vunpack.c.0.s8 %v2436
        %v2438 = vlaneseq
        %v2439 = vshrl.u32 %v2438, 7
        %v2440 = vsub.s32 %v2437, %v2439
        %v2441 = vrot.slane %v2433, %v2440
        %v2443 = vunpack.c.l.s4 1983009808
        %v2444 = vunpack.c.0.s8 %v2443
        %v2445 = vlaneseq
        %v2446 = vshrl.u32 %v2445, 7
        %v2447 = vsub.s32 %v2444, %v2446
        %v2448 = vrot.slane %v2434, %v2447
        %v2449 = vcombine.low %v1900, %v1948
        %v2450 = vcombine.high %v1900, %v1948
        %v2452 = vunpack.c.l.s4 1983009808
        %v2453 = vunpack.c.0.s8 %v2452
        %v2454 = vlaneseq
        %v2455 = vshrl.u32 %v2454, 7
        %v2456 = vsub.s32 %v2453, %v2455
        %v2457 = vrot.slane %v2449, %v2456
        %v2459 = vunpack.c.l.s4 1983009808
        %v2460 = vunpack.c.0.s8 %v2459
        %v2461 = vlaneseq
        %v2462 = vshrl.u32 %v2461, 7
        %v2463 = vsub.s32 %v2460, %v2462
        %v2464 = vrot.slane %v2450, %v2463
        %v2465 = vcombine.low %v2441, %v2457
        %v2466 = vcombine.high %v2441, %v2457
        %v2468 = vunpack.c.l.s4 1934713408
        %v2469 = vunpack.c.0.s8 %v2468
        %v2470 = vlaneseq
        %v2471 = vshrl.u32 %v2470, 7
        %v2472 = vsub.s32 %v2469, %v2471
        %v2473 = vrot.slane %v2465, %v2472
        %v2475 = vunpack.c.l.s4 1934713408
        %v2476 = vunpack.c.0.s8 %v2475
        %v2477 = vlaneseq
        %v2478 = vshrl.u32 %v2477, 7
        %v2479 = vsub.s32 %v2476, %v2478
        %v2480 = vrot.slane %v2466, %v2479
        %v2481 = vcombine.low %v2448, %v2464
        %v2482 = vcombine.high %v2448, %v2464
        %v2484 = vunpack.c.l.s4 1934713408
        %v2485 = vunpack.c.0.s8 %v2484
        %v2486 = vlaneseq
        %v2487 = vshrl.u32 %v2486, 7
        %v2488 = vsub.s32 %v2485, %v2487
        %v2489 = vrot.slane %v2481, %v2488
        %v2491 = vunpack.c.l.s4 1934713408
        %v2492 = vunpack.c.0.s8 %v2491
        %v2493 = vlaneseq
        %v2494 = vshrl.u32 %v2493, 7
        %v2495 = vsub.s32 %v2492, %v2494
        %v2496 = vrot.slane %v2482, %v2495
        %v2497 = vcombine.high %v2473, 0.0
        %v2498 = vcombine.high %v2480, 0.0
        %v2499 = vcombine.high %v2489, 0.0
        %v2500 = vcombine.high %v2496, 0.0
        %2505 = vrot.lane.b32.xlu0 %v1413, 112
        %v2506 = vpop.permute.xlu0 %2505
        %2507 = vrot.lane.b32.xlu0 %v1416, 112
        %v2508 = vpop.permute.xlu0 %2507
        %2509 = vrot.lane.b32.xlu0 %v1421, 112
        %v2510 = vpop.permute.xlu0 %2509
        %2511 = vrot.lane.b32.xlu0 %v1424, 112
        %v2512 = vpop.permute.xlu0 %2511
        %2517 = vrot.lane.b32.xlu0 %v1413, 96
        %v2518 = vpop.permute.xlu0 %2517
        %2519 = vrot.lane.b32.xlu0 %v1416, 96
        %v2520 = vpop.permute.xlu0 %2519
        %2521 = vrot.lane.b32.xlu0 %v1421, 96
        %v2522 = vpop.permute.xlu0 %2521
        %2523 = vrot.lane.b32.xlu0 %v1424, 96
        %v2524 = vpop.permute.xlu0 %2523
        %2529 = vrot.lane.b32.xlu0 %v1413, 80
        %v2530 = vpop.permute.xlu0 %2529
        %2531 = vrot.lane.b32.xlu0 %v1416, 80
        %v2532 = vpop.permute.xlu0 %2531
        %2533 = vrot.lane.b32.xlu0 %v1421, 80
        %v2534 = vpop.permute.xlu0 %2533
        %2535 = vrot.lane.b32.xlu0 %v1424, 80
        %v2536 = vpop.permute.xlu0 %2535
        %v2541 = vcombine.low %v1413, %v2518
        %v2542 = vcombine.high %v1413, %v2518
        %v2544 = vunpack.c.l.s4 1983009808
        %v2545 = vunpack.c.0.s8 %v2544
        %v2546 = vlaneseq
        %v2547 = vshrl.u32 %v2546, 7
        %v2548 = vsub.s32 %v2545, %v2547
        %v2549 = vrot.slane %v2541, %v2548
        %v2551 = vunpack.c.l.s4 1983009808
        %v2552 = vunpack.c.0.s8 %v2551
        %v2553 = vlaneseq
        %v2554 = vshrl.u32 %v2553, 7
        %v2555 = vsub.s32 %v2552, %v2554
        %v2556 = vrot.slane %v2542, %v2555
        %v2557 = vcombine.low %v2506, %v2530
        %v2558 = vcombine.high %v2506, %v2530
        %v2560 = vunpack.c.l.s4 1983009808
        %v2561 = vunpack.c.0.s8 %v2560
        %v2562 = vlaneseq
        %v2563 = vshrl.u32 %v2562, 7
        %v2564 = vsub.s32 %v2561, %v2563
        %v2565 = vrot.slane %v2557, %v2564
        %v2567 = vunpack.c.l.s4 1983009808
        %v2568 = vunpack.c.0.s8 %v2567
        %v2569 = vlaneseq
        %v2570 = vshrl.u32 %v2569, 7
        %v2571 = vsub.s32 %v2568, %v2570
        %v2572 = vrot.slane %v2558, %v2571
        %v2573 = vcombine.low %v2549, %v2565
        %v2574 = vcombine.high %v2549, %v2565
        %v2576 = vunpack.c.l.s4 1934713408
        %v2577 = vunpack.c.0.s8 %v2576
        %v2578 = vlaneseq
        %v2579 = vshrl.u32 %v2578, 7
        %v2580 = vsub.s32 %v2577, %v2579
        %v2581 = vrot.slane %v2573, %v2580
        %v2583 = vunpack.c.l.s4 1934713408
        %v2584 = vunpack.c.0.s8 %v2583
        %v2585 = vlaneseq
        %v2586 = vshrl.u32 %v2585, 7
        %v2587 = vsub.s32 %v2584, %v2586
        %v2588 = vrot.slane %v2574, %v2587
        %v2589 = vcombine.low %v2556, %v2572
        %v2590 = vcombine.high %v2556, %v2572
        %v2592 = vunpack.c.l.s4 1934713408
        %v2593 = vunpack.c.0.s8 %v2592
        %v2594 = vlaneseq
        %v2595 = vshrl.u32 %v2594, 7
        %v2596 = vsub.s32 %v2593, %v2595
        %v2597 = vrot.slane %v2589, %v2596
        %v2599 = vunpack.c.l.s4 1934713408
        %v2600 = vunpack.c.0.s8 %v2599
        %v2601 = vlaneseq
        %v2602 = vshrl.u32 %v2601, 7
        %v2603 = vsub.s32 %v2600, %v2602
        %v2604 = vrot.slane %v2590, %v2603
        %v2605 = vcombine.high %v2581, 0.0
        %v2606 = vcombine.high %v2588, 0.0
        %v2607 = vcombine.high %v2597, 0.0
        %v2608 = vcombine.high %v2604, 0.0
        %v2609 = vcombine.low %v1416, %v2520
        %v2610 = vcombine.high %v1416, %v2520
        %v2612 = vunpack.c.l.s4 1983009808
        %v2613 = vunpack.c.0.s8 %v2612
        %v2614 = vlaneseq
        %v2615 = vshrl.u32 %v2614, 7
        %v2616 = vsub.s32 %v2613, %v2615
        %v2617 = vrot.slane %v2609, %v2616
        %v2619 = vunpack.c.l.s4 1983009808
        %v2620 = vunpack.c.0.s8 %v2619
        %v2621 = vlaneseq
        %v2622 = vshrl.u32 %v2621, 7
        %v2623 = vsub.s32 %v2620, %v2622
        %v2624 = vrot.slane %v2610, %v2623
        %v2625 = vcombine.low %v2508, %v2532
        %v2626 = vcombine.high %v2508, %v2532
        %v2628 = vunpack.c.l.s4 1983009808
        %v2629 = vunpack.c.0.s8 %v2628
        %v2630 = vlaneseq
        %v2631 = vshrl.u32 %v2630, 7
        %v2632 = vsub.s32 %v2629, %v2631
        %v2633 = vrot.slane %v2625, %v2632
        %v2635 = vunpack.c.l.s4 1983009808
        %v2636 = vunpack.c.0.s8 %v2635
        %v2637 = vlaneseq
        %v2638 = vshrl.u32 %v2637, 7
        %v2639 = vsub.s32 %v2636, %v2638
        %v2640 = vrot.slane %v2626, %v2639
        %v2641 = vcombine.low %v2617, %v2633
        %v2642 = vcombine.high %v2617, %v2633
        %v2644 = vunpack.c.l.s4 1934713408
        %v2645 = vunpack.c.0.s8 %v2644
        %v2646 = vlaneseq
        %v2647 = vshrl.u32 %v2646, 7
        %v2648 = vsub.s32 %v2645, %v2647
        %v2649 = vrot.slane %v2641, %v2648
        %v2651 = vunpack.c.l.s4 1934713408
        %v2652 = vunpack.c.0.s8 %v2651
        %v2653 = vlaneseq
        %v2654 = vshrl.u32 %v2653, 7
        %v2655 = vsub.s32 %v2652, %v2654
        %v2656 = vrot.slane %v2642, %v2655
        %v2657 = vcombine.low %v2624, %v2640
        %v2658 = vcombine.high %v2624, %v2640
        %v2660 = vunpack.c.l.s4 1934713408
        %v2661 = vunpack.c.0.s8 %v2660
        %v2662 = vlaneseq
        %v2663 = vshrl.u32 %v2662, 7
        %v2664 = vsub.s32 %v2661, %v2663
        %v2665 = vrot.slane %v2657, %v2664
        %v2667 = vunpack.c.l.s4 1934713408
        %v2668 = vunpack.c.0.s8 %v2667
        %v2669 = vlaneseq
        %v2670 = vshrl.u32 %v2669, 7
        %v2671 = vsub.s32 %v2668, %v2670
        %v2672 = vrot.slane %v2658, %v2671
        %v2673 = vcombine.high %v2649, 0.0
        %v2674 = vcombine.high %v2656, 0.0
        %v2675 = vcombine.high %v2665, 0.0
        %v2676 = vcombine.high %v2672, 0.0
        %v2677 = vcombine.low %v1421, %v2522
        %v2678 = vcombine.high %v1421, %v2522
        %v2680 = vunpack.c.l.s4 1983009808
        %v2681 = vunpack.c.0.s8 %v2680
        %v2682 = vlaneseq
        %v2683 = vshrl.u32 %v2682, 7
        %v2684 = vsub.s32 %v2681, %v2683
        %v2685 = vrot.slane %v2677, %v2684
        %v2687 = vunpack.c.l.s4 1983009808
        %v2688 = vunpack.c.0.s8 %v2687
        %v2689 = vlaneseq
        %v2690 = vshrl.u32 %v2689, 7
        %v2691 = vsub.s32 %v2688, %v2690
        %v2692 = vrot.slane %v2678, %v2691
        %v2693 = vcombine.low %v2510, %v2534
        %v2694 = vcombine.high %v2510, %v2534
        %v2696 = vunpack.c.l.s4 1983009808
        %v2697 = vunpack.c.0.s8 %v2696
        %v2698 = vlaneseq
        %v2699 = vshrl.u32 %v2698, 7
        %v2700 = vsub.s32 %v2697, %v2699
        %v2701 = vrot.slane %v2693, %v2700
        %v2703 = vunpack.c.l.s4 1983009808
        %v2704 = vunpack.c.0.s8 %v2703
        %v2705 = vlaneseq
        %v2706 = vshrl.u32 %v2705, 7
        %v2707 = vsub.s32 %v2704, %v2706
        %v2708 = vrot.slane %v2694, %v2707
        %v2709 = vcombine.low %v2685, %v2701
        %v2710 = vcombine.high %v2685, %v2701
        %v2712 = vunpack.c.l.s4 1934713408
        %v2713 = vunpack.c.0.s8 %v2712
        %v2714 = vlaneseq
        %v2715 = vshrl.u32 %v2714, 7
        %v2716 = vsub.s32 %v2713, %v2715
        %v2717 = vrot.slane %v2709, %v2716
        %v2719 = vunpack.c.l.s4 1934713408
        %v2720 = vunpack.c.0.s8 %v2719
        %v2721 = vlaneseq
        %v2722 = vshrl.u32 %v2721, 7
        %v2723 = vsub.s32 %v2720, %v2722
        %v2724 = vrot.slane %v2710, %v2723
        %v2725 = vcombine.low %v2692, %v2708
        %v2726 = vcombine.high %v2692, %v2708
        %v2728 = vunpack.c.l.s4 1934713408
        %v2729 = vunpack.c.0.s8 %v2728
        %v2730 = vlaneseq
        %v2731 = vshrl.u32 %v2730, 7
        %v2732 = vsub.s32 %v2729, %v2731
        %v2733 = vrot.slane %v2725, %v2732
        %v2735 = vunpack.c.l.s4 1934713408
        %v2736 = vunpack.c.0.s8 %v2735
        %v2737 = vlaneseq
        %v2738 = vshrl.u32 %v2737, 7
        %v2739 = vsub.s32 %v2736, %v2738
        %v2740 = vrot.slane %v2726, %v2739
        %v2741 = vcombine.high %v2717, 0.0
        %v2742 = vcombine.high %v2724, 0.0
        %v2743 = vcombine.high %v2733, 0.0
        %v2744 = vcombine.high %v2740, 0.0
        %v2745 = vcombine.low %v1424, %v2524
        %v2746 = vcombine.high %v1424, %v2524
        %v2748 = vunpack.c.l.s4 1983009808
        %v2749 = vunpack.c.0.s8 %v2748
        %v2750 = vlaneseq
        %v2751 = vshrl.u32 %v2750, 7
        %v2752 = vsub.s32 %v2749, %v2751
        %v2753 = vrot.slane %v2745, %v2752
        %v2755 = vunpack.c.l.s4 1983009808
        %v2756 = vunpack.c.0.s8 %v2755
        %v2757 = vlaneseq
        %v2758 = vshrl.u32 %v2757, 7
        %v2759 = vsub.s32 %v2756, %v2758
        %v2760 = vrot.slane %v2746, %v2759
        %v2761 = vcombine.low %v2512, %v2536
        %v2762 = vcombine.high %v2512, %v2536
        %v2764 = vunpack.c.l.s4 1983009808
        %v2765 = vunpack.c.0.s8 %v2764
        %v2766 = vlaneseq
        %v2767 = vshrl.u32 %v2766, 7
        %v2768 = vsub.s32 %v2765, %v2767
        %v2769 = vrot.slane %v2761, %v2768
        %v2771 = vunpack.c.l.s4 1983009808
        %v2772 = vunpack.c.0.s8 %v2771
        %v2773 = vlaneseq
        %v2774 = vshrl.u32 %v2773, 7
        %v2775 = vsub.s32 %v2772, %v2774
        %v2776 = vrot.slane %v2762, %v2775
        %v2777 = vcombine.low %v2753, %v2769
        %v2778 = vcombine.high %v2753, %v2769
        %v2780 = vunpack.c.l.s4 1934713408
        %v2781 = vunpack.c.0.s8 %v2780
        %v2782 = vlaneseq
        %v2783 = vshrl.u32 %v2782, 7
        %v2784 = vsub.s32 %v2781, %v2783
        %v2785 = vrot.slane %v2777, %v2784
        %v2787 = vunpack.c.l.s4 1934713408
        %v2788 = vunpack.c.0.s8 %v2787
        %v2789 = vlaneseq
        %v2790 = vshrl.u32 %v2789, 7
        %v2791 = vsub.s32 %v2788, %v2790
        %v2792 = vrot.slane %v2778, %v2791
        %v2793 = vcombine.low %v2760, %v2776
        %v2794 = vcombine.high %v2760, %v2776
        %v2796 = vunpack.c.l.s4 1934713408
        %v2797 = vunpack.c.0.s8 %v2796
        %v2798 = vlaneseq
        %v2799 = vshrl.u32 %v2798, 7
        %v2800 = vsub.s32 %v2797, %v2799
        %v2801 = vrot.slane %v2793, %v2800
        %v2803 = vunpack.c.l.s4 1934713408
        %v2804 = vunpack.c.0.s8 %v2803
        %v2805 = vlaneseq
        %v2806 = vshrl.u32 %v2805, 7
        %v2807 = vsub.s32 %v2804, %v2806
        %v2808 = vrot.slane %v2794, %v2807
        %v2809 = vcombine.high %v2785, 0.0
        %v2810 = vcombine.high %v2792, 0.0
        %v2811 = vcombine.high %v2801, 0.0
        %v2812 = vcombine.high %v2808, 0.0
        %v2813 = vld [vmem:[%s892] sm:$0x1]
        %v2814 = vld [vmem:[%s895] sm:$0x1]
        %v2815 = vld [vmem:[%s898] sm:$0x1]
        %v2816 = vld [vmem:[%s901] sm:$0x1]
        %vm2817 = vcmask 125952
        %v2818 = vsel %vm2817, %v1645, 0.0
        %2819 = vadd.xlane.f32.xlu0 %v2818
        %v2820 = vpop.xlane.xlu0 %2819
        %v2821 = vsel %vm2817, %v1669, 0.0
        %2822 = vadd.xlane.f32.xlu0 %v2821
        %v2823 = vpop.xlane.xlu0 %2822
        %v2824 = vsel %vm2817, %v1652, 0.0
        %2825 = vadd.xlane.f32.xlu0 %v2824
        %v2826 = vpop.xlane.xlu0 %2825
        %v2827 = vsel %vm2817, %v1670, 0.0
        %2828 = vadd.xlane.f32.xlu0 %v2827
        %v2829 = vpop.xlane.xlu0 %2828
        %v2830 = vsel %vm2817, %v1661, 0.0
        %2831 = vadd.xlane.f32.xlu0 %v2830
        %v2832 = vpop.xlane.xlu0 %2831
        %v2833 = vsel %vm2817, %v1671, 0.0
        %2834 = vadd.xlane.f32.xlu0 %v2833
        %v2835 = vpop.xlane.xlu0 %2834
        %v2836 = vsel %vm2817, %v1668, 0.0
        %2837 = vadd.xlane.f32.xlu0 %v2836
        %v2838 = vpop.xlane.xlu0 %2837
        %v2839 = vsel %vm2817, %v1672, 0.0
        %2840 = vadd.xlane.f32.xlu0 %v2839
        %v2841 = vpop.xlane.xlu0 %2840
        %v2842 = vsel %vm2817, %v1713, 0.0
        %2843 = vadd.xlane.f32.xlu0 %v2842
        %v2844 = vpop.xlane.xlu0 %2843
        %v2845 = vsel %vm2817, %v1737, 0.0
        %2846 = vadd.xlane.f32.xlu0 %v2845
        %v2847 = vpop.xlane.xlu0 %2846
        %v2848 = vsel %vm2817, %v1720, 0.0
        %2849 = vadd.xlane.f32.xlu0 %v2848
        %v2850 = vpop.xlane.xlu0 %2849
        %v2851 = vsel %vm2817, %v1738, 0.0
        %2852 = vadd.xlane.f32.xlu0 %v2851
        %v2853 = vpop.xlane.xlu0 %2852
        %v2854 = vsel %vm2817, %v1729, 0.0
        %2855 = vadd.xlane.f32.xlu0 %v2854
        %v2856 = vpop.xlane.xlu0 %2855
        %v2857 = vsel %vm2817, %v1739, 0.0
        %2858 = vadd.xlane.f32.xlu0 %v2857
        %v2859 = vpop.xlane.xlu0 %2858
        %v2860 = vsel %vm2817, %v1736, 0.0
        %2861 = vadd.xlane.f32.xlu0 %v2860
        %v2862 = vpop.xlane.xlu0 %2861
        %v2863 = vsel %vm2817, %v1740, 0.0
        %2864 = vadd.xlane.f32.xlu0 %v2863
        %v2865 = vpop.xlane.xlu0 %2864
        %v2866 = vsel %vm2817, %v1781, 0.0
        %2867 = vadd.xlane.f32.xlu0 %v2866
        %v2868 = vpop.xlane.xlu0 %2867
        %v2869 = vsel %vm2817, %v1805, 0.0
        %2870 = vadd.xlane.f32.xlu0 %v2869
        %v2871 = vpop.xlane.xlu0 %2870
        %v2872 = vsel %vm2817, %v1788, 0.0
        %2873 = vadd.xlane.f32.xlu0 %v2872
        %v2874 = vpop.xlane.xlu0 %2873
        %v2875 = vsel %vm2817, %v1806, 0.0
        %2876 = vadd.xlane.f32.xlu0 %v2875
        %v2877 = vpop.xlane.xlu0 %2876
        %v2878 = vsel %vm2817, %v1797, 0.0
        %2879 = vadd.xlane.f32.xlu0 %v2878
        %v2880 = vpop.xlane.xlu0 %2879
        %v2881 = vsel %vm2817, %v1807, 0.0
        %2882 = vadd.xlane.f32.xlu0 %v2881
        %v2883 = vpop.xlane.xlu0 %2882
        %v2884 = vsel %vm2817, %v1804, 0.0
        %2885 = vadd.xlane.f32.xlu0 %v2884
        %v2886 = vpop.xlane.xlu0 %2885
        %v2887 = vsel %vm2817, %v1808, 0.0
        %2888 = vadd.xlane.f32.xlu0 %v2887
        %v2889 = vpop.xlane.xlu0 %2888
        %v2890 = vsel %vm2817, %v1849, 0.0
        %2891 = vadd.xlane.f32.xlu0 %v2890
        %v2892 = vpop.xlane.xlu0 %2891
        %v2893 = vsel %vm2817, %v1873, 0.0
        %2894 = vadd.xlane.f32.xlu0 %v2893
        %v2895 = vpop.xlane.xlu0 %2894
        %v2896 = vsel %vm2817, %v1856, 0.0
        %2897 = vadd.xlane.f32.xlu0 %v2896
        %v2898 = vpop.xlane.xlu0 %2897
        %v2899 = vsel %vm2817, %v1874, 0.0
        %2900 = vadd.xlane.f32.xlu0 %v2899
        %v2901 = vpop.xlane.xlu0 %2900
        %v2902 = vsel %vm2817, %v1865, 0.0
        %2903 = vadd.xlane.f32.xlu0 %v2902
        %v2904 = vpop.xlane.xlu0 %2903
        %v2905 = vsel %vm2817, %v1875, 0.0
        %2906 = vadd.xlane.f32.xlu0 %v2905
        %v2907 = vpop.xlane.xlu0 %2906
        %v2908 = vsel %vm2817, %v1872, 0.0
        %2909 = vadd.xlane.f32.xlu0 %v2908
        %v2910 = vpop.xlane.xlu0 %2909
        %v2911 = vsel %vm2817, %v1876, 0.0
        %2912 = vadd.xlane.f32.xlu0 %v2911
        %v2913 = vpop.xlane.xlu0 %2912
        %v2914 = vrcp.pop 16.0
        %v2915 = vmul.f32 %v2820, %v2914
        %v2916 = vmul.f32 %v2823, %v2914
        %v2917 = vmul.f32 %v2826, %v2914
        %v2918 = vmul.f32 %v2829, %v2914
        %v2919 = vmul.f32 %v2832, %v2914
        %v2920 = vmul.f32 %v2835, %v2914
        %v2921 = vmul.f32 %v2838, %v2914
        %v2922 = vmul.f32 %v2841, %v2914
        %v2923 = vmul.f32 %v2844, %v2914
        %v2924 = vmul.f32 %v2847, %v2914
        %v2925 = vmul.f32 %v2850, %v2914
        %v2926 = vmul.f32 %v2853, %v2914
        %v2927 = vmul.f32 %v2856, %v2914
        %v2928 = vmul.f32 %v2859, %v2914
        %v2929 = vmul.f32 %v2862, %v2914
        %v2930 = vmul.f32 %v2865, %v2914
        %v2931 = vmul.f32 %v2868, %v2914
        %v2932 = vmul.f32 %v2871, %v2914
        %v2933 = vmul.f32 %v2874, %v2914
        %v2934 = vmul.f32 %v2877, %v2914
        %v2935 = vmul.f32 %v2880, %v2914
        %v2936 = vmul.f32 %v2883, %v2914
        %v2937 = vmul.f32 %v2886, %v2914
        %v2938 = vmul.f32 %v2889, %v2914
        %v2939 = vmul.f32 %v2892, %v2914
        %v2940 = vmul.f32 %v2895, %v2914
        %v2941 = vmul.f32 %v2898, %v2914
        %v2942 = vmul.f32 %v2901, %v2914
        %v2943 = vmul.f32 %v2904, %v2914
        %v2944 = vmul.f32 %v2907, %v2914
        %v2945 = vmul.f32 %v2910, %v2914
        %v2946 = vmul.f32 %v2913, %v2914
        %v2947 = vsub.f32 %v1645, %v2915
        %v2948 = vsub.f32 %v1669, %v2916
        %v2949 = vsub.f32 %v1652, %v2917
        %v2950 = vsub.f32 %v1670, %v2918
        %v2951 = vsub.f32 %v1661, %v2919
        %v2952 = vsub.f32 %v1671, %v2920
        %v2953 = vsub.f32 %v1668, %v2921
        %v2954 = vsub.f32 %v1672, %v2922
        %v2955 = vsub.f32 %v1713, %v2923
        %v2956 = vsub.f32 %v1737, %v2924
        %v2957 = vsub.f32 %v1720, %v2925
        %v2958 = vsub.f32 %v1738, %v2926
        %v2959 = vsub.f32 %v1729, %v2927
        %v2960 = vsub.f32 %v1739, %v2928
        %v2961 = vsub.f32 %v1736, %v2929
        %v2962 = vsub.f32 %v1740, %v2930
        %v2963 = vsub.f32 %v1781, %v2931
        %v2964 = vsub.f32 %v1805, %v2932
        %v2965 = vsub.f32 %v1788, %v2933
        %v2966 = vsub.f32 %v1806, %v2934
        %v2967 = vsub.f32 %v1797, %v2935
        %v2968 = vsub.f32 %v1807, %v2936
        %v2969 = vsub.f32 %v1804, %v2937
        %v2970 = vsub.f32 %v1808, %v2938
        %v2971 = vsub.f32 %v1849, %v2939
        %v2972 = vsub.f32 %v1873, %v2940
        %v2973 = vsub.f32 %v1856, %v2941
        %v2974 = vsub.f32 %v1874, %v2942
        %v2975 = vsub.f32 %v1865, %v2943
        %v2976 = vsub.f32 %v1875, %v2944
        %v2977 = vsub.f32 %v1872, %v2945
        %v2978 = vsub.f32 %v1876, %v2946
        %v2979 = vmul.f32 %v2947, %v2947
        %v2980 = vmul.f32 %v2948, %v2948
        %v2981 = vmul.f32 %v2949, %v2949
        %v2982 = vmul.f32 %v2950, %v2950
        %v2983 = vmul.f32 %v2951, %v2951
        %v2984 = vmul.f32 %v2952, %v2952
        %v2985 = vmul.f32 %v2953, %v2953
        %v2986 = vmul.f32 %v2954, %v2954
        %v2987 = vmul.f32 %v2955, %v2955
        %v2988 = vmul.f32 %v2956, %v2956
        %v2989 = vmul.f32 %v2957, %v2957
        %v2990 = vmul.f32 %v2958, %v2958
        %v2991 = vmul.f32 %v2959, %v2959
        %v2992 = vmul.f32 %v2960, %v2960
        %v2993 = vmul.f32 %v2961, %v2961
        %v2994 = vmul.f32 %v2962, %v2962
        %v2995 = vmul.f32 %v2963, %v2963
        %v2996 = vmul.f32 %v2964, %v2964
        %v2997 = vmul.f32 %v2965, %v2965
        %v2998 = vmul.f32 %v2966, %v2966
        %v2999 = vmul.f32 %v2967, %v2967
        %v3000 = vmul.f32 %v2968, %v2968
        %v3001 = vmul.f32 %v2969, %v2969
        %v3002 = vmul.f32 %v2970, %v2970
        %v3003 = vmul.f32 %v2971, %v2971
        %v3004 = vmul.f32 %v2972, %v2972
        %v3005 = vmul.f32 %v2973, %v2973
        %v3006 = vmul.f32 %v2974, %v2974
        %v3007 = vmul.f32 %v2975, %v2975
        %v3008 = vmul.f32 %v2976, %v2976
        %v3009 = vmul.f32 %v2977, %v2977
        %v3010 = vmul.f32 %v2978, %v2978
        %v3011 = vsel %vm2817, %v2979, 0.0
        %3012 = vadd.xlane.f32.xlu0 %v3011
        %v3013 = vpop.xlane.xlu0 %3012
        %v3014 = vsel %vm2817, %v2980, 0.0
        %3015 = vadd.xlane.f32.xlu0 %v3014
        %v3016 = vpop.xlane.xlu0 %3015
        %v3017 = vsel %vm2817, %v2981, 0.0
        %3018 = vadd.xlane.f32.xlu0 %v3017
        %v3019 = vpop.xlane.xlu0 %3018
        %v3020 = vsel %vm2817, %v2982, 0.0
        %3021 = vadd.xlane.f32.xlu0 %v3020
        %v3022 = vpop.xlane.xlu0 %3021
        %v3023 = vsel %vm2817, %v2983, 0.0
        %3024 = vadd.xlane.f32.xlu0 %v3023
        %v3025 = vpop.xlane.xlu0 %3024
        %v3026 = vsel %vm2817, %v2984, 0.0
        %3027 = vadd.xlane.f32.xlu0 %v3026
        %v3028 = vpop.xlane.xlu0 %3027
        %v3029 = vsel %vm2817, %v2985, 0.0
        %3030 = vadd.xlane.f32.xlu0 %v3029
        %v3031 = vpop.xlane.xlu0 %3030
        %v3032 = vsel %vm2817, %v2986, 0.0
        %3033 = vadd.xlane.f32.xlu0 %v3032
        %v3034 = vpop.xlane.xlu0 %3033
        %v3035 = vsel %vm2817, %v2987, 0.0
        %3036 = vadd.xlane.f32.xlu0 %v3035
        %v3037 = vpop.xlane.xlu0 %3036
        %v3038 = vsel %vm2817, %v2988, 0.0
        %3039 = vadd.xlane.f32.xlu0 %v3038
        %v3040 = vpop.xlane.xlu0 %3039
        %v3041 = vsel %vm2817, %v2989, 0.0
        %3042 = vadd.xlane.f32.xlu0 %v3041
        %v3043 = vpop.xlane.xlu0 %3042
        %v3044 = vsel %vm2817, %v2990, 0.0
        %3045 = vadd.xlane.f32.xlu0 %v3044
        %v3046 = vpop.xlane.xlu0 %3045
        %v3047 = vsel %vm2817, %v2991, 0.0
        %3048 = vadd.xlane.f32.xlu0 %v3047
        %v3049 = vpop.xlane.xlu0 %3048
        %v3050 = vsel %vm2817, %v2992, 0.0
        %3051 = vadd.xlane.f32.xlu0 %v3050
        %v3052 = vpop.xlane.xlu0 %3051
        %v3053 = vsel %vm2817, %v2993, 0.0
        %3054 = vadd.xlane.f32.xlu0 %v3053
        %v3055 = vpop.xlane.xlu0 %3054
        %v3056 = vsel %vm2817, %v2994, 0.0
        %3057 = vadd.xlane.f32.xlu0 %v3056
        %v3058 = vpop.xlane.xlu0 %3057
        %v3059 = vsel %vm2817, %v2995, 0.0
        %3060 = vadd.xlane.f32.xlu0 %v3059
        %v3061 = vpop.xlane.xlu0 %3060
        %v3062 = vsel %vm2817, %v2996, 0.0
        %3063 = vadd.xlane.f32.xlu0 %v3062
        %v3064 = vpop.xlane.xlu0 %3063
        %v3065 = vsel %vm2817, %v2997, 0.0
        %3066 = vadd.xlane.f32.xlu0 %v3065
        %v3067 = vpop.xlane.xlu0 %3066
        %v3068 = vsel %vm2817, %v2998, 0.0
        %3069 = vadd.xlane.f32.xlu0 %v3068
        %v3070 = vpop.xlane.xlu0 %3069
        %v3071 = vsel %vm2817, %v2999, 0.0
        %3072 = vadd.xlane.f32.xlu0 %v3071
        %v3073 = vpop.xlane.xlu0 %3072
        %v3074 = vsel %vm2817, %v3000, 0.0
        %3075 = vadd.xlane.f32.xlu0 %v3074
        %v3076 = vpop.xlane.xlu0 %3075
        %v3077 = vsel %vm2817, %v3001, 0.0
        %3078 = vadd.xlane.f32.xlu0 %v3077
        %v3079 = vpop.xlane.xlu0 %3078
        %v3080 = vsel %vm2817, %v3002, 0.0
        %3081 = vadd.xlane.f32.xlu0 %v3080
        %v3082 = vpop.xlane.xlu0 %3081
        %v3083 = vsel %vm2817, %v3003, 0.0
        %3084 = vadd.xlane.f32.xlu0 %v3083
        %v3085 = vpop.xlane.xlu0 %3084
        %v3086 = vsel %vm2817, %v3004, 0.0
        %3087 = vadd.xlane.f32.xlu0 %v3086
        %v3088 = vpop.xlane.xlu0 %3087
        %v3089 = vsel %vm2817, %v3005, 0.0
        %3090 = vadd.xlane.f32.xlu0 %v3089
        %v3091 = vpop.xlane.xlu0 %3090
        %v3092 = vsel %vm2817, %v3006, 0.0
        %3093 = vadd.xlane.f32.xlu0 %v3092
        %v3094 = vpop.xlane.xlu0 %3093
        %v3095 = vsel %vm2817, %v3007, 0.0
        %3096 = vadd.xlane.f32.xlu0 %v3095
        %v3097 = vpop.xlane.xlu0 %3096
        %v3098 = vsel %vm2817, %v3008, 0.0
        %3099 = vadd.xlane.f32.xlu0 %v3098
        %v3100 = vpop.xlane.xlu0 %3099
        %v3101 = vsel %vm2817, %v3009, 0.0
        %3102 = vadd.xlane.f32.xlu0 %v3101
        %v3103 = vpop.xlane.xlu0 %3102
        %v3104 = vsel %vm2817, %v3010, 0.0
        %3105 = vadd.xlane.f32.xlu0 %v3104
        %v3106 = vpop.xlane.xlu0 %3105
        %v3107 = vmul.f32 %v3013, %v2914
        %v3108 = vmul.f32 %v3016, %v2914
        %v3109 = vmul.f32 %v3019, %v2914
        %v3110 = vmul.f32 %v3022, %v2914
        %v3111 = vmul.f32 %v3025, %v2914
        %v3112 = vmul.f32 %v3028, %v2914
        %v3113 = vmul.f32 %v3031, %v2914
        %v3114 = vmul.f32 %v3034, %v2914
        %v3115 = vmul.f32 %v3037, %v2914
        %v3116 = vmul.f32 %v3040, %v2914
        %v3117 = vmul.f32 %v3043, %v2914
        %v3118 = vmul.f32 %v3046, %v2914
        %v3119 = vmul.f32 %v3049, %v2914
        %v3120 = vmul.f32 %v3052, %v2914
        %v3121 = vmul.f32 %v3055, %v2914
        %v3122 = vmul.f32 %v3058, %v2914
        %v3123 = vmul.f32 %v3061, %v2914
        %v3124 = vmul.f32 %v3064, %v2914
        %v3125 = vmul.f32 %v3067, %v2914
        %v3126 = vmul.f32 %v3070, %v2914
        %v3127 = vmul.f32 %v3073, %v2914
        %v3128 = vmul.f32 %v3076, %v2914
        %v3129 = vmul.f32 %v3079, %v2914
        %v3130 = vmul.f32 %v3082, %v2914
        %v3131 = vmul.f32 %v3085, %v2914
        %v3132 = vmul.f32 %v3088, %v2914
        %v3133 = vmul.f32 %v3091, %v2914
        %v3134 = vmul.f32 %v3094, %v2914
        %v3135 = vmul.f32 %v3097, %v2914
        %v3136 = vmul.f32 %v3100, %v2914
        %v3137 = vmul.f32 %v3103, %v2914
        %v3138 = vmul.f32 %v3106, %v2914
        %v3139 = vadd.f32 %v3107, 1e-05
        %v3140 = vadd.f32 %v3108, 1e-05
        %v3141 = vadd.f32 %v3109, 1e-05
        %v3142 = vadd.f32 %v3110, 1e-05
        %v3143 = vadd.f32 %v3111, 1e-05
        %v3144 = vadd.f32 %v3112, 1e-05
        %v3145 = vadd.f32 %v3113, 1e-05
        %v3146 = vadd.f32 %v3114, 1e-05
        %v3147 = vadd.f32 %v3115, 1e-05
        %v3148 = vadd.f32 %v3116, 1e-05
        %v3149 = vadd.f32 %v3117, 1e-05
        %v3150 = vadd.f32 %v3118, 1e-05
        %v3151 = vadd.f32 %v3119, 1e-05
        %v3152 = vadd.f32 %v3120, 1e-05
        %v3153 = vadd.f32 %v3121, 1e-05
        %v3154 = vadd.f32 %v3122, 1e-05
        %v3155 = vadd.f32 %v3123, 1e-05
        %v3156 = vadd.f32 %v3124, 1e-05
        %v3157 = vadd.f32 %v3125, 1e-05
        %v3158 = vadd.f32 %v3126, 1e-05
        %v3159 = vadd.f32 %v3127, 1e-05
        %v3160 = vadd.f32 %v3128, 1e-05
        %v3161 = vadd.f32 %v3129, 1e-05
        %v3162 = vadd.f32 %v3130, 1e-05
        %v3163 = vadd.f32 %v3131, 1e-05
        %v3164 = vadd.f32 %v3132, 1e-05
        %v3165 = vadd.f32 %v3133, 1e-05
        %v3166 = vadd.f32 %v3134, 1e-05
        %v3167 = vadd.f32 %v3135, 1e-05
        %v3168 = vadd.f32 %v3136, 1e-05
        %v3169 = vadd.f32 %v3137, 1e-05
        %v3170 = vadd.f32 %v3138, 1e-05
        %v3171 = vrsqrt.pop %v3139
        %v3172 = vrsqrt.pop %v3140
        %v3173 = vrsqrt.pop %v3141
        %v3174 = vrsqrt.pop %v3142
        %v3175 = vrsqrt.pop %v3143
        %v3176 = vrsqrt.pop %v3144
        %v3177 = vrsqrt.pop %v3145
        %v3178 = vrsqrt.pop %v3146
        %v3179 = vrsqrt.pop %v3147
        %v3180 = vrsqrt.pop %v3148
        %v3181 = vrsqrt.pop %v3149
        %v3182 = vrsqrt.pop %v3150
        %v3183 = vrsqrt.pop %v3151
        %v3184 = vrsqrt.pop %v3152
        %v3185 = vrsqrt.pop %v3153
        %v3186 = vrsqrt.pop %v3154
        %v3187 = vrsqrt.pop %v3155
        %v3188 = vrsqrt.pop %v3156
        %v3189 = vrsqrt.pop %v3157
        %v3190 = vrsqrt.pop %v3158
        %v3191 = vrsqrt.pop %v3159
        %v3192 = vrsqrt.pop %v3160
        %v3193 = vrsqrt.pop %v3161
        %v3194 = vrsqrt.pop %v3162
        %v3195 = vrsqrt.pop %v3163
        %v3196 = vrsqrt.pop %v3164
        %v3197 = vrsqrt.pop %v3165
        %v3198 = vrsqrt.pop %v3166
        %v3199 = vrsqrt.pop %v3167
        %v3200 = vrsqrt.pop %v3168
        %v3201 = vrsqrt.pop %v3169
        %v3202 = vrsqrt.pop %v3170
        %v3203 = vmul.f32 %v2947, %v3171
        %v3204 = vmul.f32 %v2948, %v3172
        %v3205 = vmul.f32 %v2949, %v3173
        %v3206 = vmul.f32 %v2950, %v3174
        %v3207 = vmul.f32 %v2951, %v3175
        %v3208 = vmul.f32 %v2952, %v3176
        %v3209 = vmul.f32 %v2953, %v3177
        %v3210 = vmul.f32 %v2954, %v3178
        %v3211 = vmul.f32 %v2955, %v3179
        %v3212 = vmul.f32 %v2956, %v3180
        %v3213 = vmul.f32 %v2957, %v3181
        %v3214 = vmul.f32 %v2958, %v3182
        %v3215 = vmul.f32 %v2959, %v3183
        %v3216 = vmul.f32 %v2960, %v3184
        %v3217 = vmul.f32 %v2961, %v3185
        %v3218 = vmul.f32 %v2962, %v3186
        %v3219 = vmul.f32 %v2963, %v3187
        %v3220 = vmul.f32 %v2964, %v3188
        %v3221 = vmul.f32 %v2965, %v3189
        %v3222 = vmul.f32 %v2966, %v3190
        %v3223 = vmul.f32 %v2967, %v3191
        %v3224 = vmul.f32 %v2968, %v3192
        %v3225 = vmul.f32 %v2969, %v3193
        %v3226 = vmul.f32 %v2970, %v3194
        %v3227 = vmul.f32 %v2971, %v3195
        %v3228 = vmul.f32 %v2972, %v3196
        %v3229 = vmul.f32 %v2973, %v3197
        %v3230 = vmul.f32 %v2974, %v3198
        %v3231 = vmul.f32 %v2975, %v3199
        %v3232 = vmul.f32 %v2976, %v3200
        %v3233 = vmul.f32 %v2977, %v3201
        %v3234 = vmul.f32 %v2978, %v3202
        %v3236 = vlaneseq
        %v3237 = vshrl.u32 %v3236, 7
        %v3238 = vsub.s32 0, %v3237
        %v3239 = vrot.slane %v2813, %v3238
        %v3241 = vmul.f32 %v3203, %v3239
        %v3242 = vmul.f32 %v3204, %v3239
        %v3243 = vmul.f32 %v3205, %v3239
        %v3244 = vmul.f32 %v3206, %v3239
        %v3245 = vmul.f32 %v3207, %v3239
        %v3246 = vmul.f32 %v3208, %v3239
        %v3247 = vmul.f32 %v3209, %v3239
        %v3248 = vmul.f32 %v3210, %v3239
        %v3249 = vmul.f32 %v3211, %v3239
        %v3250 = vmul.f32 %v3212, %v3239
        %v3251 = vmul.f32 %v3213, %v3239
        %v3252 = vmul.f32 %v3214, %v3239
        %v3253 = vmul.f32 %v3215, %v3239
        %v3254 = vmul.f32 %v3216, %v3239
        %v3255 = vmul.f32 %v3217, %v3239
        %v3256 = vmul.f32 %v3218, %v3239
        %v3257 = vmul.f32 %v3219, %v3239
        %v3258 = vmul.f32 %v3220, %v3239
        %v3259 = vmul.f32 %v3221, %v3239
        %v3260 = vmul.f32 %v3222, %v3239
        %v3261 = vmul.f32 %v3223, %v3239
        %v3262 = vmul.f32 %v3224, %v3239
        %v3263 = vmul.f32 %v3225, %v3239
        %v3264 = vmul.f32 %v3226, %v3239
        %v3265 = vmul.f32 %v3227, %v3239
        %v3266 = vmul.f32 %v3228, %v3239
        %v3267 = vmul.f32 %v3229, %v3239
        %v3268 = vmul.f32 %v3230, %v3239
        %v3269 = vmul.f32 %v3231, %v3239
        %v3270 = vmul.f32 %v3232, %v3239
        %v3271 = vmul.f32 %v3233, %v3239
        %v3272 = vmul.f32 %v3234, %v3239
        %v3274 = vlaneseq
        %v3275 = vshrl.u32 %v3274, 7
        %v3276 = vsub.s32 0, %v3275
        %v3277 = vrot.slane %v2814, %v3276
        %v3279 = vadd.f32 %v3241, %v3277
        %v3280 = vadd.f32 %v3242, %v3277
        %v3281 = vadd.f32 %v3243, %v3277
        %v3282 = vadd.f32 %v3244, %v3277
        %v3283 = vadd.f32 %v3245, %v3277
        %v3284 = vadd.f32 %v3246, %v3277
        %v3285 = vadd.f32 %v3247, %v3277
        %v3286 = vadd.f32 %v3248, %v3277
        %v3287 = vadd.f32 %v3249, %v3277
        %v3288 = vadd.f32 %v3250, %v3277
        %v3289 = vadd.f32 %v3251, %v3277
        %v3290 = vadd.f32 %v3252, %v3277
        %v3291 = vadd.f32 %v3253, %v3277
        %v3292 = vadd.f32 %v3254, %v3277
        %v3293 = vadd.f32 %v3255, %v3277
        %v3294 = vadd.f32 %v3256, %v3277
        %v3295 = vadd.f32 %v3257, %v3277
        %v3296 = vadd.f32 %v3258, %v3277
        %v3297 = vadd.f32 %v3259, %v3277
        %v3298 = vadd.f32 %v3260, %v3277
        %v3299 = vadd.f32 %v3261, %v3277
        %v3300 = vadd.f32 %v3262, %v3277
        %v3301 = vadd.f32 %v3263, %v3277
        %v3302 = vadd.f32 %v3264, %v3277
        %v3303 = vadd.f32 %v3265, %v3277
        %v3304 = vadd.f32 %v3266, %v3277
        %v3305 = vadd.f32 %v3267, %v3277
        %v3306 = vadd.f32 %v3268, %v3277
        %v3307 = vadd.f32 %v3269, %v3277
        %v3308 = vadd.f32 %v3270, %v3277
        %v3309 = vadd.f32 %v3271, %v3277
        %v3310 = vadd.f32 %v3272, %v3277
        %v3311 = vsel %vm2817, %v1997, 0.0
        %3312 = vadd.xlane.f32.xlu0 %v3311
        %v3313 = vpop.xlane.xlu0 %3312
        %v3314 = vsel %vm2817, %v2021, 0.0
        %3315 = vadd.xlane.f32.xlu0 %v3314
        %v3316 = vpop.xlane.xlu0 %3315
        %v3317 = vsel %vm2817, %v2004, 0.0
        %3318 = vadd.xlane.f32.xlu0 %v3317
        %v3319 = vpop.xlane.xlu0 %3318
        %v3320 = vsel %vm2817, %v2022, 0.0
        %3321 = vadd.xlane.f32.xlu0 %v3320
        %v3322 = vpop.xlane.xlu0 %3321
        %v3323 = vsel %vm2817, %v2013, 0.0
        %3324 = vadd.xlane.f32.xlu0 %v3323
        %v3325 = vpop.xlane.xlu0 %3324
        %v3326 = vsel %vm2817, %v2023, 0.0
        %3327 = vadd.xlane.f32.xlu0 %v3326
        %v3328 = vpop.xlane.xlu0 %3327
        %v3329 = vsel %vm2817, %v2020, 0.0
        %3330 = vadd.xlane.f32.xlu0 %v3329
        %v3331 = vpop.xlane.xlu0 %3330
        %v3332 = vsel %vm2817, %v2024, 0.0
        %3333 = vadd.xlane.f32.xlu0 %v3332
        %v3334 = vpop.xlane.xlu0 %3333
        %v3335 = vsel %vm2817, %v2065, 0.0
        %3336 = vadd.xlane.f32.xlu0 %v3335
        %v3337 = vpop.xlane.xlu0 %3336
        %v3338 = vsel %vm2817, %v2089, 0.0
        %3339 = vadd.xlane.f32.xlu0 %v3338
        %v3340 = vpop.xlane.xlu0 %3339
        %v3341 = vsel %vm2817, %v2072, 0.0
        %3342 = vadd.xlane.f32.xlu0 %v3341
        %v3343 = vpop.xlane.xlu0 %3342
        %v3344 = vsel %vm2817, %v2090, 0.0
        %3345 = vadd.xlane.f32.xlu0 %v3344
        %v3346 = vpop.xlane.xlu0 %3345
        %v3347 = vsel %vm2817, %v2081, 0.0
        %3348 = vadd.xlane.f32.xlu0 %v3347
        %v3349 = vpop.xlane.xlu0 %3348
        %v3350 = vsel %vm2817, %v2091, 0.0
        %3351 = vadd.xlane.f32.xlu0 %v3350
        %v3352 = vpop.xlane.xlu0 %3351
        %v3353 = vsel %vm2817, %v2088, 0.0
        %3354 = vadd.xlane.f32.xlu0 %v3353
        %v3355 = vpop.xlane.xlu0 %3354
        %v3356 = vsel %vm2817, %v2092, 0.0
        %3357 = vadd.xlane.f32.xlu0 %v3356
        %v3358 = vpop.xlane.xlu0 %3357
        %v3359 = vsel %vm2817, %v2133, 0.0
        %3360 = vadd.xlane.f32.xlu0 %v3359
        %v3361 = vpop.xlane.xlu0 %3360
        %v3362 = vsel %vm2817, %v2157, 0.0
        %3363 = vadd.xlane.f32.xlu0 %v3362
        %v3364 = vpop.xlane.xlu0 %3363
        %v3365 = vsel %vm2817, %v2140, 0.0
        %3366 = vadd.xlane.f32.xlu0 %v3365
        %v3367 = vpop.xlane.xlu0 %3366
        %v3368 = vsel %vm2817, %v2158, 0.0
        %3369 = vadd.xlane.f32.xlu0 %v3368
        %v3370 = vpop.xlane.xlu0 %3369
        %v3371 = vsel %vm2817, %v2149, 0.0
        %3372 = vadd.xlane.f32.xlu0 %v3371
        %v3373 = vpop.xlane.xlu0 %3372
        %v3374 = vsel %vm2817, %v2159, 0.0
        %3375 = vadd.xlane.f32.xlu0 %v3374
        %v3376 = vpop.xlane.xlu0 %3375
        %v3377 = vsel %vm2817, %v2156, 0.0
        %3378 = vadd.xlane.f32.xlu0 %v3377
        %v3379 = vpop.xlane.xlu0 %3378
        %v3380 = vsel %vm2817, %v2160, 0.0
        %3381 = vadd.xlane.f32.xlu0 %v3380
        %v3382 = vpop.xlane.xlu0 %3381
        %v3383 = vsel %vm2817, %v2201, 0.0
        %3384 = vadd.xlane.f32.xlu0 %v3383
        %v3385 = vpop.xlane.xlu0 %3384
        %v3386 = vsel %vm2817, %v2225, 0.0
        %3387 = vadd.xlane.f32.xlu0 %v3386
        %v3388 = vpop.xlane.xlu0 %3387
        %v3389 = vsel %vm2817, %v2208, 0.0
        %3390 = vadd.xlane.f32.xlu0 %v3389
        %v3391 = vpop.xlane.xlu0 %3390
        %v3392 = vsel %vm2817, %v2226, 0.0
        %3393 = vadd.xlane.f32.xlu0 %v3392
        %v3394 = vpop.xlane.xlu0 %3393
        %v3395 = vsel %vm2817, %v2217, 0.0
        %3396 = vadd.xlane.f32.xlu0 %v3395
        %v3397 = vpop.xlane.xlu0 %3396
        %v3398 = vsel %vm2817, %v2227, 0.0
        %3399 = vadd.xlane.f32.xlu0 %v3398
        %v3400 = vpop.xlane.xlu0 %3399
        %v3401 = vsel %vm2817, %v2224, 0.0
        %3402 = vadd.xlane.f32.xlu0 %v3401
        %v3403 = vpop.xlane.xlu0 %3402
        %v3404 = vsel %vm2817, %v2228, 0.0
        %3405 = vadd.xlane.f32.xlu0 %v3404
        %v3406 = vpop.xlane.xlu0 %3405
        %v3407 = vsel %vm2817, %v2269, 0.0
        %3408 = vadd.xlane.f32.xlu0 %v3407
        %v3409 = vpop.xlane.xlu0 %3408
        %v3410 = vsel %vm2817, %v2293, 0.0
        %3411 = vadd.xlane.f32.xlu0 %v3410
        %v3412 = vpop.xlane.xlu0 %3411
        %v3413 = vsel %vm2817, %v2276, 0.0
        %3414 = vadd.xlane.f32.xlu0 %v3413
        %v3415 = vpop.xlane.xlu0 %3414
        %v3416 = vsel %vm2817, %v2294, 0.0
        %3417 = vadd.xlane.f32.xlu0 %v3416
        %v3418 = vpop.xlane.xlu0 %3417
        %v3419 = vsel %vm2817, %v2285, 0.0
        %3420 = vadd.xlane.f32.xlu0 %v3419
        %v3421 = vpop.xlane.xlu0 %3420
        %v3422 = vsel %vm2817, %v2295, 0.0
        %3423 = vadd.xlane.f32.xlu0 %v3422
        %v3424 = vpop.xlane.xlu0 %3423
        %v3425 = vsel %vm2817, %v2292, 0.0
        %3426 = vadd.xlane.f32.xlu0 %v3425
        %v3427 = vpop.xlane.xlu0 %3426
        %v3428 = vsel %vm2817, %v2296, 0.0
        %3429 = vadd.xlane.f32.xlu0 %v3428
        %v3430 = vpop.xlane.xlu0 %3429
        %v3431 = vsel %vm2817, %v2337, 0.0
        %3432 = vadd.xlane.f32.xlu0 %v3431
        %v3433 = vpop.xlane.xlu0 %3432
        %v3434 = vsel %vm2817, %v2361, 0.0
        %3435 = vadd.xlane.f32.xlu0 %v3434
        %v3436 = vpop.xlane.xlu0 %3435
        %v3437 = vsel %vm2817, %v2344, 0.0
        %3438 = vadd.xlane.f32.xlu0 %v3437
        %v3439 = vpop.xlane.xlu0 %3438
        %v3440 = vsel %vm2817, %v2362, 0.0
        %3441 = vadd.xlane.f32.xlu0 %v3440
        %v3442 = vpop.xlane.xlu0 %3441
        %v3443 = vsel %vm2817, %v2353, 0.0
        %3444 = vadd.xlane.f32.xlu0 %v3443
        %v3445 = vpop.xlane.xlu0 %3444
        %v3446 = vsel %vm2817, %v2363, 0.0
        %3447 = vadd.xlane.f32.xlu0 %v3446
        %v3448 = vpop.xlane.xlu0 %3447
        %v3449 = vsel %vm2817, %v2360, 0.0
        %3450 = vadd.xlane.f32.xlu0 %v3449
        %v3451 = vpop.xlane.xlu0 %3450
        %v3452 = vsel %vm2817, %v2364, 0.0
        %3453 = vadd.xlane.f32.xlu0 %v3452
        %v3454 = vpop.xlane.xlu0 %3453
        %v3455 = vsel %vm2817, %v2405, 0.0
        %3456 = vadd.xlane.f32.xlu0 %v3455
        %v3457 = vpop.xlane.xlu0 %3456
        %v3458 = vsel %vm2817, %v2429, 0.0
        %3459 = vadd.xlane.f32.xlu0 %v3458
        %v3460 = vpop.xlane.xlu0 %3459
        %v3461 = vsel %vm2817, %v2412, 0.0
        %3462 = vadd.xlane.f32.xlu0 %v3461
        %v3463 = vpop.xlane.xlu0 %3462
        %v3464 = vsel %vm2817, %v2430, 0.0
        %3465 = vadd.xlane.f32.xlu0 %v3464
        %v3466 = vpop.xlane.xlu0 %3465
        %v3467 = vsel %vm2817, %v2421, 0.0
        %3468 = vadd.xlane.f32.xlu0 %v3467
        %v3469 = vpop.xlane.xlu0 %3468
        %v3470 = vsel %vm2817, %v2431, 0.0
        %3471 = vadd.xlane.f32.xlu0 %v3470
        %v3472 = vpop.xlane.xlu0 %3471
        %v3473 = vsel %vm2817, %v2428, 0.0
        %3474 = vadd.xlane.f32.xlu0 %v3473
        %v3475 = vpop.xlane.xlu0 %3474
        %v3476 = vsel %vm2817, %v2432, 0.0
        %3477 = vadd.xlane.f32.xlu0 %v3476
        %v3478 = vpop.xlane.xlu0 %3477
        %v3479 = vsel %vm2817, %v2473, 0.0
        %3480 = vadd.xlane.f32.xlu0 %v3479
        %v3481 = vpop.xlane.xlu0 %3480
        %v3482 = vsel %vm2817, %v2497, 0.0
        %3483 = vadd.xlane.f32.xlu0 %v3482
        %v3484 = vpop.xlane.xlu0 %3483
        %v3485 = vsel %vm2817, %v2480, 0.0
        %3486 = vadd.xlane.f32.xlu0 %v3485
        %v3487 = vpop.xlane.xlu0 %3486
        %v3488 = vsel %vm2817, %v2498, 0.0
        %3489 = vadd.xlane.f32.xlu0 %v3488
        %v3490 = vpop.xlane.xlu0 %3489
        %v3491 = vsel %vm2817, %v2489, 0.0
        %3492 = vadd.xlane.f32.xlu0 %v3491
        %v3493 = vpop.xlane.xlu0 %3492
        %v3494 = vsel %vm2817, %v2499, 0.0
        %3495 = vadd.xlane.f32.xlu0 %v3494
        %v3496 = vpop.xlane.xlu0 %3495
        %v3497 = vsel %vm2817, %v2496, 0.0
        %3498 = vadd.xlane.f32.xlu0 %v3497
        %v3499 = vpop.xlane.xlu0 %3498
        %v3500 = vsel %vm2817, %v2500, 0.0
        %3501 = vadd.xlane.f32.xlu0 %v3500
        %v3502 = vpop.xlane.xlu0 %3501
        %v3503 = vmul.f32 %v3313, %v2914
        %v3504 = vmul.f32 %v3316, %v2914
        %v3505 = vmul.f32 %v3319, %v2914
        %v3506 = vmul.f32 %v3322, %v2914
        %v3507 = vmul.f32 %v3325, %v2914
        %v3508 = vmul.f32 %v3328, %v2914
        %v3509 = vmul.f32 %v3331, %v2914
        %v3510 = vmul.f32 %v3334, %v2914
        %v3511 = vmul.f32 %v3337, %v2914
        %v3512 = vmul.f32 %v3340, %v2914
        %v3513 = vmul.f32 %v3343, %v2914
        %v3514 = vmul.f32 %v3346, %v2914
        %v3515 = vmul.f32 %v3349, %v2914
        %v3516 = vmul.f32 %v3352, %v2914
        %v3517 = vmul.f32 %v3355, %v2914
        %v3518 = vmul.f32 %v3358, %v2914
        %v3519 = vmul.f32 %v3361, %v2914
        %v3520 = vmul.f32 %v3364, %v2914
        %v3521 = vmul.f32 %v3367, %v2914
        %v3522 = vmul.f32 %v3370, %v2914
        %v3523 = vmul.f32 %v3373, %v2914
        %v3524 = vmul.f32 %v3376, %v2914
        %v3525 = vmul.f32 %v3379, %v2914
        %v3526 = vmul.f32 %v3382, %v2914
        %v3527 = vmul.f32 %v3385, %v2914
        %v3528 = vmul.f32 %v3388, %v2914
        %v3529 = vmul.f32 %v3391, %v2914
        %v3530 = vmul.f32 %v3394, %v2914
        %v3531 = vmul.f32 %v3397, %v2914
        %v3532 = vmul.f32 %v3400, %v2914
        %v3533 = vmul.f32 %v3403, %v2914
        %v3534 = vmul.f32 %v3406, %v2914
        %v3535 = vmul.f32 %v3409, %v2914
        %v3536 = vmul.f32 %v3412, %v2914
        %v3537 = vmul.f32 %v3415, %v2914
        %v3538 = vmul.f32 %v3418, %v2914
        %v3539 = vmul.f32 %v3421, %v2914
        %v3540 = vmul.f32 %v3424, %v2914
        %v3541 = vmul.f32 %v3427, %v2914
        %v3542 = vmul.f32 %v3430, %v2914
        %v3543 = vmul.f32 %v3433, %v2914
        %v3544 = vmul.f32 %v3436, %v2914
        %v3545 = vmul.f32 %v3439, %v2914
        %v3546 = vmul.f32 %v3442, %v2914
        %v3547 = vmul.f32 %v3445, %v2914
        %v3548 = vmul.f32 %v3448, %v2914
        %v3549 = vmul.f32 %v3451, %v2914
        %v3550 = vmul.f32 %v3454, %v2914
        %v3551 = vmul.f32 %v3457, %v2914
        %v3552 = vmul.f32 %v3460, %v2914
        %v3553 = vmul.f32 %v3463, %v2914
        %v3554 = vmul.f32 %v3466, %v2914
        %v3555 = vmul.f32 %v3469, %v2914
        %v3556 = vmul.f32 %v3472, %v2914
        %v3557 = vmul.f32 %v3475, %v2914
        %v3558 = vmul.f32 %v3478, %v2914
        %v3559 = vmul.f32 %v3481, %v2914
        %v3560 = vmul.f32 %v3484, %v2914
        %v3561 = vmul.f32 %v3487, %v2914
        %v3562 = vmul.f32 %v3490, %v2914
        %v3563 = vmul.f32 %v3493, %v2914
        %v3564 = vmul.f32 %v3496, %v2914
        %v3565 = vmul.f32 %v3499, %v2914
        %v3566 = vmul.f32 %v3502, %v2914
        %v3567 = vsub.f32 %v1997, %v3503
        %v3568 = vsub.f32 %v2021, %v3504
        %v3569 = vsub.f32 %v2004, %v3505
        %v3570 = vsub.f32 %v2022, %v3506
        %v3571 = vsub.f32 %v2013, %v3507
        %v3572 = vsub.f32 %v2023, %v3508
        %v3573 = vsub.f32 %v2020, %v3509
        %v3574 = vsub.f32 %v2024, %v3510
        %v3575 = vsub.f32 %v2065, %v3511
        %v3576 = vsub.f32 %v2089, %v3512
        %v3577 = vsub.f32 %v2072, %v3513
        %v3578 = vsub.f32 %v2090, %v3514
        %v3579 = vsub.f32 %v2081, %v3515
        %v3580 = vsub.f32 %v2091, %v3516
        %v3581 = vsub.f32 %v2088, %v3517
        %v3582 = vsub.f32 %v2092, %v3518
        %v3583 = vsub.f32 %v2133, %v3519
        %v3584 = vsub.f32 %v2157, %v3520
        %v3585 = vsub.f32 %v2140, %v3521
        %v3586 = vsub.f32 %v2158, %v3522
        %v3587 = vsub.f32 %v2149, %v3523
        %v3588 = vsub.f32 %v2159, %v3524
        %v3589 = vsub.f32 %v2156, %v3525
        %v3590 = vsub.f32 %v2160, %v3526
        %v3591 = vsub.f32 %v2201, %v3527
        %v3592 = vsub.f32 %v2225, %v3528
        %v3593 = vsub.f32 %v2208, %v3529
        %v3594 = vsub.f32 %v2226, %v3530
        %v3595 = vsub.f32 %v2217, %v3531
        %v3596 = vsub.f32 %v2227, %v3532
        %v3597 = vsub.f32 %v2224, %v3533
        %v3598 = vsub.f32 %v2228, %v3534
        %v3599 = vsub.f32 %v2269, %v3535
        %v3600 = vsub.f32 %v2293, %v3536
        %v3601 = vsub.f32 %v2276, %v3537
        %v3602 = vsub.f32 %v2294, %v3538
        %v3603 = vsub.f32 %v2285, %v3539
        %v3604 = vsub.f32 %v2295, %v3540
        %v3605 = vsub.f32 %v2292, %v3541
        %v3606 = vsub.f32 %v2296, %v3542
        %v3607 = vsub.f32 %v2337, %v3543
        %v3608 = vsub.f32 %v2361, %v3544
        %v3609 = vsub.f32 %v2344, %v3545
        %v3610 = vsub.f32 %v2362, %v3546
        %v3611 = vsub.f32 %v2353, %v3547
        %v3612 = vsub.f32 %v2363, %v3548
        %v3613 = vsub.f32 %v2360, %v3549
        %v3614 = vsub.f32 %v2364, %v3550
        %v3615 = vsub.f32 %v2405, %v3551
        %v3616 = vsub.f32 %v2429, %v3552
        %v3617 = vsub.f32 %v2412, %v3553
        %v3618 = vsub.f32 %v2430, %v3554
        %v3619 = vsub.f32 %v2421, %v3555
        %v3620 = vsub.f32 %v2431, %v3556
        %v3621 = vsub.f32 %v2428, %v3557
        %v3622 = vsub.f32 %v2432, %v3558
        %v3623 = vsub.f32 %v2473, %v3559
        %v3624 = vsub.f32 %v2497, %v3560
        %v3625 = vsub.f32 %v2480, %v3561
        %v3626 = vsub.f32 %v2498, %v3562
        %v3627 = vsub.f32 %v2489, %v3563
        %v3628 = vsub.f32 %v2499, %v3564
        %v3629 = vsub.f32 %v2496, %v3565
        %v3630 = vsub.f32 %v2500, %v3566
        %v3631 = vmul.f32 %v3567, %v3567
        %v3632 = vmul.f32 %v3568, %v3568
        %v3633 = vmul.f32 %v3569, %v3569
        %v3634 = vmul.f32 %v3570, %v3570
        %v3635 = vmul.f32 %v3571, %v3571
        %v3636 = vmul.f32 %v3572, %v3572
        %v3637 = vmul.f32 %v3573, %v3573
        %v3638 = vmul.f32 %v3574, %v3574
        %v3639 = vmul.f32 %v3575, %v3575
        %v3640 = vmul.f32 %v3576, %v3576
        %v3641 = vmul.f32 %v3577, %v3577
        %v3642 = vmul.f32 %v3578, %v3578
        %v3643 = vmul.f32 %v3579, %v3579
        %v3644 = vmul.f32 %v3580, %v3580
        %v3645 = vmul.f32 %v3581, %v3581
        %v3646 = vmul.f32 %v3582, %v3582
        %v3647 = vmul.f32 %v3583, %v3583
        %v3648 = vmul.f32 %v3584, %v3584
        %v3649 = vmul.f32 %v3585, %v3585
        %v3650 = vmul.f32 %v3586, %v3586
        %v3651 = vmul.f32 %v3587, %v3587
        %v3652 = vmul.f32 %v3588, %v3588
        %v3653 = vmul.f32 %v3589, %v3589
        %v3654 = vmul.f32 %v3590, %v3590
        %v3655 = vmul.f32 %v3591, %v3591
        %v3656 = vmul.f32 %v3592, %v3592
        %v3657 = vmul.f32 %v3593, %v3593
        %v3658 = vmul.f32 %v3594, %v3594
        %v3659 = vmul.f32 %v3595, %v3595
        %v3660 = vmul.f32 %v3596, %v3596
        %v3661 = vmul.f32 %v3597, %v3597
        %v3662 = vmul.f32 %v3598, %v3598
        %v3663 = vmul.f32 %v3599, %v3599
        %v3664 = vmul.f32 %v3600, %v3600
        %v3665 = vmul.f32 %v3601, %v3601
        %v3666 = vmul.f32 %v3602, %v3602
        %v3667 = vmul.f32 %v3603, %v3603
        %v3668 = vmul.f32 %v3604, %v3604
        %v3669 = vmul.f32 %v3605, %v3605
        %v3670 = vmul.f32 %v3606, %v3606
        %v3671 = vmul.f32 %v3607, %v3607
        %v3672 = vmul.f32 %v3608, %v3608
        %v3673 = vmul.f32 %v3609, %v3609
        %v3674 = vmul.f32 %v3610, %v3610
        %v3675 = vmul.f32 %v3611, %v3611
        %v3676 = vmul.f32 %v3612, %v3612
        %v3677 = vmul.f32 %v3613, %v3613
        %v3678 = vmul.f32 %v3614, %v3614
        %v3679 = vmul.f32 %v3615, %v3615
        %v3680 = vmul.f32 %v3616, %v3616
        %v3681 = vmul.f32 %v3617, %v3617
        %v3682 = vmul.f32 %v3618, %v3618
        %v3683 = vmul.f32 %v3619, %v3619
        %v3684 = vmul.f32 %v3620, %v3620
        %v3685 = vmul.f32 %v3621, %v3621
        %v3686 = vmul.f32 %v3622, %v3622
        %v3687 = vmul.f32 %v3623, %v3623
        %v3688 = vmul.f32 %v3624, %v3624
        %v3689 = vmul.f32 %v3625, %v3625
        %v3690 = vmul.f32 %v3626, %v3626
        %v3691 = vmul.f32 %v3627, %v3627
        %v3692 = vmul.f32 %v3628, %v3628
        %v3693 = vmul.f32 %v3629, %v3629
        %v3694 = vmul.f32 %v3630, %v3630
        %v3695 = vsel %vm2817, %v3631, 0.0
        %3696 = vadd.xlane.f32.xlu0 %v3695
        %v3697 = vpop.xlane.xlu0 %3696
        %v3698 = vsel %vm2817, %v3632, 0.0
        %3699 = vadd.xlane.f32.xlu0 %v3698
        %v3700 = vpop.xlane.xlu0 %3699
        %v3701 = vsel %vm2817, %v3633, 0.0
        %3702 = vadd.xlane.f32.xlu0 %v3701
        %v3703 = vpop.xlane.xlu0 %3702
        %v3704 = vsel %vm2817, %v3634, 0.0
        %3705 = vadd.xlane.f32.xlu0 %v3704
        %v3706 = vpop.xlane.xlu0 %3705
        %v3707 = vsel %vm2817, %v3635, 0.0
        %3708 = vadd.xlane.f32.xlu0 %v3707
        %v3709 = vpop.xlane.xlu0 %3708
        %v3710 = vsel %vm2817, %v3636, 0.0
        %3711 = vadd.xlane.f32.xlu0 %v3710
        %v3712 = vpop.xlane.xlu0 %3711
        %v3713 = vsel %vm2817, %v3637, 0.0
        %3714 = vadd.xlane.f32.xlu0 %v3713
        %v3715 = vpop.xlane.xlu0 %3714
        %v3716 = vsel %vm2817, %v3638, 0.0
        %3717 = vadd.xlane.f32.xlu0 %v3716
        %v3718 = vpop.xlane.xlu0 %3717
        %v3719 = vsel %vm2817, %v3639, 0.0
        %3720 = vadd.xlane.f32.xlu0 %v3719
        %v3721 = vpop.xlane.xlu0 %3720
        %v3722 = vsel %vm2817, %v3640, 0.0
        %3723 = vadd.xlane.f32.xlu0 %v3722
        %v3724 = vpop.xlane.xlu0 %3723
        %v3725 = vsel %vm2817, %v3641, 0.0
        %3726 = vadd.xlane.f32.xlu0 %v3725
        %v3727 = vpop.xlane.xlu0 %3726
        %v3728 = vsel %vm2817, %v3642, 0.0
        %3729 = vadd.xlane.f32.xlu0 %v3728
        %v3730 = vpop.xlane.xlu0 %3729
        %v3731 = vsel %vm2817, %v3643, 0.0
        %3732 = vadd.xlane.f32.xlu0 %v3731
        %v3733 = vpop.xlane.xlu0 %3732
        %v3734 = vsel %vm2817, %v3644, 0.0
        %3735 = vadd.xlane.f32.xlu0 %v3734
        %v3736 = vpop.xlane.xlu0 %3735
        %v3737 = vsel %vm2817, %v3645, 0.0
        %3738 = vadd.xlane.f32.xlu0 %v3737
        %v3739 = vpop.xlane.xlu0 %3738
        %v3740 = vsel %vm2817, %v3646, 0.0
        %3741 = vadd.xlane.f32.xlu0 %v3740
        %v3742 = vpop.xlane.xlu0 %3741
        %v3743 = vsel %vm2817, %v3647, 0.0
        %3744 = vadd.xlane.f32.xlu0 %v3743
        %v3745 = vpop.xlane.xlu0 %3744
        %v3746 = vsel %vm2817, %v3648, 0.0
        %3747 = vadd.xlane.f32.xlu0 %v3746
        %v3748 = vpop.xlane.xlu0 %3747
        %v3749 = vsel %vm2817, %v3649, 0.0
        %3750 = vadd.xlane.f32.xlu0 %v3749
        %v3751 = vpop.xlane.xlu0 %3750
        %v3752 = vsel %vm2817, %v3650, 0.0
        %3753 = vadd.xlane.f32.xlu0 %v3752
        %v3754 = vpop.xlane.xlu0 %3753
        %v3755 = vsel %vm2817, %v3651, 0.0
        %3756 = vadd.xlane.f32.xlu0 %v3755
        %v3757 = vpop.xlane.xlu0 %3756
        %v3758 = vsel %vm2817, %v3652, 0.0
        %3759 = vadd.xlane.f32.xlu0 %v3758
        %v3760 = vpop.xlane.xlu0 %3759
        %v3761 = vsel %vm2817, %v3653, 0.0
        %3762 = vadd.xlane.f32.xlu0 %v3761
        %v3763 = vpop.xlane.xlu0 %3762
        %v3764 = vsel %vm2817, %v3654, 0.0
        %3765 = vadd.xlane.f32.xlu0 %v3764
        %v3766 = vpop.xlane.xlu0 %3765
        %v3767 = vsel %vm2817, %v3655, 0.0
        %3768 = vadd.xlane.f32.xlu0 %v3767
        %v3769 = vpop.xlane.xlu0 %3768
        %v3770 = vsel %vm2817, %v3656, 0.0
        %3771 = vadd.xlane.f32.xlu0 %v3770
        %v3772 = vpop.xlane.xlu0 %3771
        %v3773 = vsel %vm2817, %v3657, 0.0
        %3774 = vadd.xlane.f32.xlu0 %v3773
        %v3775 = vpop.xlane.xlu0 %3774
        %v3776 = vsel %vm2817, %v3658, 0.0
        %3777 = vadd.xlane.f32.xlu0 %v3776
        %v3778 = vpop.xlane.xlu0 %3777
        %v3779 = vsel %vm2817, %v3659, 0.0
        %3780 = vadd.xlane.f32.xlu0 %v3779
        %v3781 = vpop.xlane.xlu0 %3780
        %v3782 = vsel %vm2817, %v3660, 0.0
        %3783 = vadd.xlane.f32.xlu0 %v3782
        %v3784 = vpop.xlane.xlu0 %3783
        %v3785 = vsel %vm2817, %v3661, 0.0
        %3786 = vadd.xlane.f32.xlu0 %v3785
        %v3787 = vpop.xlane.xlu0 %3786
        %v3788 = vsel %vm2817, %v3662, 0.0
        %3789 = vadd.xlane.f32.xlu0 %v3788
        %v3790 = vpop.xlane.xlu0 %3789
        %v3791 = vsel %vm2817, %v3663, 0.0
        %3792 = vadd.xlane.f32.xlu0 %v3791
        %v3793 = vpop.xlane.xlu0 %3792
        %v3794 = vsel %vm2817, %v3664, 0.0
        %3795 = vadd.xlane.f32.xlu0 %v3794
        %v3796 = vpop.xlane.xlu0 %3795
        %v3797 = vsel %vm2817, %v3665, 0.0
        %3798 = vadd.xlane.f32.xlu0 %v3797
        %v3799 = vpop.xlane.xlu0 %3798
        %v3800 = vsel %vm2817, %v3666, 0.0
        %3801 = vadd.xlane.f32.xlu0 %v3800
        %v3802 = vpop.xlane.xlu0 %3801
        %v3803 = vsel %vm2817, %v3667, 0.0
        %3804 = vadd.xlane.f32.xlu0 %v3803
        %v3805 = vpop.xlane.xlu0 %3804
        %v3806 = vsel %vm2817, %v3668, 0.0
        %3807 = vadd.xlane.f32.xlu0 %v3806
        %v3808 = vpop.xlane.xlu0 %3807
        %v3809 = vsel %vm2817, %v3669, 0.0
        %3810 = vadd.xlane.f32.xlu0 %v3809
        %v3811 = vpop.xlane.xlu0 %3810
        %v3812 = vsel %vm2817, %v3670, 0.0
        %3813 = vadd.xlane.f32.xlu0 %v3812
        %v3814 = vpop.xlane.xlu0 %3813
        %v3815 = vsel %vm2817, %v3671, 0.0
        %3816 = vadd.xlane.f32.xlu0 %v3815
        %v3817 = vpop.xlane.xlu0 %3816
        %v3818 = vsel %vm2817, %v3672, 0.0
        %3819 = vadd.xlane.f32.xlu0 %v3818
        %v3820 = vpop.xlane.xlu0 %3819
        %v3821 = vsel %vm2817, %v3673, 0.0
        %3822 = vadd.xlane.f32.xlu0 %v3821
        %v3823 = vpop.xlane.xlu0 %3822
        %v3824 = vsel %vm2817, %v3674, 0.0
        %3825 = vadd.xlane.f32.xlu0 %v3824
        %v3826 = vpop.xlane.xlu0 %3825
        %v3827 = vsel %vm2817, %v3675, 0.0
        %3828 = vadd.xlane.f32.xlu0 %v3827
        %v3829 = vpop.xlane.xlu0 %3828
        %v3830 = vsel %vm2817, %v3676, 0.0
        %3831 = vadd.xlane.f32.xlu0 %v3830
        %v3832 = vpop.xlane.xlu0 %3831
        %v3833 = vsel %vm2817, %v3677, 0.0
        %3834 = vadd.xlane.f32.xlu0 %v3833
        %v3835 = vpop.xlane.xlu0 %3834
        %v3836 = vsel %vm2817, %v3678, 0.0
        %3837 = vadd.xlane.f32.xlu0 %v3836
        %v3838 = vpop.xlane.xlu0 %3837
        %v3839 = vsel %vm2817, %v3679, 0.0
        %3840 = vadd.xlane.f32.xlu0 %v3839
        %v3841 = vpop.xlane.xlu0 %3840
        %v3842 = vsel %vm2817, %v3680, 0.0
        %3843 = vadd.xlane.f32.xlu0 %v3842
        %v3844 = vpop.xlane.xlu0 %3843
        %v3845 = vsel %vm2817, %v3681, 0.0
        %3846 = vadd.xlane.f32.xlu0 %v3845
        %v3847 = vpop.xlane.xlu0 %3846
        %v3848 = vsel %vm2817, %v3682, 0.0
        %3849 = vadd.xlane.f32.xlu0 %v3848
        %v3850 = vpop.xlane.xlu0 %3849
        %v3851 = vsel %vm2817, %v3683, 0.0
        %3852 = vadd.xlane.f32.xlu0 %v3851
        %v3853 = vpop.xlane.xlu0 %3852
        %v3854 = vsel %vm2817, %v3684, 0.0
        %3855 = vadd.xlane.f32.xlu0 %v3854
        %v3856 = vpop.xlane.xlu0 %3855
        %v3857 = vsel %vm2817, %v3685, 0.0
        %3858 = vadd.xlane.f32.xlu0 %v3857
        %v3859 = vpop.xlane.xlu0 %3858
        %v3860 = vsel %vm2817, %v3686, 0.0
        %3861 = vadd.xlane.f32.xlu0 %v3860
        %v3862 = vpop.xlane.xlu0 %3861
        %v3863 = vsel %vm2817, %v3687, 0.0
        %3864 = vadd.xlane.f32.xlu0 %v3863
        %v3865 = vpop.xlane.xlu0 %3864
        %v3866 = vsel %vm2817, %v3688, 0.0
        %3867 = vadd.xlane.f32.xlu0 %v3866
        %v3868 = vpop.xlane.xlu0 %3867
        %v3869 = vsel %vm2817, %v3689, 0.0
        %3870 = vadd.xlane.f32.xlu0 %v3869
        %v3871 = vpop.xlane.xlu0 %3870
        %v3872 = vsel %vm2817, %v3690, 0.0
        %3873 = vadd.xlane.f32.xlu0 %v3872
        %v3874 = vpop.xlane.xlu0 %3873
        %v3875 = vsel %vm2817, %v3691, 0.0
        %3876 = vadd.xlane.f32.xlu0 %v3875
        %v3877 = vpop.xlane.xlu0 %3876
        %v3878 = vsel %vm2817, %v3692, 0.0
        %3879 = vadd.xlane.f32.xlu0 %v3878
        %v3880 = vpop.xlane.xlu0 %3879
        %v3881 = vsel %vm2817, %v3693, 0.0
        %3882 = vadd.xlane.f32.xlu0 %v3881
        %v3883 = vpop.xlane.xlu0 %3882
        %v3884 = vsel %vm2817, %v3694, 0.0
        %3885 = vadd.xlane.f32.xlu0 %v3884
        %v3886 = vpop.xlane.xlu0 %3885
        %v3887 = vmul.f32 %v3697, %v2914
        %v3888 = vmul.f32 %v3700, %v2914
        %v3889 = vmul.f32 %v3703, %v2914
        %v3890 = vmul.f32 %v3706, %v2914
        %v3891 = vmul.f32 %v3709, %v2914
        %v3892 = vmul.f32 %v3712, %v2914
        %v3893 = vmul.f32 %v3715, %v2914
        %v3894 = vmul.f32 %v3718, %v2914
        %v3895 = vmul.f32 %v3721, %v2914
        %v3896 = vmul.f32 %v3724, %v2914
        %v3897 = vmul.f32 %v3727, %v2914
        %v3898 = vmul.f32 %v3730, %v2914
        %v3899 = vmul.f32 %v3733, %v2914
        %v3900 = vmul.f32 %v3736, %v2914
        %v3901 = vmul.f32 %v3739, %v2914
        %v3902 = vmul.f32 %v3742, %v2914
        %v3903 = vmul.f32 %v3745, %v2914
        %v3904 = vmul.f32 %v3748, %v2914
        %v3905 = vmul.f32 %v3751, %v2914
        %v3906 = vmul.f32 %v3754, %v2914
        %v3907 = vmul.f32 %v3757, %v2914
        %v3908 = vmul.f32 %v3760, %v2914
        %v3909 = vmul.f32 %v3763, %v2914
        %v3910 = vmul.f32 %v3766, %v2914
        %v3911 = vmul.f32 %v3769, %v2914
        %v3912 = vmul.f32 %v3772, %v2914
        %v3913 = vmul.f32 %v3775, %v2914
        %v3914 = vmul.f32 %v3778, %v2914
        %v3915 = vmul.f32 %v3781, %v2914
        %v3916 = vmul.f32 %v3784, %v2914
        %v3917 = vmul.f32 %v3787, %v2914
        %v3918 = vmul.f32 %v3790, %v2914
        %v3919 = vmul.f32 %v3793, %v2914
        %v3920 = vmul.f32 %v3796, %v2914
        %v3921 = vmul.f32 %v3799, %v2914
        %v3922 = vmul.f32 %v3802, %v2914
        %v3923 = vmul.f32 %v3805, %v2914
        %v3924 = vmul.f32 %v3808, %v2914
        %v3925 = vmul.f32 %v3811, %v2914
        %v3926 = vmul.f32 %v3814, %v2914
        %v3927 = vmul.f32 %v3817, %v2914
        %v3928 = vmul.f32 %v3820, %v2914
        %v3929 = vmul.f32 %v3823, %v2914
        %v3930 = vmul.f32 %v3826, %v2914
        %v3931 = vmul.f32 %v3829, %v2914
        %v3932 = vmul.f32 %v3832, %v2914
        %v3933 = vmul.f32 %v3835, %v2914
        %v3934 = vmul.f32 %v3838, %v2914
        %v3935 = vmul.f32 %v3841, %v2914
        %v3936 = vmul.f32 %v3844, %v2914
        %v3937 = vmul.f32 %v3847, %v2914
        %v3938 = vmul.f32 %v3850, %v2914
        %v3939 = vmul.f32 %v3853, %v2914
        %v3940 = vmul.f32 %v3856, %v2914
        %v3941 = vmul.f32 %v3859, %v2914
        %v3942 = vmul.f32 %v3862, %v2914
        %v3943 = vmul.f32 %v3865, %v2914
        %v3944 = vmul.f32 %v3868, %v2914
        %v3945 = vmul.f32 %v3871, %v2914
        %v3946 = vmul.f32 %v3874, %v2914
        %v3947 = vmul.f32 %v3877, %v2914
        %v3948 = vmul.f32 %v3880, %v2914
        %v3949 = vmul.f32 %v3883, %v2914
        %v3950 = vmul.f32 %v3886, %v2914
        %v3951 = vadd.f32 %v3887, 1e-05
        %v3952 = vadd.f32 %v3888, 1e-05
        %v3953 = vadd.f32 %v3889, 1e-05
        %v3954 = vadd.f32 %v3890, 1e-05
        %v3955 = vadd.f32 %v3891, 1e-05
        %v3956 = vadd.f32 %v3892, 1e-05
        %v3957 = vadd.f32 %v3893, 1e-05
        %v3958 = vadd.f32 %v3894, 1e-05
        %v3959 = vadd.f32 %v3895, 1e-05
        %v3960 = vadd.f32 %v3896, 1e-05
        %v3961 = vadd.f32 %v3897, 1e-05
        %v3962 = vadd.f32 %v3898, 1e-05
        %v3963 = vadd.f32 %v3899, 1e-05
        %v3964 = vadd.f32 %v3900, 1e-05
        %v3965 = vadd.f32 %v3901, 1e-05
        %v3966 = vadd.f32 %v3902, 1e-05
        %v3967 = vadd.f32 %v3903, 1e-05
        %v3968 = vadd.f32 %v3904, 1e-05
        %v3969 = vadd.f32 %v3905, 1e-05
        %v3970 = vadd.f32 %v3906, 1e-05
        %v3971 = vadd.f32 %v3907, 1e-05
        %v3972 = vadd.f32 %v3908, 1e-05
        %v3973 = vadd.f32 %v3909, 1e-05
        %v3974 = vadd.f32 %v3910, 1e-05
        %v3975 = vadd.f32 %v3911, 1e-05
        %v3976 = vadd.f32 %v3912, 1e-05
        %v3977 = vadd.f32 %v3913, 1e-05
        %v3978 = vadd.f32 %v3914, 1e-05
        %v3979 = vadd.f32 %v3915, 1e-05
        %v3980 = vadd.f32 %v3916, 1e-05
        %v3981 = vadd.f32 %v3917, 1e-05
        %v3982 = vadd.f32 %v3918, 1e-05
        %v3983 = vadd.f32 %v3919, 1e-05
        %v3984 = vadd.f32 %v3920, 1e-05
        %v3985 = vadd.f32 %v3921, 1e-05
        %v3986 = vadd.f32 %v3922, 1e-05
        %v3987 = vadd.f32 %v3923, 1e-05
        %v3988 = vadd.f32 %v3924, 1e-05
        %v3989 = vadd.f32 %v3925, 1e-05
        %v3990 = vadd.f32 %v3926, 1e-05
        %v3991 = vadd.f32 %v3927, 1e-05
        %v3992 = vadd.f32 %v3928, 1e-05
        %v3993 = vadd.f32 %v3929, 1e-05
        %v3994 = vadd.f32 %v3930, 1e-05
        %v3995 = vadd.f32 %v3931, 1e-05
        %v3996 = vadd.f32 %v3932, 1e-05
        %v3997 = vadd.f32 %v3933, 1e-05
        %v3998 = vadd.f32 %v3934, 1e-05
        %v3999 = vadd.f32 %v3935, 1e-05
        %v4000 = vadd.f32 %v3936, 1e-05
        %v4001 = vadd.f32 %v3937, 1e-05
        %v4002 = vadd.f32 %v3938, 1e-05
        %v4003 = vadd.f32 %v3939, 1e-05
        %v4004 = vadd.f32 %v3940, 1e-05
        %v4005 = vadd.f32 %v3941, 1e-05
        %v4006 = vadd.f32 %v3942, 1e-05
        %v4007 = vadd.f32 %v3943, 1e-05
        %v4008 = vadd.f32 %v3944, 1e-05
        %v4009 = vadd.f32 %v3945, 1e-05
        %v4010 = vadd.f32 %v3946, 1e-05
        %v4011 = vadd.f32 %v3947, 1e-05
        %v4012 = vadd.f32 %v3948, 1e-05
        %v4013 = vadd.f32 %v3949, 1e-05
        %v4014 = vadd.f32 %v3950, 1e-05
        %v4015 = vrsqrt.pop %v3951
        %v4016 = vrsqrt.pop %v3952
        %v4017 = vrsqrt.pop %v3953
        %v4018 = vrsqrt.pop %v3954
        %v4019 = vrsqrt.pop %v3955
        %v4020 = vrsqrt.pop %v3956
        %v4021 = vrsqrt.pop %v3957
        %v4022 = vrsqrt.pop %v3958
        %v4023 = vrsqrt.pop %v3959
        %v4024 = vrsqrt.pop %v3960
        %v4025 = vrsqrt.pop %v3961
        %v4026 = vrsqrt.pop %v3962
        %v4027 = vrsqrt.pop %v3963
        %v4028 = vrsqrt.pop %v3964
        %v4029 = vrsqrt.pop %v3965
        %v4030 = vrsqrt.pop %v3966
        %v4031 = vrsqrt.pop %v3967
        %v4032 = vrsqrt.pop %v3968
        %v4033 = vrsqrt.pop %v3969
        %v4034 = vrsqrt.pop %v3970
        %v4035 = vrsqrt.pop %v3971
        %v4036 = vrsqrt.pop %v3972
        %v4037 = vrsqrt.pop %v3973
        %v4038 = vrsqrt.pop %v3974
        %v4039 = vrsqrt.pop %v3975
        %v4040 = vrsqrt.pop %v3976
        %v4041 = vrsqrt.pop %v3977
        %v4042 = vrsqrt.pop %v3978
        %v4043 = vrsqrt.pop %v3979
        %v4044 = vrsqrt.pop %v3980
        %v4045 = vrsqrt.pop %v3981
        %v4046 = vrsqrt.pop %v3982
        %v4047 = vrsqrt.pop %v3983
        %v4048 = vrsqrt.pop %v3984
        %v4049 = vrsqrt.pop %v3985
        %v4050 = vrsqrt.pop %v3986
        %v4051 = vrsqrt.pop %v3987
        %v4052 = vrsqrt.pop %v3988
        %v4053 = vrsqrt.pop %v3989
        %v4054 = vrsqrt.pop %v3990
        %v4055 = vrsqrt.pop %v3991
        %v4056 = vrsqrt.pop %v3992
        %v4057 = vrsqrt.pop %v3993
        %v4058 = vrsqrt.pop %v3994
        %v4059 = vrsqrt.pop %v3995
        %v4060 = vrsqrt.pop %v3996
        %v4061 = vrsqrt.pop %v3997
        %v4062 = vrsqrt.pop %v3998
        %v4063 = vrsqrt.pop %v3999
        %v4064 = vrsqrt.pop %v4000
        %v4065 = vrsqrt.pop %v4001
        %v4066 = vrsqrt.pop %v4002
        %v4067 = vrsqrt.pop %v4003
        %v4068 = vrsqrt.pop %v4004
        %v4069 = vrsqrt.pop %v4005
        %v4070 = vrsqrt.pop %v4006
        %v4071 = vrsqrt.pop %v4007
        %v4072 = vrsqrt.pop %v4008
        %v4073 = vrsqrt.pop %v4009
        %v4074 = vrsqrt.pop %v4010
        %v4075 = vrsqrt.pop %v4011
        %v4076 = vrsqrt.pop %v4012
        %v4077 = vrsqrt.pop %v4013
        %v4078 = vrsqrt.pop %v4014
        %v4079 = vmul.f32 %v3567, %v4015
        %v4080 = vmul.f32 %v3568, %v4016
        %v4081 = vmul.f32 %v3569, %v4017
        %v4082 = vmul.f32 %v3570, %v4018
        %v4083 = vmul.f32 %v3571, %v4019
        %v4084 = vmul.f32 %v3572, %v4020
        %v4085 = vmul.f32 %v3573, %v4021
        %v4086 = vmul.f32 %v3574, %v4022
        %v4087 = vmul.f32 %v3575, %v4023
        %v4088 = vmul.f32 %v3576, %v4024
        %v4089 = vmul.f32 %v3577, %v4025
        %v4090 = vmul.f32 %v3578, %v4026
        %v4091 = vmul.f32 %v3579, %v4027
        %v4092 = vmul.f32 %v3580, %v4028
        %v4093 = vmul.f32 %v3581, %v4029
        %v4094 = vmul.f32 %v3582, %v4030
        %v4095 = vmul.f32 %v3583, %v4031
        %v4096 = vmul.f32 %v3584, %v4032
        %v4097 = vmul.f32 %v3585, %v4033
        %v4098 = vmul.f32 %v3586, %v4034
        %v4099 = vmul.f32 %v3587, %v4035
        %v4100 = vmul.f32 %v3588, %v4036
        %v4101 = vmul.f32 %v3589, %v4037
        %v4102 = vmul.f32 %v3590, %v4038
        %v4103 = vmul.f32 %v3591, %v4039
        %v4104 = vmul.f32 %v3592, %v4040
        %v4105 = vmul.f32 %v3593, %v4041
        %v4106 = vmul.f32 %v3594, %v4042
        %v4107 = vmul.f32 %v3595, %v4043
        %v4108 = vmul.f32 %v3596, %v4044
        %v4109 = vmul.f32 %v3597, %v4045
        %v4110 = vmul.f32 %v3598, %v4046
        %v4111 = vmul.f32 %v3599, %v4047
        %v4112 = vmul.f32 %v3600, %v4048
        %v4113 = vmul.f32 %v3601, %v4049
        %v4114 = vmul.f32 %v3602, %v4050
        %v4115 = vmul.f32 %v3603, %v4051
        %v4116 = vmul.f32 %v3604, %v4052
        %v4117 = vmul.f32 %v3605, %v4053
        %v4118 = vmul.f32 %v3606, %v4054
        %v4119 = vmul.f32 %v3607, %v4055
        %v4120 = vmul.f32 %v3608, %v4056
        %v4121 = vmul.f32 %v3609, %v4057
        %v4122 = vmul.f32 %v3610, %v4058
        %v4123 = vmul.f32 %v3611, %v4059
        %v4124 = vmul.f32 %v3612, %v4060
        %v4125 = vmul.f32 %v3613, %v4061
        %v4126 = vmul.f32 %v3614, %v4062
        %v4127 = vmul.f32 %v3615, %v4063
        %v4128 = vmul.f32 %v3616, %v4064
        %v4129 = vmul.f32 %v3617, %v4065
        %v4130 = vmul.f32 %v3618, %v4066
        %v4131 = vmul.f32 %v3619, %v4067
        %v4132 = vmul.f32 %v3620, %v4068
        %v4133 = vmul.f32 %v3621, %v4069
        %v4134 = vmul.f32 %v3622, %v4070
        %v4135 = vmul.f32 %v3623, %v4071
        %v4136 = vmul.f32 %v3624, %v4072
        %v4137 = vmul.f32 %v3625, %v4073
        %v4138 = vmul.f32 %v3626, %v4074
        %v4139 = vmul.f32 %v3627, %v4075
        %v4140 = vmul.f32 %v3628, %v4076
        %v4141 = vmul.f32 %v3629, %v4077
        %v4142 = vmul.f32 %v3630, %v4078
        %v4144 = vlaneseq
        %v4145 = vshrl.u32 %v4144, 7
        %v4146 = vsub.s32 0, %v4145
        %v4147 = vrot.slane %v2815, %v4146
        %v4149 = vmul.f32 %v4079, %v4147
        %v4150 = vmul.f32 %v4080, %v4147
        %v4151 = vmul.f32 %v4081, %v4147
        %v4152 = vmul.f32 %v4082, %v4147
        %v4153 = vmul.f32 %v4083, %v4147
        %v4154 = vmul.f32 %v4084, %v4147
        %v4155 = vmul.f32 %v4085, %v4147
        %v4156 = vmul.f32 %v4086, %v4147
        %v4157 = vmul.f32 %v4087, %v4147
        %v4158 = vmul.f32 %v4088, %v4147
        %v4159 = vmul.f32 %v4089, %v4147
        %v4160 = vmul.f32 %v4090, %v4147
        %v4161 = vmul.f32 %v4091, %v4147
        %v4162 = vmul.f32 %v4092, %v4147
        %v4163 = vmul.f32 %v4093, %v4147
        %v4164 = vmul.f32 %v4094, %v4147
        %v4165 = vmul.f32 %v4095, %v4147
        %v4166 = vmul.f32 %v4096, %v4147
        %v4167 = vmul.f32 %v4097, %v4147
        %v4168 = vmul.f32 %v4098, %v4147
        %v4169 = vmul.f32 %v4099, %v4147
        %v4170 = vmul.f32 %v4100, %v4147
        %v4171 = vmul.f32 %v4101, %v4147
        %v4172 = vmul.f32 %v4102, %v4147
        %v4173 = vmul.f32 %v4103, %v4147
        %v4174 = vmul.f32 %v4104, %v4147
        %v4175 = vmul.f32 %v4105, %v4147
        %v4176 = vmul.f32 %v4106, %v4147
        %v4177 = vmul.f32 %v4107, %v4147
        %v4178 = vmul.f32 %v4108, %v4147
        %v4179 = vmul.f32 %v4109, %v4147
        %v4180 = vmul.f32 %v4110, %v4147
        %v4181 = vmul.f32 %v4111, %v4147
        %v4182 = vmul.f32 %v4112, %v4147
        %v4183 = vmul.f32 %v4113, %v4147
        %v4184 = vmul.f32 %v4114, %v4147
        %v4185 = vmul.f32 %v4115, %v4147
        %v4186 = vmul.f32 %v4116, %v4147
        %v4187 = vmul.f32 %v4117, %v4147
        %v4188 = vmul.f32 %v4118, %v4147
        %v4189 = vmul.f32 %v4119, %v4147
        %v4190 = vmul.f32 %v4120, %v4147
        %v4191 = vmul.f32 %v4121, %v4147
        %v4192 = vmul.f32 %v4122, %v4147
        %v4193 = vmul.f32 %v4123, %v4147
        %v4194 = vmul.f32 %v4124, %v4147
        %v4195 = vmul.f32 %v4125, %v4147
        %v4196 = vmul.f32 %v4126, %v4147
        %v4197 = vmul.f32 %v4127, %v4147
        %v4198 = vmul.f32 %v4128, %v4147
        %v4199 = vmul.f32 %v4129, %v4147
        %v4200 = vmul.f32 %v4130, %v4147
        %v4201 = vmul.f32 %v4131, %v4147
        %v4202 = vmul.f32 %v4132, %v4147
        %v4203 = vmul.f32 %v4133, %v4147
        %v4204 = vmul.f32 %v4134, %v4147
        %v4205 = vmul.f32 %v4135, %v4147
        %v4206 = vmul.f32 %v4136, %v4147
        %v4207 = vmul.f32 %v4137, %v4147
        %v4208 = vmul.f32 %v4138, %v4147
        %v4209 = vmul.f32 %v4139, %v4147
        %v4210 = vmul.f32 %v4140, %v4147
        %v4211 = vmul.f32 %v4141, %v4147
        %v4212 = vmul.f32 %v4142, %v4147
        %v4214 = vlaneseq
        %v4215 = vshrl.u32 %v4214, 7
        %v4216 = vsub.s32 0, %v4215
        %v4217 = vrot.slane %v2816, %v4216
        %v4219 = vadd.f32 %v4149, %v4217
        %v4220 = vadd.f32 %v4150, %v4217
        %v4221 = vadd.f32 %v4151, %v4217
        %v4222 = vadd.f32 %v4152, %v4217
        %v4223 = vadd.f32 %v4153, %v4217
        %v4224 = vadd.f32 %v4154, %v4217
        %v4225 = vadd.f32 %v4155, %v4217
        %v4226 = vadd.f32 %v4156, %v4217
        %v4227 = vadd.f32 %v4157, %v4217
        %v4228 = vadd.f32 %v4158, %v4217
        %v4229 = vadd.f32 %v4159, %v4217
        %v4230 = vadd.f32 %v4160, %v4217
        %v4231 = vadd.f32 %v4161, %v4217
        %v4232 = vadd.f32 %v4162, %v4217
        %v4233 = vadd.f32 %v4163, %v4217
        %v4234 = vadd.f32 %v4164, %v4217
        %v4235 = vadd.f32 %v4165, %v4217
        %v4236 = vadd.f32 %v4166, %v4217
        %v4237 = vadd.f32 %v4167, %v4217
        %v4238 = vadd.f32 %v4168, %v4217
        %v4239 = vadd.f32 %v4169, %v4217
        %v4240 = vadd.f32 %v4170, %v4217
        %v4241 = vadd.f32 %v4171, %v4217
        %v4242 = vadd.f32 %v4172, %v4217
        %v4243 = vadd.f32 %v4173, %v4217
        %v4244 = vadd.f32 %v4174, %v4217
        %v4245 = vadd.f32 %v4175, %v4217
        %v4246 = vadd.f32 %v4176, %v4217
        %v4247 = vadd.f32 %v4177, %v4217
        %v4248 = vadd.f32 %v4178, %v4217
        %v4249 = vadd.f32 %v4179, %v4217
        %v4250 = vadd.f32 %v4180, %v4217
        %v4251 = vadd.f32 %v4181, %v4217
        %v4252 = vadd.f32 %v4182, %v4217
        %v4253 = vadd.f32 %v4183, %v4217
        %v4254 = vadd.f32 %v4184, %v4217
        %v4255 = vadd.f32 %v4185, %v4217
        %v4256 = vadd.f32 %v4186, %v4217
        %v4257 = vadd.f32 %v4187, %v4217
        %v4258 = vadd.f32 %v4188, %v4217
        %v4259 = vadd.f32 %v4189, %v4217
        %v4260 = vadd.f32 %v4190, %v4217
        %v4261 = vadd.f32 %v4191, %v4217
        %v4262 = vadd.f32 %v4192, %v4217
        %v4263 = vadd.f32 %v4193, %v4217
        %v4264 = vadd.f32 %v4194, %v4217
        %v4265 = vadd.f32 %v4195, %v4217
        %v4266 = vadd.f32 %v4196, %v4217
        %v4267 = vadd.f32 %v4197, %v4217
        %v4268 = vadd.f32 %v4198, %v4217
        %v4269 = vadd.f32 %v4199, %v4217
        %v4270 = vadd.f32 %v4200, %v4217
        %v4271 = vadd.f32 %v4201, %v4217
        %v4272 = vadd.f32 %v4202, %v4217
        %v4273 = vadd.f32 %v4203, %v4217
        %v4274 = vadd.f32 %v4204, %v4217
        %v4275 = vadd.f32 %v4205, %v4217
        %v4276 = vadd.f32 %v4206, %v4217
        %v4277 = vadd.f32 %v4207, %v4217
        %v4278 = vadd.f32 %v4208, %v4217
        %v4279 = vadd.f32 %v4209, %v4217
        %v4280 = vadd.f32 %v4210, %v4217
        %v4281 = vadd.f32 %v4211, %v4217
        %v4282 = vadd.f32 %v4212, %v4217
        %v4283 = vsel %vm2817, %v2581, 0.0
        %4284 = vadd.xlane.f32.xlu0 %v4283
        %v4285 = vpop.xlane.xlu0 %4284
        %v4286 = vsel %vm2817, %v2605, 0.0
        %4287 = vadd.xlane.f32.xlu0 %v4286
        %v4288 = vpop.xlane.xlu0 %4287
        %v4289 = vsel %vm2817, %v2588, 0.0
        %4290 = vadd.xlane.f32.xlu0 %v4289
        %v4291 = vpop.xlane.xlu0 %4290
        %v4292 = vsel %vm2817, %v2606, 0.0
        %4293 = vadd.xlane.f32.xlu0 %v4292
        %v4294 = vpop.xlane.xlu0 %4293
        %v4295 = vsel %vm2817, %v2597, 0.0
        %4296 = vadd.xlane.f32.xlu0 %v4295
        %v4297 = vpop.xlane.xlu0 %4296
        %v4298 = vsel %vm2817, %v2607, 0.0
        %4299 = vadd.xlane.f32.xlu0 %v4298
        %v4300 = vpop.xlane.xlu0 %4299
        %v4301 = vsel %vm2817, %v2604, 0.0
        %4302 = vadd.xlane.f32.xlu0 %v4301
        %v4303 = vpop.xlane.xlu0 %4302
        %v4304 = vsel %vm2817, %v2608, 0.0
        %4305 = vadd.xlane.f32.xlu0 %v4304
        %v4306 = vpop.xlane.xlu0 %4305
        %v4307 = vsel %vm2817, %v2649, 0.0
        %4308 = vadd.xlane.f32.xlu0 %v4307
        %v4309 = vpop.xlane.xlu0 %4308
        %v4310 = vsel %vm2817, %v2673, 0.0
        %4311 = vadd.xlane.f32.xlu0 %v4310
        %v4312 = vpop.xlane.xlu0 %4311
        %v4313 = vsel %vm2817, %v2656, 0.0
        %4314 = vadd.xlane.f32.xlu0 %v4313
        %v4315 = vpop.xlane.xlu0 %4314
        %v4316 = vsel %vm2817, %v2674, 0.0
        %4317 = vadd.xlane.f32.xlu0 %v4316
        %v4318 = vpop.xlane.xlu0 %4317
        %v4319 = vsel %vm2817, %v2665, 0.0
        %4320 = vadd.xlane.f32.xlu0 %v4319
        %v4321 = vpop.xlane.xlu0 %4320
        %v4322 = vsel %vm2817, %v2675, 0.0
        %4323 = vadd.xlane.f32.xlu0 %v4322
        %v4324 = vpop.xlane.xlu0 %4323
        %v4325 = vsel %vm2817, %v2672, 0.0
        %4326 = vadd.xlane.f32.xlu0 %v4325
        %v4327 = vpop.xlane.xlu0 %4326
        %v4328 = vsel %vm2817, %v2676, 0.0
        %4329 = vadd.xlane.f32.xlu0 %v4328
        %v4330 = vpop.xlane.xlu0 %4329
        %v4331 = vsel %vm2817, %v2717, 0.0
        %4332 = vadd.xlane.f32.xlu0 %v4331
        %v4333 = vpop.xlane.xlu0 %4332
        %v4334 = vsel %vm2817, %v2741, 0.0
        %4335 = vadd.xlane.f32.xlu0 %v4334
        %v4336 = vpop.xlane.xlu0 %4335
        %v4337 = vsel %vm2817, %v2724, 0.0
        %4338 = vadd.xlane.f32.xlu0 %v4337
        %v4339 = vpop.xlane.xlu0 %4338
        %v4340 = vsel %vm2817, %v2742, 0.0
        %4341 = vadd.xlane.f32.xlu0 %v4340
        %v4342 = vpop.xlane.xlu0 %4341
        %v4343 = vsel %vm2817, %v2733, 0.0
        %4344 = vadd.xlane.f32.xlu0 %v4343
        %v4345 = vpop.xlane.xlu0 %4344
        %v4346 = vsel %vm2817, %v2743, 0.0
        %4347 = vadd.xlane.f32.xlu0 %v4346
        %v4348 = vpop.xlane.xlu0 %4347
        %v4349 = vsel %vm2817, %v2740, 0.0
        %4350 = vadd.xlane.f32.xlu0 %v4349
        %v4351 = vpop.xlane.xlu0 %4350
        %v4352 = vsel %vm2817, %v2744, 0.0
        %4353 = vadd.xlane.f32.xlu0 %v4352
        %v4354 = vpop.xlane.xlu0 %4353
        %v4355 = vsel %vm2817, %v2785, 0.0
        %4356 = vadd.xlane.f32.xlu0 %v4355
        %v4357 = vpop.xlane.xlu0 %4356
        %v4358 = vsel %vm2817, %v2809, 0.0
        %4359 = vadd.xlane.f32.xlu0 %v4358
        %v4360 = vpop.xlane.xlu0 %4359
        %v4361 = vsel %vm2817, %v2792, 0.0
        %4362 = vadd.xlane.f32.xlu0 %v4361
        %v4363 = vpop.xlane.xlu0 %4362
        %v4364 = vsel %vm2817, %v2810, 0.0
        %4365 = vadd.xlane.f32.xlu0 %v4364
        %v4366 = vpop.xlane.xlu0 %4365
        %v4367 = vsel %vm2817, %v2801, 0.0
        %4368 = vadd.xlane.f32.xlu0 %v4367
        %v4369 = vpop.xlane.xlu0 %4368
        %v4370 = vsel %vm2817, %v2811, 0.0
        %4371 = vadd.xlane.f32.xlu0 %v4370
        %v4372 = vpop.xlane.xlu0 %4371
        %v4373 = vsel %vm2817, %v2808, 0.0
        %4374 = vadd.xlane.f32.xlu0 %v4373
        %v4375 = vpop.xlane.xlu0 %4374
        %v4376 = vsel %vm2817, %v2812, 0.0
        %4377 = vadd.xlane.f32.xlu0 %v4376
        %v4378 = vpop.xlane.xlu0 %4377
        %v4379 = vmul.f32 %v4285, %v2914
        %v4380 = vmul.f32 %v4288, %v2914
        %v4381 = vmul.f32 %v4291, %v2914
        %v4382 = vmul.f32 %v4294, %v2914
        %v4383 = vmul.f32 %v4297, %v2914
        %v4384 = vmul.f32 %v4300, %v2914
        %v4385 = vmul.f32 %v4303, %v2914
        %v4386 = vmul.f32 %v4306, %v2914
        %v4387 = vmul.f32 %v4309, %v2914
        %v4388 = vmul.f32 %v4312, %v2914
        %v4389 = vmul.f32 %v4315, %v2914
        %v4390 = vmul.f32 %v4318, %v2914
        %v4391 = vmul.f32 %v4321, %v2914
        %v4392 = vmul.f32 %v4324, %v2914
        %v4393 = vmul.f32 %v4327, %v2914
        %v4394 = vmul.f32 %v4330, %v2914
        %v4395 = vmul.f32 %v4333, %v2914
        %v4396 = vmul.f32 %v4336, %v2914
        %v4397 = vmul.f32 %v4339, %v2914
        %v4398 = vmul.f32 %v4342, %v2914
        %v4399 = vmul.f32 %v4345, %v2914
        %v4400 = vmul.f32 %v4348, %v2914
        %v4401 = vmul.f32 %v4351, %v2914
        %v4402 = vmul.f32 %v4354, %v2914
        %v4403 = vmul.f32 %v4357, %v2914
        %v4404 = vmul.f32 %v4360, %v2914
        %v4405 = vmul.f32 %v4363, %v2914
        %v4406 = vmul.f32 %v4366, %v2914
        %v4407 = vmul.f32 %v4369, %v2914
        %v4408 = vmul.f32 %v4372, %v2914
        %v4409 = vmul.f32 %v4375, %v2914
        %v4410 = vmul.f32 %v4378, %v2914
        %v4411 = vsub.f32 %v2581, %v4379
        %v4412 = vsub.f32 %v2605, %v4380
        %v4413 = vsub.f32 %v2588, %v4381
        %v4414 = vsub.f32 %v2606, %v4382
        %v4415 = vsub.f32 %v2597, %v4383
        %v4416 = vsub.f32 %v2607, %v4384
        %v4417 = vsub.f32 %v2604, %v4385
        %v4418 = vsub.f32 %v2608, %v4386
        %v4419 = vsub.f32 %v2649, %v4387
        %v4420 = vsub.f32 %v2673, %v4388
        %v4421 = vsub.f32 %v2656, %v4389
        %v4422 = vsub.f32 %v2674, %v4390
        %v4423 = vsub.f32 %v2665, %v4391
        %v4424 = vsub.f32 %v2675, %v4392
        %v4425 = vsub.f32 %v2672, %v4393
        %v4426 = vsub.f32 %v2676, %v4394
        %v4427 = vsub.f32 %v2717, %v4395
        %v4428 = vsub.f32 %v2741, %v4396
        %v4429 = vsub.f32 %v2724, %v4397
        %v4430 = vsub.f32 %v2742, %v4398
        %v4431 = vsub.f32 %v2733, %v4399
        %v4432 = vsub.f32 %v2743, %v4400
        %v4433 = vsub.f32 %v2740, %v4401
        %v4434 = vsub.f32 %v2744, %v4402
        %v4435 = vsub.f32 %v2785, %v4403
        %v4436 = vsub.f32 %v2809, %v4404
        %v4437 = vsub.f32 %v2792, %v4405
        %v4438 = vsub.f32 %v2810, %v4406
        %v4439 = vsub.f32 %v2801, %v4407
        %v4440 = vsub.f32 %v2811, %v4408
        %v4441 = vsub.f32 %v2808, %v4409
        %v4442 = vsub.f32 %v2812, %v4410
        %v4443 = vmul.f32 %v4411, %v4411
        %v4444 = vmul.f32 %v4412, %v4412
        %v4445 = vmul.f32 %v4413, %v4413
        %v4446 = vmul.f32 %v4414, %v4414
        %v4447 = vmul.f32 %v4415, %v4415
        %v4448 = vmul.f32 %v4416, %v4416
        %v4449 = vmul.f32 %v4417, %v4417
        %v4450 = vmul.f32 %v4418, %v4418
        %v4451 = vmul.f32 %v4419, %v4419
        %v4452 = vmul.f32 %v4420, %v4420
        %v4453 = vmul.f32 %v4421, %v4421
        %v4454 = vmul.f32 %v4422, %v4422
        %v4455 = vmul.f32 %v4423, %v4423
        %v4456 = vmul.f32 %v4424, %v4424
        %v4457 = vmul.f32 %v4425, %v4425
        %v4458 = vmul.f32 %v4426, %v4426
        %v4459 = vmul.f32 %v4427, %v4427
        %v4460 = vmul.f32 %v4428, %v4428
        %v4461 = vmul.f32 %v4429, %v4429
        %v4462 = vmul.f32 %v4430, %v4430
        %v4463 = vmul.f32 %v4431, %v4431
        %v4464 = vmul.f32 %v4432, %v4432
        %v4465 = vmul.f32 %v4433, %v4433
        %v4466 = vmul.f32 %v4434, %v4434
        %v4467 = vmul.f32 %v4435, %v4435
        %v4468 = vmul.f32 %v4436, %v4436
        %v4469 = vmul.f32 %v4437, %v4437
        %v4470 = vmul.f32 %v4438, %v4438
        %v4471 = vmul.f32 %v4439, %v4439
        %v4472 = vmul.f32 %v4440, %v4440
        %v4473 = vmul.f32 %v4441, %v4441
        %v4474 = vmul.f32 %v4442, %v4442
        %v4475 = vsel %vm2817, %v4443, 0.0
        %4476 = vadd.xlane.f32.xlu0 %v4475
        %v4477 = vpop.xlane.xlu0 %4476
        %v4478 = vsel %vm2817, %v4444, 0.0
        %4479 = vadd.xlane.f32.xlu0 %v4478
        %v4480 = vpop.xlane.xlu0 %4479
        %v4481 = vsel %vm2817, %v4445, 0.0
        %4482 = vadd.xlane.f32.xlu0 %v4481
        %v4483 = vpop.xlane.xlu0 %4482
        %v4484 = vsel %vm2817, %v4446, 0.0
        %4485 = vadd.xlane.f32.xlu0 %v4484
        %v4486 = vpop.xlane.xlu0 %4485
        %v4487 = vsel %vm2817, %v4447, 0.0
        %4488 = vadd.xlane.f32.xlu0 %v4487
        %v4489 = vpop.xlane.xlu0 %4488
        %v4490 = vsel %vm2817, %v4448, 0.0
        %4491 = vadd.xlane.f32.xlu0 %v4490
        %v4492 = vpop.xlane.xlu0 %4491
        %v4493 = vsel %vm2817, %v4449, 0.0
        %4494 = vadd.xlane.f32.xlu0 %v4493
        %v4495 = vpop.xlane.xlu0 %4494
        %v4496 = vsel %vm2817, %v4450, 0.0
        %4497 = vadd.xlane.f32.xlu0 %v4496
        %v4498 = vpop.xlane.xlu0 %4497
        %v4499 = vsel %vm2817, %v4451, 0.0
        %4500 = vadd.xlane.f32.xlu0 %v4499
        %v4501 = vpop.xlane.xlu0 %4500
        %v4502 = vsel %vm2817, %v4452, 0.0
        %4503 = vadd.xlane.f32.xlu0 %v4502
        %v4504 = vpop.xlane.xlu0 %4503
        %v4505 = vsel %vm2817, %v4453, 0.0
        %4506 = vadd.xlane.f32.xlu0 %v4505
        %v4507 = vpop.xlane.xlu0 %4506
        %v4508 = vsel %vm2817, %v4454, 0.0
        %4509 = vadd.xlane.f32.xlu0 %v4508
        %v4510 = vpop.xlane.xlu0 %4509
        %v4511 = vsel %vm2817, %v4455, 0.0
        %4512 = vadd.xlane.f32.xlu0 %v4511
        %v4513 = vpop.xlane.xlu0 %4512
        %v4514 = vsel %vm2817, %v4456, 0.0
        %4515 = vadd.xlane.f32.xlu0 %v4514
        %v4516 = vpop.xlane.xlu0 %4515
        %v4517 = vsel %vm2817, %v4457, 0.0
        %4518 = vadd.xlane.f32.xlu0 %v4517
        %v4519 = vpop.xlane.xlu0 %4518
        %v4520 = vsel %vm2817, %v4458, 0.0
        %4521 = vadd.xlane.f32.xlu0 %v4520
        %v4522 = vpop.xlane.xlu0 %4521
        %v4523 = vsel %vm2817, %v4459, 0.0
        %4524 = vadd.xlane.f32.xlu0 %v4523
        %v4525 = vpop.xlane.xlu0 %4524
        %v4526 = vsel %vm2817, %v4460, 0.0
        %4527 = vadd.xlane.f32.xlu0 %v4526
        %v4528 = vpop.xlane.xlu0 %4527
        %v4529 = vsel %vm2817, %v4461, 0.0
        %4530 = vadd.xlane.f32.xlu0 %v4529
        %v4531 = vpop.xlane.xlu0 %4530
        %v4532 = vsel %vm2817, %v4462, 0.0
        %4533 = vadd.xlane.f32.xlu0 %v4532
        %v4534 = vpop.xlane.xlu0 %4533
        %v4535 = vsel %vm2817, %v4463, 0.0
        %4536 = vadd.xlane.f32.xlu0 %v4535
        %v4537 = vpop.xlane.xlu0 %4536
        %v4538 = vsel %vm2817, %v4464, 0.0
        %4539 = vadd.xlane.f32.xlu0 %v4538
        %v4540 = vpop.xlane.xlu0 %4539
        %v4541 = vsel %vm2817, %v4465, 0.0
        %4542 = vadd.xlane.f32.xlu0 %v4541
        %v4543 = vpop.xlane.xlu0 %4542
        %v4544 = vsel %vm2817, %v4466, 0.0
        %4545 = vadd.xlane.f32.xlu0 %v4544
        %v4546 = vpop.xlane.xlu0 %4545
        %v4547 = vsel %vm2817, %v4467, 0.0
        %4548 = vadd.xlane.f32.xlu0 %v4547
        %v4549 = vpop.xlane.xlu0 %4548
        %v4550 = vsel %vm2817, %v4468, 0.0
        %4551 = vadd.xlane.f32.xlu0 %v4550
        %v4552 = vpop.xlane.xlu0 %4551
        %v4553 = vsel %vm2817, %v4469, 0.0
        %4554 = vadd.xlane.f32.xlu0 %v4553
        %v4555 = vpop.xlane.xlu0 %4554
        %v4556 = vsel %vm2817, %v4470, 0.0
        %4557 = vadd.xlane.f32.xlu0 %v4556
        %v4558 = vpop.xlane.xlu0 %4557
        %v4559 = vsel %vm2817, %v4471, 0.0
        %4560 = vadd.xlane.f32.xlu0 %v4559
        %v4561 = vpop.xlane.xlu0 %4560
        %v4562 = vsel %vm2817, %v4472, 0.0
        %4563 = vadd.xlane.f32.xlu0 %v4562
        %v4564 = vpop.xlane.xlu0 %4563
        %v4565 = vsel %vm2817, %v4473, 0.0
        %4566 = vadd.xlane.f32.xlu0 %v4565
        %v4567 = vpop.xlane.xlu0 %4566
        %v4568 = vsel %vm2817, %v4474, 0.0
        %4569 = vadd.xlane.f32.xlu0 %v4568
        %v4570 = vpop.xlane.xlu0 %4569
        %v4571 = vmul.f32 %v4477, %v2914
        %v4572 = vmul.f32 %v4480, %v2914
        %v4573 = vmul.f32 %v4483, %v2914
        %v4574 = vmul.f32 %v4486, %v2914
        %v4575 = vmul.f32 %v4489, %v2914
        %v4576 = vmul.f32 %v4492, %v2914
        %v4577 = vmul.f32 %v4495, %v2914
        %v4578 = vmul.f32 %v4498, %v2914
        %v4579 = vmul.f32 %v4501, %v2914
        %v4580 = vmul.f32 %v4504, %v2914
        %v4581 = vmul.f32 %v4507, %v2914
        %v4582 = vmul.f32 %v4510, %v2914
        %v4583 = vmul.f32 %v4513, %v2914
        %v4584 = vmul.f32 %v4516, %v2914
        %v4585 = vmul.f32 %v4519, %v2914
        %v4586 = vmul.f32 %v4522, %v2914
        %v4587 = vmul.f32 %v4525, %v2914
        %v4588 = vmul.f32 %v4528, %v2914
        %v4589 = vmul.f32 %v4531, %v2914
        %v4590 = vmul.f32 %v4534, %v2914
        %v4591 = vmul.f32 %v4537, %v2914
        %v4592 = vmul.f32 %v4540, %v2914
        %v4593 = vmul.f32 %v4543, %v2914
        %v4594 = vmul.f32 %v4546, %v2914
        %v4595 = vmul.f32 %v4549, %v2914
        %v4596 = vmul.f32 %v4552, %v2914
        %v4597 = vmul.f32 %v4555, %v2914
        %v4598 = vmul.f32 %v4558, %v2914
        %v4599 = vmul.f32 %v4561, %v2914
        %v4600 = vmul.f32 %v4564, %v2914
        %v4601 = vmul.f32 %v4567, %v2914
        %v4602 = vmul.f32 %v4570, %v2914
        %v4603 = vadd.f32 %v4571, 1e-05
        %v4604 = vadd.f32 %v4572, 1e-05
        %v4605 = vadd.f32 %v4573, 1e-05
        %v4606 = vadd.f32 %v4574, 1e-05
        %v4607 = vadd.f32 %v4575, 1e-05
        %v4608 = vadd.f32 %v4576, 1e-05
        %v4609 = vadd.f32 %v4577, 1e-05
        %v4610 = vadd.f32 %v4578, 1e-05
        %v4611 = vadd.f32 %v4579, 1e-05
        %v4612 = vadd.f32 %v4580, 1e-05
        %v4613 = vadd.f32 %v4581, 1e-05
        %v4614 = vadd.f32 %v4582, 1e-05
        %v4615 = vadd.f32 %v4583, 1e-05
        %v4616 = vadd.f32 %v4584, 1e-05
        %v4617 = vadd.f32 %v4585, 1e-05
        %v4618 = vadd.f32 %v4586, 1e-05
        %v4619 = vadd.f32 %v4587, 1e-05
        %v4620 = vadd.f32 %v4588, 1e-05
        %v4621 = vadd.f32 %v4589, 1e-05
        %v4622 = vadd.f32 %v4590, 1e-05
        %v4623 = vadd.f32 %v4591, 1e-05
        %v4624 = vadd.f32 %v4592, 1e-05
        %v4625 = vadd.f32 %v4593, 1e-05
        %v4626 = vadd.f32 %v4594, 1e-05
        %v4627 = vadd.f32 %v4595, 1e-05
        %v4628 = vadd.f32 %v4596, 1e-05
        %v4629 = vadd.f32 %v4597, 1e-05
        %v4630 = vadd.f32 %v4598, 1e-05
        %v4631 = vadd.f32 %v4599, 1e-05
        %v4632 = vadd.f32 %v4600, 1e-05
        %v4633 = vadd.f32 %v4601, 1e-05
        %v4634 = vadd.f32 %v4602, 1e-05
        %v4635 = vrsqrt.pop %v4603
        %v4636 = vrsqrt.pop %v4604
        %v4637 = vrsqrt.pop %v4605
        %v4638 = vrsqrt.pop %v4606
        %v4639 = vrsqrt.pop %v4607
        %v4640 = vrsqrt.pop %v4608
        %v4641 = vrsqrt.pop %v4609
        %v4642 = vrsqrt.pop %v4610
        %v4643 = vrsqrt.pop %v4611
        %v4644 = vrsqrt.pop %v4612
        %v4645 = vrsqrt.pop %v4613
        %v4646 = vrsqrt.pop %v4614
        %v4647 = vrsqrt.pop %v4615
        %v4648 = vrsqrt.pop %v4616
        %v4649 = vrsqrt.pop %v4617
        %v4650 = vrsqrt.pop %v4618
        %v4651 = vrsqrt.pop %v4619
        %v4652 = vrsqrt.pop %v4620
        %v4653 = vrsqrt.pop %v4621
        %v4654 = vrsqrt.pop %v4622
        %v4655 = vrsqrt.pop %v4623
        %v4656 = vrsqrt.pop %v4624
        %v4657 = vrsqrt.pop %v4625
        %v4658 = vrsqrt.pop %v4626
        %v4659 = vrsqrt.pop %v4627
        %v4660 = vrsqrt.pop %v4628
        %v4661 = vrsqrt.pop %v4629
        %v4662 = vrsqrt.pop %v4630
        %v4663 = vrsqrt.pop %v4631
        %v4664 = vrsqrt.pop %v4632
        %v4665 = vrsqrt.pop %v4633
        %v4666 = vrsqrt.pop %v4634
        %v4667 = vmul.f32 %v4411, %v4635
        %v4668 = vmul.f32 %v4412, %v4636
        %v4669 = vmul.f32 %v4413, %v4637
        %v4670 = vmul.f32 %v4414, %v4638
        %v4671 = vmul.f32 %v4415, %v4639
        %v4672 = vmul.f32 %v4416, %v4640
        %v4673 = vmul.f32 %v4417, %v4641
        %v4674 = vmul.f32 %v4418, %v4642
        %v4675 = vmul.f32 %v4419, %v4643
        %v4676 = vmul.f32 %v4420, %v4644
        %v4677 = vmul.f32 %v4421, %v4645
        %v4678 = vmul.f32 %v4422, %v4646
        %v4679 = vmul.f32 %v4423, %v4647
        %v4680 = vmul.f32 %v4424, %v4648
        %v4681 = vmul.f32 %v4425, %v4649
        %v4682 = vmul.f32 %v4426, %v4650
        %v4683 = vmul.f32 %v4427, %v4651
        %v4684 = vmul.f32 %v4428, %v4652
        %v4685 = vmul.f32 %v4429, %v4653
        %v4686 = vmul.f32 %v4430, %v4654
        %v4687 = vmul.f32 %v4431, %v4655
        %v4688 = vmul.f32 %v4432, %v4656
        %v4689 = vmul.f32 %v4433, %v4657
        %v4690 = vmul.f32 %v4434, %v4658
        %v4691 = vmul.f32 %v4435, %v4659
        %v4692 = vmul.f32 %v4436, %v4660
        %v4693 = vmul.f32 %v4437, %v4661
        %v4694 = vmul.f32 %v4438, %v4662
        %v4695 = vmul.f32 %v4439, %v4663
        %v4696 = vmul.f32 %v4440, %v4664
        %v4697 = vmul.f32 %v4441, %v4665
        %v4698 = vmul.f32 %v4442, %v4666
        %v4699 = vmul.f32 %v4667, %v4147
        %v4700 = vmul.f32 %v4668, %v4147
        %v4701 = vmul.f32 %v4669, %v4147
        %v4702 = vmul.f32 %v4670, %v4147
        %v4703 = vmul.f32 %v4671, %v4147
        %v4704 = vmul.f32 %v4672, %v4147
        %v4705 = vmul.f32 %v4673, %v4147
        %v4706 = vmul.f32 %v4674, %v4147
        %v4707 = vmul.f32 %v4675, %v4147
        %v4708 = vmul.f32 %v4676, %v4147
        %v4709 = vmul.f32 %v4677, %v4147
        %v4710 = vmul.f32 %v4678, %v4147
        %v4711 = vmul.f32 %v4679, %v4147
        %v4712 = vmul.f32 %v4680, %v4147
        %v4713 = vmul.f32 %v4681, %v4147
        %v4714 = vmul.f32 %v4682, %v4147
        %v4715 = vmul.f32 %v4683, %v4147
        %v4716 = vmul.f32 %v4684, %v4147
        %v4717 = vmul.f32 %v4685, %v4147
        %v4718 = vmul.f32 %v4686, %v4147
        %v4719 = vmul.f32 %v4687, %v4147
        %v4720 = vmul.f32 %v4688, %v4147
        %v4721 = vmul.f32 %v4689, %v4147
        %v4722 = vmul.f32 %v4690, %v4147
        %v4723 = vmul.f32 %v4691, %v4147
        %v4724 = vmul.f32 %v4692, %v4147
        %v4725 = vmul.f32 %v4693, %v4147
        %v4726 = vmul.f32 %v4694, %v4147
        %v4727 = vmul.f32 %v4695, %v4147
        %v4728 = vmul.f32 %v4696, %v4147
        %v4729 = vmul.f32 %v4697, %v4147
        %v4730 = vmul.f32 %v4698, %v4147
        %v4731 = vadd.f32 %v4699, %v4217
        %v4732 = vadd.f32 %v4700, %v4217
        %v4733 = vadd.f32 %v4701, %v4217
        %v4734 = vadd.f32 %v4702, %v4217
        %v4735 = vadd.f32 %v4703, %v4217
        %v4736 = vadd.f32 %v4704, %v4217
        %v4737 = vadd.f32 %v4705, %v4217
        %v4738 = vadd.f32 %v4706, %v4217
        %v4739 = vadd.f32 %v4707, %v4217
        %v4740 = vadd.f32 %v4708, %v4217
        %v4741 = vadd.f32 %v4709, %v4217
        %v4742 = vadd.f32 %v4710, %v4217
        %v4743 = vadd.f32 %v4711, %v4217
        %v4744 = vadd.f32 %v4712, %v4217
        %v4745 = vadd.f32 %v4713, %v4217
        %v4746 = vadd.f32 %v4714, %v4217
        %v4747 = vadd.f32 %v4715, %v4217
        %v4748 = vadd.f32 %v4716, %v4217
        %v4749 = vadd.f32 %v4717, %v4217
        %v4750 = vadd.f32 %v4718, %v4217
        %v4751 = vadd.f32 %v4719, %v4217
        %v4752 = vadd.f32 %v4720, %v4217
        %v4753 = vadd.f32 %v4721, %v4217
        %v4754 = vadd.f32 %v4722, %v4217
        %v4755 = vadd.f32 %v4723, %v4217
        %v4756 = vadd.f32 %v4724, %v4217
        %v4757 = vadd.f32 %v4725, %v4217
        %v4758 = vadd.f32 %v4726, %v4217
        %v4759 = vadd.f32 %v4727, %v4217
        %v4760 = vadd.f32 %v4728, %v4217
        %v4761 = vadd.f32 %v4729, %v4217
        %v4762 = vadd.f32 %v4730, %v4217
        %v4763 = vpack.c.bf16 %v3279, %v3279
        %v4764 = vpack.c.bf16 %v3280, %v3280
        %v4765 = vpack.c.bf16 %v3281, %v3281
        %v4766 = vpack.c.bf16 %v3282, %v3282
        %v4767 = vpack.c.bf16 %v3283, %v3283
        %v4768 = vpack.c.bf16 %v3284, %v3284
        %v4769 = vpack.c.bf16 %v3285, %v3285
        %v4770 = vpack.c.bf16 %v3286, %v3286
        %v4771 = vpack.c.bf16 %v3287, %v3287
        %v4772 = vpack.c.bf16 %v3288, %v3288
        %v4773 = vpack.c.bf16 %v3289, %v3289
        %v4774 = vpack.c.bf16 %v3290, %v3290
        %v4775 = vpack.c.bf16 %v3291, %v3291
        %v4776 = vpack.c.bf16 %v3292, %v3292
        %v4777 = vpack.c.bf16 %v3293, %v3293
        %v4778 = vpack.c.bf16 %v3294, %v3294
        %v4779 = vpack.c.bf16 %v3295, %v3295
        %v4780 = vpack.c.bf16 %v3296, %v3296
        %v4781 = vpack.c.bf16 %v3297, %v3297
        %v4782 = vpack.c.bf16 %v3298, %v3298
        %v4783 = vpack.c.bf16 %v3299, %v3299
        %v4784 = vpack.c.bf16 %v3300, %v3300
        %v4785 = vpack.c.bf16 %v3301, %v3301
        %v4786 = vpack.c.bf16 %v3302, %v3302
        %v4787 = vpack.c.bf16 %v3303, %v3303
        %v4788 = vpack.c.bf16 %v3304, %v3304
        %v4789 = vpack.c.bf16 %v3305, %v3305
        %v4790 = vpack.c.bf16 %v3306, %v3306
        %v4791 = vpack.c.bf16 %v3307, %v3307
        %v4792 = vpack.c.bf16 %v3308, %v3308
        %v4793 = vpack.c.bf16 %v3309, %v3309
        %v4794 = vpack.c.bf16 %v3310, %v3310
        %v4795 = vcombine.low %v4763, %v4767
        %v4797 = vunpack.c.l.s4 1983009808
        %v4798 = vunpack.c.0.s8 %v4797
        %v4799 = vlaneseq
        %v4800 = vshrl.u32 %v4799, 7
        %v4801 = vsub.s32 %v4798, %v4800
        %v4802 = vrot.slane %v4795, %v4801
        %v4803 = vcombine.low %v4765, %v4769
        %v4805 = vunpack.c.l.s4 1983009808
        %v4806 = vunpack.c.0.s8 %v4805
        %v4807 = vlaneseq
        %v4808 = vshrl.u32 %v4807, 7
        %v4809 = vsub.s32 %v4806, %v4808
        %v4810 = vrot.slane %v4803, %v4809
        %v4811 = vcombine.low %v4771, %v4775
        %v4813 = vunpack.c.l.s4 1983009808
        %v4814 = vunpack.c.0.s8 %v4813
        %v4815 = vlaneseq
        %v4816 = vshrl.u32 %v4815, 7
        %v4817 = vsub.s32 %v4814, %v4816
        %v4818 = vrot.slane %v4811, %v4817
        %v4819 = vcombine.low %v4773, %v4777
        %v4821 = vunpack.c.l.s4 1983009808
        %v4822 = vunpack.c.0.s8 %v4821
        %v4823 = vlaneseq
        %v4824 = vshrl.u32 %v4823, 7
        %v4825 = vsub.s32 %v4822, %v4824
        %v4826 = vrot.slane %v4819, %v4825
        %v4827 = vcombine.low %v4802, %v4810
        %v4829 = vunpack.c.l.s4 1934713408
        %v4830 = vunpack.c.0.s8 %v4829
        %v4831 = vlaneseq
        %v4832 = vshrl.u32 %v4831, 7
        %v4833 = vsub.s32 %v4830, %v4832
        %v4834 = vrot.slane %v4827, %v4833
        %v4835 = vcombine.low %v4818, %v4826
        %v4837 = vunpack.c.l.s4 1934713408
        %v4838 = vunpack.c.0.s8 %v4837
        %v4839 = vlaneseq
        %v4840 = vshrl.u32 %v4839, 7
        %v4841 = vsub.s32 %v4838, %v4840
        %v4842 = vrot.slane %v4835, %v4841
        %v4843 = vcombine.low %v4834, %v4842
        %v4844 = vcombine.high %v4834, %v4842
        %v4845 = vcombine.low %v4764, %v4768
        %v4847 = vunpack.c.l.s4 1983009808
        %v4848 = vunpack.c.0.s8 %v4847
        %v4849 = vlaneseq
        %v4850 = vshrl.u32 %v4849, 7
        %v4851 = vsub.s32 %v4848, %v4850
        %v4852 = vrot.slane %v4845, %v4851
        %v4853 = vcombine.low %v4766, %v4770
        %v4855 = vunpack.c.l.s4 1983009808
        %v4856 = vunpack.c.0.s8 %v4855
        %v4857 = vlaneseq
        %v4858 = vshrl.u32 %v4857, 7
        %v4859 = vsub.s32 %v4856, %v4858
        %v4860 = vrot.slane %v4853, %v4859
        %v4861 = vcombine.low %v4772, %v4776
        %v4863 = vunpack.c.l.s4 1983009808
        %v4864 = vunpack.c.0.s8 %v4863
        %v4865 = vlaneseq
        %v4866 = vshrl.u32 %v4865, 7
        %v4867 = vsub.s32 %v4864, %v4866
        %v4868 = vrot.slane %v4861, %v4867
        %v4869 = vcombine.low %v4774, %v4778
        %v4871 = vunpack.c.l.s4 1983009808
        %v4872 = vunpack.c.0.s8 %v4871
        %v4873 = vlaneseq
        %v4874 = vshrl.u32 %v4873, 7
        %v4875 = vsub.s32 %v4872, %v4874
        %v4876 = vrot.slane %v4869, %v4875
        %v4877 = vcombine.low %v4852, %v4860
        %v4879 = vunpack.c.l.s4 1934713408
        %v4880 = vunpack.c.0.s8 %v4879
        %v4881 = vlaneseq
        %v4882 = vshrl.u32 %v4881, 7
        %v4883 = vsub.s32 %v4880, %v4882
        %v4884 = vrot.slane %v4877, %v4883
        %v4885 = vcombine.low %v4868, %v4876
        %v4887 = vunpack.c.l.s4 1934713408
        %v4888 = vunpack.c.0.s8 %v4887
        %v4889 = vlaneseq
        %v4890 = vshrl.u32 %v4889, 7
        %v4891 = vsub.s32 %v4888, %v4890
        %v4892 = vrot.slane %v4885, %v4891
        %v4893 = vcombine.low %v4884, %v4892
        %v4894 = vcombine.high %v4884, %v4892
        %v4895 = vcombine.low %v4779, %v4783
        %v4897 = vunpack.c.l.s4 1983009808
        %v4898 = vunpack.c.0.s8 %v4897
        %v4899 = vlaneseq
        %v4900 = vshrl.u32 %v4899, 7
        %v4901 = vsub.s32 %v4898, %v4900
        %v4902 = vrot.slane %v4895, %v4901
        %v4903 = vcombine.low %v4781, %v4785
        %v4905 = vunpack.c.l.s4 1983009808
        %v4906 = vunpack.c.0.s8 %v4905
        %v4907 = vlaneseq
        %v4908 = vshrl.u32 %v4907, 7
        %v4909 = vsub.s32 %v4906, %v4908
        %v4910 = vrot.slane %v4903, %v4909
        %v4911 = vcombine.low %v4787, %v4791
        %v4913 = vunpack.c.l.s4 1983009808
        %v4914 = vunpack.c.0.s8 %v4913
        %v4915 = vlaneseq
        %v4916 = vshrl.u32 %v4915, 7
        %v4917 = vsub.s32 %v4914, %v4916
        %v4918 = vrot.slane %v4911, %v4917
        %v4919 = vcombine.low %v4789, %v4793
        %v4921 = vunpack.c.l.s4 1983009808
        %v4922 = vunpack.c.0.s8 %v4921
        %v4923 = vlaneseq
        %v4924 = vshrl.u32 %v4923, 7
        %v4925 = vsub.s32 %v4922, %v4924
        %v4926 = vrot.slane %v4919, %v4925
        %v4927 = vcombine.low %v4902, %v4910
        %v4929 = vunpack.c.l.s4 1934713408
        %v4930 = vunpack.c.0.s8 %v4929
        %v4931 = vlaneseq
        %v4932 = vshrl.u32 %v4931, 7
        %v4933 = vsub.s32 %v4930, %v4932
        %v4934 = vrot.slane %v4927, %v4933
        %v4935 = vcombine.low %v4918, %v4926
        %v4937 = vunpack.c.l.s4 1934713408
        %v4938 = vunpack.c.0.s8 %v4937
        %v4939 = vlaneseq
        %v4940 = vshrl.u32 %v4939, 7
        %v4941 = vsub.s32 %v4938, %v4940
        %v4942 = vrot.slane %v4935, %v4941
        %v4943 = vcombine.low %v4934, %v4942
        %v4944 = vcombine.high %v4934, %v4942
        %v4945 = vcombine.low %v4780, %v4784
        %v4947 = vunpack.c.l.s4 1983009808
        %v4948 = vunpack.c.0.s8 %v4947
        %v4949 = vlaneseq
        %v4950 = vshrl.u32 %v4949, 7
        %v4951 = vsub.s32 %v4948, %v4950
        %v4952 = vrot.slane %v4945, %v4951
        %v4953 = vcombine.low %v4782, %v4786
        %v4955 = vunpack.c.l.s4 1983009808
        %v4956 = vunpack.c.0.s8 %v4955
        %v4957 = vlaneseq
        %v4958 = vshrl.u32 %v4957, 7
        %v4959 = vsub.s32 %v4956, %v4958
        %v4960 = vrot.slane %v4953, %v4959
        %v4961 = vcombine.low %v4788, %v4792
        %v4963 = vunpack.c.l.s4 1983009808
        %v4964 = vunpack.c.0.s8 %v4963
        %v4965 = vlaneseq
        %v4966 = vshrl.u32 %v4965, 7
        %v4967 = vsub.s32 %v4964, %v4966
        %v4968 = vrot.slane %v4961, %v4967
        %v4969 = vcombine.low %v4790, %v4794
        %v4971 = vunpack.c.l.s4 1983009808
        %v4972 = vunpack.c.0.s8 %v4971
        %v4973 = vlaneseq
        %v4974 = vshrl.u32 %v4973, 7
        %v4975 = vsub.s32 %v4972, %v4974
        %v4976 = vrot.slane %v4969, %v4975
        %v4977 = vcombine.low %v4952, %v4960
        %v4979 = vunpack.c.l.s4 1934713408
        %v4980 = vunpack.c.0.s8 %v4979
        %v4981 = vlaneseq
        %v4982 = vshrl.u32 %v4981, 7
        %v4983 = vsub.s32 %v4980, %v4982
        %v4984 = vrot.slane %v4977, %v4983
        %v4985 = vcombine.low %v4968, %v4976
        %v4987 = vunpack.c.l.s4 1934713408
        %v4988 = vunpack.c.0.s8 %v4987
        %v4989 = vlaneseq
        %v4990 = vshrl.u32 %v4989, 7
        %v4991 = vsub.s32 %v4988, %v4990
        %v4992 = vrot.slane %v4985, %v4991
        %v4993 = vcombine.low %v4984, %v4992
        %v4994 = vcombine.high %v4984, %v4992
        %v4997 = vpack.i.b16 %v4893, %v4843
        %v4998 = vshrl.u32 %v4843, 16
        %v4999 = vshrl.u32 %v4893, 16
        %v5000 = vpack.i.b16 %v4999, %v4998
        %v5003 = vpack.i.b16 %v4894, %v4844
        %v5004 = vshrl.u32 %v4844, 16
        %v5005 = vshrl.u32 %v4894, 16
        %v5006 = vpack.i.b16 %v5005, %v5004
        %v5009 = vpack.i.b16 %v4993, %v4943
        %v5010 = vshrl.u32 %v4943, 16
        %v5011 = vshrl.u32 %v4993, 16
        %v5012 = vpack.i.b16 %v5011, %v5010
        %v5015 = vpack.i.b16 %v4994, %v4944
        %v5016 = vshrl.u32 %v4944, 16
        %v5017 = vshrl.u32 %v4994, 16
        %v5018 = vpack.i.b16 %v5017, %v5016
        %v5019 = vpack.c.bf16 %v4219, %v4219
        %v5020 = vpack.c.bf16 %v4220, %v4220
        %v5021 = vpack.c.bf16 %v4221, %v4221
        %v5022 = vpack.c.bf16 %v4222, %v4222
        %v5023 = vpack.c.bf16 %v4223, %v4223
        %v5024 = vpack.c.bf16 %v4224, %v4224
        %v5025 = vpack.c.bf16 %v4225, %v4225
        %v5026 = vpack.c.bf16 %v4226, %v4226
        %v5027 = vpack.c.bf16 %v4227, %v4227
        %v5028 = vpack.c.bf16 %v4228, %v4228
        %v5029 = vpack.c.bf16 %v4229, %v4229
        %v5030 = vpack.c.bf16 %v4230, %v4230
        %v5031 = vpack.c.bf16 %v4231, %v4231
        %v5032 = vpack.c.bf16 %v4232, %v4232
        %v5033 = vpack.c.bf16 %v4233, %v4233
        %v5034 = vpack.c.bf16 %v4234, %v4234
        %v5035 = vpack.c.bf16 %v4235, %v4235
        %v5036 = vpack.c.bf16 %v4236, %v4236
        %v5037 = vpack.c.bf16 %v4237, %v4237
        %v5038 = vpack.c.bf16 %v4238, %v4238
        %v5039 = vpack.c.bf16 %v4239, %v4239
        %v5040 = vpack.c.bf16 %v4240, %v4240
        %v5041 = vpack.c.bf16 %v4241, %v4241
        %v5042 = vpack.c.bf16 %v4242, %v4242
        %v5043 = vpack.c.bf16 %v4243, %v4243
        %v5044 = vpack.c.bf16 %v4244, %v4244
        %v5045 = vpack.c.bf16 %v4245, %v4245
        %v5046 = vpack.c.bf16 %v4246, %v4246
        %v5047 = vpack.c.bf16 %v4247, %v4247
        %v5048 = vpack.c.bf16 %v4248, %v4248
        %v5049 = vpack.c.bf16 %v4249, %v4249
        %v5050 = vpack.c.bf16 %v4250, %v4250
        %v5051 = vpack.c.bf16 %v4251, %v4251
        %v5052 = vpack.c.bf16 %v4252, %v4252
        %v5053 = vpack.c.bf16 %v4253, %v4253
        %v5054 = vpack.c.bf16 %v4254, %v4254
        %v5055 = vpack.c.bf16 %v4255, %v4255
        %v5056 = vpack.c.bf16 %v4256, %v4256
        %v5057 = vpack.c.bf16 %v4257, %v4257
        %v5058 = vpack.c.bf16 %v4258, %v4258
        %v5059 = vpack.c.bf16 %v4259, %v4259
        %v5060 = vpack.c.bf16 %v4260, %v4260
        %v5061 = vpack.c.bf16 %v4261, %v4261
        %v5062 = vpack.c.bf16 %v4262, %v4262
        %v5063 = vpack.c.bf16 %v4263, %v4263
        %v5064 = vpack.c.bf16 %v4264, %v4264
        %v5065 = vpack.c.bf16 %v4265, %v4265
        %v5066 = vpack.c.bf16 %v4266, %v4266
        %v5067 = vpack.c.bf16 %v4267, %v4267
        %v5068 = vpack.c.bf16 %v4268, %v4268
        %v5069 = vpack.c.bf16 %v4269, %v4269
        %v5070 = vpack.c.bf16 %v4270, %v4270
        %v5071 = vpack.c.bf16 %v4271, %v4271
        %v5072 = vpack.c.bf16 %v4272, %v4272
        %v5073 = vpack.c.bf16 %v4273, %v4273
        %v5074 = vpack.c.bf16 %v4274, %v4274
        %v5075 = vpack.c.bf16 %v4275, %v4275
        %v5076 = vpack.c.bf16 %v4276, %v4276
        %v5077 = vpack.c.bf16 %v4277, %v4277
        %v5078 = vpack.c.bf16 %v4278, %v4278
        %v5079 = vpack.c.bf16 %v4279, %v4279
        %v5080 = vpack.c.bf16 %v4280, %v4280
        %v5081 = vpack.c.bf16 %v4281, %v4281
        %v5082 = vpack.c.bf16 %v4282, %v4282
        %v5083 = vcombine.low %v5019, %v5023
        %v5085 = vunpack.c.l.s4 1983009808
        %v5086 = vunpack.c.0.s8 %v5085
        %v5087 = vlaneseq
        %v5088 = vshrl.u32 %v5087, 7
        %v5089 = vsub.s32 %v5086, %v5088
        %v5090 = vrot.slane %v5083, %v5089
        %v5091 = vcombine.low %v5021, %v5025
        %v5093 = vunpack.c.l.s4 1983009808
        %v5094 = vunpack.c.0.s8 %v5093
        %v5095 = vlaneseq
        %v5096 = vshrl.u32 %v5095, 7
        %v5097 = vsub.s32 %v5094, %v5096
        %v5098 = vrot.slane %v5091, %v5097
        %v5099 = vcombine.low %v5027, %v5031
        %v5101 = vunpack.c.l.s4 1983009808
        %v5102 = vunpack.c.0.s8 %v5101
        %v5103 = vlaneseq
        %v5104 = vshrl.u32 %v5103, 7
        %v5105 = vsub.s32 %v5102, %v5104
        %v5106 = vrot.slane %v5099, %v5105
        %v5107 = vcombine.low %v5029, %v5033
        %v5109 = vunpack.c.l.s4 1983009808
        %v5110 = vunpack.c.0.s8 %v5109
        %v5111 = vlaneseq
        %v5112 = vshrl.u32 %v5111, 7
        %v5113 = vsub.s32 %v5110, %v5112
        %v5114 = vrot.slane %v5107, %v5113
        %v5115 = vcombine.low %v5090, %v5098
        %v5117 = vunpack.c.l.s4 1934713408
        %v5118 = vunpack.c.0.s8 %v5117
        %v5119 = vlaneseq
        %v5120 = vshrl.u32 %v5119, 7
        %v5121 = vsub.s32 %v5118, %v5120
        %v5122 = vrot.slane %v5115, %v5121
        %v5123 = vcombine.low %v5106, %v5114
        %v5125 = vunpack.c.l.s4 1934713408
        %v5126 = vunpack.c.0.s8 %v5125
        %v5127 = vlaneseq
        %v5128 = vshrl.u32 %v5127, 7
        %v5129 = vsub.s32 %v5126, %v5128
        %v5130 = vrot.slane %v5123, %v5129
        %v5131 = vcombine.low %v5122, %v5130
        %v5132 = vcombine.high %v5122, %v5130
        %v5133 = vcombine.low %v5020, %v5024
        %v5135 = vunpack.c.l.s4 1983009808
        %v5136 = vunpack.c.0.s8 %v5135
        %v5137 = vlaneseq
        %v5138 = vshrl.u32 %v5137, 7
        %v5139 = vsub.s32 %v5136, %v5138
        %v5140 = vrot.slane %v5133, %v5139
        %v5141 = vcombine.low %v5022, %v5026
        %v5143 = vunpack.c.l.s4 1983009808
        %v5144 = vunpack.c.0.s8 %v5143
        %v5145 = vlaneseq
        %v5146 = vshrl.u32 %v5145, 7
        %v5147 = vsub.s32 %v5144, %v5146
        %v5148 = vrot.slane %v5141, %v5147
        %v5149 = vcombine.low %v5028, %v5032
        %v5151 = vunpack.c.l.s4 1983009808
        %v5152 = vunpack.c.0.s8 %v5151
        %v5153 = vlaneseq
        %v5154 = vshrl.u32 %v5153, 7
        %v5155 = vsub.s32 %v5152, %v5154
        %v5156 = vrot.slane %v5149, %v5155
        %v5157 = vcombine.low %v5030, %v5034
        %v5159 = vunpack.c.l.s4 1983009808
        %v5160 = vunpack.c.0.s8 %v5159
        %v5161 = vlaneseq
        %v5162 = vshrl.u32 %v5161, 7
        %v5163 = vsub.s32 %v5160, %v5162
        %v5164 = vrot.slane %v5157, %v5163
        %v5165 = vcombine.low %v5140, %v5148
        %v5167 = vunpack.c.l.s4 1934713408
        %v5168 = vunpack.c.0.s8 %v5167
        %v5169 = vlaneseq
        %v5170 = vshrl.u32 %v5169, 7
        %v5171 = vsub.s32 %v5168, %v5170
        %v5172 = vrot.slane %v5165, %v5171
        %v5173 = vcombine.low %v5156, %v5164
        %v5175 = vunpack.c.l.s4 1934713408
        %v5176 = vunpack.c.0.s8 %v5175
        %v5177 = vlaneseq
        %v5178 = vshrl.u32 %v5177, 7
        %v5179 = vsub.s32 %v5176, %v5178
        %v5180 = vrot.slane %v5173, %v5179
        %v5181 = vcombine.low %v5172, %v5180
        %v5182 = vcombine.high %v5172, %v5180
        %v5183 = vcombine.low %v5035, %v5039
        %v5185 = vunpack.c.l.s4 1983009808
        %v5186 = vunpack.c.0.s8 %v5185
        %v5187 = vlaneseq
        %v5188 = vshrl.u32 %v5187, 7
        %v5189 = vsub.s32 %v5186, %v5188
        %v5190 = vrot.slane %v5183, %v5189
        %v5191 = vcombine.low %v5037, %v5041
        %v5193 = vunpack.c.l.s4 1983009808
        %v5194 = vunpack.c.0.s8 %v5193
        %v5195 = vlaneseq
        %v5196 = vshrl.u32 %v5195, 7
        %v5197 = vsub.s32 %v5194, %v5196
        %v5198 = vrot.slane %v5191, %v5197
        %v5199 = vcombine.low %v5043, %v5047
        %v5201 = vunpack.c.l.s4 1983009808
        %v5202 = vunpack.c.0.s8 %v5201
        %v5203 = vlaneseq
        %v5204 = vshrl.u32 %v5203, 7
        %v5205 = vsub.s32 %v5202, %v5204
        %v5206 = vrot.slane %v5199, %v5205
        %v5207 = vcombine.low %v5045, %v5049
        %v5209 = vunpack.c.l.s4 1983009808
        %v5210 = vunpack.c.0.s8 %v5209
        %v5211 = vlaneseq
        %v5212 = vshrl.u32 %v5211, 7
        %v5213 = vsub.s32 %v5210, %v5212
        %v5214 = vrot.slane %v5207, %v5213
        %v5215 = vcombine.low %v5190, %v5198
        %v5217 = vunpack.c.l.s4 1934713408
        %v5218 = vunpack.c.0.s8 %v5217
        %v5219 = vlaneseq
        %v5220 = vshrl.u32 %v5219, 7
        %v5221 = vsub.s32 %v5218, %v5220
        %v5222 = vrot.slane %v5215, %v5221
        %v5223 = vcombine.low %v5206, %v5214
        %v5225 = vunpack.c.l.s4 1934713408
        %v5226 = vunpack.c.0.s8 %v5225
        %v5227 = vlaneseq
        %v5228 = vshrl.u32 %v5227, 7
        %v5229 = vsub.s32 %v5226, %v5228
        %v5230 = vrot.slane %v5223, %v5229
        %v5231 = vcombine.low %v5222, %v5230
        %v5232 = vcombine.high %v5222, %v5230
        %v5233 = vcombine.low %v5036, %v5040
        %v5235 = vunpack.c.l.s4 1983009808
        %v5236 = vunpack.c.0.s8 %v5235
        %v5237 = vlaneseq
        %v5238 = vshrl.u32 %v5237, 7
        %v5239 = vsub.s32 %v5236, %v5238
        %v5240 = vrot.slane %v5233, %v5239
        %v5241 = vcombine.low %v5038, %v5042
        %v5243 = vunpack.c.l.s4 1983009808
        %v5244 = vunpack.c.0.s8 %v5243
        %v5245 = vlaneseq
        %v5246 = vshrl.u32 %v5245, 7
        %v5247 = vsub.s32 %v5244, %v5246
        %v5248 = vrot.slane %v5241, %v5247
        %v5249 = vcombine.low %v5044, %v5048
        %v5251 = vunpack.c.l.s4 1983009808
        %v5252 = vunpack.c.0.s8 %v5251
        %v5253 = vlaneseq
        %v5254 = vshrl.u32 %v5253, 7
        %v5255 = vsub.s32 %v5252, %v5254
        %v5256 = vrot.slane %v5249, %v5255
        %v5257 = vcombine.low %v5046, %v5050
        %v5259 = vunpack.c.l.s4 1983009808
        %v5260 = vunpack.c.0.s8 %v5259
        %v5261 = vlaneseq
        %v5262 = vshrl.u32 %v5261, 7
        %v5263 = vsub.s32 %v5260, %v5262
        %v5264 = vrot.slane %v5257, %v5263
        %v5265 = vcombine.low %v5240, %v5248
        %v5267 = vunpack.c.l.s4 1934713408
        %v5268 = vunpack.c.0.s8 %v5267
        %v5269 = vlaneseq
        %v5270 = vshrl.u32 %v5269, 7
        %v5271 = vsub.s32 %v5268, %v5270
        %v5272 = vrot.slane %v5265, %v5271
        %v5273 = vcombine.low %v5256, %v5264
        %v5275 = vunpack.c.l.s4 1934713408
        %v5276 = vunpack.c.0.s8 %v5275
        %v5277 = vlaneseq
        %v5278 = vshrl.u32 %v5277, 7
        %v5279 = vsub.s32 %v5276, %v5278
        %v5280 = vrot.slane %v5273, %v5279
        %v5281 = vcombine.low %v5272, %v5280
        %v5282 = vcombine.high %v5272, %v5280
        %v5283 = vcombine.low %v5051, %v5055
        %v5285 = vunpack.c.l.s4 1983009808
        %v5286 = vunpack.c.0.s8 %v5285
        %v5287 = vlaneseq
        %v5288 = vshrl.u32 %v5287, 7
        %v5289 = vsub.s32 %v5286, %v5288
        %v5290 = vrot.slane %v5283, %v5289
        %v5291 = vcombine.low %v5053, %v5057
        %v5293 = vunpack.c.l.s4 1983009808
        %v5294 = vunpack.c.0.s8 %v5293
        %v5295 = vlaneseq
        %v5296 = vshrl.u32 %v5295, 7
        %v5297 = vsub.s32 %v5294, %v5296
        %v5298 = vrot.slane %v5291, %v5297
        %v5299 = vcombine.low %v5059, %v5063
        %v5301 = vunpack.c.l.s4 1983009808
        %v5302 = vunpack.c.0.s8 %v5301
        %v5303 = vlaneseq
        %v5304 = vshrl.u32 %v5303, 7
        %v5305 = vsub.s32 %v5302, %v5304
        %v5306 = vrot.slane %v5299, %v5305
        %v5307 = vcombine.low %v5061, %v5065
        %v5309 = vunpack.c.l.s4 1983009808
        %v5310 = vunpack.c.0.s8 %v5309
        %v5311 = vlaneseq
        %v5312 = vshrl.u32 %v5311, 7
        %v5313 = vsub.s32 %v5310, %v5312
        %v5314 = vrot.slane %v5307, %v5313
        %v5315 = vcombine.low %v5290, %v5298
        %v5317 = vunpack.c.l.s4 1934713408
        %v5318 = vunpack.c.0.s8 %v5317
        %v5319 = vlaneseq
        %v5320 = vshrl.u32 %v5319, 7
        %v5321 = vsub.s32 %v5318, %v5320
        %v5322 = vrot.slane %v5315, %v5321
        %v5323 = vcombine.low %v5306, %v5314
        %v5325 = vunpack.c.l.s4 1934713408
        %v5326 = vunpack.c.0.s8 %v5325
        %v5327 = vlaneseq
        %v5328 = vshrl.u32 %v5327, 7
        %v5329 = vsub.s32 %v5326, %v5328
        %v5330 = vrot.slane %v5323, %v5329
        %v5331 = vcombine.low %v5322, %v5330
        %v5332 = vcombine.high %v5322, %v5330
        %v5333 = vcombine.low %v5052, %v5056
        %v5335 = vunpack.c.l.s4 1983009808
        %v5336 = vunpack.c.0.s8 %v5335
        %v5337 = vlaneseq
        %v5338 = vshrl.u32 %v5337, 7
        %v5339 = vsub.s32 %v5336, %v5338
        %v5340 = vrot.slane %v5333, %v5339
        %v5341 = vcombine.low %v5054, %v5058
        %v5343 = vunpack.c.l.s4 1983009808
        %v5344 = vunpack.c.0.s8 %v5343
        %v5345 = vlaneseq
        %v5346 = vshrl.u32 %v5345, 7
        %v5347 = vsub.s32 %v5344, %v5346
        %v5348 = vrot.slane %v5341, %v5347
        %v5349 = vcombine.low %v5060, %v5064
        %v5351 = vunpack.c.l.s4 1983009808
        %v5352 = vunpack.c.0.s8 %v5351
        %v5353 = vlaneseq
        %v5354 = vshrl.u32 %v5353, 7
        %v5355 = vsub.s32 %v5352, %v5354
        %v5356 = vrot.slane %v5349, %v5355
        %v5357 = vcombine.low %v5062, %v5066
        %v5359 = vunpack.c.l.s4 1983009808
        %v5360 = vunpack.c.0.s8 %v5359
        %v5361 = vlaneseq
        %v5362 = vshrl.u32 %v5361, 7
        %v5363 = vsub.s32 %v5360, %v5362
        %v5364 = vrot.slane %v5357, %v5363
        %v5365 = vcombine.low %v5340, %v5348
        %v5367 = vunpack.c.l.s4 1934713408
        %v5368 = vunpack.c.0.s8 %v5367
        %v5369 = vlaneseq
        %v5370 = vshrl.u32 %v5369, 7
        %v5371 = vsub.s32 %v5368, %v5370
        %v5372 = vrot.slane %v5365, %v5371
        %v5373 = vcombine.low %v5356, %v5364
        %v5375 = vunpack.c.l.s4 1934713408
        %v5376 = vunpack.c.0.s8 %v5375
        %v5377 = vlaneseq
        %v5378 = vshrl.u32 %v5377, 7
        %v5379 = vsub.s32 %v5376, %v5378
        %v5380 = vrot.slane %v5373, %v5379
        %v5381 = vcombine.low %v5372, %v5380
        %v5382 = vcombine.high %v5372, %v5380
        %v5383 = vcombine.low %v5067, %v5071
        %v5385 = vunpack.c.l.s4 1983009808
        %v5386 = vunpack.c.0.s8 %v5385
        %v5387 = vlaneseq
        %v5388 = vshrl.u32 %v5387, 7
        %v5389 = vsub.s32 %v5386, %v5388
        %v5390 = vrot.slane %v5383, %v5389
        %v5391 = vcombine.low %v5069, %v5073
        %v5393 = vunpack.c.l.s4 1983009808
        %v5394 = vunpack.c.0.s8 %v5393
        %v5395 = vlaneseq
        %v5396 = vshrl.u32 %v5395, 7
        %v5397 = vsub.s32 %v5394, %v5396
        %v5398 = vrot.slane %v5391, %v5397
        %v5399 = vcombine.low %v5075, %v5079
        %v5401 = vunpack.c.l.s4 1983009808
        %v5402 = vunpack.c.0.s8 %v5401
        %v5403 = vlaneseq
        %v5404 = vshrl.u32 %v5403, 7
        %v5405 = vsub.s32 %v5402, %v5404
        %v5406 = vrot.slane %v5399, %v5405
        %v5407 = vcombine.low %v5077, %v5081
        %v5409 = vunpack.c.l.s4 1983009808
        %v5410 = vunpack.c.0.s8 %v5409
        %v5411 = vlaneseq
        %v5412 = vshrl.u32 %v5411, 7
        %v5413 = vsub.s32 %v5410, %v5412
        %v5414 = vrot.slane %v5407, %v5413
        %v5415 = vcombine.low %v5390, %v5398
        %v5417 = vunpack.c.l.s4 1934713408
        %v5418 = vunpack.c.0.s8 %v5417
        %v5419 = vlaneseq
        %v5420 = vshrl.u32 %v5419, 7
        %v5421 = vsub.s32 %v5418, %v5420
        %v5422 = vrot.slane %v5415, %v5421
        %v5423 = vcombine.low %v5406, %v5414
        %v5425 = vunpack.c.l.s4 1934713408
        %v5426 = vunpack.c.0.s8 %v5425
        %v5427 = vlaneseq
        %v5428 = vshrl.u32 %v5427, 7
        %v5429 = vsub.s32 %v5426, %v5428
        %v5430 = vrot.slane %v5423, %v5429
        %v5431 = vcombine.low %v5422, %v5430
        %v5432 = vcombine.high %v5422, %v5430
        %v5433 = vcombine.low %v5068, %v5072
        %v5435 = vunpack.c.l.s4 1983009808
        %v5436 = vunpack.c.0.s8 %v5435
        %v5437 = vlaneseq
        %v5438 = vshrl.u32 %v5437, 7
        %v5439 = vsub.s32 %v5436, %v5438
        %v5440 = vrot.slane %v5433, %v5439
        %v5441 = vcombine.low %v5070, %v5074
        %v5443 = vunpack.c.l.s4 1983009808
        %v5444 = vunpack.c.0.s8 %v5443
        %v5445 = vlaneseq
        %v5446 = vshrl.u32 %v5445, 7
        %v5447 = vsub.s32 %v5444, %v5446
        %v5448 = vrot.slane %v5441, %v5447
        %v5449 = vcombine.low %v5076, %v5080
        %v5451 = vunpack.c.l.s4 1983009808
        %v5452 = vunpack.c.0.s8 %v5451
        %v5453 = vlaneseq
        %v5454 = vshrl.u32 %v5453, 7
        %v5455 = vsub.s32 %v5452, %v5454
        %v5456 = vrot.slane %v5449, %v5455
        %v5457 = vcombine.low %v5078, %v5082
        %v5459 = vunpack.c.l.s4 1983009808
        %v5460 = vunpack.c.0.s8 %v5459
        %v5461 = vlaneseq
        %v5462 = vshrl.u32 %v5461, 7
        %v5463 = vsub.s32 %v5460, %v5462
        %v5464 = vrot.slane %v5457, %v5463
        %v5465 = vcombine.low %v5440, %v5448
        %v5467 = vunpack.c.l.s4 1934713408
        %v5468 = vunpack.c.0.s8 %v5467
        %v5469 = vlaneseq
        %v5470 = vshrl.u32 %v5469, 7
        %v5471 = vsub.s32 %v5468, %v5470
        %v5472 = vrot.slane %v5465, %v5471
        %v5473 = vcombine.low %v5456, %v5464
        %v5475 = vunpack.c.l.s4 1934713408
        %v5476 = vunpack.c.0.s8 %v5475
        %v5477 = vlaneseq
        %v5478 = vshrl.u32 %v5477, 7
        %v5479 = vsub.s32 %v5476, %v5478
        %v5480 = vrot.slane %v5473, %v5479
        %v5481 = vcombine.low %v5472, %v5480
        %v5482 = vcombine.high %v5472, %v5480
        %v5485 = vpack.i.b16 %v5181, %v5131
        %v5486 = vshrl.u32 %v5131, 16
        %v5487 = vshrl.u32 %v5181, 16
        %v5488 = vpack.i.b16 %v5487, %v5486
        %v5491 = vpack.i.b16 %v5182, %v5132
        %v5492 = vshrl.u32 %v5132, 16
        %v5493 = vshrl.u32 %v5182, 16
        %v5494 = vpack.i.b16 %v5493, %v5492
        %v5497 = vpack.i.b16 %v5281, %v5231
        %v5498 = vshrl.u32 %v5231, 16
        %v5499 = vshrl.u32 %v5281, 16
        %v5500 = vpack.i.b16 %v5499, %v5498
        %v5503 = vpack.i.b16 %v5282, %v5232
        %v5504 = vshrl.u32 %v5232, 16
        %v5505 = vshrl.u32 %v5282, 16
        %v5506 = vpack.i.b16 %v5505, %v5504
        %v5509 = vpack.i.b16 %v5381, %v5331
        %v5510 = vshrl.u32 %v5331, 16
        %v5511 = vshrl.u32 %v5381, 16
        %v5512 = vpack.i.b16 %v5511, %v5510
        %v5515 = vpack.i.b16 %v5382, %v5332
        %v5516 = vshrl.u32 %v5332, 16
        %v5517 = vshrl.u32 %v5382, 16
        %v5518 = vpack.i.b16 %v5517, %v5516
        %v5521 = vpack.i.b16 %v5481, %v5431
        %v5522 = vshrl.u32 %v5431, 16
        %v5523 = vshrl.u32 %v5481, 16
        %v5524 = vpack.i.b16 %v5523, %v5522
        %v5527 = vpack.i.b16 %v5482, %v5432
        %v5528 = vshrl.u32 %v5432, 16
        %v5529 = vshrl.u32 %v5482, 16
        %v5530 = vpack.i.b16 %v5529, %v5528
        %v5531 = vpack.c.bf16 %v4731, %v4731
        %v5532 = vpack.c.bf16 %v4732, %v4732
        %v5533 = vpack.c.bf16 %v4733, %v4733
        %v5534 = vpack.c.bf16 %v4734, %v4734
        %v5535 = vpack.c.bf16 %v4735, %v4735
        %v5536 = vpack.c.bf16 %v4736, %v4736
        %v5537 = vpack.c.bf16 %v4737, %v4737
        %v5538 = vpack.c.bf16 %v4738, %v4738
        %v5539 = vpack.c.bf16 %v4739, %v4739
        %v5540 = vpack.c.bf16 %v4740, %v4740
        %v5541 = vpack.c.bf16 %v4741, %v4741
        %v5542 = vpack.c.bf16 %v4742, %v4742
        %v5543 = vpack.c.bf16 %v4743, %v4743
        %v5544 = vpack.c.bf16 %v4744, %v4744
        %v5545 = vpack.c.bf16 %v4745, %v4745
        %v5546 = vpack.c.bf16 %v4746, %v4746
        %v5547 = vpack.c.bf16 %v4747, %v4747
        %v5548 = vpack.c.bf16 %v4748, %v4748
        %v5549 = vpack.c.bf16 %v4749, %v4749
        %v5550 = vpack.c.bf16 %v4750, %v4750
        %v5551 = vpack.c.bf16 %v4751, %v4751
        %v5552 = vpack.c.bf16 %v4752, %v4752
        %v5553 = vpack.c.bf16 %v4753, %v4753
        %v5554 = vpack.c.bf16 %v4754, %v4754
        %v5555 = vpack.c.bf16 %v4755, %v4755
        %v5556 = vpack.c.bf16 %v4756, %v4756
        %v5557 = vpack.c.bf16 %v4757, %v4757
        %v5558 = vpack.c.bf16 %v4758, %v4758
        %v5559 = vpack.c.bf16 %v4759, %v4759
        %v5560 = vpack.c.bf16 %v4760, %v4760
        %v5561 = vpack.c.bf16 %v4761, %v4761
        %v5562 = vpack.c.bf16 %v4762, %v4762
        %v5563 = vcombine.low %v5531, %v5535
        %v5565 = vunpack.c.l.s4 1983009808
        %v5566 = vunpack.c.0.s8 %v5565
        %v5567 = vlaneseq
        %v5568 = vshrl.u32 %v5567, 7
        %v5569 = vsub.s32 %v5566, %v5568
        %v5570 = vrot.slane %v5563, %v5569
        %v5571 = vcombine.low %v5533, %v5537
        %v5573 = vunpack.c.l.s4 1983009808
        %v5574 = vunpack.c.0.s8 %v5573
        %v5575 = vlaneseq
        %v5576 = vshrl.u32 %v5575, 7
        %v5577 = vsub.s32 %v5574, %v5576
        %v5578 = vrot.slane %v5571, %v5577
        %v5579 = vcombine.low %v5539, %v5543
        %v5581 = vunpack.c.l.s4 1983009808
        %v5582 = vunpack.c.0.s8 %v5581
        %v5583 = vlaneseq
        %v5584 = vshrl.u32 %v5583, 7
        %v5585 = vsub.s32 %v5582, %v5584
        %v5586 = vrot.slane %v5579, %v5585
        %v5587 = vcombine.low %v5541, %v5545
        %v5589 = vunpack.c.l.s4 1983009808
        %v5590 = vunpack.c.0.s8 %v5589
        %v5591 = vlaneseq
        %v5592 = vshrl.u32 %v5591, 7
        %v5593 = vsub.s32 %v5590, %v5592
        %v5594 = vrot.slane %v5587, %v5593
        %v5595 = vcombine.low %v5570, %v5578
        %v5597 = vunpack.c.l.s4 1934713408
        %v5598 = vunpack.c.0.s8 %v5597
        %v5599 = vlaneseq
        %v5600 = vshrl.u32 %v5599, 7
        %v5601 = vsub.s32 %v5598, %v5600
        %v5602 = vrot.slane %v5595, %v5601
        %v5603 = vcombine.low %v5586, %v5594
        %v5605 = vunpack.c.l.s4 1934713408
        %v5606 = vunpack.c.0.s8 %v5605
        %v5607 = vlaneseq
        %v5608 = vshrl.u32 %v5607, 7
        %v5609 = vsub.s32 %v5606, %v5608
        %v5610 = vrot.slane %v5603, %v5609
        %v5611 = vcombine.low %v5602, %v5610
        %v5612 = vcombine.high %v5602, %v5610
        %v5613 = vcombine.low %v5532, %v5536
        %v5615 = vunpack.c.l.s4 1983009808
        %v5616 = vunpack.c.0.s8 %v5615
        %v5617 = vlaneseq
        %v5618 = vshrl.u32 %v5617, 7
        %v5619 = vsub.s32 %v5616, %v5618
        %v5620 = vrot.slane %v5613, %v5619
        %v5621 = vcombine.low %v5534, %v5538
        %v5623 = vunpack.c.l.s4 1983009808
        %v5624 = vunpack.c.0.s8 %v5623
        %v5625 = vlaneseq
        %v5626 = vshrl.u32 %v5625, 7
        %v5627 = vsub.s32 %v5624, %v5626
        %v5628 = vrot.slane %v5621, %v5627
        %v5629 = vcombine.low %v5540, %v5544
        %v5631 = vunpack.c.l.s4 1983009808
        %v5632 = vunpack.c.0.s8 %v5631
        %v5633 = vlaneseq
        %v5634 = vshrl.u32 %v5633, 7
        %v5635 = vsub.s32 %v5632, %v5634
        %v5636 = vrot.slane %v5629, %v5635
        %v5637 = vcombine.low %v5542, %v5546
        %v5639 = vunpack.c.l.s4 1983009808
        %v5640 = vunpack.c.0.s8 %v5639
        %v5641 = vlaneseq
        %v5642 = vshrl.u32 %v5641, 7
        %v5643 = vsub.s32 %v5640, %v5642
        %v5644 = vrot.slane %v5637, %v5643
        %v5645 = vcombine.low %v5620, %v5628
        %v5647 = vunpack.c.l.s4 1934713408
        %v5648 = vunpack.c.0.s8 %v5647
        %v5649 = vlaneseq
        %v5650 = vshrl.u32 %v5649, 7
        %v5651 = vsub.s32 %v5648, %v5650
        %v5652 = vrot.slane %v5645, %v5651
        %v5653 = vcombine.low %v5636, %v5644
        %v5655 = vunpack.c.l.s4 1934713408
        %v5656 = vunpack.c.0.s8 %v5655
        %v5657 = vlaneseq
        %v5658 = vshrl.u32 %v5657, 7
        %v5659 = vsub.s32 %v5656, %v5658
        %v5660 = vrot.slane %v5653, %v5659
        %v5661 = vcombine.low %v5652, %v5660
        %v5662 = vcombine.high %v5652, %v5660
        %v5663 = vcombine.low %v5547, %v5551
        %v5665 = vunpack.c.l.s4 1983009808
        %v5666 = vunpack.c.0.s8 %v5665
        %v5667 = vlaneseq
        %v5668 = vshrl.u32 %v5667, 7
        %v5669 = vsub.s32 %v5666, %v5668
        %v5670 = vrot.slane %v5663, %v5669
        %v5671 = vcombine.low %v5549, %v5553
        %v5673 = vunpack.c.l.s4 1983009808
        %v5674 = vunpack.c.0.s8 %v5673
        %v5675 = vlaneseq
        %v5676 = vshrl.u32 %v5675, 7
        %v5677 = vsub.s32 %v5674, %v5676
        %v5678 = vrot.slane %v5671, %v5677
        %v5679 = vcombine.low %v5555, %v5559
        %v5681 = vunpack.c.l.s4 1983009808
        %v5682 = vunpack.c.0.s8 %v5681
        %v5683 = vlaneseq
        %v5684 = vshrl.u32 %v5683, 7
        %v5685 = vsub.s32 %v5682, %v5684
        %v5686 = vrot.slane %v5679, %v5685
        %v5687 = vcombine.low %v5557, %v5561
        %v5689 = vunpack.c.l.s4 1983009808
        %v5690 = vunpack.c.0.s8 %v5689
        %v5691 = vlaneseq
        %v5692 = vshrl.u32 %v5691, 7
        %v5693 = vsub.s32 %v5690, %v5692
        %v5694 = vrot.slane %v5687, %v5693
        %v5695 = vcombine.low %v5670, %v5678
        %v5697 = vunpack.c.l.s4 1934713408
        %v5698 = vunpack.c.0.s8 %v5697
        %v5699 = vlaneseq
        %v5700 = vshrl.u32 %v5699, 7
        %v5701 = vsub.s32 %v5698, %v5700
        %v5702 = vrot.slane %v5695, %v5701
        %v5703 = vcombine.low %v5686, %v5694
        %v5705 = vunpack.c.l.s4 1934713408
        %v5706 = vunpack.c.0.s8 %v5705
        %v5707 = vlaneseq
        %v5708 = vshrl.u32 %v5707, 7
        %v5709 = vsub.s32 %v5706, %v5708
        %v5710 = vrot.slane %v5703, %v5709
        %v5711 = vcombine.low %v5702, %v5710
        %v5712 = vcombine.high %v5702, %v5710
        %v5713 = vcombine.low %v5548, %v5552
        %v5715 = vunpack.c.l.s4 1983009808
        %v5716 = vunpack.c.0.s8 %v5715
        %v5717 = vlaneseq
        %v5718 = vshrl.u32 %v5717, 7
        %v5719 = vsub.s32 %v5716, %v5718
        %v5720 = vrot.slane %v5713, %v5719
        %v5721 = vcombine.low %v5550, %v5554
        %v5723 = vunpack.c.l.s4 1983009808
        %v5724 = vunpack.c.0.s8 %v5723
        %v5725 = vlaneseq
        %v5726 = vshrl.u32 %v5725, 7
        %v5727 = vsub.s32 %v5724, %v5726
        %v5728 = vrot.slane %v5721, %v5727
        %v5729 = vcombine.low %v5556, %v5560
        %v5731 = vunpack.c.l.s4 1983009808
        %v5732 = vunpack.c.0.s8 %v5731
        %v5733 = vlaneseq
        %v5734 = vshrl.u32 %v5733, 7
        %v5735 = vsub.s32 %v5732, %v5734
        %v5736 = vrot.slane %v5729, %v5735
        %v5737 = vcombine.low %v5558, %v5562
        %v5739 = vunpack.c.l.s4 1983009808
        %v5740 = vunpack.c.0.s8 %v5739
        %v5741 = vlaneseq
        %v5742 = vshrl.u32 %v5741, 7
        %v5743 = vsub.s32 %v5740, %v5742
        %v5744 = vrot.slane %v5737, %v5743
        %v5745 = vcombine.low %v5720, %v5728
        %v5747 = vunpack.c.l.s4 1934713408
        %v5748 = vunpack.c.0.s8 %v5747
        %v5749 = vlaneseq
        %v5750 = vshrl.u32 %v5749, 7
        %v5751 = vsub.s32 %v5748, %v5750
        %v5752 = vrot.slane %v5745, %v5751
        %v5753 = vcombine.low %v5736, %v5744
        %v5755 = vunpack.c.l.s4 1934713408
        %v5756 = vunpack.c.0.s8 %v5755
        %v5757 = vlaneseq
        %v5758 = vshrl.u32 %v5757, 7
        %v5759 = vsub.s32 %v5756, %v5758
        %v5760 = vrot.slane %v5753, %v5759
        %v5761 = vcombine.low %v5752, %v5760
        %v5762 = vcombine.high %v5752, %v5760
        %v5765 = vpack.i.b16 %v5661, %v5611
        %v5766 = vshrl.u32 %v5611, 16
        %v5767 = vshrl.u32 %v5661, 16
        %v5768 = vpack.i.b16 %v5767, %v5766
        %v5771 = vpack.i.b16 %v5662, %v5612
        %v5772 = vshrl.u32 %v5612, 16
        %v5773 = vshrl.u32 %v5662, 16
        %v5774 = vpack.i.b16 %v5773, %v5772
        %v5777 = vpack.i.b16 %v5761, %v5711
        %v5778 = vshrl.u32 %v5711, 16
        %v5779 = vshrl.u32 %v5761, 16
        %v5780 = vpack.i.b16 %v5779, %v5778
        %v5783 = vpack.i.b16 %v5762, %v5712
        %v5784 = vshrl.u32 %v5712, 16
        %v5785 = vshrl.u32 %v5762, 16
        %v5786 = vpack.i.b16 %v5785, %v5784
        %5795 = vrot.lane.b32.xlu0 %v1486, 112
        %v5796 = vpop.permute.xlu0 %5795
        %5797 = vrot.lane.b32.xlu0 %v1489, 112
        %v5798 = vpop.permute.xlu0 %5797
        %5799 = vrot.lane.b32.xlu0 %v1494, 112
        %v5800 = vpop.permute.xlu0 %5799
        %5801 = vrot.lane.b32.xlu0 %v1497, 112
        %v5802 = vpop.permute.xlu0 %5801
        %5803 = vrot.lane.b32.xlu0 %v1502, 112
        %v5804 = vpop.permute.xlu0 %5803
        %5805 = vrot.lane.b32.xlu0 %v1505, 112
        %v5806 = vpop.permute.xlu0 %5805
        %5807 = vrot.lane.b32.xlu0 %v1510, 112
        %v5808 = vpop.permute.xlu0 %5807
        %5809 = vrot.lane.b32.xlu0 %v1513, 112
        %v5810 = vpop.permute.xlu0 %5809
        %5819 = vrot.lane.b32.xlu0 %v1486, 96
        %v5820 = vpop.permute.xlu0 %5819
        %5821 = vrot.lane.b32.xlu0 %v1489, 96
        %v5822 = vpop.permute.xlu0 %5821
        %5823 = vrot.lane.b32.xlu0 %v1494, 96
        %v5824 = vpop.permute.xlu0 %5823
        %5825 = vrot.lane.b32.xlu0 %v1497, 96
        %v5826 = vpop.permute.xlu0 %5825
        %5827 = vrot.lane.b32.xlu0 %v1502, 96
        %v5828 = vpop.permute.xlu0 %5827
        %5829 = vrot.lane.b32.xlu0 %v1505, 96
        %v5830 = vpop.permute.xlu0 %5829
        %5831 = vrot.lane.b32.xlu0 %v1510, 96
        %v5832 = vpop.permute.xlu0 %5831
        %5833 = vrot.lane.b32.xlu0 %v1513, 96
        %v5834 = vpop.permute.xlu0 %5833
        %5843 = vrot.lane.b32.xlu0 %v1486, 80
        %v5844 = vpop.permute.xlu0 %5843
        %5845 = vrot.lane.b32.xlu0 %v1489, 80
        %v5846 = vpop.permute.xlu0 %5845
        %5847 = vrot.lane.b32.xlu0 %v1494, 80
        %v5848 = vpop.permute.xlu0 %5847
        %5849 = vrot.lane.b32.xlu0 %v1497, 80
        %v5850 = vpop.permute.xlu0 %5849
        %5851 = vrot.lane.b32.xlu0 %v1502, 80
        %v5852 = vpop.permute.xlu0 %5851
        %5853 = vrot.lane.b32.xlu0 %v1505, 80
        %v5854 = vpop.permute.xlu0 %5853
        %5855 = vrot.lane.b32.xlu0 %v1510, 80
        %v5856 = vpop.permute.xlu0 %5855
        %5857 = vrot.lane.b32.xlu0 %v1513, 80
        %v5858 = vpop.permute.xlu0 %5857
        %v5867 = vcombine.low %v1486, %v5820
        %v5868 = vcombine.high %v1486, %v5820
        %v5870 = vunpack.c.l.s4 1983009808
        %v5871 = vunpack.c.0.s8 %v5870
        %v5872 = vlaneseq
        %v5873 = vshrl.u32 %v5872, 7
        %v5874 = vsub.s32 %v5871, %v5873
        %v5875 = vrot.slane %v5867, %v5874
        %v5877 = vunpack.c.l.s4 1983009808
        %v5878 = vunpack.c.0.s8 %v5877
        %v5879 = vlaneseq
        %v5880 = vshrl.u32 %v5879, 7
        %v5881 = vsub.s32 %v5878, %v5880
        %v5882 = vrot.slane %v5868, %v5881
        %v5883 = vcombine.low %v5796, %v5844
        %v5884 = vcombine.high %v5796, %v5844
        %v5886 = vunpack.c.l.s4 1983009808
        %v5887 = vunpack.c.0.s8 %v5886
        %v5888 = vlaneseq
        %v5889 = vshrl.u32 %v5888, 7
        %v5890 = vsub.s32 %v5887, %v5889
        %v5891 = vrot.slane %v5883, %v5890
        %v5893 = vunpack.c.l.s4 1983009808
        %v5894 = vunpack.c.0.s8 %v5893
        %v5895 = vlaneseq
        %v5896 = vshrl.u32 %v5895, 7
        %v5897 = vsub.s32 %v5894, %v5896
        %v5898 = vrot.slane %v5884, %v5897
        %v5899 = vcombine.low %v5875, %v5891
        %v5900 = vcombine.high %v5875, %v5891
        %v5902 = vunpack.c.l.s4 1934713408
        %v5903 = vunpack.c.0.s8 %v5902
        %v5904 = vlaneseq
        %v5905 = vshrl.u32 %v5904, 7
        %v5906 = vsub.s32 %v5903, %v5905
        %v5907 = vrot.slane %v5899, %v5906
        %v5909 = vunpack.c.l.s4 1934713408
        %v5910 = vunpack.c.0.s8 %v5909
        %v5911 = vlaneseq
        %v5912 = vshrl.u32 %v5911, 7
        %v5913 = vsub.s32 %v5910, %v5912
        %v5914 = vrot.slane %v5900, %v5913
        %v5915 = vcombine.low %v5882, %v5898
        %v5916 = vcombine.high %v5882, %v5898
        %v5918 = vunpack.c.l.s4 1934713408
        %v5919 = vunpack.c.0.s8 %v5918
        %v5920 = vlaneseq
        %v5921 = vshrl.u32 %v5920, 7
        %v5922 = vsub.s32 %v5919, %v5921
        %v5923 = vrot.slane %v5915, %v5922
        %v5925 = vunpack.c.l.s4 1934713408
        %v5926 = vunpack.c.0.s8 %v5925
        %v5927 = vlaneseq
        %v5928 = vshrl.u32 %v5927, 7
        %v5929 = vsub.s32 %v5926, %v5928
        %v5930 = vrot.slane %v5916, %v5929
        %v5931 = vcombine.high %v5907, 0.0
        %v5932 = vcombine.high %v5914, 0.0
        %v5933 = vcombine.high %v5923, 0.0
        %v5934 = vcombine.high %v5930, 0.0
        %v5935 = vcombine.low %v1489, %v5822
        %v5936 = vcombine.high %v1489, %v5822
        %v5938 = vunpack.c.l.s4 1983009808
        %v5939 = vunpack.c.0.s8 %v5938
        %v5940 = vlaneseq
        %v5941 = vshrl.u32 %v5940, 7
        %v5942 = vsub.s32 %v5939, %v5941
        %v5943 = vrot.slane %v5935, %v5942
        %v5945 = vunpack.c.l.s4 1983009808
        %v5946 = vunpack.c.0.s8 %v5945
        %v5947 = vlaneseq
        %v5948 = vshrl.u32 %v5947, 7
        %v5949 = vsub.s32 %v5946, %v5948
        %v5950 = vrot.slane %v5936, %v5949
        %v5951 = vcombine.low %v5798, %v5846
        %v5952 = vcombine.high %v5798, %v5846
        %v5954 = vunpack.c.l.s4 1983009808
        %v5955 = vunpack.c.0.s8 %v5954
        %v5956 = vlaneseq
        %v5957 = vshrl.u32 %v5956, 7
        %v5958 = vsub.s32 %v5955, %v5957
        %v5959 = vrot.slane %v5951, %v5958
        %v5961 = vunpack.c.l.s4 1983009808
        %v5962 = vunpack.c.0.s8 %v5961
        %v5963 = vlaneseq
        %v5964 = vshrl.u32 %v5963, 7
        %v5965 = vsub.s32 %v5962, %v5964
        %v5966 = vrot.slane %v5952, %v5965
        %v5967 = vcombine.low %v5943, %v5959
        %v5968 = vcombine.high %v5943, %v5959
        %v5970 = vunpack.c.l.s4 1934713408
        %v5971 = vunpack.c.0.s8 %v5970
        %v5972 = vlaneseq
        %v5973 = vshrl.u32 %v5972, 7
        %v5974 = vsub.s32 %v5971, %v5973
        %v5975 = vrot.slane %v5967, %v5974
        %v5977 = vunpack.c.l.s4 1934713408
        %v5978 = vunpack.c.0.s8 %v5977
        %v5979 = vlaneseq
        %v5980 = vshrl.u32 %v5979, 7
        %v5981 = vsub.s32 %v5978, %v5980
        %v5982 = vrot.slane %v5968, %v5981
        %v5983 = vcombine.low %v5950, %v5966
        %v5984 = vcombine.high %v5950, %v5966
        %v5986 = vunpack.c.l.s4 1934713408
        %v5987 = vunpack.c.0.s8 %v5986
        %v5988 = vlaneseq
        %v5989 = vshrl.u32 %v5988, 7
        %v5990 = vsub.s32 %v5987, %v5989
        %v5991 = vrot.slane %v5983, %v5990
        %v5993 = vunpack.c.l.s4 1934713408
        %v5994 = vunpack.c.0.s8 %v5993
        %v5995 = vlaneseq
        %v5996 = vshrl.u32 %v5995, 7
        %v5997 = vsub.s32 %v5994, %v5996
        %v5998 = vrot.slane %v5984, %v5997
        %v5999 = vcombine.high %v5975, 0.0
        %v6000 = vcombine.high %v5982, 0.0
        %v6001 = vcombine.high %v5991, 0.0
        %v6002 = vcombine.high %v5998, 0.0
        %v6003 = vcombine.low %v1494, %v5824
        %v6004 = vcombine.high %v1494, %v5824
        %v6006 = vunpack.c.l.s4 1983009808
        %v6007 = vunpack.c.0.s8 %v6006
        %v6008 = vlaneseq
        %v6009 = vshrl.u32 %v6008, 7
        %v6010 = vsub.s32 %v6007, %v6009
        %v6011 = vrot.slane %v6003, %v6010
        %v6013 = vunpack.c.l.s4 1983009808
        %v6014 = vunpack.c.0.s8 %v6013
        %v6015 = vlaneseq
        %v6016 = vshrl.u32 %v6015, 7
        %v6017 = vsub.s32 %v6014, %v6016
        %v6018 = vrot.slane %v6004, %v6017
        %v6019 = vcombine.low %v5800, %v5848
        %v6020 = vcombine.high %v5800, %v5848
        %v6022 = vunpack.c.l.s4 1983009808
        %v6023 = vunpack.c.0.s8 %v6022
        %v6024 = vlaneseq
        %v6025 = vshrl.u32 %v6024, 7
        %v6026 = vsub.s32 %v6023, %v6025
        %v6027 = vrot.slane %v6019, %v6026
        %v6029 = vunpack.c.l.s4 1983009808
        %v6030 = vunpack.c.0.s8 %v6029
        %v6031 = vlaneseq
        %v6032 = vshrl.u32 %v6031, 7
        %v6033 = vsub.s32 %v6030, %v6032
        %v6034 = vrot.slane %v6020, %v6033
        %v6035 = vcombine.low %v6011, %v6027
        %v6036 = vcombine.high %v6011, %v6027
        %v6038 = vunpack.c.l.s4 1934713408
        %v6039 = vunpack.c.0.s8 %v6038
        %v6040 = vlaneseq
        %v6041 = vshrl.u32 %v6040, 7
        %v6042 = vsub.s32 %v6039, %v6041
        %v6043 = vrot.slane %v6035, %v6042
        %v6045 = vunpack.c.l.s4 1934713408
        %v6046 = vunpack.c.0.s8 %v6045
        %v6047 = vlaneseq
        %v6048 = vshrl.u32 %v6047, 7
        %v6049 = vsub.s32 %v6046, %v6048
        %v6050 = vrot.slane %v6036, %v6049
        %v6051 = vcombine.low %v6018, %v6034
        %v6052 = vcombine.high %v6018, %v6034
        %v6054 = vunpack.c.l.s4 1934713408
        %v6055 = vunpack.c.0.s8 %v6054
        %v6056 = vlaneseq
        %v6057 = vshrl.u32 %v6056, 7
        %v6058 = vsub.s32 %v6055, %v6057
        %v6059 = vrot.slane %v6051, %v6058
        %v6061 = vunpack.c.l.s4 1934713408
        %v6062 = vunpack.c.0.s8 %v6061
        %v6063 = vlaneseq
        %v6064 = vshrl.u32 %v6063, 7
        %v6065 = vsub.s32 %v6062, %v6064
        %v6066 = vrot.slane %v6052, %v6065
        %v6067 = vcombine.high %v6043, 0.0
        %v6068 = vcombine.high %v6050, 0.0
        %v6069 = vcombine.high %v6059, 0.0
        %v6070 = vcombine.high %v6066, 0.0
        %v6071 = vcombine.low %v1497, %v5826
        %v6072 = vcombine.high %v1497, %v5826
        %v6074 = vunpack.c.l.s4 1983009808
        %v6075 = vunpack.c.0.s8 %v6074
        %v6076 = vlaneseq
        %v6077 = vshrl.u32 %v6076, 7
        %v6078 = vsub.s32 %v6075, %v6077
        %v6079 = vrot.slane %v6071, %v6078
        %v6081 = vunpack.c.l.s4 1983009808
        %v6082 = vunpack.c.0.s8 %v6081
        %v6083 = vlaneseq
        %v6084 = vshrl.u32 %v6083, 7
        %v6085 = vsub.s32 %v6082, %v6084
        %v6086 = vrot.slane %v6072, %v6085
        %v6087 = vcombine.low %v5802, %v5850
        %v6088 = vcombine.high %v5802, %v5850
        %v6090 = vunpack.c.l.s4 1983009808
        %v6091 = vunpack.c.0.s8 %v6090
        %v6092 = vlaneseq
        %v6093 = vshrl.u32 %v6092, 7
        %v6094 = vsub.s32 %v6091, %v6093
        %v6095 = vrot.slane %v6087, %v6094
        %v6097 = vunpack.c.l.s4 1983009808
        %v6098 = vunpack.c.0.s8 %v6097
        %v6099 = vlaneseq
        %v6100 = vshrl.u32 %v6099, 7
        %v6101 = vsub.s32 %v6098, %v6100
        %v6102 = vrot.slane %v6088, %v6101
        %v6103 = vcombine.low %v6079, %v6095
        %v6104 = vcombine.high %v6079, %v6095
        %v6106 = vunpack.c.l.s4 1934713408
        %v6107 = vunpack.c.0.s8 %v6106
        %v6108 = vlaneseq
        %v6109 = vshrl.u32 %v6108, 7
        %v6110 = vsub.s32 %v6107, %v6109
        %v6111 = vrot.slane %v6103, %v6110
        %v6113 = vunpack.c.l.s4 1934713408
        %v6114 = vunpack.c.0.s8 %v6113
        %v6115 = vlaneseq
        %v6116 = vshrl.u32 %v6115, 7
        %v6117 = vsub.s32 %v6114, %v6116
        %v6118 = vrot.slane %v6104, %v6117
        %v6119 = vcombine.low %v6086, %v6102
        %v6120 = vcombine.high %v6086, %v6102
        %v6122 = vunpack.c.l.s4 1934713408
        %v6123 = vunpack.c.0.s8 %v6122
        %v6124 = vlaneseq
        %v6125 = vshrl.u32 %v6124, 7
        %v6126 = vsub.s32 %v6123, %v6125
        %v6127 = vrot.slane %v6119, %v6126
        %v6129 = vunpack.c.l.s4 1934713408
        %v6130 = vunpack.c.0.s8 %v6129
        %v6131 = vlaneseq
        %v6132 = vshrl.u32 %v6131, 7
        %v6133 = vsub.s32 %v6130, %v6132
        %v6134 = vrot.slane %v6120, %v6133
        %v6135 = vcombine.high %v6111, 0.0
        %v6136 = vcombine.high %v6118, 0.0
        %v6137 = vcombine.high %v6127, 0.0
        %v6138 = vcombine.high %v6134, 0.0
        %v6139 = vcombine.low %v1502, %v5828
        %v6140 = vcombine.high %v1502, %v5828
        %v6142 = vunpack.c.l.s4 1983009808
        %v6143 = vunpack.c.0.s8 %v6142
        %v6144 = vlaneseq
        %v6145 = vshrl.u32 %v6144, 7
        %v6146 = vsub.s32 %v6143, %v6145
        %v6147 = vrot.slane %v6139, %v6146
        %v6149 = vunpack.c.l.s4 1983009808
        %v6150 = vunpack.c.0.s8 %v6149
        %v6151 = vlaneseq
        %v6152 = vshrl.u32 %v6151, 7
        %v6153 = vsub.s32 %v6150, %v6152
        %v6154 = vrot.slane %v6140, %v6153
        %v6155 = vcombine.low %v5804, %v5852
        %v6156 = vcombine.high %v5804, %v5852
        %v6158 = vunpack.c.l.s4 1983009808
        %v6159 = vunpack.c.0.s8 %v6158
        %v6160 = vlaneseq
        %v6161 = vshrl.u32 %v6160, 7
        %v6162 = vsub.s32 %v6159, %v6161
        %v6163 = vrot.slane %v6155, %v6162
        %v6165 = vunpack.c.l.s4 1983009808
        %v6166 = vunpack.c.0.s8 %v6165
        %v6167 = vlaneseq
        %v6168 = vshrl.u32 %v6167, 7
        %v6169 = vsub.s32 %v6166, %v6168
        %v6170 = vrot.slane %v6156, %v6169
        %v6171 = vcombine.low %v6147, %v6163
        %v6172 = vcombine.high %v6147, %v6163
        %v6174 = vunpack.c.l.s4 1934713408
        %v6175 = vunpack.c.0.s8 %v6174
        %v6176 = vlaneseq
        %v6177 = vshrl.u32 %v6176, 7
        %v6178 = vsub.s32 %v6175, %v6177
        %v6179 = vrot.slane %v6171, %v6178
        %v6181 = vunpack.c.l.s4 1934713408
        %v6182 = vunpack.c.0.s8 %v6181
        %v6183 = vlaneseq
        %v6184 = vshrl.u32 %v6183, 7
        %v6185 = vsub.s32 %v6182, %v6184
        %v6186 = vrot.slane %v6172, %v6185
        %v6187 = vcombine.low %v6154, %v6170
        %v6188 = vcombine.high %v6154, %v6170
        %v6190 = vunpack.c.l.s4 1934713408
        %v6191 = vunpack.c.0.s8 %v6190
        %v6192 = vlaneseq
        %v6193 = vshrl.u32 %v6192, 7
        %v6194 = vsub.s32 %v6191, %v6193
        %v6195 = vrot.slane %v6187, %v6194
        %v6197 = vunpack.c.l.s4 1934713408
        %v6198 = vunpack.c.0.s8 %v6197
        %v6199 = vlaneseq
        %v6200 = vshrl.u32 %v6199, 7
        %v6201 = vsub.s32 %v6198, %v6200
        %v6202 = vrot.slane %v6188, %v6201
        %v6203 = vcombine.high %v6179, 0.0
        %v6204 = vcombine.high %v6186, 0.0
        %v6205 = vcombine.high %v6195, 0.0
        %v6206 = vcombine.high %v6202, 0.0
        %v6207 = vcombine.low %v1505, %v5830
        %v6208 = vcombine.high %v1505, %v5830
        %v6210 = vunpack.c.l.s4 1983009808
        %v6211 = vunpack.c.0.s8 %v6210
        %v6212 = vlaneseq
        %v6213 = vshrl.u32 %v6212, 7
        %v6214 = vsub.s32 %v6211, %v6213
        %v6215 = vrot.slane %v6207, %v6214
        %v6217 = vunpack.c.l.s4 1983009808
        %v6218 = vunpack.c.0.s8 %v6217
        %v6219 = vlaneseq
        %v6220 = vshrl.u32 %v6219, 7
        %v6221 = vsub.s32 %v6218, %v6220
        %v6222 = vrot.slane %v6208, %v6221
        %v6223 = vcombine.low %v5806, %v5854
        %v6224 = vcombine.high %v5806, %v5854
        %v6226 = vunpack.c.l.s4 1983009808
        %v6227 = vunpack.c.0.s8 %v6226
        %v6228 = vlaneseq
        %v6229 = vshrl.u32 %v6228, 7
        %v6230 = vsub.s32 %v6227, %v6229
        %v6231 = vrot.slane %v6223, %v6230
        %v6233 = vunpack.c.l.s4 1983009808
        %v6234 = vunpack.c.0.s8 %v6233
        %v6235 = vlaneseq
        %v6236 = vshrl.u32 %v6235, 7
        %v6237 = vsub.s32 %v6234, %v6236
        %v6238 = vrot.slane %v6224, %v6237
        %v6239 = vcombine.low %v6215, %v6231
        %v6240 = vcombine.high %v6215, %v6231
        %v6242 = vunpack.c.l.s4 1934713408
        %v6243 = vunpack.c.0.s8 %v6242
        %v6244 = vlaneseq
        %v6245 = vshrl.u32 %v6244, 7
        %v6246 = vsub.s32 %v6243, %v6245
        %v6247 = vrot.slane %v6239, %v6246
        %v6249 = vunpack.c.l.s4 1934713408
        %v6250 = vunpack.c.0.s8 %v6249
        %v6251 = vlaneseq
        %v6252 = vshrl.u32 %v6251, 7
        %v6253 = vsub.s32 %v6250, %v6252
        %v6254 = vrot.slane %v6240, %v6253
        %v6255 = vcombine.low %v6222, %v6238
        %v6256 = vcombine.high %v6222, %v6238
        %v6258 = vunpack.c.l.s4 1934713408
        %v6259 = vunpack.c.0.s8 %v6258
        %v6260 = vlaneseq
        %v6261 = vshrl.u32 %v6260, 7
        %v6262 = vsub.s32 %v6259, %v6261
        %v6263 = vrot.slane %v6255, %v6262
        %v6265 = vunpack.c.l.s4 1934713408
        %v6266 = vunpack.c.0.s8 %v6265
        %v6267 = vlaneseq
        %v6268 = vshrl.u32 %v6267, 7
        %v6269 = vsub.s32 %v6266, %v6268
        %v6270 = vrot.slane %v6256, %v6269
        %v6271 = vcombine.high %v6247, 0.0
        %v6272 = vcombine.high %v6254, 0.0
        %v6273 = vcombine.high %v6263, 0.0
        %v6274 = vcombine.high %v6270, 0.0
        %v6275 = vcombine.low %v1510, %v5832
        %v6276 = vcombine.high %v1510, %v5832
        %v6278 = vunpack.c.l.s4 1983009808
        %v6279 = vunpack.c.0.s8 %v6278
        %v6280 = vlaneseq
        %v6281 = vshrl.u32 %v6280, 7
        %v6282 = vsub.s32 %v6279, %v6281
        %v6283 = vrot.slane %v6275, %v6282
        %v6285 = vunpack.c.l.s4 1983009808
        %v6286 = vunpack.c.0.s8 %v6285
        %v6287 = vlaneseq
        %v6288 = vshrl.u32 %v6287, 7
        %v6289 = vsub.s32 %v6286, %v6288
        %v6290 = vrot.slane %v6276, %v6289
        %v6291 = vcombine.low %v5808, %v5856
        %v6292 = vcombine.high %v5808, %v5856
        %v6294 = vunpack.c.l.s4 1983009808
        %v6295 = vunpack.c.0.s8 %v6294
        %v6296 = vlaneseq
        %v6297 = vshrl.u32 %v6296, 7
        %v6298 = vsub.s32 %v6295, %v6297
        %v6299 = vrot.slane %v6291, %v6298
        %v6301 = vunpack.c.l.s4 1983009808
        %v6302 = vunpack.c.0.s8 %v6301
        %v6303 = vlaneseq
        %v6304 = vshrl.u32 %v6303, 7
        %v6305 = vsub.s32 %v6302, %v6304
        %v6306 = vrot.slane %v6292, %v6305
        %v6307 = vcombine.low %v6283, %v6299
        %v6308 = vcombine.high %v6283, %v6299
        %v6310 = vunpack.c.l.s4 1934713408
        %v6311 = vunpack.c.0.s8 %v6310
        %v6312 = vlaneseq
        %v6313 = vshrl.u32 %v6312, 7
        %v6314 = vsub.s32 %v6311, %v6313
        %v6315 = vrot.slane %v6307, %v6314
        %v6317 = vunpack.c.l.s4 1934713408
        %v6318 = vunpack.c.0.s8 %v6317
        %v6319 = vlaneseq
        %v6320 = vshrl.u32 %v6319, 7
        %v6321 = vsub.s32 %v6318, %v6320
        %v6322 = vrot.slane %v6308, %v6321
        %v6323 = vcombine.low %v6290, %v6306
        %v6324 = vcombine.high %v6290, %v6306
        %v6326 = vunpack.c.l.s4 1934713408
        %v6327 = vunpack.c.0.s8 %v6326
        %v6328 = vlaneseq
        %v6329 = vshrl.u32 %v6328, 7
        %v6330 = vsub.s32 %v6327, %v6329
        %v6331 = vrot.slane %v6323, %v6330
        %v6333 = vunpack.c.l.s4 1934713408
        %v6334 = vunpack.c.0.s8 %v6333
        %v6335 = vlaneseq
        %v6336 = vshrl.u32 %v6335, 7
        %v6337 = vsub.s32 %v6334, %v6336
        %v6338 = vrot.slane %v6324, %v6337
        %v6339 = vcombine.high %v6315, 0.0
        %v6340 = vcombine.high %v6322, 0.0
        %v6341 = vcombine.high %v6331, 0.0
        %v6342 = vcombine.high %v6338, 0.0
        %v6343 = vcombine.low %v1513, %v5834
        %v6344 = vcombine.high %v1513, %v5834
        %v6346 = vunpack.c.l.s4 1983009808
        %v6347 = vunpack.c.0.s8 %v6346
        %v6348 = vlaneseq
        %v6349 = vshrl.u32 %v6348, 7
        %v6350 = vsub.s32 %v6347, %v6349
        %v6351 = vrot.slane %v6343, %v6350
        %v6353 = vunpack.c.l.s4 1983009808
        %v6354 = vunpack.c.0.s8 %v6353
        %v6355 = vlaneseq
        %v6356 = vshrl.u32 %v6355, 7
        %v6357 = vsub.s32 %v6354, %v6356
        %v6358 = vrot.slane %v6344, %v6357
        %v6359 = vcombine.low %v5810, %v5858
        %v6360 = vcombine.high %v5810, %v5858
        %v6362 = vunpack.c.l.s4 1983009808
        %v6363 = vunpack.c.0.s8 %v6362
        %v6364 = vlaneseq
        %v6365 = vshrl.u32 %v6364, 7
        %v6366 = vsub.s32 %v6363, %v6365
        %v6367 = vrot.slane %v6359, %v6366
        %v6369 = vunpack.c.l.s4 1983009808
        %v6370 = vunpack.c.0.s8 %v6369
        %v6371 = vlaneseq
        %v6372 = vshrl.u32 %v6371, 7
        %v6373 = vsub.s32 %v6370, %v6372
        %v6374 = vrot.slane %v6360, %v6373
        %v6375 = vcombine.low %v6351, %v6367
        %v6376 = vcombine.high %v6351, %v6367
        %v6378 = vunpack.c.l.s4 1934713408
        %v6379 = vunpack.c.0.s8 %v6378
        %v6380 = vlaneseq
        %v6381 = vshrl.u32 %v6380, 7
        %v6382 = vsub.s32 %v6379, %v6381
        %v6383 = vrot.slane %v6375, %v6382
        %v6385 = vunpack.c.l.s4 1934713408
        %v6386 = vunpack.c.0.s8 %v6385
        %v6387 = vlaneseq
        %v6388 = vshrl.u32 %v6387, 7
        %v6389 = vsub.s32 %v6386, %v6388
        %v6390 = vrot.slane %v6376, %v6389
        %v6391 = vcombine.low %v6358, %v6374
        %v6392 = vcombine.high %v6358, %v6374
        %v6394 = vunpack.c.l.s4 1934713408
        %v6395 = vunpack.c.0.s8 %v6394
        %v6396 = vlaneseq
        %v6397 = vshrl.u32 %v6396, 7
        %v6398 = vsub.s32 %v6395, %v6397
        %v6399 = vrot.slane %v6391, %v6398
        %v6401 = vunpack.c.l.s4 1934713408
        %v6402 = vunpack.c.0.s8 %v6401
        %v6403 = vlaneseq
        %v6404 = vshrl.u32 %v6403, 7
        %v6405 = vsub.s32 %v6402, %v6404
        %v6406 = vrot.slane %v6392, %v6405
        %v6407 = vcombine.high %v6383, 0.0
        %v6408 = vcombine.high %v6390, 0.0
        %v6409 = vcombine.high %v6399, 0.0
        %v6410 = vcombine.high %v6406, 0.0
        %v6411 = vpack.c.bf16 %v5907, %v5907
        %v6412 = vpack.c.bf16 %v5931, %v5931
        %v6413 = vpack.c.bf16 %v5914, %v5914
        %v6414 = vpack.c.bf16 %v5932, %v5932
        %v6415 = vpack.c.bf16 %v5923, %v5923
        %v6416 = vpack.c.bf16 %v5933, %v5933
        %v6417 = vpack.c.bf16 %v5930, %v5930
        %v6418 = vpack.c.bf16 %v5934, %v5934
        %v6419 = vpack.c.bf16 %v5975, %v5975
        %v6420 = vpack.c.bf16 %v5999, %v5999
        %v6421 = vpack.c.bf16 %v5982, %v5982
        %v6422 = vpack.c.bf16 %v6000, %v6000
        %v6423 = vpack.c.bf16 %v5991, %v5991
        %v6424 = vpack.c.bf16 %v6001, %v6001
        %v6425 = vpack.c.bf16 %v5998, %v5998
        %v6426 = vpack.c.bf16 %v6002, %v6002
        %v6427 = vpack.c.bf16 %v6043, %v6043
        %v6428 = vpack.c.bf16 %v6067, %v6067
        %v6429 = vpack.c.bf16 %v6050, %v6050
        %v6430 = vpack.c.bf16 %v6068, %v6068
        %v6431 = vpack.c.bf16 %v6059, %v6059
        %v6432 = vpack.c.bf16 %v6069, %v6069
        %v6433 = vpack.c.bf16 %v6066, %v6066
        %v6434 = vpack.c.bf16 %v6070, %v6070
        %v6435 = vpack.c.bf16 %v6111, %v6111
        %v6436 = vpack.c.bf16 %v6135, %v6135
        %v6437 = vpack.c.bf16 %v6118, %v6118
        %v6438 = vpack.c.bf16 %v6136, %v6136
        %v6439 = vpack.c.bf16 %v6127, %v6127
        %v6440 = vpack.c.bf16 %v6137, %v6137
        %v6441 = vpack.c.bf16 %v6134, %v6134
        %v6442 = vpack.c.bf16 %v6138, %v6138
        %v6443 = vpack.c.bf16 %v6179, %v6179
        %v6444 = vpack.c.bf16 %v6203, %v6203
        %v6445 = vpack.c.bf16 %v6186, %v6186
        %v6446 = vpack.c.bf16 %v6204, %v6204
        %v6447 = vpack.c.bf16 %v6195, %v6195
        %v6448 = vpack.c.bf16 %v6205, %v6205
        %v6449 = vpack.c.bf16 %v6202, %v6202
        %v6450 = vpack.c.bf16 %v6206, %v6206
        %v6451 = vpack.c.bf16 %v6247, %v6247
        %v6452 = vpack.c.bf16 %v6271, %v6271
        %v6453 = vpack.c.bf16 %v6254, %v6254
        %v6454 = vpack.c.bf16 %v6272, %v6272
        %v6455 = vpack.c.bf16 %v6263, %v6263
        %v6456 = vpack.c.bf16 %v6273, %v6273
        %v6457 = vpack.c.bf16 %v6270, %v6270
        %v6458 = vpack.c.bf16 %v6274, %v6274
        %v6459 = vpack.c.bf16 %v6315, %v6315
        %v6460 = vpack.c.bf16 %v6339, %v6339
        %v6461 = vpack.c.bf16 %v6322, %v6322
        %v6462 = vpack.c.bf16 %v6340, %v6340
        %v6463 = vpack.c.bf16 %v6331, %v6331
        %v6464 = vpack.c.bf16 %v6341, %v6341
        %v6465 = vpack.c.bf16 %v6338, %v6338
        %v6466 = vpack.c.bf16 %v6342, %v6342
        %v6467 = vpack.c.bf16 %v6383, %v6383
        %v6468 = vpack.c.bf16 %v6407, %v6407
        %v6469 = vpack.c.bf16 %v6390, %v6390
        %v6470 = vpack.c.bf16 %v6408, %v6408
        %v6471 = vpack.c.bf16 %v6399, %v6399
        %v6472 = vpack.c.bf16 %v6409, %v6409
        %v6473 = vpack.c.bf16 %v6406, %v6406
        %v6474 = vpack.c.bf16 %v6410, %v6410
        %v6475 = vcombine.low %v6411, %v6415
        %v6477 = vunpack.c.l.s4 1983009808
        %v6478 = vunpack.c.0.s8 %v6477
        %v6479 = vlaneseq
        %v6480 = vshrl.u32 %v6479, 7
        %v6481 = vsub.s32 %v6478, %v6480
        %v6482 = vrot.slane %v6475, %v6481
        %v6483 = vcombine.low %v6413, %v6417
        %v6485 = vunpack.c.l.s4 1983009808
        %v6486 = vunpack.c.0.s8 %v6485
        %v6487 = vlaneseq
        %v6488 = vshrl.u32 %v6487, 7
        %v6489 = vsub.s32 %v6486, %v6488
        %v6490 = vrot.slane %v6483, %v6489
        %v6491 = vcombine.low %v6419, %v6423
        %v6493 = vunpack.c.l.s4 1983009808
        %v6494 = vunpack.c.0.s8 %v6493
        %v6495 = vlaneseq
        %v6496 = vshrl.u32 %v6495, 7
        %v6497 = vsub.s32 %v6494, %v6496
        %v6498 = vrot.slane %v6491, %v6497
        %v6499 = vcombine.low %v6421, %v6425
        %v6501 = vunpack.c.l.s4 1983009808
        %v6502 = vunpack.c.0.s8 %v6501
        %v6503 = vlaneseq
        %v6504 = vshrl.u32 %v6503, 7
        %v6505 = vsub.s32 %v6502, %v6504
        %v6506 = vrot.slane %v6499, %v6505
        %v6507 = vcombine.low %v6482, %v6490
        %v6509 = vunpack.c.l.s4 1934713408
        %v6510 = vunpack.c.0.s8 %v6509
        %v6511 = vlaneseq
        %v6512 = vshrl.u32 %v6511, 7
        %v6513 = vsub.s32 %v6510, %v6512
        %v6514 = vrot.slane %v6507, %v6513
        %v6515 = vcombine.low %v6498, %v6506
        %v6517 = vunpack.c.l.s4 1934713408
        %v6518 = vunpack.c.0.s8 %v6517
        %v6519 = vlaneseq
        %v6520 = vshrl.u32 %v6519, 7
        %v6521 = vsub.s32 %v6518, %v6520
        %v6522 = vrot.slane %v6515, %v6521
        %v6523 = vcombine.low %v6514, %v6522
        %v6524 = vcombine.high %v6514, %v6522
        %v6525 = vcombine.low %v6412, %v6416
        %v6527 = vunpack.c.l.s4 1983009808
        %v6528 = vunpack.c.0.s8 %v6527
        %v6529 = vlaneseq
        %v6530 = vshrl.u32 %v6529, 7
        %v6531 = vsub.s32 %v6528, %v6530
        %v6532 = vrot.slane %v6525, %v6531
        %v6533 = vcombine.low %v6414, %v6418
        %v6535 = vunpack.c.l.s4 1983009808
        %v6536 = vunpack.c.0.s8 %v6535
        %v6537 = vlaneseq
        %v6538 = vshrl.u32 %v6537, 7
        %v6539 = vsub.s32 %v6536, %v6538
        %v6540 = vrot.slane %v6533, %v6539
        %v6541 = vcombine.low %v6420, %v6424
        %v6543 = vunpack.c.l.s4 1983009808
        %v6544 = vunpack.c.0.s8 %v6543
        %v6545 = vlaneseq
        %v6546 = vshrl.u32 %v6545, 7
        %v6547 = vsub.s32 %v6544, %v6546
        %v6548 = vrot.slane %v6541, %v6547
        %v6549 = vcombine.low %v6422, %v6426
        %v6551 = vunpack.c.l.s4 1983009808
        %v6552 = vunpack.c.0.s8 %v6551
        %v6553 = vlaneseq
        %v6554 = vshrl.u32 %v6553, 7
        %v6555 = vsub.s32 %v6552, %v6554
        %v6556 = vrot.slane %v6549, %v6555
        %v6557 = vcombine.low %v6532, %v6540
        %v6559 = vunpack.c.l.s4 1934713408
        %v6560 = vunpack.c.0.s8 %v6559
        %v6561 = vlaneseq
        %v6562 = vshrl.u32 %v6561, 7
        %v6563 = vsub.s32 %v6560, %v6562
        %v6564 = vrot.slane %v6557, %v6563
        %v6565 = vcombine.low %v6548, %v6556
        %v6567 = vunpack.c.l.s4 1934713408
        %v6568 = vunpack.c.0.s8 %v6567
        %v6569 = vlaneseq
        %v6570 = vshrl.u32 %v6569, 7
        %v6571 = vsub.s32 %v6568, %v6570
        %v6572 = vrot.slane %v6565, %v6571
        %v6573 = vcombine.low %v6564, %v6572
        %v6574 = vcombine.high %v6564, %v6572
        %v6575 = vcombine.low %v6427, %v6431
        %v6577 = vunpack.c.l.s4 1983009808
        %v6578 = vunpack.c.0.s8 %v6577
        %v6579 = vlaneseq
        %v6580 = vshrl.u32 %v6579, 7
        %v6581 = vsub.s32 %v6578, %v6580
        %v6582 = vrot.slane %v6575, %v6581
        %v6583 = vcombine.low %v6429, %v6433
        %v6585 = vunpack.c.l.s4 1983009808
        %v6586 = vunpack.c.0.s8 %v6585
        %v6587 = vlaneseq
        %v6588 = vshrl.u32 %v6587, 7
        %v6589 = vsub.s32 %v6586, %v6588
        %v6590 = vrot.slane %v6583, %v6589
        %v6591 = vcombine.low %v6435, %v6439
        %v6593 = vunpack.c.l.s4 1983009808
        %v6594 = vunpack.c.0.s8 %v6593
        %v6595 = vlaneseq
        %v6596 = vshrl.u32 %v6595, 7
        %v6597 = vsub.s32 %v6594, %v6596
        %v6598 = vrot.slane %v6591, %v6597
        %v6599 = vcombine.low %v6437, %v6441
        %v6601 = vunpack.c.l.s4 1983009808
        %v6602 = vunpack.c.0.s8 %v6601
        %v6603 = vlaneseq
        %v6604 = vshrl.u32 %v6603, 7
        %v6605 = vsub.s32 %v6602, %v6604
        %v6606 = vrot.slane %v6599, %v6605
        %v6607 = vcombine.low %v6582, %v6590
        %v6609 = vunpack.c.l.s4 1934713408
        %v6610 = vunpack.c.0.s8 %v6609
        %v6611 = vlaneseq
        %v6612 = vshrl.u32 %v6611, 7
        %v6613 = vsub.s32 %v6610, %v6612
        %v6614 = vrot.slane %v6607, %v6613
        %v6615 = vcombine.low %v6598, %v6606
        %v6617 = vunpack.c.l.s4 1934713408
        %v6618 = vunpack.c.0.s8 %v6617
        %v6619 = vlaneseq
        %v6620 = vshrl.u32 %v6619, 7
        %v6621 = vsub.s32 %v6618, %v6620
        %v6622 = vrot.slane %v6615, %v6621
        %v6623 = vcombine.low %v6614, %v6622
        %v6624 = vcombine.high %v6614, %v6622
        %v6625 = vcombine.low %v6428, %v6432
        %v6627 = vunpack.c.l.s4 1983009808
        %v6628 = vunpack.c.0.s8 %v6627
        %v6629 = vlaneseq
        %v6630 = vshrl.u32 %v6629, 7
        %v6631 = vsub.s32 %v6628, %v6630
        %v6632 = vrot.slane %v6625, %v6631
        %v6633 = vcombine.low %v6430, %v6434
        %v6635 = vunpack.c.l.s4 1983009808
        %v6636 = vunpack.c.0.s8 %v6635
        %v6637 = vlaneseq
        %v6638 = vshrl.u32 %v6637, 7
        %v6639 = vsub.s32 %v6636, %v6638
        %v6640 = vrot.slane %v6633, %v6639
        %v6641 = vcombine.low %v6436, %v6440
        %v6643 = vunpack.c.l.s4 1983009808
        %v6644 = vunpack.c.0.s8 %v6643
        %v6645 = vlaneseq
        %v6646 = vshrl.u32 %v6645, 7
        %v6647 = vsub.s32 %v6644, %v6646
        %v6648 = vrot.slane %v6641, %v6647
        %v6649 = vcombine.low %v6438, %v6442
        %v6651 = vunpack.c.l.s4 1983009808
        %v6652 = vunpack.c.0.s8 %v6651
        %v6653 = vlaneseq
        %v6654 = vshrl.u32 %v6653, 7
        %v6655 = vsub.s32 %v6652, %v6654
        %v6656 = vrot.slane %v6649, %v6655
        %v6657 = vcombine.low %v6632, %v6640
        %v6659 = vunpack.c.l.s4 1934713408
        %v6660 = vunpack.c.0.s8 %v6659
        %v6661 = vlaneseq
        %v6662 = vshrl.u32 %v6661, 7
        %v6663 = vsub.s32 %v6660, %v6662
        %v6664 = vrot.slane %v6657, %v6663
        %v6665 = vcombine.low %v6648, %v6656
        %v6667 = vunpack.c.l.s4 1934713408
        %v6668 = vunpack.c.0.s8 %v6667
        %v6669 = vlaneseq
        %v6670 = vshrl.u32 %v6669, 7
        %v6671 = vsub.s32 %v6668, %v6670
        %v6672 = vrot.slane %v6665, %v6671
        %v6673 = vcombine.low %v6664, %v6672
        %v6674 = vcombine.high %v6664, %v6672
        %v6675 = vcombine.low %v6443, %v6447
        %v6677 = vunpack.c.l.s4 1983009808
        %v6678 = vunpack.c.0.s8 %v6677
        %v6679 = vlaneseq
        %v6680 = vshrl.u32 %v6679, 7
        %v6681 = vsub.s32 %v6678, %v6680
        %v6682 = vrot.slane %v6675, %v6681
        %v6683 = vcombine.low %v6445, %v6449
        %v6685 = vunpack.c.l.s4 1983009808
        %v6686 = vunpack.c.0.s8 %v6685
        %v6687 = vlaneseq
        %v6688 = vshrl.u32 %v6687, 7
        %v6689 = vsub.s32 %v6686, %v6688
        %v6690 = vrot.slane %v6683, %v6689
        %v6691 = vcombine.low %v6451, %v6455
        %v6693 = vunpack.c.l.s4 1983009808
        %v6694 = vunpack.c.0.s8 %v6693
        %v6695 = vlaneseq
        %v6696 = vshrl.u32 %v6695, 7
        %v6697 = vsub.s32 %v6694, %v6696
        %v6698 = vrot.slane %v6691, %v6697
        %v6699 = vcombine.low %v6453, %v6457
        %v6701 = vunpack.c.l.s4 1983009808
        %v6702 = vunpack.c.0.s8 %v6701
        %v6703 = vlaneseq
        %v6704 = vshrl.u32 %v6703, 7
        %v6705 = vsub.s32 %v6702, %v6704
        %v6706 = vrot.slane %v6699, %v6705
        %v6707 = vcombine.low %v6682, %v6690
        %v6709 = vunpack.c.l.s4 1934713408
        %v6710 = vunpack.c.0.s8 %v6709
        %v6711 = vlaneseq
        %v6712 = vshrl.u32 %v6711, 7
        %v6713 = vsub.s32 %v6710, %v6712
        %v6714 = vrot.slane %v6707, %v6713
        %v6715 = vcombine.low %v6698, %v6706
        %v6717 = vunpack.c.l.s4 1934713408
        %v6718 = vunpack.c.0.s8 %v6717
        %v6719 = vlaneseq
        %v6720 = vshrl.u32 %v6719, 7
        %v6721 = vsub.s32 %v6718, %v6720
        %v6722 = vrot.slane %v6715, %v6721
        %v6723 = vcombine.low %v6714, %v6722
        %v6724 = vcombine.high %v6714, %v6722
        %v6725 = vcombine.low %v6444, %v6448
        %v6727 = vunpack.c.l.s4 1983009808
        %v6728 = vunpack.c.0.s8 %v6727
        %v6729 = vlaneseq
        %v6730 = vshrl.u32 %v6729, 7
        %v6731 = vsub.s32 %v6728, %v6730
        %v6732 = vrot.slane %v6725, %v6731
        %v6733 = vcombine.low %v6446, %v6450
        %v6735 = vunpack.c.l.s4 1983009808
        %v6736 = vunpack.c.0.s8 %v6735
        %v6737 = vlaneseq
        %v6738 = vshrl.u32 %v6737, 7
        %v6739 = vsub.s32 %v6736, %v6738
        %v6740 = vrot.slane %v6733, %v6739
        %v6741 = vcombine.low %v6452, %v6456
        %v6743 = vunpack.c.l.s4 1983009808
        %v6744 = vunpack.c.0.s8 %v6743
        %v6745 = vlaneseq
        %v6746 = vshrl.u32 %v6745, 7
        %v6747 = vsub.s32 %v6744, %v6746
        %v6748 = vrot.slane %v6741, %v6747
        %v6749 = vcombine.low %v6454, %v6458
        %v6751 = vunpack.c.l.s4 1983009808
        %v6752 = vunpack.c.0.s8 %v6751
        %v6753 = vlaneseq
        %v6754 = vshrl.u32 %v6753, 7
        %v6755 = vsub.s32 %v6752, %v6754
        %v6756 = vrot.slane %v6749, %v6755
        %v6757 = vcombine.low %v6732, %v6740
        %v6759 = vunpack.c.l.s4 1934713408
        %v6760 = vunpack.c.0.s8 %v6759
        %v6761 = vlaneseq
        %v6762 = vshrl.u32 %v6761, 7
        %v6763 = vsub.s32 %v6760, %v6762
        %v6764 = vrot.slane %v6757, %v6763
        %v6765 = vcombine.low %v6748, %v6756
        %v6767 = vunpack.c.l.s4 1934713408
        %v6768 = vunpack.c.0.s8 %v6767
        %v6769 = vlaneseq
        %v6770 = vshrl.u32 %v6769, 7
        %v6771 = vsub.s32 %v6768, %v6770
        %v6772 = vrot.slane %v6765, %v6771
        %v6773 = vcombine.low %v6764, %v6772
        %v6774 = vcombine.high %v6764, %v6772
        %v6775 = vcombine.low %v6459, %v6463
        %v6777 = vunpack.c.l.s4 1983009808
        %v6778 = vunpack.c.0.s8 %v6777
        %v6779 = vlaneseq
        %v6780 = vshrl.u32 %v6779, 7
        %v6781 = vsub.s32 %v6778, %v6780
        %v6782 = vrot.slane %v6775, %v6781
        %v6783 = vcombine.low %v6461, %v6465
        %v6785 = vunpack.c.l.s4 1983009808
        %v6786 = vunpack.c.0.s8 %v6785
        %v6787 = vlaneseq
        %v6788 = vshrl.u32 %v6787, 7
        %v6789 = vsub.s32 %v6786, %v6788
        %v6790 = vrot.slane %v6783, %v6789
        %v6791 = vcombine.low %v6467, %v6471
        %v6793 = vunpack.c.l.s4 1983009808
        %v6794 = vunpack.c.0.s8 %v6793
        %v6795 = vlaneseq
        %v6796 = vshrl.u32 %v6795, 7
        %v6797 = vsub.s32 %v6794, %v6796
        %v6798 = vrot.slane %v6791, %v6797
        %v6799 = vcombine.low %v6469, %v6473
        %v6801 = vunpack.c.l.s4 1983009808
        %v6802 = vunpack.c.0.s8 %v6801
        %v6803 = vlaneseq
        %v6804 = vshrl.u32 %v6803, 7
        %v6805 = vsub.s32 %v6802, %v6804
        %v6806 = vrot.slane %v6799, %v6805
        %v6807 = vcombine.low %v6782, %v6790
        %v6809 = vunpack.c.l.s4 1934713408
        %v6810 = vunpack.c.0.s8 %v6809
        %v6811 = vlaneseq
        %v6812 = vshrl.u32 %v6811, 7
        %v6813 = vsub.s32 %v6810, %v6812
        %v6814 = vrot.slane %v6807, %v6813
        %v6815 = vcombine.low %v6798, %v6806
        %v6817 = vunpack.c.l.s4 1934713408
        %v6818 = vunpack.c.0.s8 %v6817
        %v6819 = vlaneseq
        %v6820 = vshrl.u32 %v6819, 7
        %v6821 = vsub.s32 %v6818, %v6820
        %v6822 = vrot.slane %v6815, %v6821
        %v6823 = vcombine.low %v6814, %v6822
        %v6824 = vcombine.high %v6814, %v6822
        %v6825 = vcombine.low %v6460, %v6464
        %v6827 = vunpack.c.l.s4 1983009808
        %v6828 = vunpack.c.0.s8 %v6827
        %v6829 = vlaneseq
        %v6830 = vshrl.u32 %v6829, 7
        %v6831 = vsub.s32 %v6828, %v6830
        %v6832 = vrot.slane %v6825, %v6831
        %v6833 = vcombine.low %v6462, %v6466
        %v6835 = vunpack.c.l.s4 1983009808
        %v6836 = vunpack.c.0.s8 %v6835
        %v6837 = vlaneseq
        %v6838 = vshrl.u32 %v6837, 7
        %v6839 = vsub.s32 %v6836, %v6838
        %v6840 = vrot.slane %v6833, %v6839
        %v6841 = vcombine.low %v6468, %v6472
        %v6843 = vunpack.c.l.s4 1983009808
        %v6844 = vunpack.c.0.s8 %v6843
        %v6845 = vlaneseq
        %v6846 = vshrl.u32 %v6845, 7
        %v6847 = vsub.s32 %v6844, %v6846
        %v6848 = vrot.slane %v6841, %v6847
        %v6849 = vcombine.low %v6470, %v6474
        %v6851 = vunpack.c.l.s4 1983009808
        %v6852 = vunpack.c.0.s8 %v6851
        %v6853 = vlaneseq
        %v6854 = vshrl.u32 %v6853, 7
        %v6855 = vsub.s32 %v6852, %v6854
        %v6856 = vrot.slane %v6849, %v6855
        %v6857 = vcombine.low %v6832, %v6840
        %v6859 = vunpack.c.l.s4 1934713408
        %v6860 = vunpack.c.0.s8 %v6859
        %v6861 = vlaneseq
        %v6862 = vshrl.u32 %v6861, 7
        %v6863 = vsub.s32 %v6860, %v6862
        %v6864 = vrot.slane %v6857, %v6863
        %v6865 = vcombine.low %v6848, %v6856
        %v6867 = vunpack.c.l.s4 1934713408
        %v6868 = vunpack.c.0.s8 %v6867
        %v6869 = vlaneseq
        %v6870 = vshrl.u32 %v6869, 7
        %v6871 = vsub.s32 %v6868, %v6870
        %v6872 = vrot.slane %v6865, %v6871
        %v6873 = vcombine.low %v6864, %v6872
        %v6874 = vcombine.high %v6864, %v6872
        %v6877 = vpack.i.b16 %v6573, %v6523
        %v6879 = vshrl.u32 %v6523, 16
        %v6880 = vshrl.u32 %v6573, 16
        %v6881 = vpack.i.b16 %v6880, %v6879
        %v6885 = vpack.i.b16 %v6574, %v6524
        %v6887 = vshrl.u32 %v6524, 16
        %v6888 = vshrl.u32 %v6574, 16
        %v6889 = vpack.i.b16 %v6888, %v6887
        %v6893 = vpack.i.b16 %v6673, %v6623
        %v6895 = vshrl.u32 %v6623, 16
        %v6896 = vshrl.u32 %v6673, 16
        %v6897 = vpack.i.b16 %v6896, %v6895
        %v6901 = vpack.i.b16 %v6674, %v6624
        %v6903 = vshrl.u32 %v6624, 16
        %v6904 = vshrl.u32 %v6674, 16
        %v6905 = vpack.i.b16 %v6904, %v6903
        %v6909 = vpack.i.b16 %v6773, %v6723
        %v6911 = vshrl.u32 %v6723, 16
        %v6912 = vshrl.u32 %v6773, 16
        %v6913 = vpack.i.b16 %v6912, %v6911
        %v6917 = vpack.i.b16 %v6774, %v6724
        %v6919 = vshrl.u32 %v6724, 16
        %v6920 = vshrl.u32 %v6774, 16
        %v6921 = vpack.i.b16 %v6920, %v6919
        %v6925 = vpack.i.b16 %v6873, %v6823
        %v6927 = vshrl.u32 %v6823, 16
        %v6928 = vshrl.u32 %v6873, 16
        %v6929 = vpack.i.b16 %v6928, %v6927
        %v6933 = vpack.i.b16 %v6874, %v6824
        %v6935 = vshrl.u32 %v6824, 16
        %v6936 = vshrl.u32 %v6874, 16
        %v6937 = vpack.i.b16 %v6936, %v6935
        %6943 = vrot.lane.b32.xlu0 %v1551, 112
        %v6944 = vpop.permute.xlu0 %6943
        %6945 = vrot.lane.b32.xlu0 %v1554, 112
        %v6946 = vpop.permute.xlu0 %6945
        %6947 = vrot.lane.b32.xlu0 %v1559, 112
        %v6948 = vpop.permute.xlu0 %6947
        %6949 = vrot.lane.b32.xlu0 %v1562, 112
        %v6950 = vpop.permute.xlu0 %6949
        %6955 = vrot.lane.b32.xlu0 %v1551, 96
        %v6956 = vpop.permute.xlu0 %6955
        %6957 = vrot.lane.b32.xlu0 %v1554, 96
        %v6958 = vpop.permute.xlu0 %6957
        %6959 = vrot.lane.b32.xlu0 %v1559, 96
        %v6960 = vpop.permute.xlu0 %6959
        %6961 = vrot.lane.b32.xlu0 %v1562, 96
        %v6962 = vpop.permute.xlu0 %6961
        %6967 = vrot.lane.b32.xlu0 %v1551, 80
        %v6968 = vpop.permute.xlu0 %6967
        %6969 = vrot.lane.b32.xlu0 %v1554, 80
        %v6970 = vpop.permute.xlu0 %6969
        %6971 = vrot.lane.b32.xlu0 %v1559, 80
        %v6972 = vpop.permute.xlu0 %6971
        %6973 = vrot.lane.b32.xlu0 %v1562, 80
        %v6974 = vpop.permute.xlu0 %6973
        %v6979 = vcombine.low %v1551, %v6956
        %v6980 = vcombine.high %v1551, %v6956
        %v6982 = vunpack.c.l.s4 1983009808
        %v6983 = vunpack.c.0.s8 %v6982
        %v6984 = vlaneseq
        %v6985 = vshrl.u32 %v6984, 7
        %v6986 = vsub.s32 %v6983, %v6985
        %v6987 = vrot.slane %v6979, %v6986
        %v6989 = vunpack.c.l.s4 1983009808
        %v6990 = vunpack.c.0.s8 %v6989
        %v6991 = vlaneseq
        %v6992 = vshrl.u32 %v6991, 7
        %v6993 = vsub.s32 %v6990, %v6992
        %v6994 = vrot.slane %v6980, %v6993
        %v6995 = vcombine.low %v6944, %v6968
        %v6996 = vcombine.high %v6944, %v6968
        %v6998 = vunpack.c.l.s4 1983009808
        %v6999 = vunpack.c.0.s8 %v6998
        %v7000 = vlaneseq
        %v7001 = vshrl.u32 %v7000, 7
        %v7002 = vsub.s32 %v6999, %v7001
        %v7003 = vrot.slane %v6995, %v7002
        %v7005 = vunpack.c.l.s4 1983009808
        %v7006 = vunpack.c.0.s8 %v7005
        %v7007 = vlaneseq
        %v7008 = vshrl.u32 %v7007, 7
        %v7009 = vsub.s32 %v7006, %v7008
        %v7010 = vrot.slane %v6996, %v7009
        %v7011 = vcombine.low %v6987, %v7003
        %v7012 = vcombine.high %v6987, %v7003
        %v7014 = vunpack.c.l.s4 1934713408
        %v7015 = vunpack.c.0.s8 %v7014
        %v7016 = vlaneseq
        %v7017 = vshrl.u32 %v7016, 7
        %v7018 = vsub.s32 %v7015, %v7017
        %v7019 = vrot.slane %v7011, %v7018
        %v7021 = vunpack.c.l.s4 1934713408
        %v7022 = vunpack.c.0.s8 %v7021
        %v7023 = vlaneseq
        %v7024 = vshrl.u32 %v7023, 7
        %v7025 = vsub.s32 %v7022, %v7024
        %v7026 = vrot.slane %v7012, %v7025
        %v7027 = vcombine.low %v6994, %v7010
        %v7028 = vcombine.high %v6994, %v7010
        %v7030 = vunpack.c.l.s4 1934713408
        %v7031 = vunpack.c.0.s8 %v7030
        %v7032 = vlaneseq
        %v7033 = vshrl.u32 %v7032, 7
        %v7034 = vsub.s32 %v7031, %v7033
        %v7035 = vrot.slane %v7027, %v7034
        %v7037 = vunpack.c.l.s4 1934713408
        %v7038 = vunpack.c.0.s8 %v7037
        %v7039 = vlaneseq
        %v7040 = vshrl.u32 %v7039, 7
        %v7041 = vsub.s32 %v7038, %v7040
        %v7042 = vrot.slane %v7028, %v7041
        %v7043 = vcombine.high %v7019, 0.0
        %v7044 = vcombine.high %v7026, 0.0
        %v7045 = vcombine.high %v7035, 0.0
        %v7046 = vcombine.high %v7042, 0.0
        %v7047 = vcombine.low %v1554, %v6958
        %v7048 = vcombine.high %v1554, %v6958
        %v7050 = vunpack.c.l.s4 1983009808
        %v7051 = vunpack.c.0.s8 %v7050
        %v7052 = vlaneseq
        %v7053 = vshrl.u32 %v7052, 7
        %v7054 = vsub.s32 %v7051, %v7053
        %v7055 = vrot.slane %v7047, %v7054
        %v7057 = vunpack.c.l.s4 1983009808
        %v7058 = vunpack.c.0.s8 %v7057
        %v7059 = vlaneseq
        %v7060 = vshrl.u32 %v7059, 7
        %v7061 = vsub.s32 %v7058, %v7060
        %v7062 = vrot.slane %v7048, %v7061
        %v7063 = vcombine.low %v6946, %v6970
        %v7064 = vcombine.high %v6946, %v6970
        %v7066 = vunpack.c.l.s4 1983009808
        %v7067 = vunpack.c.0.s8 %v7066
        %v7068 = vlaneseq
        %v7069 = vshrl.u32 %v7068, 7
        %v7070 = vsub.s32 %v7067, %v7069
        %v7071 = vrot.slane %v7063, %v7070
        %v7073 = vunpack.c.l.s4 1983009808
        %v7074 = vunpack.c.0.s8 %v7073
        %v7075 = vlaneseq
        %v7076 = vshrl.u32 %v7075, 7
        %v7077 = vsub.s32 %v7074, %v7076
        %v7078 = vrot.slane %v7064, %v7077
        %v7079 = vcombine.low %v7055, %v7071
        %v7080 = vcombine.high %v7055, %v7071
        %v7082 = vunpack.c.l.s4 1934713408
        %v7083 = vunpack.c.0.s8 %v7082
        %v7084 = vlaneseq
        %v7085 = vshrl.u32 %v7084, 7
        %v7086 = vsub.s32 %v7083, %v7085
        %v7087 = vrot.slane %v7079, %v7086
        %v7089 = vunpack.c.l.s4 1934713408
        %v7090 = vunpack.c.0.s8 %v7089
        %v7091 = vlaneseq
        %v7092 = vshrl.u32 %v7091, 7
        %v7093 = vsub.s32 %v7090, %v7092
        %v7094 = vrot.slane %v7080, %v7093
        %v7095 = vcombine.low %v7062, %v7078
        %v7096 = vcombine.high %v7062, %v7078
        %v7098 = vunpack.c.l.s4 1934713408
        %v7099 = vunpack.c.0.s8 %v7098
        %v7100 = vlaneseq
        %v7101 = vshrl.u32 %v7100, 7
        %v7102 = vsub.s32 %v7099, %v7101
        %v7103 = vrot.slane %v7095, %v7102
        %v7105 = vunpack.c.l.s4 1934713408
        %v7106 = vunpack.c.0.s8 %v7105
        %v7107 = vlaneseq
        %v7108 = vshrl.u32 %v7107, 7
        %v7109 = vsub.s32 %v7106, %v7108
        %v7110 = vrot.slane %v7096, %v7109
        %v7111 = vcombine.high %v7087, 0.0
        %v7112 = vcombine.high %v7094, 0.0
        %v7113 = vcombine.high %v7103, 0.0
        %v7114 = vcombine.high %v7110, 0.0
        %v7115 = vcombine.low %v1559, %v6960
        %v7116 = vcombine.high %v1559, %v6960
        %v7118 = vunpack.c.l.s4 1983009808
        %v7119 = vunpack.c.0.s8 %v7118
        %v7120 = vlaneseq
        %v7121 = vshrl.u32 %v7120, 7
        %v7122 = vsub.s32 %v7119, %v7121
        %v7123 = vrot.slane %v7115, %v7122
        %v7125 = vunpack.c.l.s4 1983009808
        %v7126 = vunpack.c.0.s8 %v7125
        %v7127 = vlaneseq
        %v7128 = vshrl.u32 %v7127, 7
        %v7129 = vsub.s32 %v7126, %v7128
        %v7130 = vrot.slane %v7116, %v7129
        %v7131 = vcombine.low %v6948, %v6972
        %v7132 = vcombine.high %v6948, %v6972
        %v7134 = vunpack.c.l.s4 1983009808
        %v7135 = vunpack.c.0.s8 %v7134
        %v7136 = vlaneseq
        %v7137 = vshrl.u32 %v7136, 7
        %v7138 = vsub.s32 %v7135, %v7137
        %v7139 = vrot.slane %v7131, %v7138
        %v7141 = vunpack.c.l.s4 1983009808
        %v7142 = vunpack.c.0.s8 %v7141
        %v7143 = vlaneseq
        %v7144 = vshrl.u32 %v7143, 7
        %v7145 = vsub.s32 %v7142, %v7144
        %v7146 = vrot.slane %v7132, %v7145
        %v7147 = vcombine.low %v7123, %v7139
        %v7148 = vcombine.high %v7123, %v7139
        %v7150 = vunpack.c.l.s4 1934713408
        %v7151 = vunpack.c.0.s8 %v7150
        %v7152 = vlaneseq
        %v7153 = vshrl.u32 %v7152, 7
        %v7154 = vsub.s32 %v7151, %v7153
        %v7155 = vrot.slane %v7147, %v7154
        %v7157 = vunpack.c.l.s4 1934713408
        %v7158 = vunpack.c.0.s8 %v7157
        %v7159 = vlaneseq
        %v7160 = vshrl.u32 %v7159, 7
        %v7161 = vsub.s32 %v7158, %v7160
        %v7162 = vrot.slane %v7148, %v7161
        %v7163 = vcombine.low %v7130, %v7146
        %v7164 = vcombine.high %v7130, %v7146
        %v7166 = vunpack.c.l.s4 1934713408
        %v7167 = vunpack.c.0.s8 %v7166
        %v7168 = vlaneseq
        %v7169 = vshrl.u32 %v7168, 7
        %v7170 = vsub.s32 %v7167, %v7169
        %v7171 = vrot.slane %v7163, %v7170
        %v7173 = vunpack.c.l.s4 1934713408
        %v7174 = vunpack.c.0.s8 %v7173
        %v7175 = vlaneseq
        %v7176 = vshrl.u32 %v7175, 7
        %v7177 = vsub.s32 %v7174, %v7176
        %v7178 = vrot.slane %v7164, %v7177
        %v7179 = vcombine.high %v7155, 0.0
        %v7180 = vcombine.high %v7162, 0.0
        %v7181 = vcombine.high %v7171, 0.0
        %v7182 = vcombine.high %v7178, 0.0
        %v7183 = vcombine.low %v1562, %v6962
        %v7184 = vcombine.high %v1562, %v6962
        %v7186 = vunpack.c.l.s4 1983009808
        %v7187 = vunpack.c.0.s8 %v7186
        %v7188 = vlaneseq
        %v7189 = vshrl.u32 %v7188, 7
        %v7190 = vsub.s32 %v7187, %v7189
        %v7191 = vrot.slane %v7183, %v7190
        %v7193 = vunpack.c.l.s4 1983009808
        %v7194 = vunpack.c.0.s8 %v7193
        %v7195 = vlaneseq
        %v7196 = vshrl.u32 %v7195, 7
        %v7197 = vsub.s32 %v7194, %v7196
        %v7198 = vrot.slane %v7184, %v7197
        %v7199 = vcombine.low %v6950, %v6974
        %v7200 = vcombine.high %v6950, %v6974
        %v7202 = vunpack.c.l.s4 1983009808
        %v7203 = vunpack.c.0.s8 %v7202
        %v7204 = vlaneseq
        %v7205 = vshrl.u32 %v7204, 7
        %v7206 = vsub.s32 %v7203, %v7205
        %v7207 = vrot.slane %v7199, %v7206
        %v7209 = vunpack.c.l.s4 1983009808
        %v7210 = vunpack.c.0.s8 %v7209
        %v7211 = vlaneseq
        %v7212 = vshrl.u32 %v7211, 7
        %v7213 = vsub.s32 %v7210, %v7212
        %v7214 = vrot.slane %v7200, %v7213
        %v7215 = vcombine.low %v7191, %v7207
        %v7216 = vcombine.high %v7191, %v7207
        %v7218 = vunpack.c.l.s4 1934713408
        %v7219 = vunpack.c.0.s8 %v7218
        %v7220 = vlaneseq
        %v7221 = vshrl.u32 %v7220, 7
        %v7222 = vsub.s32 %v7219, %v7221
        %v7223 = vrot.slane %v7215, %v7222
        %v7225 = vunpack.c.l.s4 1934713408
        %v7226 = vunpack.c.0.s8 %v7225
        %v7227 = vlaneseq
        %v7228 = vshrl.u32 %v7227, 7
        %v7229 = vsub.s32 %v7226, %v7228
        %v7230 = vrot.slane %v7216, %v7229
        %v7231 = vcombine.low %v7198, %v7214
        %v7232 = vcombine.high %v7198, %v7214
        %v7234 = vunpack.c.l.s4 1934713408
        %v7235 = vunpack.c.0.s8 %v7234
        %v7236 = vlaneseq
        %v7237 = vshrl.u32 %v7236, 7
        %v7238 = vsub.s32 %v7235, %v7237
        %v7239 = vrot.slane %v7231, %v7238
        %v7241 = vunpack.c.l.s4 1934713408
        %v7242 = vunpack.c.0.s8 %v7241
        %v7243 = vlaneseq
        %v7244 = vshrl.u32 %v7243, 7
        %v7245 = vsub.s32 %v7242, %v7244
        %v7246 = vrot.slane %v7232, %v7245
        %v7247 = vcombine.high %v7223, 0.0
        %v7248 = vcombine.high %v7230, 0.0
        %v7249 = vcombine.high %v7239, 0.0
        %v7250 = vcombine.high %v7246, 0.0
        %v7251 = vpack.c.bf16 %v7019, %v7019
        %v7252 = vpack.c.bf16 %v7043, %v7043
        %v7253 = vpack.c.bf16 %v7026, %v7026
        %v7254 = vpack.c.bf16 %v7044, %v7044
        %v7255 = vpack.c.bf16 %v7035, %v7035
        %v7256 = vpack.c.bf16 %v7045, %v7045
        %v7257 = vpack.c.bf16 %v7042, %v7042
        %v7258 = vpack.c.bf16 %v7046, %v7046
        %v7259 = vpack.c.bf16 %v7087, %v7087
        %v7260 = vpack.c.bf16 %v7111, %v7111
        %v7261 = vpack.c.bf16 %v7094, %v7094
        %v7262 = vpack.c.bf16 %v7112, %v7112
        %v7263 = vpack.c.bf16 %v7103, %v7103
        %v7264 = vpack.c.bf16 %v7113, %v7113
        %v7265 = vpack.c.bf16 %v7110, %v7110
        %v7266 = vpack.c.bf16 %v7114, %v7114
        %v7267 = vpack.c.bf16 %v7155, %v7155
        %v7268 = vpack.c.bf16 %v7179, %v7179
        %v7269 = vpack.c.bf16 %v7162, %v7162
        %v7270 = vpack.c.bf16 %v7180, %v7180
        %v7271 = vpack.c.bf16 %v7171, %v7171
        %v7272 = vpack.c.bf16 %v7181, %v7181
        %v7273 = vpack.c.bf16 %v7178, %v7178
        %v7274 = vpack.c.bf16 %v7182, %v7182
        %v7275 = vpack.c.bf16 %v7223, %v7223
        %v7276 = vpack.c.bf16 %v7247, %v7247
        %v7277 = vpack.c.bf16 %v7230, %v7230
        %v7278 = vpack.c.bf16 %v7248, %v7248
        %v7279 = vpack.c.bf16 %v7239, %v7239
        %v7280 = vpack.c.bf16 %v7249, %v7249
        %v7281 = vpack.c.bf16 %v7246, %v7246
        %v7282 = vpack.c.bf16 %v7250, %v7250
        %v7283 = vcombine.low %v7251, %v7255
        %v7285 = vunpack.c.l.s4 1983009808
        %v7286 = vunpack.c.0.s8 %v7285
        %v7287 = vlaneseq
        %v7288 = vshrl.u32 %v7287, 7
        %v7289 = vsub.s32 %v7286, %v7288
        %v7290 = vrot.slane %v7283, %v7289
        %v7291 = vcombine.low %v7253, %v7257
        %v7293 = vunpack.c.l.s4 1983009808
        %v7294 = vunpack.c.0.s8 %v7293
        %v7295 = vlaneseq
        %v7296 = vshrl.u32 %v7295, 7
        %v7297 = vsub.s32 %v7294, %v7296
        %v7298 = vrot.slane %v7291, %v7297
        %v7299 = vcombine.low %v7259, %v7263
        %v7301 = vunpack.c.l.s4 1983009808
        %v7302 = vunpack.c.0.s8 %v7301
        %v7303 = vlaneseq
        %v7304 = vshrl.u32 %v7303, 7
        %v7305 = vsub.s32 %v7302, %v7304
        %v7306 = vrot.slane %v7299, %v7305
        %v7307 = vcombine.low %v7261, %v7265
        %v7309 = vunpack.c.l.s4 1983009808
        %v7310 = vunpack.c.0.s8 %v7309
        %v7311 = vlaneseq
        %v7312 = vshrl.u32 %v7311, 7
        %v7313 = vsub.s32 %v7310, %v7312
        %v7314 = vrot.slane %v7307, %v7313
        %v7315 = vcombine.low %v7290, %v7298
        %v7317 = vunpack.c.l.s4 1934713408
        %v7318 = vunpack.c.0.s8 %v7317
        %v7319 = vlaneseq
        %v7320 = vshrl.u32 %v7319, 7
        %v7321 = vsub.s32 %v7318, %v7320
        %v7322 = vrot.slane %v7315, %v7321
        %v7323 = vcombine.low %v7306, %v7314
        %v7325 = vunpack.c.l.s4 1934713408
        %v7326 = vunpack.c.0.s8 %v7325
        %v7327 = vlaneseq
        %v7328 = vshrl.u32 %v7327, 7
        %v7329 = vsub.s32 %v7326, %v7328
        %v7330 = vrot.slane %v7323, %v7329
        %v7331 = vcombine.low %v7322, %v7330
        %v7332 = vcombine.high %v7322, %v7330
        %v7333 = vcombine.low %v7252, %v7256
        %v7335 = vunpack.c.l.s4 1983009808
        %v7336 = vunpack.c.0.s8 %v7335
        %v7337 = vlaneseq
        %v7338 = vshrl.u32 %v7337, 7
        %v7339 = vsub.s32 %v7336, %v7338
        %v7340 = vrot.slane %v7333, %v7339
        %v7341 = vcombine.low %v7254, %v7258
        %v7343 = vunpack.c.l.s4 1983009808
        %v7344 = vunpack.c.0.s8 %v7343
        %v7345 = vlaneseq
        %v7346 = vshrl.u32 %v7345, 7
        %v7347 = vsub.s32 %v7344, %v7346
        %v7348 = vrot.slane %v7341, %v7347
        %v7349 = vcombine.low %v7260, %v7264
        %v7351 = vunpack.c.l.s4 1983009808
        %v7352 = vunpack.c.0.s8 %v7351
        %v7353 = vlaneseq
        %v7354 = vshrl.u32 %v7353, 7
        %v7355 = vsub.s32 %v7352, %v7354
        %v7356 = vrot.slane %v7349, %v7355
        %v7357 = vcombine.low %v7262, %v7266
        %v7359 = vunpack.c.l.s4 1983009808
        %v7360 = vunpack.c.0.s8 %v7359
        %v7361 = vlaneseq
        %v7362 = vshrl.u32 %v7361, 7
        %v7363 = vsub.s32 %v7360, %v7362
        %v7364 = vrot.slane %v7357, %v7363
        %v7365 = vcombine.low %v7340, %v7348
        %v7367 = vunpack.c.l.s4 1934713408
        %v7368 = vunpack.c.0.s8 %v7367
        %v7369 = vlaneseq
        %v7370 = vshrl.u32 %v7369, 7
        %v7371 = vsub.s32 %v7368, %v7370
        %v7372 = vrot.slane %v7365, %v7371
        %v7373 = vcombine.low %v7356, %v7364
        %v7375 = vunpack.c.l.s4 1934713408
        %v7376 = vunpack.c.0.s8 %v7375
        %v7377 = vlaneseq
        %v7378 = vshrl.u32 %v7377, 7
        %v7379 = vsub.s32 %v7376, %v7378
        %v7380 = vrot.slane %v7373, %v7379
        %v7381 = vcombine.low %v7372, %v7380
        %v7382 = vcombine.high %v7372, %v7380
        %v7383 = vcombine.low %v7267, %v7271
        %v7385 = vunpack.c.l.s4 1983009808
        %v7386 = vunpack.c.0.s8 %v7385
        %v7387 = vlaneseq
        %v7388 = vshrl.u32 %v7387, 7
        %v7389 = vsub.s32 %v7386, %v7388
        %v7390 = vrot.slane %v7383, %v7389
        %v7391 = vcombine.low %v7269, %v7273
        %v7393 = vunpack.c.l.s4 1983009808
        %v7394 = vunpack.c.0.s8 %v7393
        %v7395 = vlaneseq
        %v7396 = vshrl.u32 %v7395, 7
        %v7397 = vsub.s32 %v7394, %v7396
        %v7398 = vrot.slane %v7391, %v7397
        %v7399 = vcombine.low %v7275, %v7279
        %v7401 = vunpack.c.l.s4 1983009808
        %v7402 = vunpack.c.0.s8 %v7401
        %v7403 = vlaneseq
        %v7404 = vshrl.u32 %v7403, 7
        %v7405 = vsub.s32 %v7402, %v7404
        %v7406 = vrot.slane %v7399, %v7405
        %v7407 = vcombine.low %v7277, %v7281
        %v7409 = vunpack.c.l.s4 1983009808
        %v7410 = vunpack.c.0.s8 %v7409
        %v7411 = vlaneseq
        %v7412 = vshrl.u32 %v7411, 7
        %v7413 = vsub.s32 %v7410, %v7412
        %v7414 = vrot.slane %v7407, %v7413
        %v7415 = vcombine.low %v7390, %v7398
        %v7417 = vunpack.c.l.s4 1934713408
        %v7418 = vunpack.c.0.s8 %v7417
        %v7419 = vlaneseq
        %v7420 = vshrl.u32 %v7419, 7
        %v7421 = vsub.s32 %v7418, %v7420
        %v7422 = vrot.slane %v7415, %v7421
        %v7423 = vcombine.low %v7406, %v7414
        %v7425 = vunpack.c.l.s4 1934713408
        %v7426 = vunpack.c.0.s8 %v7425
        %v7427 = vlaneseq
        %v7428 = vshrl.u32 %v7427, 7
        %v7429 = vsub.s32 %v7426, %v7428
        %v7430 = vrot.slane %v7423, %v7429
        %v7431 = vcombine.low %v7422, %v7430
        %v7432 = vcombine.high %v7422, %v7430
        %v7433 = vcombine.low %v7268, %v7272
        %v7435 = vunpack.c.l.s4 1983009808
        %v7436 = vunpack.c.0.s8 %v7435
        %v7437 = vlaneseq
        %v7438 = vshrl.u32 %v7437, 7
        %v7439 = vsub.s32 %v7436, %v7438
        %v7440 = vrot.slane %v7433, %v7439
        %v7441 = vcombine.low %v7270, %v7274
        %v7443 = vunpack.c.l.s4 1983009808
        %v7444 = vunpack.c.0.s8 %v7443
        %v7445 = vlaneseq
        %v7446 = vshrl.u32 %v7445, 7
        %v7447 = vsub.s32 %v7444, %v7446
        %v7448 = vrot.slane %v7441, %v7447
        %v7449 = vcombine.low %v7276, %v7280
        %v7451 = vunpack.c.l.s4 1983009808
        %v7452 = vunpack.c.0.s8 %v7451
        %v7453 = vlaneseq
        %v7454 = vshrl.u32 %v7453, 7
        %v7455 = vsub.s32 %v7452, %v7454
        %v7456 = vrot.slane %v7449, %v7455
        %v7457 = vcombine.low %v7278, %v7282
        %v7459 = vunpack.c.l.s4 1983009808
        %v7460 = vunpack.c.0.s8 %v7459
        %v7461 = vlaneseq
        %v7462 = vshrl.u32 %v7461, 7
        %v7463 = vsub.s32 %v7460, %v7462
        %v7464 = vrot.slane %v7457, %v7463
        %v7465 = vcombine.low %v7440, %v7448
        %v7467 = vunpack.c.l.s4 1934713408
        %v7468 = vunpack.c.0.s8 %v7467
        %v7469 = vlaneseq
        %v7470 = vshrl.u32 %v7469, 7
        %v7471 = vsub.s32 %v7468, %v7470
        %v7472 = vrot.slane %v7465, %v7471
        %v7473 = vcombine.low %v7456, %v7464
        %v7475 = vunpack.c.l.s4 1934713408
        %v7476 = vunpack.c.0.s8 %v7475
        %v7477 = vlaneseq
        %v7478 = vshrl.u32 %v7477, 7
        %v7479 = vsub.s32 %v7476, %v7478
        %v7480 = vrot.slane %v7473, %v7479
        %v7481 = vcombine.low %v7472, %v7480
        %v7482 = vcombine.high %v7472, %v7480
        %v7485 = vpack.i.b16 %v7381, %v7331
        %v7487 = vshrl.u32 %v7331, 16
        %v7488 = vshrl.u32 %v7381, 16
        %v7489 = vpack.i.b16 %v7488, %v7487
        %v7493 = vpack.i.b16 %v7382, %v7332
        %v7495 = vshrl.u32 %v7332, 16
        %v7496 = vshrl.u32 %v7382, 16
        %v7497 = vpack.i.b16 %v7496, %v7495
        %v7501 = vpack.i.b16 %v7481, %v7431
        %v7503 = vshrl.u32 %v7431, 16
        %v7504 = vshrl.u32 %v7481, 16
        %v7505 = vpack.i.b16 %v7504, %v7503
        %v7509 = vpack.i.b16 %v7482, %v7432
        %v7511 = vshrl.u32 %v7432, 16
        %v7512 = vshrl.u32 %v7482, 16
        %v7513 = vpack.i.b16 %v7512, %v7511
        %vm7515 = vcmask 130048
        %v7517 = vsel %vm7515, %v4997, 0
        %v7520 = vsel %vm7515, %v5485, 0
        %v7523 = vsel %vm7515, %v5497, 0
        %7525 = vmatprep.subr.bf16.mxu0 0
        %7526 = vmatpush1.bf16.xpose.msra.mxu0 %v7520
        %7527 = vmatprep.subr.bf16.mxu0 0
        %7528 = vmatpush1.bf16.xpose.msra.mxu0 %v7523
        %7529 = vmatprep.subr.bf16.mxu0 0
        %7530 = vmatpush1.bf16.xpose.msra.mxu0 0
        %7531 = vmatprep.subr.bf16.mxu0 0
        %7532 = vmatpush1.bf16.xpose.msra.mxu0 0
        %7533 = vmatprep.subr.bf16.mxu0 0
        %7534 = vmatpush1.bf16.xpose.msra.mxu0 0
        %7535 = vmatprep.subr.bf16.mxu0 0
        %7536 = vmatpush1.bf16.xpose.msra.mxu0 0
        %7537 = vmatprep.subr.bf16.mxu0 0
        %7538 = vmatpush1.bf16.xpose.msra.mxu0 0
        %7539 = vmatprep.subr.bf16.mxu0 0
        %7540 = vmatpush1.bf16.xpose.msra.mxu0 0
        %7541 = vmatprep.subr.bf16.mxu0 0
        %7542 = vmatpush1.bf16.xpose.msra.mxu0 0
        %7543 = vmatprep.subr.bf16.mxu0 0
        %7544 = vmatpush1.bf16.xpose.msra.mxu0 0
        %7545 = vmatprep.subr.bf16.mxu0 0
        %7546 = vmatpush1.bf16.xpose.msra.mxu0 0
        %7547 = vmatprep.subr.bf16.mxu0 0
        %7548 = vmatpush1.bf16.xpose.msra.mxu0 0
        %7549 = vmatprep.subr.bf16.mxu0 0
        %7550 = vmatpush1.bf16.xpose.msra.mxu0 0
        %7551 = vmatprep.subr.bf16.mxu0 0
        %7552 = vmatpush1.bf16.xpose.msra.mxu0 0
        %7553 = vmatprep.subr.bf16.mxu0 0
        %7554 = vmatpush1.bf16.xpose.msra.mxu0 0
        %7555 = vmatprep.subr.bf16.mxu0 0
        %7556 = vmatpush1.bf16.xpose.msra.mxu0 0
        %7557 = vmatprep.mubr.bf16.mxu0 0
        %7558 = vmatmul.mubr.bf16.gmra.mrb[0].mxu0 %v7517
        %v7559 = vpop.f32.mrb[0].mxu0
        %v7560 = vadd.f32 0.0, %v7559
        %v7561 = vpop.f32.mrb[0].mxu0
        %v7562 = vpop.f32.mrb[0].mxu0
        %v7563 = vadd.f32 0.0, %v7562
        %v7564 = vpop.f32.mrb[0].mxu0
        %7565 = vdwg.mxu0
        %v7567 = vsel %vm7515, %v5000, 0
        %v7570 = vsel %vm7515, %v5488, 0
        %v7573 = vsel %vm7515, %v5500, 0
        %7575 = vmatprep.subr.bf16.mxu0 0
        %7576 = vmatpush1.bf16.xpose.msra.mxu0 %v7570
        %7577 = vmatprep.subr.bf16.mxu0 0
        %7578 = vmatpush1.bf16.xpose.msra.mxu0 %v7573
        %7579 = vmatprep.subr.bf16.mxu0 0
        %7580 = vmatpush1.bf16.xpose.msra.mxu0 0
        %7581 = vmatprep.subr.bf16.mxu0 0
        %7582 = vmatpush1.bf16.xpose.msra.mxu0 0
        %7583 = vmatprep.subr.bf16.mxu0 0
        %7584 = vmatpush1.bf16.xpose.msra.mxu0 0
        %7585 = vmatprep.subr.bf16.mxu0 0
        %7586 = vmatpush1.bf16.xpose.msra.mxu0 0
        %7587 = vmatprep.subr.bf16.mxu0 0
        %7588 = vmatpush1.bf16.xpose.msra.mxu0 0
        %7589 = vmatprep.subr.bf16.mxu0 0
        %7590 = vmatpush1.bf16.xpose.msra.mxu0 0
        %7591 = vmatprep.subr.bf16.mxu0 0
        %7592 = vmatpush1.bf16.xpose.msra.mxu0 0
        %7593 = vmatprep.subr.bf16.mxu0 0
        %7594 = vmatpush1.bf16.xpose.msra.mxu0 0
        %7595 = vmatprep.subr.bf16.mxu0 0
        %7596 = vmatpush1.bf16.xpose.msra.mxu0 0
        %7597 = vmatprep.subr.bf16.mxu0 0
        %7598 = vmatpush1.bf16.xpose.msra.mxu0 0
        %7599 = vmatprep.subr.bf16.mxu0 0
        %7600 = vmatpush1.bf16.xpose.msra.mxu0 0
        %7601 = vmatprep.subr.bf16.mxu0 0
        %7602 = vmatpush1.bf16.xpose.msra.mxu0 0
        %7603 = vmatprep.subr.bf16.mxu0 0
        %7604 = vmatpush1.bf16.xpose.msra.mxu0 0
        %7605 = vmatprep.subr.bf16.mxu0 0
        %7606 = vmatpush1.bf16.xpose.msra.mxu0 0
        %7607 = vmatprep.mubr.bf16.mxu0 0
        %7608 = vmatmul.mubr.bf16.gmra.mrb[0].mxu0 %v7567
        %v7609 = vpop.f32.mrb[0].mxu0
        %v7610 = vadd.f32 0.0, %v7609
        %v7611 = vpop.f32.mrb[0].mxu0
        %v7612 = vpop.f32.mrb[0].mxu0
        %v7613 = vadd.f32 0.0, %v7612
        %v7614 = vpop.f32.mrb[0].mxu0
        %7615 = vdwg.mxu0
        %v7617 = vsel %vm7515, %v5003, 0
        %v7620 = vsel %vm7515, %v5491, 0
        %v7623 = vsel %vm7515, %v5503, 0
        %7625 = vmatprep.subr.bf16.mxu0 0
        %7626 = vmatpush1.bf16.xpose.msra.mxu0 %v7620
        %7627 = vmatprep.subr.bf16.mxu0 0
        %7628 = vmatpush1.bf16.xpose.msra.mxu0 %v7623
        %7629 = vmatprep.subr.bf16.mxu0 0
        %7630 = vmatpush1.bf16.xpose.msra.mxu0 0
        %7631 = vmatprep.subr.bf16.mxu0 0
        %7632 = vmatpush1.bf16.xpose.msra.mxu0 0
        %7633 = vmatprep.subr.bf16.mxu0 0
        %7634 = vmatpush1.bf16.xpose.msra.mxu0 0
        %7635 = vmatprep.subr.bf16.mxu0 0
        %7636 = vmatpush1.bf16.xpose.msra.mxu0 0
        %7637 = vmatprep.subr.bf16.mxu0 0
        %7638 = vmatpush1.bf16.xpose.msra.mxu0 0
        %7639 = vmatprep.subr.bf16.mxu0 0
        %7640 = vmatpush1.bf16.xpose.msra.mxu0 0
        %7641 = vmatprep.subr.bf16.mxu0 0
        %7642 = vmatpush1.bf16.xpose.msra.mxu0 0
        %7643 = vmatprep.subr.bf16.mxu0 0
        %7644 = vmatpush1.bf16.xpose.msra.mxu0 0
        %7645 = vmatprep.subr.bf16.mxu0 0
        %7646 = vmatpush1.bf16.xpose.msra.mxu0 0
        %7647 = vmatprep.subr.bf16.mxu0 0
        %7648 = vmatpush1.bf16.xpose.msra.mxu0 0
        %7649 = vmatprep.subr.bf16.mxu0 0
        %7650 = vmatpush1.bf16.xpose.msra.mxu0 0
        %7651 = vmatprep.subr.bf16.mxu0 0
        %7652 = vmatpush1.bf16.xpose.msra.mxu0 0
        %7653 = vmatprep.subr.bf16.mxu0 0
        %7654 = vmatpush1.bf16.xpose.msra.mxu0 0
        %7655 = vmatprep.subr.bf16.mxu0 0
        %7656 = vmatpush1.bf16.xpose.msra.mxu0 0
        %7657 = vmatprep.mubr.bf16.mxu0 0
        %7658 = vmatmul.mubr.bf16.gmra.mrb[0].mxu0 %v7617
        %v7659 = vpop.f32.mrb[0].mxu0
        %v7660 = vadd.f32 0.0, %v7659
        %v7661 = vpop.f32.mrb[0].mxu0
        %v7662 = vpop.f32.mrb[0].mxu0
        %v7663 = vadd.f32 0.0, %v7662
        %v7664 = vpop.f32.mrb[0].mxu0
        %7665 = vdwg.mxu0
        %v7667 = vsel %vm7515, %v5006, 0
        %v7670 = vsel %vm7515, %v5494, 0
        %v7673 = vsel %vm7515, %v5506, 0
        %7675 = vmatprep.subr.bf16.mxu0 0
        %7676 = vmatpush1.bf16.xpose.msra.mxu0 %v7670
        %7677 = vmatprep.subr.bf16.mxu0 0
        %7678 = vmatpush1.bf16.xpose.msra.mxu0 %v7673
        %7679 = vmatprep.subr.bf16.mxu0 0
        %7680 = vmatpush1.bf16.xpose.msra.mxu0 0
        %7681 = vmatprep.subr.bf16.mxu0 0
        %7682 = vmatpush1.bf16.xpose.msra.mxu0 0
        %7683 = vmatprep.subr.bf16.mxu0 0
        %7684 = vmatpush1.bf16.xpose.msra.mxu0 0
        %7685 = vmatprep.subr.bf16.mxu0 0
        %7686 = vmatpush1.bf16.xpose.msra.mxu0 0
        %7687 = vmatprep.subr.bf16.mxu0 0
        %7688 = vmatpush1.bf16.xpose.msra.mxu0 0
        %7689 = vmatprep.subr.bf16.mxu0 0
        %7690 = vmatpush1.bf16.xpose.msra.mxu0 0
        %7691 = vmatprep.subr.bf16.mxu0 0
        %7692 = vmatpush1.bf16.xpose.msra.mxu0 0
        %7693 = vmatprep.subr.bf16.mxu0 0
        %7694 = vmatpush1.bf16.xpose.msra.mxu0 0
        %7695 = vmatprep.subr.bf16.mxu0 0
        %7696 = vmatpush1.bf16.xpose.msra.mxu0 0
        %7697 = vmatprep.subr.bf16.mxu0 0
        %7698 = vmatpush1.bf16.xpose.msra.mxu0 0
        %7699 = vmatprep.subr.bf16.mxu0 0
        %7700 = vmatpush1.bf16.xpose.msra.mxu0 0
        %7701 = vmatprep.subr.bf16.mxu0 0
        %7702 = vmatpush1.bf16.xpose.msra.mxu0 0
        %7703 = vmatprep.subr.bf16.mxu0 0
        %7704 = vmatpush1.bf16.xpose.msra.mxu0 0
        %7705 = vmatprep.subr.bf16.mxu0 0
        %7706 = vmatpush1.bf16.xpose.msra.mxu0 0
        %7707 = vmatprep.mubr.bf16.mxu0 0
        %7708 = vmatmul.mubr.bf16.gmra.mrb[0].mxu0 %v7667
        %v7709 = vpop.f32.mrb[0].mxu0
        %v7710 = vadd.f32 0.0, %v7709
        %v7711 = vpop.f32.mrb[0].mxu0
        %v7712 = vpop.f32.mrb[0].mxu0
        %v7713 = vadd.f32 0.0, %v7712
        %v7714 = vpop.f32.mrb[0].mxu0
        %7715 = vdwg.mxu0
        %v7717 = vsel %vm7515, %v5765, 0
        %7719 = vmatprep.subr.bf16.mxu0 0
        %7720 = vmatpush1.bf16.xpose.msra.mxu0 %v7717
        %7721 = vmatprep.subr.bf16.mxu0 0
        %7722 = vmatpush1.bf16.xpose.msra.mxu0 0
        %7723 = vmatprep.subr.bf16.mxu0 0
        %7724 = vmatpush1.bf16.xpose.msra.mxu0 0
        %7725 = vmatprep.subr.bf16.mxu0 0
        %7726 = vmatpush1.bf16.xpose.msra.mxu0 0
        %7727 = vmatprep.subr.bf16.mxu0 0
        %7728 = vmatpush1.bf16.xpose.msra.mxu0 0
        %7729 = vmatprep.subr.bf16.mxu0 0
        %7730 = vmatpush1.bf16.xpose.msra.mxu0 0
        %7731 = vmatprep.subr.bf16.mxu0 0
        %7732 = vmatpush1.bf16.xpose.msra.mxu0 0
        %7733 = vmatprep.subr.bf16.mxu0 0
        %7734 = vmatpush1.bf16.xpose.msra.mxu0 0
        %7735 = vmatprep.subr.bf16.mxu0 0
        %7736 = vmatpush1.bf16.xpose.msra.mxu0 0
        %7737 = vmatprep.subr.bf16.mxu0 0
        %7738 = vmatpush1.bf16.xpose.msra.mxu0 0
        %7739 = vmatprep.subr.bf16.mxu0 0
        %7740 = vmatpush1.bf16.xpose.msra.mxu0 0
        %7741 = vmatprep.subr.bf16.mxu0 0
        %7742 = vmatpush1.bf16.xpose.msra.mxu0 0
        %7743 = vmatprep.subr.bf16.mxu0 0
        %7744 = vmatpush1.bf16.xpose.msra.mxu0 0
        %7745 = vmatprep.subr.bf16.mxu0 0
        %7746 = vmatpush1.bf16.xpose.msra.mxu0 0
        %7747 = vmatprep.subr.bf16.mxu0 0
        %7748 = vmatpush1.bf16.xpose.msra.mxu0 0
        %7749 = vmatprep.subr.bf16.mxu0 0
        %7750 = vmatpush1.bf16.xpose.msra.mxu0 0
        %7751 = vmatprep.mubr.bf16.mxu0 0
        %7752 = vmatmul.mubr.bf16.gmra.mrb[0].mxu0 %v7517
        %v7753 = vpop.f32.mrb[0].mxu0
        %v7754 = vadd.f32 0.0, %v7753
        %v7755 = vpop.f32.mrb[0].mxu0
        %v7756 = vpop.f32.mrb[0].mxu0
        %v7757 = vadd.f32 0.0, %v7756
        %v7758 = vpop.f32.mrb[0].mxu0
        %7759 = vdwg.mxu0
        %v7761 = vsel %vm7515, %v5768, 0
        %7763 = vmatprep.subr.bf16.mxu0 0
        %7764 = vmatpush1.bf16.xpose.msra.mxu0 %v7761
        %7765 = vmatprep.subr.bf16.mxu0 0
        %7766 = vmatpush1.bf16.xpose.msra.mxu0 0
        %7767 = vmatprep.subr.bf16.mxu0 0
        %7768 = vmatpush1.bf16.xpose.msra.mxu0 0
        %7769 = vmatprep.subr.bf16.mxu0 0
        %7770 = vmatpush1.bf16.xpose.msra.mxu0 0
        %7771 = vmatprep.subr.bf16.mxu0 0
        %7772 = vmatpush1.bf16.xpose.msra.mxu0 0
        %7773 = vmatprep.subr.bf16.mxu0 0
        %7774 = vmatpush1.bf16.xpose.msra.mxu0 0
        %7775 = vmatprep.subr.bf16.mxu0 0
        %7776 = vmatpush1.bf16.xpose.msra.mxu0 0
        %7777 = vmatprep.subr.bf16.mxu0 0
        %7778 = vmatpush1.bf16.xpose.msra.mxu0 0
        %7779 = vmatprep.subr.bf16.mxu0 0
        %7780 = vmatpush1.bf16.xpose.msra.mxu0 0
        %7781 = vmatprep.subr.bf16.mxu0 0
        %7782 = vmatpush1.bf16.xpose.msra.mxu0 0
        %7783 = vmatprep.subr.bf16.mxu0 0
        %7784 = vmatpush1.bf16.xpose.msra.mxu0 0
        %7785 = vmatprep.subr.bf16.mxu0 0
        %7786 = vmatpush1.bf16.xpose.msra.mxu0 0
        %7787 = vmatprep.subr.bf16.mxu0 0
        %7788 = vmatpush1.bf16.xpose.msra.mxu0 0
        %7789 = vmatprep.subr.bf16.mxu0 0
        %7790 = vmatpush1.bf16.xpose.msra.mxu0 0
        %7791 = vmatprep.subr.bf16.mxu0 0
        %7792 = vmatpush1.bf16.xpose.msra.mxu0 0
        %7793 = vmatprep.subr.bf16.mxu0 0
        %7794 = vmatpush1.bf16.xpose.msra.mxu0 0
        %7795 = vmatprep.mubr.bf16.mxu0 0
        %7796 = vmatmul.mubr.bf16.gmra.mrb[0].mxu0 %v7567
        %v7797 = vpop.f32.mrb[0].mxu0
        %v7798 = vadd.f32 0.0, %v7797
        %v7799 = vpop.f32.mrb[0].mxu0
        %v7800 = vpop.f32.mrb[0].mxu0
        %v7801 = vadd.f32 0.0, %v7800
        %v7802 = vpop.f32.mrb[0].mxu0
        %7803 = vdwg.mxu0
        %v7805 = vsel %vm7515, %v5771, 0
        %7807 = vmatprep.subr.bf16.mxu0 0
        %7808 = vmatpush1.bf16.xpose.msra.mxu0 %v7805
        %7809 = vmatprep.subr.bf16.mxu0 0
        %7810 = vmatpush1.bf16.xpose.msra.mxu0 0
        %7811 = vmatprep.subr.bf16.mxu0 0
        %7812 = vmatpush1.bf16.xpose.msra.mxu0 0
        %7813 = vmatprep.subr.bf16.mxu0 0
        %7814 = vmatpush1.bf16.xpose.msra.mxu0 0
        %7815 = vmatprep.subr.bf16.mxu0 0
        %7816 = vmatpush1.bf16.xpose.msra.mxu0 0
        %7817 = vmatprep.subr.bf16.mxu0 0
        %7818 = vmatpush1.bf16.xpose.msra.mxu0 0
        %7819 = vmatprep.subr.bf16.mxu0 0
        %7820 = vmatpush1.bf16.xpose.msra.mxu0 0
        %7821 = vmatprep.subr.bf16.mxu0 0
        %7822 = vmatpush1.bf16.xpose.msra.mxu0 0
        %7823 = vmatprep.subr.bf16.mxu0 0
        %7824 = vmatpush1.bf16.xpose.msra.mxu0 0
        %7825 = vmatprep.subr.bf16.mxu0 0
        %7826 = vmatpush1.bf16.xpose.msra.mxu0 0
        %7827 = vmatprep.subr.bf16.mxu0 0
        %7828 = vmatpush1.bf16.xpose.msra.mxu0 0
        %7829 = vmatprep.subr.bf16.mxu0 0
        %7830 = vmatpush1.bf16.xpose.msra.mxu0 0
        %7831 = vmatprep.subr.bf16.mxu0 0
        %7832 = vmatpush1.bf16.xpose.msra.mxu0 0
        %7833 = vmatprep.subr.bf16.mxu0 0
        %7834 = vmatpush1.bf16.xpose.msra.mxu0 0
        %7835 = vmatprep.subr.bf16.mxu0 0
        %7836 = vmatpush1.bf16.xpose.msra.mxu0 0
        %7837 = vmatprep.subr.bf16.mxu0 0
        %7838 = vmatpush1.bf16.xpose.msra.mxu0 0
        %7839 = vmatprep.mubr.bf16.mxu0 0
        %7840 = vmatmul.mubr.bf16.gmra.mrb[0].mxu0 %v7617
        %v7841 = vpop.f32.mrb[0].mxu0
        %v7842 = vadd.f32 0.0, %v7841
        %v7843 = vpop.f32.mrb[0].mxu0
        %v7844 = vpop.f32.mrb[0].mxu0
        %v7845 = vadd.f32 0.0, %v7844
        %v7846 = vpop.f32.mrb[0].mxu0
        %7847 = vdwg.mxu0
        %v7849 = vsel %vm7515, %v5774, 0
        %7851 = vmatprep.subr.bf16.mxu0 0
        %7852 = vmatpush1.bf16.xpose.msra.mxu0 %v7849
        %7853 = vmatprep.subr.bf16.mxu0 0
        %7854 = vmatpush1.bf16.xpose.msra.mxu0 0
        %7855 = vmatprep.subr.bf16.mxu0 0
        %7856 = vmatpush1.bf16.xpose.msra.mxu0 0
        %7857 = vmatprep.subr.bf16.mxu0 0
        %7858 = vmatpush1.bf16.xpose.msra.mxu0 0
        %7859 = vmatprep.subr.bf16.mxu0 0
        %7860 = vmatpush1.bf16.xpose.msra.mxu0 0
        %7861 = vmatprep.subr.bf16.mxu0 0
        %7862 = vmatpush1.bf16.xpose.msra.mxu0 0
        %7863 = vmatprep.subr.bf16.mxu0 0
        %7864 = vmatpush1.bf16.xpose.msra.mxu0 0
        %7865 = vmatprep.subr.bf16.mxu0 0
        %7866 = vmatpush1.bf16.xpose.msra.mxu0 0
        %7867 = vmatprep.subr.bf16.mxu0 0
        %7868 = vmatpush1.bf16.xpose.msra.mxu0 0
        %7869 = vmatprep.subr.bf16.mxu0 0
        %7870 = vmatpush1.bf16.xpose.msra.mxu0 0
        %7871 = vmatprep.subr.bf16.mxu0 0
        %7872 = vmatpush1.bf16.xpose.msra.mxu0 0
        %7873 = vmatprep.subr.bf16.mxu0 0
        %7874 = vmatpush1.bf16.xpose.msra.mxu0 0
        %7875 = vmatprep.subr.bf16.mxu0 0
        %7876 = vmatpush1.bf16.xpose.msra.mxu0 0
        %7877 = vmatprep.subr.bf16.mxu0 0
        %7878 = vmatpush1.bf16.xpose.msra.mxu0 0
        %7879 = vmatprep.subr.bf16.mxu0 0
        %7880 = vmatpush1.bf16.xpose.msra.mxu0 0
        %7881 = vmatprep.subr.bf16.mxu0 0
        %7882 = vmatpush1.bf16.xpose.msra.mxu0 0
        %7883 = vmatprep.mubr.bf16.mxu0 0
        %7884 = vmatmul.mubr.bf16.gmra.mrb[0].mxu0 %v7667
        %v7885 = vpop.f32.mrb[0].mxu0
        %v7886 = vadd.f32 0.0, %v7885
        %v7887 = vpop.f32.mrb[0].mxu0
        %v7888 = vpop.f32.mrb[0].mxu0
        %v7889 = vadd.f32 0.0, %v7888
        %v7890 = vpop.f32.mrb[0].mxu0
        %7891 = vdwg.mxu0
        %vm7892 = vcmask 261120
        %v7893 = vsel %vm7892, %v7560, -inf
        %7894 = vmax.xlane.f32.xlu0 %v7893
        %v7895 = vpop.xlane.xlu0 %7894
        %v7896 = vsel %vm7892, %v7563, -inf
        %7897 = vmax.xlane.f32.xlu0 %v7896
        %v7898 = vpop.xlane.xlu0 %7897
        %v7899 = vsel %vm7892, %v7610, -inf
        %7900 = vmax.xlane.f32.xlu0 %v7899
        %v7901 = vpop.xlane.xlu0 %7900
        %v7902 = vsel %vm7892, %v7613, -inf
        %7903 = vmax.xlane.f32.xlu0 %v7902
        %v7904 = vpop.xlane.xlu0 %7903
        %v7905 = vsel %vm7892, %v7660, -inf
        %7906 = vmax.xlane.f32.xlu0 %v7905
        %v7907 = vpop.xlane.xlu0 %7906
        %v7908 = vsel %vm7892, %v7663, -inf
        %7909 = vmax.xlane.f32.xlu0 %v7908
        %v7910 = vpop.xlane.xlu0 %7909
        %v7911 = vsel %vm7892, %v7710, -inf
        %7912 = vmax.xlane.f32.xlu0 %v7911
        %v7913 = vpop.xlane.xlu0 %7912
        %v7914 = vsel %vm7892, %v7713, -inf
        %7915 = vmax.xlane.f32.xlu0 %v7914
        %v7916 = vpop.xlane.xlu0 %7915
        %v7917 = vsel %vm7515, %v7754, -inf
        %7918 = vmax.xlane.f32.xlu0 %v7917
        %v7919 = vpop.xlane.xlu0 %7918
        %v7920 = vsel %vm7515, %v7757, -inf
        %7921 = vmax.xlane.f32.xlu0 %v7920
        %v7922 = vpop.xlane.xlu0 %7921
        %v7923 = vsel %vm7515, %v7798, -inf
        %7924 = vmax.xlane.f32.xlu0 %v7923
        %v7925 = vpop.xlane.xlu0 %7924
        %v7926 = vsel %vm7515, %v7801, -inf
        %7927 = vmax.xlane.f32.xlu0 %v7926
        %v7928 = vpop.xlane.xlu0 %7927
        %v7929 = vsel %vm7515, %v7842, -inf
        %7930 = vmax.xlane.f32.xlu0 %v7929
        %v7931 = vpop.xlane.xlu0 %7930
        %v7932 = vsel %vm7515, %v7845, -inf
        %7933 = vmax.xlane.f32.xlu0 %v7932
        %v7934 = vpop.xlane.xlu0 %7933
        %v7935 = vsel %vm7515, %v7886, -inf
        %7936 = vmax.xlane.f32.xlu0 %v7935
        %v7937 = vpop.xlane.xlu0 %7936
        %v7938 = vsel %vm7515, %v7889, -inf
        %7939 = vmax.xlane.f32.xlu0 %v7938
        %v7940 = vpop.xlane.xlu0 %7939
        %v7941 = vmax.f32 %v7895, %v7919
        %v7942 = vmax.f32 %v7898, %v7922
        %v7943 = vmax.f32 %v7901, %v7925
        %v7944 = vmax.f32 %v7904, %v7928
        %v7945 = vmax.f32 %v7907, %v7931
        %v7946 = vmax.f32 %v7910, %v7934
        %v7947 = vmax.f32 %v7913, %v7937
        %v7948 = vmax.f32 %v7916, %v7940
        %v7949 = vsub.f32 %v7560, %v7941
        %v7950 = vsub.f32 %v7563, %v7942
        %v7951 = vsub.f32 %v7610, %v7943
        %v7952 = vsub.f32 %v7613, %v7944
        %v7953 = vsub.f32 %v7660, %v7945
        %v7954 = vsub.f32 %v7663, %v7946
        %v7955 = vsub.f32 %v7710, %v7947
        %v7956 = vsub.f32 %v7713, %v7948
        %v7957 = vmul.f32 %v7949, 1.442695
        %v7958 = vpow.pop %v7957
        %v7959 = vmul.f32 %v7950, 1.442695
        %v7960 = vpow.pop %v7959
        %v7961 = vmul.f32 %v7951, 1.442695
        %v7962 = vpow.pop %v7961
        %v7963 = vmul.f32 %v7952, 1.442695
        %v7964 = vpow.pop %v7963
        %v7965 = vmul.f32 %v7953, 1.442695
        %v7966 = vpow.pop %v7965
        %v7967 = vmul.f32 %v7954, 1.442695
        %v7968 = vpow.pop %v7967
        %v7969 = vmul.f32 %v7955, 1.442695
        %v7970 = vpow.pop %v7969
        %v7971 = vmul.f32 %v7956, 1.442695
        %v7972 = vpow.pop %v7971
        %v7973 = vsub.f32 %v7754, %v7941
        %v7974 = vsub.f32 %v7757, %v7942
        %v7975 = vsub.f32 %v7798, %v7943
        %v7976 = vsub.f32 %v7801, %v7944
        %v7977 = vsub.f32 %v7842, %v7945
        %v7978 = vsub.f32 %v7845, %v7946
        %v7979 = vsub.f32 %v7886, %v7947
        %v7980 = vsub.f32 %v7889, %v7948
        %v7981 = vmul.f32 %v7973, 1.442695
        %v7982 = vpow.pop %v7981
        %v7983 = vmul.f32 %v7974, 1.442695
        %v7984 = vpow.pop %v7983
        %v7985 = vmul.f32 %v7975, 1.442695
        %v7986 = vpow.pop %v7985
        %v7987 = vmul.f32 %v7976, 1.442695
        %v7988 = vpow.pop %v7987
        %v7989 = vmul.f32 %v7977, 1.442695
        %v7990 = vpow.pop %v7989
        %v7991 = vmul.f32 %v7978, 1.442695
        %v7992 = vpow.pop %v7991
        %v7993 = vmul.f32 %v7979, 1.442695
        %v7994 = vpow.pop %v7993
        %v7995 = vmul.f32 %v7980, 1.442695
        %v7996 = vpow.pop %v7995
        %v7997 = vsel %vm7892, %v7958, 0.0
        %7998 = vadd.xlane.f32.xlu0 %v7997
        %v7999 = vpop.xlane.xlu0 %7998
        %v8000 = vsel %vm7892, %v7960, 0.0
        %8001 = vadd.xlane.f32.xlu0 %v8000
        %v8002 = vpop.xlane.xlu0 %8001
        %v8003 = vsel %vm7892, %v7962, 0.0
        %8004 = vadd.xlane.f32.xlu0 %v8003
        %v8005 = vpop.xlane.xlu0 %8004
        %v8006 = vsel %vm7892, %v7964, 0.0
        %8007 = vadd.xlane.f32.xlu0 %v8006
        %v8008 = vpop.xlane.xlu0 %8007
        %v8009 = vsel %vm7892, %v7966, 0.0
        %8010 = vadd.xlane.f32.xlu0 %v8009
        %v8011 = vpop.xlane.xlu0 %8010
        %v8012 = vsel %vm7892, %v7968, 0.0
        %8013 = vadd.xlane.f32.xlu0 %v8012
        %v8014 = vpop.xlane.xlu0 %8013
        %v8015 = vsel %vm7892, %v7970, 0.0
        %8016 = vadd.xlane.f32.xlu0 %v8015
        %v8017 = vpop.xlane.xlu0 %8016
        %v8018 = vsel %vm7892, %v7972, 0.0
        %8019 = vadd.xlane.f32.xlu0 %v8018
        %v8020 = vpop.xlane.xlu0 %8019
        %v8021 = vsel %vm7515, %v7982, 0.0
        %8022 = vadd.xlane.f32.xlu0 %v8021
        %v8023 = vpop.xlane.xlu0 %8022
        %v8024 = vsel %vm7515, %v7984, 0.0
        %8025 = vadd.xlane.f32.xlu0 %v8024
        %v8026 = vpop.xlane.xlu0 %8025
        %v8027 = vsel %vm7515, %v7986, 0.0
        %8028 = vadd.xlane.f32.xlu0 %v8027
        %v8029 = vpop.xlane.xlu0 %8028
        %v8030 = vsel %vm7515, %v7988, 0.0
        %8031 = vadd.xlane.f32.xlu0 %v8030
        %v8032 = vpop.xlane.xlu0 %8031
        %v8033 = vsel %vm7515, %v7990, 0.0
        %8034 = vadd.xlane.f32.xlu0 %v8033
        %v8035 = vpop.xlane.xlu0 %8034
        %v8036 = vsel %vm7515, %v7992, 0.0
        %8037 = vadd.xlane.f32.xlu0 %v8036
        %v8038 = vpop.xlane.xlu0 %8037
        %v8039 = vsel %vm7515, %v7994, 0.0
        %8040 = vadd.xlane.f32.xlu0 %v8039
        %v8041 = vpop.xlane.xlu0 %8040
        %v8042 = vsel %vm7515, %v7996, 0.0
        %8043 = vadd.xlane.f32.xlu0 %v8042
        %v8044 = vpop.xlane.xlu0 %8043
        %v8045 = vadd.f32 %v7999, %v8023
        %v8046 = vadd.f32 %v8002, %v8026
        %v8047 = vadd.f32 %v8005, %v8029
        %v8048 = vadd.f32 %v8008, %v8032
        %v8049 = vadd.f32 %v8011, %v8035
        %v8050 = vadd.f32 %v8014, %v8038
        %v8051 = vadd.f32 %v8017, %v8041
        %v8052 = vadd.f32 %v8020, %v8044
        %v8053 = vrcp.pop %v8045
        %v8054 = vrcp.pop %v8046
        %v8055 = vrcp.pop %v8047
        %v8056 = vrcp.pop %v8048
        %v8057 = vrcp.pop %v8049
        %v8058 = vrcp.pop %v8050
        %v8059 = vrcp.pop %v8051
        %v8060 = vrcp.pop %v8052
        %v8061 = vmul.f32 %v7958, %v8053
        %v8062 = vmul.f32 %v7960, %v8054
        %v8063 = vmul.f32 %v7962, %v8055
        %v8064 = vmul.f32 %v7964, %v8056
        %v8065 = vmul.f32 %v7966, %v8057
        %v8066 = vmul.f32 %v7968, %v8058
        %v8067 = vmul.f32 %v7970, %v8059
        %v8068 = vmul.f32 %v7972, %v8060
        %v8069 = vpack.c.bf16 %v8062, %v8061
        %v8070 = vpack.c.bf16 %v8064, %v8063
        %v8071 = vpack.c.bf16 %v8066, %v8065
        %v8072 = vpack.c.bf16 %v8068, %v8067
        %v8073 = vmul.f32 %v7982, %v8053
        %v8074 = vmul.f32 %v7984, %v8054
        %v8075 = vmul.f32 %v7986, %v8055
        %v8076 = vmul.f32 %v7988, %v8056
        %v8077 = vmul.f32 %v7990, %v8057
        %v8078 = vmul.f32 %v7992, %v8058
        %v8079 = vmul.f32 %v7994, %v8059
        %v8080 = vmul.f32 %v7996, %v8060
        %v8081 = vpack.c.bf16 %v8074, %v8073
        %v8082 = vpack.c.bf16 %v8076, %v8075
        %v8083 = vpack.c.bf16 %v8078, %v8077
        %v8084 = vpack.c.bf16 %v8080, %v8079
        %v8086 = vsel %vm7515, %v8081, 0
        %8088 = vmatprep.subr.bf16.mxu0 0
        %8089 = vmatpush1.bf16.msra.mxu0 %v7485
        %8090 = vmatprep.subr.bf16.mxu0 0
        %8091 = vmatpush1.bf16.msra.mxu0 0
        %8092 = vmatprep.subr.bf16.mxu0 0
        %8093 = vmatpush1.bf16.msra.mxu0 0
        %8094 = vmatprep.subr.bf16.mxu0 0
        %8095 = vmatpush1.bf16.msra.mxu0 0
        %8096 = vmatprep.subr.bf16.mxu0 0
        %8097 = vmatpush1.bf16.msra.mxu0 0
        %8098 = vmatprep.subr.bf16.mxu0 0
        %8099 = vmatpush1.bf16.msra.mxu0 0
        %8100 = vmatprep.subr.bf16.mxu0 0
        %8101 = vmatpush1.bf16.msra.mxu0 0
        %8102 = vmatprep.subr.bf16.mxu0 0
        %8103 = vmatpush1.bf16.msra.mxu0 0
        %8104 = vmatprep.subr.bf16.mxu0 0
        %8105 = vmatpush1.bf16.msra.mxu0 0
        %8106 = vmatprep.subr.bf16.mxu0 0
        %8107 = vmatpush1.bf16.msra.mxu0 0
        %8108 = vmatprep.subr.bf16.mxu0 0
        %8109 = vmatpush1.bf16.msra.mxu0 0
        %8110 = vmatprep.subr.bf16.mxu0 0
        %8111 = vmatpush1.bf16.msra.mxu0 0
        %8112 = vmatprep.subr.bf16.mxu0 0
        %8113 = vmatpush1.bf16.msra.mxu0 0
        %8114 = vmatprep.subr.bf16.mxu0 0
        %8115 = vmatpush1.bf16.msra.mxu0 0
        %8116 = vmatprep.subr.bf16.mxu0 0
        %8117 = vmatpush1.bf16.msra.mxu0 0
        %8118 = vmatprep.subr.bf16.mxu0 0
        %8119 = vmatpush1.bf16.msra.mxu0 0
        %8120 = vmatprep.mubr.bf16.mxu0 0
        %8121 = vmatmul.mubr.bf16.gmra.mrb[0].mxu0 %v8086
        %v8122 = vpop.f32.mrb[0].mxu0
        %v8123 = vadd.f32 0.0, %v8122
        %v8124 = vpop.f32.mrb[0].mxu0
        %v8125 = vpop.f32.mrb[0].mxu0
        %v8126 = vadd.f32 0.0, %v8125
        %v8127 = vpop.f32.mrb[0].mxu0
        %8128 = vdwg.mxu0
        %v8130 = vsel %vm7515, %v8082, 0
        %8132 = vmatprep.subr.bf16.mxu0 0
        %8133 = vmatpush1.bf16.msra.mxu0 %v7489
        %8134 = vmatprep.subr.bf16.mxu0 0
        %8135 = vmatpush1.bf16.msra.mxu0 0
        %8136 = vmatprep.subr.bf16.mxu0 0
        %8137 = vmatpush1.bf16.msra.mxu0 0
        %8138 = vmatprep.subr.bf16.mxu0 0
        %8139 = vmatpush1.bf16.msra.mxu0 0
        %8140 = vmatprep.subr.bf16.mxu0 0
        %8141 = vmatpush1.bf16.msra.mxu0 0
        %8142 = vmatprep.subr.bf16.mxu0 0
        %8143 = vmatpush1.bf16.msra.mxu0 0
        %8144 = vmatprep.subr.bf16.mxu0 0
        %8145 = vmatpush1.bf16.msra.mxu0 0
        %8146 = vmatprep.subr.bf16.mxu0 0
        %8147 = vmatpush1.bf16.msra.mxu0 0
        %8148 = vmatprep.subr.bf16.mxu0 0
        %8149 = vmatpush1.bf16.msra.mxu0 0
        %8150 = vmatprep.subr.bf16.mxu0 0
        %8151 = vmatpush1.bf16.msra.mxu0 0
        %8152 = vmatprep.subr.bf16.mxu0 0
        %8153 = vmatpush1.bf16.msra.mxu0 0
        %8154 = vmatprep.subr.bf16.mxu0 0
        %8155 = vmatpush1.bf16.msra.mxu0 0
        %8156 = vmatprep.subr.bf16.mxu0 0
        %8157 = vmatpush1.bf16.msra.mxu0 0
        %8158 = vmatprep.subr.bf16.mxu0 0
        %8159 = vmatpush1.bf16.msra.mxu0 0
        %8160 = vmatprep.subr.bf16.mxu0 0
        %8161 = vmatpush1.bf16.msra.mxu0 0
        %8162 = vmatprep.subr.bf16.mxu0 0
        %8163 = vmatpush1.bf16.msra.mxu0 0
        %8164 = vmatprep.mubr.bf16.mxu0 0
        %8165 = vmatmul.mubr.bf16.gmra.mrb[0].mxu0 %v8130
        %v8166 = vpop.f32.mrb[0].mxu0
        %v8167 = vadd.f32 0.0, %v8166
        %v8168 = vpop.f32.mrb[0].mxu0
        %v8169 = vpop.f32.mrb[0].mxu0
        %v8170 = vadd.f32 0.0, %v8169
        %v8171 = vpop.f32.mrb[0].mxu0
        %8172 = vdwg.mxu0
        %v8174 = vsel %vm7515, %v8083, 0
        %8176 = vmatprep.subr.bf16.mxu0 0
        %8177 = vmatpush1.bf16.msra.mxu0 %v7493
        %8178 = vmatprep.subr.bf16.mxu0 0
        %8179 = vmatpush1.bf16.msra.mxu0 0
        %8180 = vmatprep.subr.bf16.mxu0 0
        %8181 = vmatpush1.bf16.msra.mxu0 0
        %8182 = vmatprep.subr.bf16.mxu0 0
        %8183 = vmatpush1.bf16.msra.mxu0 0
        %8184 = vmatprep.subr.bf16.mxu0 0
        %8185 = vmatpush1.bf16.msra.mxu0 0
        %8186 = vmatprep.subr.bf16.mxu0 0
        %8187 = vmatpush1.bf16.msra.mxu0 0
        %8188 = vmatprep.subr.bf16.mxu0 0
        %8189 = vmatpush1.bf16.msra.mxu0 0
        %8190 = vmatprep.subr.bf16.mxu0 0
        %8191 = vmatpush1.bf16.msra.mxu0 0
        %8192 = vmatprep.subr.bf16.mxu0 0
        %8193 = vmatpush1.bf16.msra.mxu0 0
        %8194 = vmatprep.subr.bf16.mxu0 0
        %8195 = vmatpush1.bf16.msra.mxu0 0
        %8196 = vmatprep.subr.bf16.mxu0 0
        %8197 = vmatpush1.bf16.msra.mxu0 0
        %8198 = vmatprep.subr.bf16.mxu0 0
        %8199 = vmatpush1.bf16.msra.mxu0 0
        %8200 = vmatprep.subr.bf16.mxu0 0
        %8201 = vmatpush1.bf16.msra.mxu0 0
        %8202 = vmatprep.subr.bf16.mxu0 0
        %8203 = vmatpush1.bf16.msra.mxu0 0
        %8204 = vmatprep.subr.bf16.mxu0 0
        %8205 = vmatpush1.bf16.msra.mxu0 0
        %8206 = vmatprep.subr.bf16.mxu0 0
        %8207 = vmatpush1.bf16.msra.mxu0 0
        %8208 = vmatprep.mubr.bf16.mxu0 0
        %8209 = vmatmul.mubr.bf16.gmra.mrb[0].mxu0 %v8174
        %v8210 = vpop.f32.mrb[0].mxu0
        %v8211 = vadd.f32 0.0, %v8210
        %v8212 = vpop.f32.mrb[0].mxu0
        %v8213 = vpop.f32.mrb[0].mxu0
        %v8214 = vadd.f32 0.0, %v8213
        %v8215 = vpop.f32.mrb[0].mxu0
        %8216 = vdwg.mxu0
        %v8218 = vsel %vm7515, %v8084, 0
        %8220 = vmatprep.subr.bf16.mxu0 0
        %8221 = vmatpush1.bf16.msra.mxu0 %v7497
        %8222 = vmatprep.subr.bf16.mxu0 0
        %8223 = vmatpush1.bf16.msra.mxu0 0
        %8224 = vmatprep.subr.bf16.mxu0 0
        %8225 = vmatpush1.bf16.msra.mxu0 0
        %8226 = vmatprep.subr.bf16.mxu0 0
        %8227 = vmatpush1.bf16.msra.mxu0 0
        %8228 = vmatprep.subr.bf16.mxu0 0
        %8229 = vmatpush1.bf16.msra.mxu0 0
        %8230 = vmatprep.subr.bf16.mxu0 0
        %8231 = vmatpush1.bf16.msra.mxu0 0
        %8232 = vmatprep.subr.bf16.mxu0 0
        %8233 = vmatpush1.bf16.msra.mxu0 0
        %8234 = vmatprep.subr.bf16.mxu0 0
        %8235 = vmatpush1.bf16.msra.mxu0 0
        %8236 = vmatprep.subr.bf16.mxu0 0
        %8237 = vmatpush1.bf16.msra.mxu0 0
        %8238 = vmatprep.subr.bf16.mxu0 0
        %8239 = vmatpush1.bf16.msra.mxu0 0
        %8240 = vmatprep.subr.bf16.mxu0 0
        %8241 = vmatpush1.bf16.msra.mxu0 0
        %8242 = vmatprep.subr.bf16.mxu0 0
        %8243 = vmatpush1.bf16.msra.mxu0 0
        %8244 = vmatprep.subr.bf16.mxu0 0
        %8245 = vmatpush1.bf16.msra.mxu0 0
        %8246 = vmatprep.subr.bf16.mxu0 0
        %8247 = vmatpush1.bf16.msra.mxu0 0
        %8248 = vmatprep.subr.bf16.mxu0 0
        %8249 = vmatpush1.bf16.msra.mxu0 0
        %8250 = vmatprep.subr.bf16.mxu0 0
        %8251 = vmatpush1.bf16.msra.mxu0 0
        %8252 = vmatprep.mubr.bf16.mxu0 0
        %8253 = vmatmul.mubr.bf16.gmra.mrb[0].mxu0 %v8218
        %v8254 = vpop.f32.mrb[0].mxu0
        %v8255 = vadd.f32 0.0, %v8254
        %v8256 = vpop.f32.mrb[0].mxu0
        %v8257 = vpop.f32.mrb[0].mxu0
        %v8258 = vadd.f32 0.0, %v8257
        %v8259 = vpop.f32.mrb[0].mxu0
        %8260 = vdwg.mxu0
        %v8262 = vsel %vm7892, %v8069, 0
        %8264 = vmatprep.subr.bf16.mxu0 0
        %8265 = vmatpush1.bf16.msra.mxu0 %v6877
        %8266 = vmatprep.subr.bf16.mxu0 0
        %8267 = vmatpush1.bf16.msra.mxu0 %v6893
        %8268 = vmatprep.subr.bf16.mxu0 0
        %8269 = vmatpush1.bf16.msra.mxu0 0
        %8270 = vmatprep.subr.bf16.mxu0 0
        %8271 = vmatpush1.bf16.msra.mxu0 0
        %8272 = vmatprep.subr.bf16.mxu0 0
        %8273 = vmatpush1.bf16.msra.mxu0 0
        %8274 = vmatprep.subr.bf16.mxu0 0
        %8275 = vmatpush1.bf16.msra.mxu0 0
        %8276 = vmatprep.subr.bf16.mxu0 0
        %8277 = vmatpush1.bf16.msra.mxu0 0
        %8278 = vmatprep.subr.bf16.mxu0 0
        %8279 = vmatpush1.bf16.msra.mxu0 0
        %8280 = vmatprep.subr.bf16.mxu0 0
        %8281 = vmatpush1.bf16.msra.mxu0 0
        %8282 = vmatprep.subr.bf16.mxu0 0
        %8283 = vmatpush1.bf16.msra.mxu0 0
        %8284 = vmatprep.subr.bf16.mxu0 0
        %8285 = vmatpush1.bf16.msra.mxu0 0
        %8286 = vmatprep.subr.bf16.mxu0 0
        %8287 = vmatpush1.bf16.msra.mxu0 0
        %8288 = vmatprep.subr.bf16.mxu0 0
        %8289 = vmatpush1.bf16.msra.mxu0 0
        %8290 = vmatprep.subr.bf16.mxu0 0
        %8291 = vmatpush1.bf16.msra.mxu0 0
        %8292 = vmatprep.subr.bf16.mxu0 0
        %8293 = vmatpush1.bf16.msra.mxu0 0
        %8294 = vmatprep.subr.bf16.mxu0 0
        %8295 = vmatpush1.bf16.msra.mxu0 0
        %8296 = vmatprep.mubr.bf16.mxu0 0
        %8297 = vmatmul.mubr.bf16.gmra.mrb[0].mxu0 %v8262
        %v8298 = vpop.f32.mrb[0].mxu0
        %v8299 = vadd.f32 %v8123, %v8298
        %v8300 = vpop.f32.mrb[0].mxu0
        %v8301 = vpop.f32.mrb[0].mxu0
        %v8302 = vadd.f32 %v8126, %v8301
        %v8303 = vpop.f32.mrb[0].mxu0
        %8304 = vdwg.mxu0
        %v8306 = vsel %vm7892, %v8070, 0
        %8308 = vmatprep.subr.bf16.mxu0 0
        %8309 = vmatpush1.bf16.msra.mxu0 %v6881
        %8310 = vmatprep.subr.bf16.mxu0 0
        %8311 = vmatpush1.bf16.msra.mxu0 %v6897
        %8312 = vmatprep.subr.bf16.mxu0 0
        %8313 = vmatpush1.bf16.msra.mxu0 0
        %8314 = vmatprep.subr.bf16.mxu0 0
        %8315 = vmatpush1.bf16.msra.mxu0 0
        %8316 = vmatprep.subr.bf16.mxu0 0
        %8317 = vmatpush1.bf16.msra.mxu0 0
        %8318 = vmatprep.subr.bf16.mxu0 0
        %8319 = vmatpush1.bf16.msra.mxu0 0
        %8320 = vmatprep.subr.bf16.mxu0 0
        %8321 = vmatpush1.bf16.msra.mxu0 0
        %8322 = vmatprep.subr.bf16.mxu0 0
        %8323 = vmatpush1.bf16.msra.mxu0 0
        %8324 = vmatprep.subr.bf16.mxu0 0
        %8325 = vmatpush1.bf16.msra.mxu0 0
        %8326 = vmatprep.subr.bf16.mxu0 0
        %8327 = vmatpush1.bf16.msra.mxu0 0
        %8328 = vmatprep.subr.bf16.mxu0 0
        %8329 = vmatpush1.bf16.msra.mxu0 0
        %8330 = vmatprep.subr.bf16.mxu0 0
        %8331 = vmatpush1.bf16.msra.mxu0 0
        %8332 = vmatprep.subr.bf16.mxu0 0
        %8333 = vmatpush1.bf16.msra.mxu0 0
        %8334 = vmatprep.subr.bf16.mxu0 0
        %8335 = vmatpush1.bf16.msra.mxu0 0
        %8336 = vmatprep.subr.bf16.mxu0 0
        %8337 = vmatpush1.bf16.msra.mxu0 0
        %8338 = vmatprep.subr.bf16.mxu0 0
        %8339 = vmatpush1.bf16.msra.mxu0 0
        %8340 = vmatprep.mubr.bf16.mxu0 0
        %8341 = vmatmul.mubr.bf16.gmra.mrb[0].mxu0 %v8306
        %v8342 = vpop.f32.mrb[0].mxu0
        %v8343 = vadd.f32 %v8167, %v8342
        %v8344 = vpop.f32.mrb[0].mxu0
        %v8345 = vpop.f32.mrb[0].mxu0
        %v8346 = vadd.f32 %v8170, %v8345
        %v8347 = vpop.f32.mrb[0].mxu0
        %8348 = vdwg.mxu0
        %v8350 = vsel %vm7892, %v8071, 0
        %8352 = vmatprep.subr.bf16.mxu0 0
        %8353 = vmatpush1.bf16.msra.mxu0 %v6885
        %8354 = vmatprep.subr.bf16.mxu0 0
        %8355 = vmatpush1.bf16.msra.mxu0 %v6901
        %8356 = vmatprep.subr.bf16.mxu0 0
        %8357 = vmatpush1.bf16.msra.mxu0 0
        %8358 = vmatprep.subr.bf16.mxu0 0
        %8359 = vmatpush1.bf16.msra.mxu0 0
        %8360 = vmatprep.subr.bf16.mxu0 0
        %8361 = vmatpush1.bf16.msra.mxu0 0
        %8362 = vmatprep.subr.bf16.mxu0 0
        %8363 = vmatpush1.bf16.msra.mxu0 0
        %8364 = vmatprep.subr.bf16.mxu0 0
        %8365 = vmatpush1.bf16.msra.mxu0 0
        %8366 = vmatprep.subr.bf16.mxu0 0
        %8367 = vmatpush1.bf16.msra.mxu0 0
        %8368 = vmatprep.subr.bf16.mxu0 0
        %8369 = vmatpush1.bf16.msra.mxu0 0
        %8370 = vmatprep.subr.bf16.mxu0 0
        %8371 = vmatpush1.bf16.msra.mxu0 0
        %8372 = vmatprep.subr.bf16.mxu0 0
        %8373 = vmatpush1.bf16.msra.mxu0 0
        %8374 = vmatprep.subr.bf16.mxu0 0
        %8375 = vmatpush1.bf16.msra.mxu0 0
        %8376 = vmatprep.subr.bf16.mxu0 0
        %8377 = vmatpush1.bf16.msra.mxu0 0
        %8378 = vmatprep.subr.bf16.mxu0 0
        %8379 = vmatpush1.bf16.msra.mxu0 0
        %8380 = vmatprep.subr.bf16.mxu0 0
        %8381 = vmatpush1.bf16.msra.mxu0 0
        %8382 = vmatprep.subr.bf16.mxu0 0
        %8383 = vmatpush1.bf16.msra.mxu0 0
        %8384 = vmatprep.mubr.bf16.mxu0 0
        %8385 = vmatmul.mubr.bf16.gmra.mrb[0].mxu0 %v8350
        %v8386 = vpop.f32.mrb[0].mxu0
        %v8387 = vadd.f32 %v8211, %v8386
        %v8388 = vpop.f32.mrb[0].mxu0
        %v8389 = vpop.f32.mrb[0].mxu0
        %v8390 = vadd.f32 %v8214, %v8389
        %v8391 = vpop.f32.mrb[0].mxu0
        %8392 = vdwg.mxu0
        %v8394 = vsel %vm7892, %v8072, 0
        %8396 = vmatprep.subr.bf16.mxu0 0
        %8397 = vmatpush1.bf16.msra.mxu0 %v6889
        %8398 = vmatprep.subr.bf16.mxu0 0
        %8399 = vmatpush1.bf16.msra.mxu0 %v6905
        %8400 = vmatprep.subr.bf16.mxu0 0
        %8401 = vmatpush1.bf16.msra.mxu0 0
        %8402 = vmatprep.subr.bf16.mxu0 0
        %8403 = vmatpush1.bf16.msra.mxu0 0
        %8404 = vmatprep.subr.bf16.mxu0 0
        %8405 = vmatpush1.bf16.msra.mxu0 0
        %8406 = vmatprep.subr.bf16.mxu0 0
        %8407 = vmatpush1.bf16.msra.mxu0 0
        %8408 = vmatprep.subr.bf16.mxu0 0
        %8409 = vmatpush1.bf16.msra.mxu0 0
        %8410 = vmatprep.subr.bf16.mxu0 0
        %8411 = vmatpush1.bf16.msra.mxu0 0
        %8412 = vmatprep.subr.bf16.mxu0 0
        %8413 = vmatpush1.bf16.msra.mxu0 0
        %8414 = vmatprep.subr.bf16.mxu0 0
        %8415 = vmatpush1.bf16.msra.mxu0 0
        %8416 = vmatprep.subr.bf16.mxu0 0
        %8417 = vmatpush1.bf16.msra.mxu0 0
        %8418 = vmatprep.subr.bf16.mxu0 0
        %8419 = vmatpush1.bf16.msra.mxu0 0
        %8420 = vmatprep.subr.bf16.mxu0 0
        %8421 = vmatpush1.bf16.msra.mxu0 0
        %8422 = vmatprep.subr.bf16.mxu0 0
        %8423 = vmatpush1.bf16.msra.mxu0 0
        %8424 = vmatprep.subr.bf16.mxu0 0
        %8425 = vmatpush1.bf16.msra.mxu0 0
        %8426 = vmatprep.subr.bf16.mxu0 0
        %8427 = vmatpush1.bf16.msra.mxu0 0
        %8428 = vmatprep.mubr.bf16.mxu0 0
        %8429 = vmatmul.mubr.bf16.gmra.mrb[0].mxu0 %v8394
        %v8430 = vpop.f32.mrb[0].mxu0
        %v8431 = vadd.f32 %v8255, %v8430
        %v8432 = vpop.f32.mrb[0].mxu0
        %v8433 = vpop.f32.mrb[0].mxu0
        %v8434 = vadd.f32 %v8258, %v8433
        %v8435 = vpop.f32.mrb[0].mxu0
        %8436 = vdwg.mxu0
        %v8438 = vsel %vm7515, %v5009, 0
        %v8441 = vsel %vm7515, %v5509, 0
        %v8444 = vsel %vm7515, %v5521, 0
        %8446 = vmatprep.subr.bf16.mxu0 0
        %8447 = vmatpush1.bf16.xpose.msra.mxu0 %v8441
        %8448 = vmatprep.subr.bf16.mxu0 0
        %8449 = vmatpush1.bf16.xpose.msra.mxu0 %v8444
        %8450 = vmatprep.subr.bf16.mxu0 0
        %8451 = vmatpush1.bf16.xpose.msra.mxu0 0
        %8452 = vmatprep.subr.bf16.mxu0 0
        %8453 = vmatpush1.bf16.xpose.msra.mxu0 0
        %8454 = vmatprep.subr.bf16.mxu0 0
        %8455 = vmatpush1.bf16.xpose.msra.mxu0 0
        %8456 = vmatprep.subr.bf16.mxu0 0
        %8457 = vmatpush1.bf16.xpose.msra.mxu0 0
        %8458 = vmatprep.subr.bf16.mxu0 0
        %8459 = vmatpush1.bf16.xpose.msra.mxu0 0
        %8460 = vmatprep.subr.bf16.mxu0 0
        %8461 = vmatpush1.bf16.xpose.msra.mxu0 0
        %8462 = vmatprep.subr.bf16.mxu0 0
        %8463 = vmatpush1.bf16.xpose.msra.mxu0 0
        %8464 = vmatprep.subr.bf16.mxu0 0
        %8465 = vmatpush1.bf16.xpose.msra.mxu0 0
        %8466 = vmatprep.subr.bf16.mxu0 0
        %8467 = vmatpush1.bf16.xpose.msra.mxu0 0
        %8468 = vmatprep.subr.bf16.mxu0 0
        %8469 = vmatpush1.bf16.xpose.msra.mxu0 0
        %8470 = vmatprep.subr.bf16.mxu0 0
        %8471 = vmatpush1.bf16.xpose.msra.mxu0 0
        %8472 = vmatprep.subr.bf16.mxu0 0
        %8473 = vmatpush1.bf16.xpose.msra.mxu0 0
        %8474 = vmatprep.subr.bf16.mxu0 0
        %8475 = vmatpush1.bf16.xpose.msra.mxu0 0
        %8476 = vmatprep.subr.bf16.mxu0 0
        %8477 = vmatpush1.bf16.xpose.msra.mxu0 0
        %8478 = vmatprep.mubr.bf16.mxu0 0
        %8479 = vmatmul.mubr.bf16.gmra.mrb[0].mxu0 %v8438
        %v8480 = vpop.f32.mrb[0].mxu0
        %v8481 = vadd.f32 0.0, %v8480
        %v8482 = vpop.f32.mrb[0].mxu0
        %v8483 = vpop.f32.mrb[0].mxu0
        %v8484 = vadd.f32 0.0, %v8483
        %v8485 = vpop.f32.mrb[0].mxu0
        %8486 = vdwg.mxu0
        %v8488 = vsel %vm7515, %v5012, 0
        %v8491 = vsel %vm7515, %v5512, 0
        %v8494 = vsel %vm7515, %v5524, 0
        %8496 = vmatprep.subr.bf16.mxu0 0
        %8497 = vmatpush1.bf16.xpose.msra.mxu0 %v8491
        %8498 = vmatprep.subr.bf16.mxu0 0
        %8499 = vmatpush1.bf16.xpose.msra.mxu0 %v8494
        %8500 = vmatprep.subr.bf16.mxu0 0
        %8501 = vmatpush1.bf16.xpose.msra.mxu0 0
        %8502 = vmatprep.subr.bf16.mxu0 0
        %8503 = vmatpush1.bf16.xpose.msra.mxu0 0
        %8504 = vmatprep.subr.bf16.mxu0 0
        %8505 = vmatpush1.bf16.xpose.msra.mxu0 0
        %8506 = vmatprep.subr.bf16.mxu0 0
        %8507 = vmatpush1.bf16.xpose.msra.mxu0 0
        %8508 = vmatprep.subr.bf16.mxu0 0
        %8509 = vmatpush1.bf16.xpose.msra.mxu0 0
        %8510 = vmatprep.subr.bf16.mxu0 0
        %8511 = vmatpush1.bf16.xpose.msra.mxu0 0
        %8512 = vmatprep.subr.bf16.mxu0 0
        %8513 = vmatpush1.bf16.xpose.msra.mxu0 0
        %8514 = vmatprep.subr.bf16.mxu0 0
        %8515 = vmatpush1.bf16.xpose.msra.mxu0 0
        %8516 = vmatprep.subr.bf16.mxu0 0
        %8517 = vmatpush1.bf16.xpose.msra.mxu0 0
        %8518 = vmatprep.subr.bf16.mxu0 0
        %8519 = vmatpush1.bf16.xpose.msra.mxu0 0
        %8520 = vmatprep.subr.bf16.mxu0 0
        %8521 = vmatpush1.bf16.xpose.msra.mxu0 0
        %8522 = vmatprep.subr.bf16.mxu0 0
        %8523 = vmatpush1.bf16.xpose.msra.mxu0 0
        %8524 = vmatprep.subr.bf16.mxu0 0
        %8525 = vmatpush1.bf16.xpose.msra.mxu0 0
        %8526 = vmatprep.subr.bf16.mxu0 0
        %8527 = vmatpush1.bf16.xpose.msra.mxu0 0
        %8528 = vmatprep.mubr.bf16.mxu0 0
        %8529 = vmatmul.mubr.bf16.gmra.mrb[0].mxu0 %v8488
        %v8530 = vpop.f32.mrb[0].mxu0
        %v8531 = vadd.f32 0.0, %v8530
        %v8532 = vpop.f32.mrb[0].mxu0
        %v8533 = vpop.f32.mrb[0].mxu0
        %v8534 = vadd.f32 0.0, %v8533
        %v8535 = vpop.f32.mrb[0].mxu0
        %8536 = vdwg.mxu0
        %v8538 = vsel %vm7515, %v5015, 0
        %v8541 = vsel %vm7515, %v5515, 0
        %v8544 = vsel %vm7515, %v5527, 0
        %8546 = vmatprep.subr.bf16.mxu0 0
        %8547 = vmatpush1.bf16.xpose.msra.mxu0 %v8541
        %8548 = vmatprep.subr.bf16.mxu0 0
        %8549 = vmatpush1.bf16.xpose.msra.mxu0 %v8544
        %8550 = vmatprep.subr.bf16.mxu0 0
        %8551 = vmatpush1.bf16.xpose.msra.mxu0 0
        %8552 = vmatprep.subr.bf16.mxu0 0
        %8553 = vmatpush1.bf16.xpose.msra.mxu0 0
        %8554 = vmatprep.subr.bf16.mxu0 0
        %8555 = vmatpush1.bf16.xpose.msra.mxu0 0
        %8556 = vmatprep.subr.bf16.mxu0 0
        %8557 = vmatpush1.bf16.xpose.msra.mxu0 0
        %8558 = vmatprep.subr.bf16.mxu0 0
        %8559 = vmatpush1.bf16.xpose.msra.mxu0 0
        %8560 = vmatprep.subr.bf16.mxu0 0
        %8561 = vmatpush1.bf16.xpose.msra.mxu0 0
        %8562 = vmatprep.subr.bf16.mxu0 0
        %8563 = vmatpush1.bf16.xpose.msra.mxu0 0
        %8564 = vmatprep.subr.bf16.mxu0 0
        %8565 = vmatpush1.bf16.xpose.msra.mxu0 0
        %8566 = vmatprep.subr.bf16.mxu0 0
        %8567 = vmatpush1.bf16.xpose.msra.mxu0 0
        %8568 = vmatprep.subr.bf16.mxu0 0
        %8569 = vmatpush1.bf16.xpose.msra.mxu0 0
        %8570 = vmatprep.subr.bf16.mxu0 0
        %8571 = vmatpush1.bf16.xpose.msra.mxu0 0
        %8572 = vmatprep.subr.bf16.mxu0 0
        %8573 = vmatpush1.bf16.xpose.msra.mxu0 0
        %8574 = vmatprep.subr.bf16.mxu0 0
        %8575 = vmatpush1.bf16.xpose.msra.mxu0 0
        %8576 = vmatprep.subr.bf16.mxu0 0
        %8577 = vmatpush1.bf16.xpose.msra.mxu0 0
        %8578 = vmatprep.mubr.bf16.mxu0 0
        %8579 = vmatmul.mubr.bf16.gmra.mrb[0].mxu0 %v8538
        %v8580 = vpop.f32.mrb[0].mxu0
        %v8581 = vadd.f32 0.0, %v8580
        %v8582 = vpop.f32.mrb[0].mxu0
        %v8583 = vpop.f32.mrb[0].mxu0
        %v8584 = vadd.f32 0.0, %v8583
        %v8585 = vpop.f32.mrb[0].mxu0
        %8586 = vdwg.mxu0
        %v8588 = vsel %vm7515, %v5018, 0
        %v8591 = vsel %vm7515, %v5518, 0
        %v8594 = vsel %vm7515, %v5530, 0
        %8596 = vmatprep.subr.bf16.mxu0 0
        %8597 = vmatpush1.bf16.xpose.msra.mxu0 %v8591
        %8598 = vmatprep.subr.bf16.mxu0 0
        %8599 = vmatpush1.bf16.xpose.msra.mxu0 %v8594
        %8600 = vmatprep.subr.bf16.mxu0 0
        %8601 = vmatpush1.bf16.xpose.msra.mxu0 0
        %8602 = vmatprep.subr.bf16.mxu0 0
        %8603 = vmatpush1.bf16.xpose.msra.mxu0 0
        %8604 = vmatprep.subr.bf16.mxu0 0
        %8605 = vmatpush1.bf16.xpose.msra.mxu0 0
        %8606 = vmatprep.subr.bf16.mxu0 0
        %8607 = vmatpush1.bf16.xpose.msra.mxu0 0
        %8608 = vmatprep.subr.bf16.mxu0 0
        %8609 = vmatpush1.bf16.xpose.msra.mxu0 0
        %8610 = vmatprep.subr.bf16.mxu0 0
        %8611 = vmatpush1.bf16.xpose.msra.mxu0 0
        %8612 = vmatprep.subr.bf16.mxu0 0
        %8613 = vmatpush1.bf16.xpose.msra.mxu0 0
        %8614 = vmatprep.subr.bf16.mxu0 0
        %8615 = vmatpush1.bf16.xpose.msra.mxu0 0
        %8616 = vmatprep.subr.bf16.mxu0 0
        %8617 = vmatpush1.bf16.xpose.msra.mxu0 0
        %8618 = vmatprep.subr.bf16.mxu0 0
        %8619 = vmatpush1.bf16.xpose.msra.mxu0 0
        %8620 = vmatprep.subr.bf16.mxu0 0
        %8621 = vmatpush1.bf16.xpose.msra.mxu0 0
        %8622 = vmatprep.subr.bf16.mxu0 0
        %8623 = vmatpush1.bf16.xpose.msra.mxu0 0
        %8624 = vmatprep.subr.bf16.mxu0 0
        %8625 = vmatpush1.bf16.xpose.msra.mxu0 0
        %8626 = vmatprep.subr.bf16.mxu0 0
        %8627 = vmatpush1.bf16.xpose.msra.mxu0 0
        %8628 = vmatprep.mubr.bf16.mxu0 0
        %8629 = vmatmul.mubr.bf16.gmra.mrb[0].mxu0 %v8588
        %v8630 = vpop.f32.mrb[0].mxu0
        %v8631 = vadd.f32 0.0, %v8630
        %v8632 = vpop.f32.mrb[0].mxu0
        %v8633 = vpop.f32.mrb[0].mxu0
        %v8634 = vadd.f32 0.0, %v8633
        %v8635 = vpop.f32.mrb[0].mxu0
        %8636 = vdwg.mxu0
        %v8638 = vsel %vm7515, %v5777, 0
        %8640 = vmatprep.subr.bf16.mxu0 0
        %8641 = vmatpush1.bf16.xpose.msra.mxu0 %v8638
        %8642 = vmatprep.subr.bf16.mxu0 0
        %8643 = vmatpush1.bf16.xpose.msra.mxu0 0
        %8644 = vmatprep.subr.bf16.mxu0 0
        %8645 = vmatpush1.bf16.xpose.msra.mxu0 0
        %8646 = vmatprep.subr.bf16.mxu0 0
        %8647 = vmatpush1.bf16.xpose.msra.mxu0 0
        %8648 = vmatprep.subr.bf16.mxu0 0
        %8649 = vmatpush1.bf16.xpose.msra.mxu0 0
        %8650 = vmatprep.subr.bf16.mxu0 0
        %8651 = vmatpush1.bf16.xpose.msra.mxu0 0
        %8652 = vmatprep.subr.bf16.mxu0 0
        %8653 = vmatpush1.bf16.xpose.msra.mxu0 0
        %8654 = vmatprep.subr.bf16.mxu0 0
        %8655 = vmatpush1.bf16.xpose.msra.mxu0 0
        %8656 = vmatprep.subr.bf16.mxu0 0
        %8657 = vmatpush1.bf16.xpose.msra.mxu0 0
        %8658 = vmatprep.subr.bf16.mxu0 0
        %8659 = vmatpush1.bf16.xpose.msra.mxu0 0
        %8660 = vmatprep.subr.bf16.mxu0 0
        %8661 = vmatpush1.bf16.xpose.msra.mxu0 0
        %8662 = vmatprep.subr.bf16.mxu0 0
        %8663 = vmatpush1.bf16.xpose.msra.mxu0 0
        %8664 = vmatprep.subr.bf16.mxu0 0
        %8665 = vmatpush1.bf16.xpose.msra.mxu0 0
        %8666 = vmatprep.subr.bf16.mxu0 0
        %8667 = vmatpush1.bf16.xpose.msra.mxu0 0
        %8668 = vmatprep.subr.bf16.mxu0 0
        %8669 = vmatpush1.bf16.xpose.msra.mxu0 0
        %8670 = vmatprep.subr.bf16.mxu0 0
        %8671 = vmatpush1.bf16.xpose.msra.mxu0 0
        %8672 = vmatprep.mubr.bf16.mxu0 0
        %8673 = vmatmul.mubr.bf16.gmra.mrb[0].mxu0 %v8438
        %v8674 = vpop.f32.mrb[0].mxu0
        %v8675 = vadd.f32 0.0, %v8674
        %v8676 = vpop.f32.mrb[0].mxu0
        %v8677 = vpop.f32.mrb[0].mxu0
        %v8678 = vadd.f32 0.0, %v8677
        %v8679 = vpop.f32.mrb[0].mxu0
        %8680 = vdwg.mxu0
        %v8682 = vsel %vm7515, %v5780, 0
        %8684 = vmatprep.subr.bf16.mxu0 0
        %8685 = vmatpush1.bf16.xpose.msra.mxu0 %v8682
        %8686 = vmatprep.subr.bf16.mxu0 0
        %8687 = vmatpush1.bf16.xpose.msra.mxu0 0
        %8688 = vmatprep.subr.bf16.mxu0 0
        %8689 = vmatpush1.bf16.xpose.msra.mxu0 0
        %8690 = vmatprep.subr.bf16.mxu0 0
        %8691 = vmatpush1.bf16.xpose.msra.mxu0 0
        %8692 = vmatprep.subr.bf16.mxu0 0
        %8693 = vmatpush1.bf16.xpose.msra.mxu0 0
        %8694 = vmatprep.subr.bf16.mxu0 0
        %8695 = vmatpush1.bf16.xpose.msra.mxu0 0
        %8696 = vmatprep.subr.bf16.mxu0 0
        %8697 = vmatpush1.bf16.xpose.msra.mxu0 0
        %8698 = vmatprep.subr.bf16.mxu0 0
        %8699 = vmatpush1.bf16.xpose.msra.mxu0 0
        %8700 = vmatprep.subr.bf16.mxu0 0
        %8701 = vmatpush1.bf16.xpose.msra.mxu0 0
        %8702 = vmatprep.subr.bf16.mxu0 0
        %8703 = vmatpush1.bf16.xpose.msra.mxu0 0
        %8704 = vmatprep.subr.bf16.mxu0 0
        %8705 = vmatpush1.bf16.xpose.msra.mxu0 0
        %8706 = vmatprep.subr.bf16.mxu0 0
        %8707 = vmatpush1.bf16.xpose.msra.mxu0 0
        %8708 = vmatprep.subr.bf16.mxu0 0
        %8709 = vmatpush1.bf16.xpose.msra.mxu0 0
        %8710 = vmatprep.subr.bf16.mxu0 0
        %8711 = vmatpush1.bf16.xpose.msra.mxu0 0
        %8712 = vmatprep.subr.bf16.mxu0 0
        %8713 = vmatpush1.bf16.xpose.msra.mxu0 0
        %8714 = vmatprep.subr.bf16.mxu0 0
        %8715 = vmatpush1.bf16.xpose.msra.mxu0 0
        %8716 = vmatprep.mubr.bf16.mxu0 0
        %8717 = vmatmul.mubr.bf16.gmra.mrb[0].mxu0 %v8488
        %v8718 = vpop.f32.mrb[0].mxu0
        %v8719 = vadd.f32 0.0, %v8718
        %v8720 = vpop.f32.mrb[0].mxu0
        %v8721 = vpop.f32.mrb[0].mxu0
        %v8722 = vadd.f32 0.0, %v8721
        %v8723 = vpop.f32.mrb[0].mxu0
        %8724 = vdwg.mxu0
        %v8726 = vsel %vm7515, %v5783, 0
        %8728 = vmatprep.subr.bf16.mxu0 0
        %8729 = vmatpush1.bf16.xpose.msra.mxu0 %v8726
        %8730 = vmatprep.subr.bf16.mxu0 0
        %8731 = vmatpush1.bf16.xpose.msra.mxu0 0
        %8732 = vmatprep.subr.bf16.mxu0 0
        %8733 = vmatpush1.bf16.xpose.msra.mxu0 0
        %8734 = vmatprep.subr.bf16.mxu0 0
        %8735 = vmatpush1.bf16.xpose.msra.mxu0 0
        %8736 = vmatprep.subr.bf16.mxu0 0
        %8737 = vmatpush1.bf16.xpose.msra.mxu0 0
        %8738 = vmatprep.subr.bf16.mxu0 0
        %8739 = vmatpush1.bf16.xpose.msra.mxu0 0
        %8740 = vmatprep.subr.bf16.mxu0 0
        %8741 = vmatpush1.bf16.xpose.msra.mxu0 0
        %8742 = vmatprep.subr.bf16.mxu0 0
        %8743 = vmatpush1.bf16.xpose.msra.mxu0 0
        %8744 = vmatprep.subr.bf16.mxu0 0
        %8745 = vmatpush1.bf16.xpose.msra.mxu0 0
        %8746 = vmatprep.subr.bf16.mxu0 0
        %8747 = vmatpush1.bf16.xpose.msra.mxu0 0
        %8748 = vmatprep.subr.bf16.mxu0 0
        %8749 = vmatpush1.bf16.xpose.msra.mxu0 0
        %8750 = vmatprep.subr.bf16.mxu0 0
        %8751 = vmatpush1.bf16.xpose.msra.mxu0 0
        %8752 = vmatprep.subr.bf16.mxu0 0
        %8753 = vmatpush1.bf16.xpose.msra.mxu0 0
        %8754 = vmatprep.subr.bf16.mxu0 0
        %8755 = vmatpush1.bf16.xpose.msra.mxu0 0
        %8756 = vmatprep.subr.bf16.mxu0 0
        %8757 = vmatpush1.bf16.xpose.msra.mxu0 0
        %8758 = vmatprep.subr.bf16.mxu0 0
        %8759 = vmatpush1.bf16.xpose.msra.mxu0 0
        %8760 = vmatprep.mubr.bf16.mxu0 0
        %8761 = vmatmul.mubr.bf16.gmra.mrb[0].mxu0 %v8538
        %v8762 = vpop.f32.mrb[0].mxu0
        %v8763 = vadd.f32 0.0, %v8762
        %v8764 = vpop.f32.mrb[0].mxu0
        %v8765 = vpop.f32.mrb[0].mxu0
        %v8766 = vadd.f32 0.0, %v8765
        %v8767 = vpop.f32.mrb[0].mxu0
        %8768 = vdwg.mxu0
        %v8770 = vsel %vm7515, %v5786, 0
        %8772 = vmatprep.subr.bf16.mxu0 0
        %8773 = vmatpush1.bf16.xpose.msra.mxu0 %v8770
        %8774 = vmatprep.subr.bf16.mxu0 0
        %8775 = vmatpush1.bf16.xpose.msra.mxu0 0
        %8776 = vmatprep.subr.bf16.mxu0 0
        %8777 = vmatpush1.bf16.xpose.msra.mxu0 0
        %8778 = vmatprep.subr.bf16.mxu0 0
        %8779 = vmatpush1.bf16.xpose.msra.mxu0 0
        %8780 = vmatprep.subr.bf16.mxu0 0
        %8781 = vmatpush1.bf16.xpose.msra.mxu0 0
        %8782 = vmatprep.subr.bf16.mxu0 0
        %8783 = vmatpush1.bf16.xpose.msra.mxu0 0
        %8784 = vmatprep.subr.bf16.mxu0 0
        %8785 = vmatpush1.bf16.xpose.msra.mxu0 0
        %8786 = vmatprep.subr.bf16.mxu0 0
        %8787 = vmatpush1.bf16.xpose.msra.mxu0 0
        %8788 = vmatprep.subr.bf16.mxu0 0
        %8789 = vmatpush1.bf16.xpose.msra.mxu0 0
        %8790 = vmatprep.subr.bf16.mxu0 0
        %8791 = vmatpush1.bf16.xpose.msra.mxu0 0
        %8792 = vmatprep.subr.bf16.mxu0 0
        %8793 = vmatpush1.bf16.xpose.msra.mxu0 0
        %8794 = vmatprep.subr.bf16.mxu0 0
        %8795 = vmatpush1.bf16.xpose.msra.mxu0 0
        %8796 = vmatprep.subr.bf16.mxu0 0
        %8797 = vmatpush1.bf16.xpose.msra.mxu0 0
        %8798 = vmatprep.subr.bf16.mxu0 0
        %8799 = vmatpush1.bf16.xpose.msra.mxu0 0
        %8800 = vmatprep.subr.bf16.mxu0 0
        %8801 = vmatpush1.bf16.xpose.msra.mxu0 0
        %8802 = vmatprep.subr.bf16.mxu0 0
        %8803 = vmatpush1.bf16.xpose.msra.mxu0 0
        %8804 = vmatprep.mubr.bf16.mxu0 0
        %8805 = vmatmul.mubr.bf16.gmra.mrb[0].mxu0 %v8588
        %v8806 = vpop.f32.mrb[0].mxu0
        %v8807 = vadd.f32 0.0, %v8806
        %v8808 = vpop.f32.mrb[0].mxu0
        %v8809 = vpop.f32.mrb[0].mxu0
        %v8810 = vadd.f32 0.0, %v8809
        %v8811 = vpop.f32.mrb[0].mxu0
        %8812 = vdwg.mxu0
        %v8813 = vsel %vm7892, %v8481, -inf
        %8814 = vmax.xlane.f32.xlu0 %v8813
        %v8815 = vpop.xlane.xlu0 %8814
        %v8816 = vsel %vm7892, %v8484, -inf
        %8817 = vmax.xlane.f32.xlu0 %v8816
        %v8818 = vpop.xlane.xlu0 %8817
        %v8819 = vsel %vm7892, %v8531, -inf
        %8820 = vmax.xlane.f32.xlu0 %v8819
        %v8821 = vpop.xlane.xlu0 %8820
        %v8822 = vsel %vm7892, %v8534, -inf
        %8823 = vmax.xlane.f32.xlu0 %v8822
        %v8824 = vpop.xlane.xlu0 %8823
        %v8825 = vsel %vm7892, %v8581, -inf
        %8826 = vmax.xlane.f32.xlu0 %v8825
        %v8827 = vpop.xlane.xlu0 %8826
        %v8828 = vsel %vm7892, %v8584, -inf
        %8829 = vmax.xlane.f32.xlu0 %v8828
        %v8830 = vpop.xlane.xlu0 %8829
        %v8831 = vsel %vm7892, %v8631, -inf
        %8832 = vmax.xlane.f32.xlu0 %v8831
        %v8833 = vpop.xlane.xlu0 %8832
        %v8834 = vsel %vm7892, %v8634, -inf
        %8835 = vmax.xlane.f32.xlu0 %v8834
        %v8836 = vpop.xlane.xlu0 %8835
        %v8837 = vsel %vm7515, %v8675, -inf
        %8838 = vmax.xlane.f32.xlu0 %v8837
        %v8839 = vpop.xlane.xlu0 %8838
        %v8840 = vsel %vm7515, %v8678, -inf
        %8841 = vmax.xlane.f32.xlu0 %v8840
        %v8842 = vpop.xlane.xlu0 %8841
        %v8843 = vsel %vm7515, %v8719, -inf
        %8844 = vmax.xlane.f32.xlu0 %v8843
        %v8845 = vpop.xlane.xlu0 %8844
        %v8846 = vsel %vm7515, %v8722, -inf
        %8847 = vmax.xlane.f32.xlu0 %v8846
        %v8848 = vpop.xlane.xlu0 %8847
        %v8849 = vsel %vm7515, %v8763, -inf
        %8850 = vmax.xlane.f32.xlu0 %v8849
        %v8851 = vpop.xlane.xlu0 %8850
        %v8852 = vsel %vm7515, %v8766, -inf
        %8853 = vmax.xlane.f32.xlu0 %v8852
        %v8854 = vpop.xlane.xlu0 %8853
        %v8855 = vsel %vm7515, %v8807, -inf
        %8856 = vmax.xlane.f32.xlu0 %v8855
        %v8857 = vpop.xlane.xlu0 %8856
        %v8858 = vsel %vm7515, %v8810, -inf
        %8859 = vmax.xlane.f32.xlu0 %v8858
        %v8860 = vpop.xlane.xlu0 %8859
        %v8861 = vmax.f32 %v8815, %v8839
        %v8862 = vmax.f32 %v8818, %v8842
        %v8863 = vmax.f32 %v8821, %v8845
        %v8864 = vmax.f32 %v8824, %v8848
        %v8865 = vmax.f32 %v8827, %v8851
        %v8866 = vmax.f32 %v8830, %v8854
        %v8867 = vmax.f32 %v8833, %v8857
        %v8868 = vmax.f32 %v8836, %v8860
        %v8869 = vsub.f32 %v8481, %v8861
        %v8870 = vsub.f32 %v8484, %v8862
        %v8871 = vsub.f32 %v8531, %v8863
        %v8872 = vsub.f32 %v8534, %v8864
        %v8873 = vsub.f32 %v8581, %v8865
        %v8874 = vsub.f32 %v8584, %v8866
        %v8875 = vsub.f32 %v8631, %v8867
        %v8876 = vsub.f32 %v8634, %v8868
        %v8877 = vmul.f32 %v8869, 1.442695
        %v8878 = vpow.pop %v8877
        %v8879 = vmul.f32 %v8870, 1.442695
        %v8880 = vpow.pop %v8879
        %v8881 = vmul.f32 %v8871, 1.442695
        %v8882 = vpow.pop %v8881
        %v8883 = vmul.f32 %v8872, 1.442695
        %v8884 = vpow.pop %v8883
        %v8885 = vmul.f32 %v8873, 1.442695
        %v8886 = vpow.pop %v8885
        %v8887 = vmul.f32 %v8874, 1.442695
        %v8888 = vpow.pop %v8887
        %v8889 = vmul.f32 %v8875, 1.442695
        %v8890 = vpow.pop %v8889
        %v8891 = vmul.f32 %v8876, 1.442695
        %v8892 = vpow.pop %v8891
        %v8893 = vsub.f32 %v8675, %v8861
        %v8894 = vsub.f32 %v8678, %v8862
        %v8895 = vsub.f32 %v8719, %v8863
        %v8896 = vsub.f32 %v8722, %v8864
        %v8897 = vsub.f32 %v8763, %v8865
        %v8898 = vsub.f32 %v8766, %v8866
        %v8899 = vsub.f32 %v8807, %v8867
        %v8900 = vsub.f32 %v8810, %v8868
        %v8901 = vmul.f32 %v8893, 1.442695
        %v8902 = vpow.pop %v8901
        %v8903 = vmul.f32 %v8894, 1.442695
        %v8904 = vpow.pop %v8903
        %v8905 = vmul.f32 %v8895, 1.442695
        %v8906 = vpow.pop %v8905
        %v8907 = vmul.f32 %v8896, 1.442695
        %v8908 = vpow.pop %v8907
        %v8909 = vmul.f32 %v8897, 1.442695
        %v8910 = vpow.pop %v8909
        %v8911 = vmul.f32 %v8898, 1.442695
        %v8912 = vpow.pop %v8911
        %v8913 = vmul.f32 %v8899, 1.442695
        %v8914 = vpow.pop %v8913
        %v8915 = vmul.f32 %v8900, 1.442695
        %v8916 = vpow.pop %v8915
        %v8917 = vsel %vm7892, %v8878, 0.0
        %8918 = vadd.xlane.f32.xlu0 %v8917
        %v8919 = vpop.xlane.xlu0 %8918
        %v8920 = vsel %vm7892, %v8880, 0.0
        %8921 = vadd.xlane.f32.xlu0 %v8920
        %v8922 = vpop.xlane.xlu0 %8921
        %v8923 = vsel %vm7892, %v8882, 0.0
        %8924 = vadd.xlane.f32.xlu0 %v8923
        %v8925 = vpop.xlane.xlu0 %8924
        %v8926 = vsel %vm7892, %v8884, 0.0
        %8927 = vadd.xlane.f32.xlu0 %v8926
        %v8928 = vpop.xlane.xlu0 %8927
        %v8929 = vsel %vm7892, %v8886, 0.0
        %8930 = vadd.xlane.f32.xlu0 %v8929
        %v8931 = vpop.xlane.xlu0 %8930
        %v8932 = vsel %vm7892, %v8888, 0.0
        %8933 = vadd.xlane.f32.xlu0 %v8932
        %v8934 = vpop.xlane.xlu0 %8933
        %v8935 = vsel %vm7892, %v8890, 0.0
        %8936 = vadd.xlane.f32.xlu0 %v8935
        %v8937 = vpop.xlane.xlu0 %8936
        %v8938 = vsel %vm7892, %v8892, 0.0
        %8939 = vadd.xlane.f32.xlu0 %v8938
        %v8940 = vpop.xlane.xlu0 %8939
        %v8941 = vsel %vm7515, %v8902, 0.0
        %8942 = vadd.xlane.f32.xlu0 %v8941
        %v8943 = vpop.xlane.xlu0 %8942
        %v8944 = vsel %vm7515, %v8904, 0.0
        %8945 = vadd.xlane.f32.xlu0 %v8944
        %v8946 = vpop.xlane.xlu0 %8945
        %v8947 = vsel %vm7515, %v8906, 0.0
        %8948 = vadd.xlane.f32.xlu0 %v8947
        %v8949 = vpop.xlane.xlu0 %8948
        %v8950 = vsel %vm7515, %v8908, 0.0
        %8951 = vadd.xlane.f32.xlu0 %v8950
        %v8952 = vpop.xlane.xlu0 %8951
        %v8953 = vsel %vm7515, %v8910, 0.0
        %8954 = vadd.xlane.f32.xlu0 %v8953
        %v8955 = vpop.xlane.xlu0 %8954
        %v8956 = vsel %vm7515, %v8912, 0.0
        %8957 = vadd.xlane.f32.xlu0 %v8956
        %v8958 = vpop.xlane.xlu0 %8957
        %v8959 = vsel %vm7515, %v8914, 0.0
        %8960 = vadd.xlane.f32.xlu0 %v8959
        %v8961 = vpop.xlane.xlu0 %8960
        %v8962 = vsel %vm7515, %v8916, 0.0
        %8963 = vadd.xlane.f32.xlu0 %v8962
        %v8964 = vpop.xlane.xlu0 %8963
        %v8965 = vadd.f32 %v8919, %v8943
        %v8966 = vadd.f32 %v8922, %v8946
        %v8967 = vadd.f32 %v8925, %v8949
        %v8968 = vadd.f32 %v8928, %v8952
        %v8969 = vadd.f32 %v8931, %v8955
        %v8970 = vadd.f32 %v8934, %v8958
        %v8971 = vadd.f32 %v8937, %v8961
        %v8972 = vadd.f32 %v8940, %v8964
        %v8973 = vrcp.pop %v8965
        %v8974 = vrcp.pop %v8966
        %v8975 = vrcp.pop %v8967
        %v8976 = vrcp.pop %v8968
        %v8977 = vrcp.pop %v8969
        %v8978 = vrcp.pop %v8970
        %v8979 = vrcp.pop %v8971
        %v8980 = vrcp.pop %v8972
        %v8981 = vmul.f32 %v8878, %v8973
        %v8982 = vmul.f32 %v8880, %v8974
        %v8983 = vmul.f32 %v8882, %v8975
        %v8984 = vmul.f32 %v8884, %v8976
        %v8985 = vmul.f32 %v8886, %v8977
        %v8986 = vmul.f32 %v8888, %v8978
        %v8987 = vmul.f32 %v8890, %v8979
        %v8988 = vmul.f32 %v8892, %v8980
        %v8989 = vpack.c.bf16 %v8982, %v8981
        %v8990 = vpack.c.bf16 %v8984, %v8983
        %v8991 = vpack.c.bf16 %v8986, %v8985
        %v8992 = vpack.c.bf16 %v8988, %v8987
        %v8993 = vmul.f32 %v8902, %v8973
        %v8994 = vmul.f32 %v8904, %v8974
        %v8995 = vmul.f32 %v8906, %v8975
        %v8996 = vmul.f32 %v8908, %v8976
        %v8997 = vmul.f32 %v8910, %v8977
        %v8998 = vmul.f32 %v8912, %v8978
        %v8999 = vmul.f32 %v8914, %v8979
        %v9000 = vmul.f32 %v8916, %v8980
        %v9001 = vpack.c.bf16 %v8994, %v8993
        %v9002 = vpack.c.bf16 %v8996, %v8995
        %v9003 = vpack.c.bf16 %v8998, %v8997
        %v9004 = vpack.c.bf16 %v9000, %v8999
        %v9006 = vsel %vm7515, %v9001, 0
        %9008 = vmatprep.subr.bf16.mxu0 0
        %9009 = vmatpush1.bf16.msra.mxu0 %v7501
        %9010 = vmatprep.subr.bf16.mxu0 0
        %9011 = vmatpush1.bf16.msra.mxu0 0
        %9012 = vmatprep.subr.bf16.mxu0 0
        %9013 = vmatpush1.bf16.msra.mxu0 0
        %9014 = vmatprep.subr.bf16.mxu0 0
        %9015 = vmatpush1.bf16.msra.mxu0 0
        %9016 = vmatprep.subr.bf16.mxu0 0
        %9017 = vmatpush1.bf16.msra.mxu0 0
        %9018 = vmatprep.subr.bf16.mxu0 0
        %9019 = vmatpush1.bf16.msra.mxu0 0
        %9020 = vmatprep.subr.bf16.mxu0 0
        %9021 = vmatpush1.bf16.msra.mxu0 0
        %9022 = vmatprep.subr.bf16.mxu0 0
        %9023 = vmatpush1.bf16.msra.mxu0 0
        %9024 = vmatprep.subr.bf16.mxu0 0
        %9025 = vmatpush1.bf16.msra.mxu0 0
        %9026 = vmatprep.subr.bf16.mxu0 0
        %9027 = vmatpush1.bf16.msra.mxu0 0
        %9028 = vmatprep.subr.bf16.mxu0 0
        %9029 = vmatpush1.bf16.msra.mxu0 0
        %9030 = vmatprep.subr.bf16.mxu0 0
        %9031 = vmatpush1.bf16.msra.mxu0 0
        %9032 = vmatprep.subr.bf16.mxu0 0
        %9033 = vmatpush1.bf16.msra.mxu0 0
        %9034 = vmatprep.subr.bf16.mxu0 0
        %9035 = vmatpush1.bf16.msra.mxu0 0
        %9036 = vmatprep.subr.bf16.mxu0 0
        %9037 = vmatpush1.bf16.msra.mxu0 0
        %9038 = vmatprep.subr.bf16.mxu0 0
        %9039 = vmatpush1.bf16.msra.mxu0 0
        %9040 = vmatprep.mubr.bf16.mxu0 0
        %9041 = vmatmul.mubr.bf16.gmra.mrb[0].mxu0 %v9006
        %v9042 = vpop.f32.mrb[0].mxu0
        %v9043 = vadd.f32 0.0, %v9042
        %v9044 = vpop.f32.mrb[0].mxu0
        %v9045 = vpop.f32.mrb[0].mxu0
        %v9046 = vadd.f32 0.0, %v9045
        %v9047 = vpop.f32.mrb[0].mxu0
        %9048 = vdwg.mxu0
        %v9050 = vsel %vm7515, %v9002, 0
        %9052 = vmatprep.subr.bf16.mxu0 0
        %9053 = vmatpush1.bf16.msra.mxu0 %v7505
        %9054 = vmatprep.subr.bf16.mxu0 0
        %9055 = vmatpush1.bf16.msra.mxu0 0
        %9056 = vmatprep.subr.bf16.mxu0 0
        %9057 = vmatpush1.bf16.msra.mxu0 0
        %9058 = vmatprep.subr.bf16.mxu0 0
        %9059 = vmatpush1.bf16.msra.mxu0 0
        %9060 = vmatprep.subr.bf16.mxu0 0
        %9061 = vmatpush1.bf16.msra.mxu0 0
        %9062 = vmatprep.subr.bf16.mxu0 0
        %9063 = vmatpush1.bf16.msra.mxu0 0
        %9064 = vmatprep.subr.bf16.mxu0 0
        %9065 = vmatpush1.bf16.msra.mxu0 0
        %9066 = vmatprep.subr.bf16.mxu0 0
        %9067 = vmatpush1.bf16.msra.mxu0 0
        %9068 = vmatprep.subr.bf16.mxu0 0
        %9069 = vmatpush1.bf16.msra.mxu0 0
        %9070 = vmatprep.subr.bf16.mxu0 0
        %9071 = vmatpush1.bf16.msra.mxu0 0
        %9072 = vmatprep.subr.bf16.mxu0 0
        %9073 = vmatpush1.bf16.msra.mxu0 0
        %9074 = vmatprep.subr.bf16.mxu0 0
        %9075 = vmatpush1.bf16.msra.mxu0 0
        %9076 = vmatprep.subr.bf16.mxu0 0
        %9077 = vmatpush1.bf16.msra.mxu0 0
        %9078 = vmatprep.subr.bf16.mxu0 0
        %9079 = vmatpush1.bf16.msra.mxu0 0
        %9080 = vmatprep.subr.bf16.mxu0 0
        %9081 = vmatpush1.bf16.msra.mxu0 0
        %9082 = vmatprep.subr.bf16.mxu0 0
        %9083 = vmatpush1.bf16.msra.mxu0 0
        %9084 = vmatprep.mubr.bf16.mxu0 0
        %9085 = vmatmul.mubr.bf16.gmra.mrb[0].mxu0 %v9050
        %v9086 = vpop.f32.mrb[0].mxu0
        %v9087 = vadd.f32 0.0, %v9086
        %v9088 = vpop.f32.mrb[0].mxu0
        %v9089 = vpop.f32.mrb[0].mxu0
        %v9090 = vadd.f32 0.0, %v9089
        %v9091 = vpop.f32.mrb[0].mxu0
        %9092 = vdwg.mxu0
        %v9094 = vsel %vm7515, %v9003, 0
        %9096 = vmatprep.subr.bf16.mxu0 0
        %9097 = vmatpush1.bf16.msra.mxu0 %v7509
        %9098 = vmatprep.subr.bf16.mxu0 0
        %9099 = vmatpush1.bf16.msra.mxu0 0
        %9100 = vmatprep.subr.bf16.mxu0 0
        %9101 = vmatpush1.bf16.msra.mxu0 0
        %9102 = vmatprep.subr.bf16.mxu0 0
        %9103 = vmatpush1.bf16.msra.mxu0 0
        %9104 = vmatprep.subr.bf16.mxu0 0
        %9105 = vmatpush1.bf16.msra.mxu0 0
        %9106 = vmatprep.subr.bf16.mxu0 0
        %9107 = vmatpush1.bf16.msra.mxu0 0
        %9108 = vmatprep.subr.bf16.mxu0 0
        %9109 = vmatpush1.bf16.msra.mxu0 0
        %9110 = vmatprep.subr.bf16.mxu0 0
        %9111 = vmatpush1.bf16.msra.mxu0 0
        %9112 = vmatprep.subr.bf16.mxu0 0
        %9113 = vmatpush1.bf16.msra.mxu0 0
        %9114 = vmatprep.subr.bf16.mxu0 0
        %9115 = vmatpush1.bf16.msra.mxu0 0
        %9116 = vmatprep.subr.bf16.mxu0 0
        %9117 = vmatpush1.bf16.msra.mxu0 0
        %9118 = vmatprep.subr.bf16.mxu0 0
        %9119 = vmatpush1.bf16.msra.mxu0 0
        %9120 = vmatprep.subr.bf16.mxu0 0
        %9121 = vmatpush1.bf16.msra.mxu0 0
        %9122 = vmatprep.subr.bf16.mxu0 0
        %9123 = vmatpush1.bf16.msra.mxu0 0
        %9124 = vmatprep.subr.bf16.mxu0 0
        %9125 = vmatpush1.bf16.msra.mxu0 0
        %9126 = vmatprep.subr.bf16.mxu0 0
        %9127 = vmatpush1.bf16.msra.mxu0 0
        %9128 = vmatprep.mubr.bf16.mxu0 0
        %9129 = vmatmul.mubr.bf16.gmra.mrb[0].mxu0 %v9094
        %v9130 = vpop.f32.mrb[0].mxu0
        %v9131 = vadd.f32 0.0, %v9130
        %v9132 = vpop.f32.mrb[0].mxu0
        %v9133 = vpop.f32.mrb[0].mxu0
        %v9134 = vadd.f32 0.0, %v9133
        %v9135 = vpop.f32.mrb[0].mxu0
        %9136 = vdwg.mxu0
        %v9138 = vsel %vm7515, %v9004, 0
        %9140 = vmatprep.subr.bf16.mxu0 0
        %9141 = vmatpush1.bf16.msra.mxu0 %v7513
        %9142 = vmatprep.subr.bf16.mxu0 0
        %9143 = vmatpush1.bf16.msra.mxu0 0
        %9144 = vmatprep.subr.bf16.mxu0 0
        %9145 = vmatpush1.bf16.msra.mxu0 0
        %9146 = vmatprep.subr.bf16.mxu0 0
        %9147 = vmatpush1.bf16.msra.mxu0 0
        %9148 = vmatprep.subr.bf16.mxu0 0
        %9149 = vmatpush1.bf16.msra.mxu0 0
        %9150 = vmatprep.subr.bf16.mxu0 0
        %9151 = vmatpush1.bf16.msra.mxu0 0
        %9152 = vmatprep.subr.bf16.mxu0 0
        %9153 = vmatpush1.bf16.msra.mxu0 0
        %9154 = vmatprep.subr.bf16.mxu0 0
        %9155 = vmatpush1.bf16.msra.mxu0 0
        %9156 = vmatprep.subr.bf16.mxu0 0
        %9157 = vmatpush1.bf16.msra.mxu0 0
        %9158 = vmatprep.subr.bf16.mxu0 0
        %9159 = vmatpush1.bf16.msra.mxu0 0
        %9160 = vmatprep.subr.bf16.mxu0 0
        %9161 = vmatpush1.bf16.msra.mxu0 0
        %9162 = vmatprep.subr.bf16.mxu0 0
        %9163 = vmatpush1.bf16.msra.mxu0 0
        %9164 = vmatprep.subr.bf16.mxu0 0
        %9165 = vmatpush1.bf16.msra.mxu0 0
        %9166 = vmatprep.subr.bf16.mxu0 0
        %9167 = vmatpush1.bf16.msra.mxu0 0
        %9168 = vmatprep.subr.bf16.mxu0 0
        %9169 = vmatpush1.bf16.msra.mxu0 0
        %9170 = vmatprep.subr.bf16.mxu0 0
        %9171 = vmatpush1.bf16.msra.mxu0 0
        %9172 = vmatprep.mubr.bf16.mxu0 0
        %9173 = vmatmul.mubr.bf16.gmra.mrb[0].mxu0 %v9138
        %v9174 = vpop.f32.mrb[0].mxu0
        %v9175 = vadd.f32 0.0, %v9174
        %v9176 = vpop.f32.mrb[0].mxu0
        %v9177 = vpop.f32.mrb[0].mxu0
        %v9178 = vadd.f32 0.0, %v9177
        %v9179 = vpop.f32.mrb[0].mxu0
        %9180 = vdwg.mxu0
        %v9182 = vsel %vm7892, %v8989, 0
        %9184 = vmatprep.subr.bf16.mxu0 0
        %9185 = vmatpush1.bf16.msra.mxu0 %v6909
        %9186 = vmatprep.subr.bf16.mxu0 0
        %9187 = vmatpush1.bf16.msra.mxu0 %v6925
        %9188 = vmatprep.subr.bf16.mxu0 0
        %9189 = vmatpush1.bf16.msra.mxu0 0
        %9190 = vmatprep.subr.bf16.mxu0 0
        %9191 = vmatpush1.bf16.msra.mxu0 0
        %9192 = vmatprep.subr.bf16.mxu0 0
        %9193 = vmatpush1.bf16.msra.mxu0 0
        %9194 = vmatprep.subr.bf16.mxu0 0
        %9195 = vmatpush1.bf16.msra.mxu0 0
        %9196 = vmatprep.subr.bf16.mxu0 0
        %9197 = vmatpush1.bf16.msra.mxu0 0
        %9198 = vmatprep.subr.bf16.mxu0 0
        %9199 = vmatpush1.bf16.msra.mxu0 0
        %9200 = vmatprep.subr.bf16.mxu0 0
        %9201 = vmatpush1.bf16.msra.mxu0 0
        %9202 = vmatprep.subr.bf16.mxu0 0
        %9203 = vmatpush1.bf16.msra.mxu0 0
        %9204 = vmatprep.subr.bf16.mxu0 0
        %9205 = vmatpush1.bf16.msra.mxu0 0
        %9206 = vmatprep.subr.bf16.mxu0 0
        %9207 = vmatpush1.bf16.msra.mxu0 0
        %9208 = vmatprep.subr.bf16.mxu0 0
        %9209 = vmatpush1.bf16.msra.mxu0 0
        %9210 = vmatprep.subr.bf16.mxu0 0
        %9211 = vmatpush1.bf16.msra.mxu0 0
        %9212 = vmatprep.subr.bf16.mxu0 0
        %9213 = vmatpush1.bf16.msra.mxu0 0
        %9214 = vmatprep.subr.bf16.mxu0 0
        %9215 = vmatpush1.bf16.msra.mxu0 0
        %9216 = vmatprep.mubr.bf16.mxu0 0
        %9217 = vmatmul.mubr.bf16.gmra.mrb[0].mxu0 %v9182
        %v9218 = vpop.f32.mrb[0].mxu0
        %v9219 = vadd.f32 %v9043, %v9218
        %v9220 = vpop.f32.mrb[0].mxu0
        %v9221 = vpop.f32.mrb[0].mxu0
        %v9222 = vadd.f32 %v9046, %v9221
        %v9223 = vpop.f32.mrb[0].mxu0
        %9224 = vdwg.mxu0
        %v9226 = vsel %vm7892, %v8990, 0
        %9228 = vmatprep.subr.bf16.mxu0 0
        %9229 = vmatpush1.bf16.msra.mxu0 %v6913
        %9230 = vmatprep.subr.bf16.mxu0 0
        %9231 = vmatpush1.bf16.msra.mxu0 %v6929
        %9232 = vmatprep.subr.bf16.mxu0 0
        %9233 = vmatpush1.bf16.msra.mxu0 0
        %9234 = vmatprep.subr.bf16.mxu0 0
        %9235 = vmatpush1.bf16.msra.mxu0 0
        %9236 = vmatprep.subr.bf16.mxu0 0
        %9237 = vmatpush1.bf16.msra.mxu0 0
        %9238 = vmatprep.subr.bf16.mxu0 0
        %9239 = vmatpush1.bf16.msra.mxu0 0
        %9240 = vmatprep.subr.bf16.mxu0 0
        %9241 = vmatpush1.bf16.msra.mxu0 0
        %9242 = vmatprep.subr.bf16.mxu0 0
        %9243 = vmatpush1.bf16.msra.mxu0 0
        %9244 = vmatprep.subr.bf16.mxu0 0
        %9245 = vmatpush1.bf16.msra.mxu0 0
        %9246 = vmatprep.subr.bf16.mxu0 0
        %9247 = vmatpush1.bf16.msra.mxu0 0
        %9248 = vmatprep.subr.bf16.mxu0 0
        %9249 = vmatpush1.bf16.msra.mxu0 0
        %9250 = vmatprep.subr.bf16.mxu0 0
        %9251 = vmatpush1.bf16.msra.mxu0 0
        %9252 = vmatprep.subr.bf16.mxu0 0
        %9253 = vmatpush1.bf16.msra.mxu0 0
        %9254 = vmatprep.subr.bf16.mxu0 0
        %9255 = vmatpush1.bf16.msra.mxu0 0
        %9256 = vmatprep.subr.bf16.mxu0 0
        %9257 = vmatpush1.bf16.msra.mxu0 0
        %9258 = vmatprep.subr.bf16.mxu0 0
        %9259 = vmatpush1.bf16.msra.mxu0 0
        %9260 = vmatprep.mubr.bf16.mxu0 0
        %9261 = vmatmul.mubr.bf16.gmra.mrb[0].mxu0 %v9226
        %v9262 = vpop.f32.mrb[0].mxu0
        %v9263 = vadd.f32 %v9087, %v9262
        %v9264 = vpop.f32.mrb[0].mxu0
        %v9265 = vpop.f32.mrb[0].mxu0
        %v9266 = vadd.f32 %v9090, %v9265
        %v9267 = vpop.f32.mrb[0].mxu0
        %9268 = vdwg.mxu0
        %v9270 = vsel %vm7892, %v8991, 0
        %9272 = vmatprep.subr.bf16.mxu0 0
        %9273 = vmatpush1.bf16.msra.mxu0 %v6917
        %9274 = vmatprep.subr.bf16.mxu0 0
        %9275 = vmatpush1.bf16.msra.mxu0 %v6933
        %9276 = vmatprep.subr.bf16.mxu0 0
        %9277 = vmatpush1.bf16.msra.mxu0 0
        %9278 = vmatprep.subr.bf16.mxu0 0
        %9279 = vmatpush1.bf16.msra.mxu0 0
        %9280 = vmatprep.subr.bf16.mxu0 0
        %9281 = vmatpush1.bf16.msra.mxu0 0
        %9282 = vmatprep.subr.bf16.mxu0 0
        %9283 = vmatpush1.bf16.msra.mxu0 0
        %9284 = vmatprep.subr.bf16.mxu0 0
        %9285 = vmatpush1.bf16.msra.mxu0 0
        %9286 = vmatprep.subr.bf16.mxu0 0
        %9287 = vmatpush1.bf16.msra.mxu0 0
        %9288 = vmatprep.subr.bf16.mxu0 0
        %9289 = vmatpush1.bf16.msra.mxu0 0
        %9290 = vmatprep.subr.bf16.mxu0 0
        %9291 = vmatpush1.bf16.msra.mxu0 0
        %9292 = vmatprep.subr.bf16.mxu0 0
        %9293 = vmatpush1.bf16.msra.mxu0 0
        %9294 = vmatprep.subr.bf16.mxu0 0
        %9295 = vmatpush1.bf16.msra.mxu0 0
        %9296 = vmatprep.subr.bf16.mxu0 0
        %9297 = vmatpush1.bf16.msra.mxu0 0
        %9298 = vmatprep.subr.bf16.mxu0 0
        %9299 = vmatpush1.bf16.msra.mxu0 0
        %9300 = vmatprep.subr.bf16.mxu0 0
        %9301 = vmatpush1.bf16.msra.mxu0 0
        %9302 = vmatprep.subr.bf16.mxu0 0
        %9303 = vmatpush1.bf16.msra.mxu0 0
        %9304 = vmatprep.mubr.bf16.mxu0 0
        %9305 = vmatmul.mubr.bf16.gmra.mrb[0].mxu0 %v9270
        %v9306 = vpop.f32.mrb[0].mxu0
        %v9307 = vadd.f32 %v9131, %v9306
        %v9308 = vpop.f32.mrb[0].mxu0
        %v9309 = vpop.f32.mrb[0].mxu0
        %v9310 = vadd.f32 %v9134, %v9309
        %v9311 = vpop.f32.mrb[0].mxu0
        %9312 = vdwg.mxu0
        %v9314 = vsel %vm7892, %v8992, 0
        %9316 = vmatprep.subr.bf16.mxu0 0
        %9317 = vmatpush1.bf16.msra.mxu0 %v6921
        %9318 = vmatprep.subr.bf16.mxu0 0
        %9319 = vmatpush1.bf16.msra.mxu0 %v6937
        %9320 = vmatprep.subr.bf16.mxu0 0
        %9321 = vmatpush1.bf16.msra.mxu0 0
        %9322 = vmatprep.subr.bf16.mxu0 0
        %9323 = vmatpush1.bf16.msra.mxu0 0
        %9324 = vmatprep.subr.bf16.mxu0 0
        %9325 = vmatpush1.bf16.msra.mxu0 0
        %9326 = vmatprep.subr.bf16.mxu0 0
        %9327 = vmatpush1.bf16.msra.mxu0 0
        %9328 = vmatprep.subr.bf16.mxu0 0
        %9329 = vmatpush1.bf16.msra.mxu0 0
        %9330 = vmatprep.subr.bf16.mxu0 0
        %9331 = vmatpush1.bf16.msra.mxu0 0
        %9332 = vmatprep.subr.bf16.mxu0 0
        %9333 = vmatpush1.bf16.msra.mxu0 0
        %9334 = vmatprep.subr.bf16.mxu0 0
        %9335 = vmatpush1.bf16.msra.mxu0 0
        %9336 = vmatprep.subr.bf16.mxu0 0
        %9337 = vmatpush1.bf16.msra.mxu0 0
        %9338 = vmatprep.subr.bf16.mxu0 0
        %9339 = vmatpush1.bf16.msra.mxu0 0
        %9340 = vmatprep.subr.bf16.mxu0 0
        %9341 = vmatpush1.bf16.msra.mxu0 0
        %9342 = vmatprep.subr.bf16.mxu0 0
        %9343 = vmatpush1.bf16.msra.mxu0 0
        %9344 = vmatprep.subr.bf16.mxu0 0
        %9345 = vmatpush1.bf16.msra.mxu0 0
        %9346 = vmatprep.subr.bf16.mxu0 0
        %9347 = vmatpush1.bf16.msra.mxu0 0
        %9348 = vmatprep.mubr.bf16.mxu0 0
        %9349 = vmatmul.mubr.bf16.gmra.mrb[0].mxu0 %v9314
        %v9350 = vpop.f32.mrb[0].mxu0
        %v9351 = vadd.f32 %v9175, %v9350
        %v9352 = vpop.f32.mrb[0].mxu0
        %v9353 = vpop.f32.mrb[0].mxu0
        %v9354 = vadd.f32 %v9178, %v9353
        %v9355 = vpop.f32.mrb[0].mxu0
        %9356 = vdwg.mxu0
        %v9357 = vcombine.low %v8299, %v8387
        %v9358 = vcombine.high %v8299, %v8387
        %v9360 = vunpack.c.l.s4 1983009808
        %v9361 = vunpack.c.0.s8 %v9360
        %v9362 = vlaneseq
        %v9363 = vshrl.u32 %v9362, 7
        %v9364 = vsub.s32 %v9361, %v9363
        %v9365 = vrot.slane %v9357, %v9364
        %v9367 = vunpack.c.l.s4 1983009808
        %v9368 = vunpack.c.0.s8 %v9367
        %v9369 = vlaneseq
        %v9370 = vshrl.u32 %v9369, 7
        %v9371 = vsub.s32 %v9368, %v9370
        %v9372 = vrot.slane %v9358, %v9371
        %v9373 = vcombine.low %v8343, %v8431
        %v9374 = vcombine.high %v8343, %v8431
        %v9376 = vunpack.c.l.s4 1983009808
        %v9377 = vunpack.c.0.s8 %v9376
        %v9378 = vlaneseq
        %v9379 = vshrl.u32 %v9378, 7
        %v9380 = vsub.s32 %v9377, %v9379
        %v9381 = vrot.slane %v9373, %v9380
        %v9383 = vunpack.c.l.s4 1983009808
        %v9384 = vunpack.c.0.s8 %v9383
        %v9385 = vlaneseq
        %v9386 = vshrl.u32 %v9385, 7
        %v9387 = vsub.s32 %v9384, %v9386
        %v9388 = vrot.slane %v9374, %v9387
        %v9389 = vcombine.low %v9365, %v9381
        %v9390 = vcombine.high %v9365, %v9381
        %v9392 = vunpack.c.l.s4 1934713408
        %v9393 = vunpack.c.0.s8 %v9392
        %v9394 = vlaneseq
        %v9395 = vshrl.u32 %v9394, 7
        %v9396 = vsub.s32 %v9393, %v9395
        %v9397 = vrot.slane %v9389, %v9396
        %v9399 = vunpack.c.l.s4 1934713408
        %v9400 = vunpack.c.0.s8 %v9399
        %v9401 = vlaneseq
        %v9402 = vshrl.u32 %v9401, 7
        %v9403 = vsub.s32 %v9400, %v9402
        %v9404 = vrot.slane %v9390, %v9403
        %v9405 = vcombine.low %v9372, %v9388
        %v9406 = vcombine.high %v9372, %v9388
        %v9408 = vunpack.c.l.s4 1934713408
        %v9409 = vunpack.c.0.s8 %v9408
        %v9410 = vlaneseq
        %v9411 = vshrl.u32 %v9410, 7
        %v9412 = vsub.s32 %v9409, %v9411
        %v9413 = vrot.slane %v9405, %v9412
        %v9415 = vunpack.c.l.s4 1934713408
        %v9416 = vunpack.c.0.s8 %v9415
        %v9417 = vlaneseq
        %v9418 = vshrl.u32 %v9417, 7
        %v9419 = vsub.s32 %v9416, %v9418
        %v9420 = vrot.slane %v9406, %v9419
        %v9421 = vcombine.high %v9397, 0.0
        %v9422 = vcombine.high %v9404, 0.0
        %v9423 = vcombine.high %v9413, 0.0
        %v9424 = vcombine.high %v9420, 0.0
        %v9425 = vcombine.low %v8302, %v8390
        %v9426 = vcombine.high %v8302, %v8390
        %v9428 = vunpack.c.l.s4 1983009808
        %v9429 = vunpack.c.0.s8 %v9428
        %v9430 = vlaneseq
        %v9431 = vshrl.u32 %v9430, 7
        %v9432 = vsub.s32 %v9429, %v9431
        %v9433 = vrot.slane %v9425, %v9432
        %v9435 = vunpack.c.l.s4 1983009808
        %v9436 = vunpack.c.0.s8 %v9435
        %v9437 = vlaneseq
        %v9438 = vshrl.u32 %v9437, 7
        %v9439 = vsub.s32 %v9436, %v9438
        %v9440 = vrot.slane %v9426, %v9439
        %v9441 = vcombine.low %v8346, %v8434
        %v9442 = vcombine.high %v8346, %v8434
        %v9444 = vunpack.c.l.s4 1983009808
        %v9445 = vunpack.c.0.s8 %v9444
        %v9446 = vlaneseq
        %v9447 = vshrl.u32 %v9446, 7
        %v9448 = vsub.s32 %v9445, %v9447
        %v9449 = vrot.slane %v9441, %v9448
        %v9451 = vunpack.c.l.s4 1983009808
        %v9452 = vunpack.c.0.s8 %v9451
        %v9453 = vlaneseq
        %v9454 = vshrl.u32 %v9453, 7
        %v9455 = vsub.s32 %v9452, %v9454
        %v9456 = vrot.slane %v9442, %v9455
        %v9457 = vcombine.low %v9433, %v9449
        %v9458 = vcombine.high %v9433, %v9449
        %v9460 = vunpack.c.l.s4 1934713408
        %v9461 = vunpack.c.0.s8 %v9460
        %v9462 = vlaneseq
        %v9463 = vshrl.u32 %v9462, 7
        %v9464 = vsub.s32 %v9461, %v9463
        %v9465 = vrot.slane %v9457, %v9464
        %v9467 = vunpack.c.l.s4 1934713408
        %v9468 = vunpack.c.0.s8 %v9467
        %v9469 = vlaneseq
        %v9470 = vshrl.u32 %v9469, 7
        %v9471 = vsub.s32 %v9468, %v9470
        %v9472 = vrot.slane %v9458, %v9471
        %v9473 = vcombine.low %v9440, %v9456
        %v9474 = vcombine.high %v9440, %v9456
        %v9476 = vunpack.c.l.s4 1934713408
        %v9477 = vunpack.c.0.s8 %v9476
        %v9478 = vlaneseq
        %v9479 = vshrl.u32 %v9478, 7
        %v9480 = vsub.s32 %v9477, %v9479
        %v9481 = vrot.slane %v9473, %v9480
        %v9483 = vunpack.c.l.s4 1934713408
        %v9484 = vunpack.c.0.s8 %v9483
        %v9485 = vlaneseq
        %v9486 = vshrl.u32 %v9485, 7
        %v9487 = vsub.s32 %v9484, %v9486
        %v9488 = vrot.slane %v9474, %v9487
        %v9489 = vcombine.high %v9465, 0.0
        %v9490 = vcombine.high %v9472, 0.0
        %v9491 = vcombine.high %v9481, 0.0
        %v9492 = vcombine.high %v9488, 0.0
        %v9493 = vcombine.low %v9219, %v9307
        %v9494 = vcombine.high %v9219, %v9307
        %v9496 = vunpack.c.l.s4 1983009808
        %v9497 = vunpack.c.0.s8 %v9496
        %v9498 = vlaneseq
        %v9499 = vshrl.u32 %v9498, 7
        %v9500 = vsub.s32 %v9497, %v9499
        %v9501 = vrot.slane %v9493, %v9500
        %v9503 = vunpack.c.l.s4 1983009808
        %v9504 = vunpack.c.0.s8 %v9503
        %v9505 = vlaneseq
        %v9506 = vshrl.u32 %v9505, 7
        %v9507 = vsub.s32 %v9504, %v9506
        %v9508 = vrot.slane %v9494, %v9507
        %v9509 = vcombine.low %v9263, %v9351
        %v9510 = vcombine.high %v9263, %v9351
        %v9512 = vunpack.c.l.s4 1983009808
        %v9513 = vunpack.c.0.s8 %v9512
        %v9514 = vlaneseq
        %v9515 = vshrl.u32 %v9514, 7
        %v9516 = vsub.s32 %v9513, %v9515
        %v9517 = vrot.slane %v9509, %v9516
        %v9519 = vunpack.c.l.s4 1983009808
        %v9520 = vunpack.c.0.s8 %v9519
        %v9521 = vlaneseq
        %v9522 = vshrl.u32 %v9521, 7
        %v9523 = vsub.s32 %v9520, %v9522
        %v9524 = vrot.slane %v9510, %v9523
        %v9525 = vcombine.low %v9501, %v9517
        %v9526 = vcombine.high %v9501, %v9517
        %v9528 = vunpack.c.l.s4 1934713408
        %v9529 = vunpack.c.0.s8 %v9528
        %v9530 = vlaneseq
        %v9531 = vshrl.u32 %v9530, 7
        %v9532 = vsub.s32 %v9529, %v9531
        %v9533 = vrot.slane %v9525, %v9532
        %v9535 = vunpack.c.l.s4 1934713408
        %v9536 = vunpack.c.0.s8 %v9535
        %v9537 = vlaneseq
        %v9538 = vshrl.u32 %v9537, 7
        %v9539 = vsub.s32 %v9536, %v9538
        %v9540 = vrot.slane %v9526, %v9539
        %v9541 = vcombine.low %v9508, %v9524
        %v9542 = vcombine.high %v9508, %v9524
        %v9544 = vunpack.c.l.s4 1934713408
        %v9545 = vunpack.c.0.s8 %v9544
        %v9546 = vlaneseq
        %v9547 = vshrl.u32 %v9546, 7
        %v9548 = vsub.s32 %v9545, %v9547
        %v9549 = vrot.slane %v9541, %v9548
        %v9551 = vunpack.c.l.s4 1934713408
        %v9552 = vunpack.c.0.s8 %v9551
        %v9553 = vlaneseq
        %v9554 = vshrl.u32 %v9553, 7
        %v9555 = vsub.s32 %v9552, %v9554
        %v9556 = vrot.slane %v9542, %v9555
        %v9557 = vcombine.high %v9533, 0.0
        %v9558 = vcombine.high %v9540, 0.0
        %v9559 = vcombine.high %v9549, 0.0
        %v9560 = vcombine.high %v9556, 0.0
        %v9561 = vcombine.low %v9222, %v9310
        %v9562 = vcombine.high %v9222, %v9310
        %v9564 = vunpack.c.l.s4 1983009808
        %v9565 = vunpack.c.0.s8 %v9564
        %v9566 = vlaneseq
        %v9567 = vshrl.u32 %v9566, 7
        %v9568 = vsub.s32 %v9565, %v9567
        %v9569 = vrot.slane %v9561, %v9568
        %v9571 = vunpack.c.l.s4 1983009808
        %v9572 = vunpack.c.0.s8 %v9571
        %v9573 = vlaneseq
        %v9574 = vshrl.u32 %v9573, 7
        %v9575 = vsub.s32 %v9572, %v9574
        %v9576 = vrot.slane %v9562, %v9575
        %v9577 = vcombine.low %v9266, %v9354
        %v9578 = vcombine.high %v9266, %v9354
        %v9580 = vunpack.c.l.s4 1983009808
        %v9581 = vunpack.c.0.s8 %v9580
        %v9582 = vlaneseq
        %v9583 = vshrl.u32 %v9582, 7
        %v9584 = vsub.s32 %v9581, %v9583
        %v9585 = vrot.slane %v9577, %v9584
        %v9587 = vunpack.c.l.s4 1983009808
        %v9588 = vunpack.c.0.s8 %v9587
        %v9589 = vlaneseq
        %v9590 = vshrl.u32 %v9589, 7
        %v9591 = vsub.s32 %v9588, %v9590
        %v9592 = vrot.slane %v9578, %v9591
        %v9593 = vcombine.low %v9569, %v9585
        %v9594 = vcombine.high %v9569, %v9585
        %v9596 = vunpack.c.l.s4 1934713408
        %v9597 = vunpack.c.0.s8 %v9596
        %v9598 = vlaneseq
        %v9599 = vshrl.u32 %v9598, 7
        %v9600 = vsub.s32 %v9597, %v9599
        %v9601 = vrot.slane %v9593, %v9600
        %v9603 = vunpack.c.l.s4 1934713408
        %v9604 = vunpack.c.0.s8 %v9603
        %v9605 = vlaneseq
        %v9606 = vshrl.u32 %v9605, 7
        %v9607 = vsub.s32 %v9604, %v9606
        %v9608 = vrot.slane %v9594, %v9607
        %v9609 = vcombine.low %v9576, %v9592
        %v9610 = vcombine.high %v9576, %v9592
        %v9612 = vunpack.c.l.s4 1934713408
        %v9613 = vunpack.c.0.s8 %v9612
        %v9614 = vlaneseq
        %v9615 = vshrl.u32 %v9614, 7
        %v9616 = vsub.s32 %v9613, %v9615
        %v9617 = vrot.slane %v9609, %v9616
        %v9619 = vunpack.c.l.s4 1934713408
        %v9620 = vunpack.c.0.s8 %v9619
        %v9621 = vlaneseq
        %v9622 = vshrl.u32 %v9621, 7
        %v9623 = vsub.s32 %v9620, %v9622
        %v9624 = vrot.slane %v9610, %v9623
        %v9625 = vcombine.high %v9601, 0.0
        %v9626 = vcombine.high %v9608, 0.0
        %v9627 = vcombine.high %v9617, 0.0
        %v9628 = vcombine.high %v9624, 0.0
        %v9629 = vcombine.low %v9397, %v9404
        %v9631 = vunpack.c.l.s4 1983009808
        %v9632 = vunpack.c.0.s8 %v9631
        %v9633 = vlaneseq
        %v9634 = vshrl.u32 %v9633, 7
        %v9635 = vsub.s32 %v9632, %v9634
        %v9636 = vrot.slane %v9629, %v9635
        %v9637 = vcombine.low %v9421, %v9422
        %v9639 = vunpack.c.l.s4 1983009808
        %v9640 = vunpack.c.0.s8 %v9639
        %v9641 = vlaneseq
        %v9642 = vshrl.u32 %v9641, 7
        %v9643 = vsub.s32 %v9640, %v9642
        %v9644 = vrot.slane %v9637, %v9643
        %v9645 = vcombine.low %v9413, %v9420
        %v9647 = vunpack.c.l.s4 1983009808
        %v9648 = vunpack.c.0.s8 %v9647
        %v9649 = vlaneseq
        %v9650 = vshrl.u32 %v9649, 7
        %v9651 = vsub.s32 %v9648, %v9650
        %v9652 = vrot.slane %v9645, %v9651
        %v9653 = vcombine.low %v9423, %v9424
        %v9655 = vunpack.c.l.s4 1983009808
        %v9656 = vunpack.c.0.s8 %v9655
        %v9657 = vlaneseq
        %v9658 = vshrl.u32 %v9657, 7
        %v9659 = vsub.s32 %v9656, %v9658
        %v9660 = vrot.slane %v9653, %v9659
        %v9661 = vcombine.low %v9636, %v9644
        %v9662 = vcombine.high %v9636, %v9644
        %v9664 = vunpack.c.l.s4 1934713408
        %v9665 = vunpack.c.0.s8 %v9664
        %v9666 = vlaneseq
        %v9667 = vshrl.u32 %v9666, 7
        %v9668 = vsub.s32 %v9665, %v9667
        %v9669 = vrot.slane %v9661, %v9668
        %v9671 = vunpack.c.l.s4 1934713408
        %v9672 = vunpack.c.0.s8 %v9671
        %v9673 = vlaneseq
        %v9674 = vshrl.u32 %v9673, 7
        %v9675 = vsub.s32 %v9672, %v9674
        %v9676 = vrot.slane %v9662, %v9675
        %v9677 = vcombine.low %v9652, %v9660
        %v9678 = vcombine.high %v9652, %v9660
        %v9680 = vunpack.c.l.s4 1934713408
        %v9681 = vunpack.c.0.s8 %v9680
        %v9682 = vlaneseq
        %v9683 = vshrl.u32 %v9682, 7
        %v9684 = vsub.s32 %v9681, %v9683
        %v9685 = vrot.slane %v9677, %v9684
        %v9687 = vunpack.c.l.s4 1934713408
        %v9688 = vunpack.c.0.s8 %v9687
        %v9689 = vlaneseq
        %v9690 = vshrl.u32 %v9689, 7
        %v9691 = vsub.s32 %v9688, %v9690
        %v9692 = vrot.slane %v9678, %v9691
        %v9693 = vcombine.low %v9669, %v9685
        %v9694 = vcombine.high %v9669, %v9685
        %v9695 = vcombine.low %v9676, %v9692
        %v9696 = vcombine.high %v9676, %v9692
        %v9697 = vcombine.low %v9465, %v9472
        %v9699 = vunpack.c.l.s4 1983009808
        %v9700 = vunpack.c.0.s8 %v9699
        %v9701 = vlaneseq
        %v9702 = vshrl.u32 %v9701, 7
        %v9703 = vsub.s32 %v9700, %v9702
        %v9704 = vrot.slane %v9697, %v9703
        %v9705 = vcombine.low %v9489, %v9490
        %v9707 = vunpack.c.l.s4 1983009808
        %v9708 = vunpack.c.0.s8 %v9707
        %v9709 = vlaneseq
        %v9710 = vshrl.u32 %v9709, 7
        %v9711 = vsub.s32 %v9708, %v9710
        %v9712 = vrot.slane %v9705, %v9711
        %v9713 = vcombine.low %v9481, %v9488
        %v9715 = vunpack.c.l.s4 1983009808
        %v9716 = vunpack.c.0.s8 %v9715
        %v9717 = vlaneseq
        %v9718 = vshrl.u32 %v9717, 7
        %v9719 = vsub.s32 %v9716, %v9718
        %v9720 = vrot.slane %v9713, %v9719
        %v9721 = vcombine.low %v9491, %v9492
        %v9723 = vunpack.c.l.s4 1983009808
        %v9724 = vunpack.c.0.s8 %v9723
        %v9725 = vlaneseq
        %v9726 = vshrl.u32 %v9725, 7
        %v9727 = vsub.s32 %v9724, %v9726
        %v9728 = vrot.slane %v9721, %v9727
        %v9729 = vcombine.low %v9704, %v9712
        %v9730 = vcombine.high %v9704, %v9712
        %v9732 = vunpack.c.l.s4 1934713408
        %v9733 = vunpack.c.0.s8 %v9732
        %v9734 = vlaneseq
        %v9735 = vshrl.u32 %v9734, 7
        %v9736 = vsub.s32 %v9733, %v9735
        %v9737 = vrot.slane %v9729, %v9736
        %v9739 = vunpack.c.l.s4 1934713408
        %v9740 = vunpack.c.0.s8 %v9739
        %v9741 = vlaneseq
        %v9742 = vshrl.u32 %v9741, 7
        %v9743 = vsub.s32 %v9740, %v9742
        %v9744 = vrot.slane %v9730, %v9743
        %v9745 = vcombine.low %v9720, %v9728
        %v9746 = vcombine.high %v9720, %v9728
        %v9748 = vunpack.c.l.s4 1934713408
        %v9749 = vunpack.c.0.s8 %v9748
        %v9750 = vlaneseq
        %v9751 = vshrl.u32 %v9750, 7
        %v9752 = vsub.s32 %v9749, %v9751
        %v9753 = vrot.slane %v9745, %v9752
        %v9755 = vunpack.c.l.s4 1934713408
        %v9756 = vunpack.c.0.s8 %v9755
        %v9757 = vlaneseq
        %v9758 = vshrl.u32 %v9757, 7
        %v9759 = vsub.s32 %v9756, %v9758
        %v9760 = vrot.slane %v9746, %v9759
        %v9761 = vcombine.low %v9737, %v9753
        %v9762 = vcombine.high %v9737, %v9753
        %v9763 = vcombine.low %v9744, %v9760
        %v9764 = vcombine.high %v9744, %v9760
        %v9765 = vcombine.low %v9533, %v9540
        %v9767 = vunpack.c.l.s4 1983009808
        %v9768 = vunpack.c.0.s8 %v9767
        %v9769 = vlaneseq
        %v9770 = vshrl.u32 %v9769, 7
        %v9771 = vsub.s32 %v9768, %v9770
        %v9772 = vrot.slane %v9765, %v9771
        %v9773 = vcombine.low %v9557, %v9558
        %v9775 = vunpack.c.l.s4 1983009808
        %v9776 = vunpack.c.0.s8 %v9775
        %v9777 = vlaneseq
        %v9778 = vshrl.u32 %v9777, 7
        %v9779 = vsub.s32 %v9776, %v9778
        %v9780 = vrot.slane %v9773, %v9779
        %v9781 = vcombine.low %v9549, %v9556
        %v9783 = vunpack.c.l.s4 1983009808
        %v9784 = vunpack.c.0.s8 %v9783
        %v9785 = vlaneseq
        %v9786 = vshrl.u32 %v9785, 7
        %v9787 = vsub.s32 %v9784, %v9786
        %v9788 = vrot.slane %v9781, %v9787
        %v9789 = vcombine.low %v9559, %v9560
        %v9791 = vunpack.c.l.s4 1983009808
        %v9792 = vunpack.c.0.s8 %v9791
        %v9793 = vlaneseq
        %v9794 = vshrl.u32 %v9793, 7
        %v9795 = vsub.s32 %v9792, %v9794
        %v9796 = vrot.slane %v9789, %v9795
        %v9797 = vcombine.low %v9772, %v9780
        %v9798 = vcombine.high %v9772, %v9780
        %v9800 = vunpack.c.l.s4 1934713408
        %v9801 = vunpack.c.0.s8 %v9800
        %v9802 = vlaneseq
        %v9803 = vshrl.u32 %v9802, 7
        %v9804 = vsub.s32 %v9801, %v9803
        %v9805 = vrot.slane %v9797, %v9804
        %v9807 = vunpack.c.l.s4 1934713408
        %v9808 = vunpack.c.0.s8 %v9807
        %v9809 = vlaneseq
        %v9810 = vshrl.u32 %v9809, 7
        %v9811 = vsub.s32 %v9808, %v9810
        %v9812 = vrot.slane %v9798, %v9811
        %v9813 = vcombine.low %v9788, %v9796
        %v9814 = vcombine.high %v9788, %v9796
        %v9816 = vunpack.c.l.s4 1934713408
        %v9817 = vunpack.c.0.s8 %v9816
        %v9818 = vlaneseq
        %v9819 = vshrl.u32 %v9818, 7
        %v9820 = vsub.s32 %v9817, %v9819
        %v9821 = vrot.slane %v9813, %v9820
        %v9823 = vunpack.c.l.s4 1934713408
        %v9824 = vunpack.c.0.s8 %v9823
        %v9825 = vlaneseq
        %v9826 = vshrl.u32 %v9825, 7
        %v9827 = vsub.s32 %v9824, %v9826
        %v9828 = vrot.slane %v9814, %v9827
        %v9829 = vcombine.low %v9805, %v9821
        %v9830 = vcombine.high %v9805, %v9821
        %v9831 = vcombine.low %v9812, %v9828
        %v9832 = vcombine.high %v9812, %v9828
        %v9833 = vcombine.low %v9601, %v9608
        %v9835 = vunpack.c.l.s4 1983009808
        %v9836 = vunpack.c.0.s8 %v9835
        %v9837 = vlaneseq
        %v9838 = vshrl.u32 %v9837, 7
        %v9839 = vsub.s32 %v9836, %v9838
        %v9840 = vrot.slane %v9833, %v9839
        %v9841 = vcombine.low %v9625, %v9626
        %v9843 = vunpack.c.l.s4 1983009808
        %v9844 = vunpack.c.0.s8 %v9843
        %v9845 = vlaneseq
        %v9846 = vshrl.u32 %v9845, 7
        %v9847 = vsub.s32 %v9844, %v9846
        %v9848 = vrot.slane %v9841, %v9847
        %v9849 = vcombine.low %v9617, %v9624
        %v9851 = vunpack.c.l.s4 1983009808
        %v9852 = vunpack.c.0.s8 %v9851
        %v9853 = vlaneseq
        %v9854 = vshrl.u32 %v9853, 7
        %v9855 = vsub.s32 %v9852, %v9854
        %v9856 = vrot.slane %v9849, %v9855
        %v9857 = vcombine.low %v9627, %v9628
        %v9859 = vunpack.c.l.s4 1983009808
        %v9860 = vunpack.c.0.s8 %v9859
        %v9861 = vlaneseq
        %v9862 = vshrl.u32 %v9861, 7
        %v9863 = vsub.s32 %v9860, %v9862
        %v9864 = vrot.slane %v9857, %v9863
        %v9865 = vcombine.low %v9840, %v9848
        %v9866 = vcombine.high %v9840, %v9848
        %v9868 = vunpack.c.l.s4 1934713408
        %v9869 = vunpack.c.0.s8 %v9868
        %v9870 = vlaneseq
        %v9871 = vshrl.u32 %v9870, 7
        %v9872 = vsub.s32 %v9869, %v9871
        %v9873 = vrot.slane %v9865, %v9872
        %v9875 = vunpack.c.l.s4 1934713408
        %v9876 = vunpack.c.0.s8 %v9875
        %v9877 = vlaneseq
        %v9878 = vshrl.u32 %v9877, 7
        %v9879 = vsub.s32 %v9876, %v9878
        %v9880 = vrot.slane %v9866, %v9879
        %v9881 = vcombine.low %v9856, %v9864
        %v9882 = vcombine.high %v9856, %v9864
        %v9884 = vunpack.c.l.s4 1934713408
        %v9885 = vunpack.c.0.s8 %v9884
        %v9886 = vlaneseq
        %v9887 = vshrl.u32 %v9886, 7
        %v9888 = vsub.s32 %v9885, %v9887
        %v9889 = vrot.slane %v9881, %v9888
        %v9891 = vunpack.c.l.s4 1934713408
        %v9892 = vunpack.c.0.s8 %v9891
        %v9893 = vlaneseq
        %v9894 = vshrl.u32 %v9893, 7
        %v9895 = vsub.s32 %v9892, %v9894
        %v9896 = vrot.slane %v9882, %v9895
        %v9897 = vcombine.low %v9873, %v9889
        %v9898 = vcombine.high %v9873, %v9889
        %v9899 = vcombine.low %v9880, %v9896
        %v9900 = vcombine.high %v9880, %v9896
        %9905 = vrot.lane.b32.xlu0 %v9694, 16
        %v9906 = vpop.permute.xlu0 %9905
        %9907 = vrot.lane.b32.xlu0 %v9762, 16
        %v9908 = vpop.permute.xlu0 %9907
        %9909 = vrot.lane.b32.xlu0 %v9830, 16
        %v9910 = vpop.permute.xlu0 %9909
        %9911 = vrot.lane.b32.xlu0 %v9898, 16
        %v9912 = vpop.permute.xlu0 %9911
        %9921 = vrot.lane.b32.xlu0 %v9695, 32
        %v9922 = vpop.permute.xlu0 %9921
        %9923 = vrot.lane.b32.xlu0 %v9763, 32
        %v9924 = vpop.permute.xlu0 %9923
        %9925 = vrot.lane.b32.xlu0 %v9831, 32
        %v9926 = vpop.permute.xlu0 %9925
        %9927 = vrot.lane.b32.xlu0 %v9899, 32
        %v9928 = vpop.permute.xlu0 %9927
        %9937 = vrot.lane.b32.xlu0 %v9696, 48
        %v9938 = vpop.permute.xlu0 %9937
        %9939 = vrot.lane.b32.xlu0 %v9764, 48
        %v9940 = vpop.permute.xlu0 %9939
        %9941 = vrot.lane.b32.xlu0 %v9832, 48
        %v9942 = vpop.permute.xlu0 %9941
        %9943 = vrot.lane.b32.xlu0 %v9900, 48
        %v9944 = vpop.permute.xlu0 %9943
        %v9949 = vsel %vm7515, %v9693, %v9906
        %v9950 = vsel %vm7515, %v9761, %v9908
        %v9951 = vsel %vm7515, %v9829, %v9910
        %v9952 = vsel %vm7515, %v9897, %v9912
        %v9953 = vsel %vm7892, %v9949, %v9922
        %v9954 = vsel %vm7892, %v9950, %v9924
        %v9955 = vsel %vm7892, %v9951, %v9926
        %v9956 = vsel %vm7892, %v9952, %v9928
        %vm9957 = vcmask 392192
        %v9958 = vsel %vm9957, %v9953, %v9938
        %v9959 = vsel %vm9957, %v9954, %v9940
        %v9960 = vsel %vm9957, %v9955, %v9942
        %v9961 = vsel %vm9957, %v9956, %v9944
        %v9962 = vpack.c.bf16 %v9959, %v9958
        %v9963 = vpack.c.bf16 %v9961, %v9960
        %v9964 = vld [vmem:[%s758] sm:$0xf]
        %v9965 = vld [vmem:[%s758 + $0x4] sm:$0xf]
        %v9966 = vld [vmem:[%s758 + $0x8] sm:$0xf]
        %v9967 = vld [vmem:[%s758 + $0xc] sm:$0xf]
        %v9968 = vld [vmem:[%s758 + $0x10] sm:$0xf]
        %v9969 = vld [vmem:[%s758 + $0x14] sm:$0xf]
        %v9970 = vld [vmem:[%s758 + $0x18] sm:$0xf]
        %v9971 = vld [vmem:[%s758 + $0x1c] sm:$0xf]
        %v9980 = vunpack.c.l.b16 %v9964
        %v9981 = vunpack.c.l.b16 %v9965
        %v9982 = vunpack.c.l.b16 %v9966
        %v9983 = vunpack.c.l.b16 %v9967
        %v9984 = vunpack.c.l.b16 %v9968
        %v9985 = vunpack.c.l.b16 %v9969
        %v9986 = vunpack.c.l.b16 %v9970
        %v9987 = vunpack.c.l.b16 %v9971
        %v9988 = vpack.c.b16 %v9981, %v9980
        %v9989 = vpack.c.b16 %v9983, %v9982
        %v9990 = vpack.c.b16 %v9985, %v9984
        %v9991 = vpack.c.b16 %v9987, %v9986
        %v9997 = vsel %vm960, %v9962, 0
        %v10000 = vsel %vm960, %v9963, 0
        %10002 = vmatprep.subr.bf16.mxu0 0
        %10003 = vmatpush1.bf16.msra.mxu0 %v9988
        %10004 = vmatprep.subr.bf16.mxu0 0
        %10005 = vmatpush1.bf16.msra.mxu0 %v9989
        %10006 = vmatprep.subr.bf16.mxu0 0
        %10007 = vmatpush1.bf16.msra.mxu0 %v9990
        %10008 = vmatprep.subr.bf16.mxu0 0
        %10009 = vmatpush1.bf16.msra.mxu0 %v9991
        %10010 = vmatprep.subr.bf16.mxu0 0
        %10011 = vmatpush1.bf16.msra.mxu0 0
        %10012 = vmatprep.subr.bf16.mxu0 0
        %10013 = vmatpush1.bf16.msra.mxu0 0
        %10014 = vmatprep.subr.bf16.mxu0 0
        %10015 = vmatpush1.bf16.msra.mxu0 0
        %10016 = vmatprep.subr.bf16.mxu0 0
        %10017 = vmatpush1.bf16.msra.mxu0 0
        %10018 = vmatprep.subr.bf16.mxu0 0
        %10019 = vmatpush1.bf16.msra.mxu0 0
        %10020 = vmatprep.subr.bf16.mxu0 0
        %10021 = vmatpush1.bf16.msra.mxu0 0
        %10022 = vmatprep.subr.bf16.mxu0 0
        %10023 = vmatpush1.bf16.msra.mxu0 0
        %10024 = vmatprep.subr.bf16.mxu0 0
        %10025 = vmatpush1.bf16.msra.mxu0 0
        %10026 = vmatprep.subr.bf16.mxu0 0
        %10027 = vmatpush1.bf16.msra.mxu0 0
        %10028 = vmatprep.subr.bf16.mxu0 0
        %10029 = vmatpush1.bf16.msra.mxu0 0
        %10030 = vmatprep.subr.bf16.mxu0 0
        %10031 = vmatpush1.bf16.msra.mxu0 0
        %10032 = vmatprep.subr.bf16.mxu0 0
        %10033 = vmatpush1.bf16.msra.mxu0 0
        %10034 = vmatprep.mubr.bf16.mxu0 0
        %10035 = vmatmul.mubr.bf16.gmra.mrb[0].mxu0 %v9997
        %v10036 = vpop.f32.mrb[0].mxu0
        %v10037 = vadd.f32 0.0, %v10036
        %v10038 = vpop.f32.mrb[0].mxu0
        %v10039 = vpop.f32.mrb[0].mxu0
        %v10040 = vadd.f32 0.0, %v10039
        %v10041 = vpop.f32.mrb[0].mxu0
        %10042 = vmatprep.mubr.bf16.mxu0 0
        %10043 = vmatmul.mubr.bf16.gmra.mrb[0].mxu0 %v10000
        %v10044 = vpop.f32.mrb[0].mxu0
        %v10045 = vadd.f32 0.0, %v10044
        %v10046 = vpop.f32.mrb[0].mxu0
        %v10047 = vpop.f32.mrb[0].mxu0
        %v10048 = vadd.f32 0.0, %v10047
        %v10049 = vpop.f32.mrb[0].mxu0
        %10050 = vdwg.mxu0
        %v10051 = vadd.f32 %v946, %v10037
        %v10052 = vadd.f32 %v947, %v10040
        %v10053 = vadd.f32 %v948, %v10045
        %v10054 = vadd.f32 %v949, %v10048
        %v10055 = vld [vmem:[%s919] sm:$0x1]
        %v10056 = vld [vmem:[%s922] sm:$0x1]
        %v10057 = vsel %vm960, %v10051, 0.0
        %10058 = vadd.xlane.f32.xlu0 %v10057
        %v10059 = vpop.xlane.xlu0 %10058
        %v10060 = vsel %vm960, %v10052, 0.0
        %10061 = vadd.xlane.f32.xlu0 %v10060
        %v10062 = vpop.xlane.xlu0 %10061
        %v10063 = vsel %vm960, %v10053, 0.0
        %10064 = vadd.xlane.f32.xlu0 %v10063
        %v10065 = vpop.xlane.xlu0 %10064
        %v10066 = vsel %vm960, %v10054, 0.0
        %10067 = vadd.xlane.f32.xlu0 %v10066
        %v10068 = vpop.xlane.xlu0 %10067
        %v10069 = vmul.f32 %v10059, %v985
        %v10070 = vmul.f32 %v10062, %v985
        %v10071 = vmul.f32 %v10065, %v985
        %v10072 = vmul.f32 %v10068, %v985
        %v10073 = vsub.f32 %v10051, %v10069
        %v10074 = vsub.f32 %v10052, %v10070
        %v10075 = vsub.f32 %v10053, %v10071
        %v10076 = vsub.f32 %v10054, %v10072
        %v10077 = vmul.f32 %v10073, %v10073
        %v10078 = vmul.f32 %v10074, %v10074
        %v10079 = vmul.f32 %v10075, %v10075
        %v10080 = vmul.f32 %v10076, %v10076
        %v10081 = vsel %vm960, %v10077, 0.0
        %10082 = vadd.xlane.f32.xlu0 %v10081
        %v10083 = vpop.xlane.xlu0 %10082
        %v10084 = vsel %vm960, %v10078, 0.0
        %10085 = vadd.xlane.f32.xlu0 %v10084
        %v10086 = vpop.xlane.xlu0 %10085
        %v10087 = vsel %vm960, %v10079, 0.0
        %10088 = vadd.xlane.f32.xlu0 %v10087
        %v10089 = vpop.xlane.xlu0 %10088
        %v10090 = vsel %vm960, %v10080, 0.0
        %10091 = vadd.xlane.f32.xlu0 %v10090
        %v10092 = vpop.xlane.xlu0 %10091
        %v10093 = vmul.f32 %v10083, %v985
        %v10094 = vmul.f32 %v10086, %v985
        %v10095 = vmul.f32 %v10089, %v985
        %v10096 = vmul.f32 %v10092, %v985
        %v10097 = vadd.f32 %v10093, 1e-05
        %v10098 = vadd.f32 %v10094, 1e-05
        %v10099 = vadd.f32 %v10095, 1e-05
        %v10100 = vadd.f32 %v10096, 1e-05
        %v10101 = vrsqrt.pop %v10097
        %v10102 = vrsqrt.pop %v10098
        %v10103 = vrsqrt.pop %v10099
        %v10104 = vrsqrt.pop %v10100
        %v10105 = vmul.f32 %v10073, %v10101
        %v10106 = vmul.f32 %v10074, %v10102
        %v10107 = vmul.f32 %v10075, %v10103
        %v10108 = vmul.f32 %v10076, %v10104
        %v10110 = vlaneseq
        %v10111 = vshrl.u32 %v10110, 7
        %v10112 = vsub.s32 0, %v10111
        %v10113 = vrot.slane %v10055, %v10112
        %v10115 = vmul.f32 %v10105, %v10113
        %v10116 = vmul.f32 %v10106, %v10113
        %v10117 = vmul.f32 %v10107, %v10113
        %v10118 = vmul.f32 %v10108, %v10113
        %v10120 = vlaneseq
        %v10121 = vshrl.u32 %v10120, 7
        %v10122 = vsub.s32 0, %v10121
        %v10123 = vrot.slane %v10056, %v10122
        %v10125 = vadd.f32 %v10115, %v10123
        %v10126 = vadd.f32 %v10116, %v10123
        %v10127 = vadd.f32 %v10117, %v10123
        %v10128 = vadd.f32 %v10118, %v10123
        %v10129 = vpack.c.bf16 %v10126, %v10125
        %v10130 = vpack.c.bf16 %v10128, %v10127
        %v10131 = vld [vmem:[%s927] sm:$0xff]
        %v10132 = vld [vmem:[%s927 + $0x8] sm:$0xff]
        %v10133 = vld [vmem:[%s927 + $0x10] sm:$0xff]
        %v10134 = vld [vmem:[%s927 + $0x18] sm:$0xff]
        %v10135 = vld [vmem:[%s927 + $0x20] sm:$0xff]
        %v10136 = vld [vmem:[%s927 + $0x28] sm:$0xff]
        %v10137 = vld [vmem:[%s927 + $0x30] sm:$0xff]
        %v10138 = vld [vmem:[%s927 + $0x38] sm:$0xff]
        %v10147 = vunpack.c.l.b16 %v10131
        %v10148 = vunpack.c.h.b16 %v10131
        %v10149 = vunpack.c.l.b16 %v10132
        %v10150 = vunpack.c.h.b16 %v10132
        %v10151 = vunpack.c.l.b16 %v10133
        %v10152 = vunpack.c.h.b16 %v10133
        %v10153 = vunpack.c.l.b16 %v10134
        %v10154 = vunpack.c.h.b16 %v10134
        %v10155 = vunpack.c.l.b16 %v10135
        %v10156 = vunpack.c.h.b16 %v10135
        %v10157 = vunpack.c.l.b16 %v10136
        %v10158 = vunpack.c.h.b16 %v10136
        %v10159 = vunpack.c.l.b16 %v10137
        %v10160 = vunpack.c.h.b16 %v10137
        %v10161 = vunpack.c.l.b16 %v10138
        %v10162 = vunpack.c.h.b16 %v10138
        %v10163 = vpack.c.b16 %v10149, %v10147
        %v10164 = vpack.c.b16 %v10150, %v10148
        %v10165 = vpack.c.b16 %v10153, %v10151
        %v10166 = vpack.c.b16 %v10154, %v10152
        %v10167 = vpack.c.b16 %v10157, %v10155
        %v10168 = vpack.c.b16 %v10158, %v10156
        %v10169 = vpack.c.b16 %v10161, %v10159
        %v10170 = vpack.c.b16 %v10162, %v10160
        %v10180 = vsel %vm960, %v10129, 0
        %v10183 = vsel %vm960, %v10130, 0
        %10185 = vmatprep.subr.bf16.mxu0 %v10164
        %10186 = vmatpush1.bf16.msra.mxu0 %v10163
        %10187 = vmatprep.subr.bf16.mxu0 %v10166
        %10188 = vmatpush1.bf16.msra.mxu0 %v10165
        %10189 = vmatprep.subr.bf16.mxu0 %v10168
        %10190 = vmatpush1.bf16.msra.mxu0 %v10167
        %10191 = vmatprep.subr.bf16.mxu0 %v10170
        %10192 = vmatpush1.bf16.msra.mxu0 %v10169
        %10193 = vmatprep.subr.bf16.mxu0 0
        %10194 = vmatpush1.bf16.msra.mxu0 0
        %10195 = vmatprep.subr.bf16.mxu0 0
        %10196 = vmatpush1.bf16.msra.mxu0 0
        %10197 = vmatprep.subr.bf16.mxu0 0
        %10198 = vmatpush1.bf16.msra.mxu0 0
        %10199 = vmatprep.subr.bf16.mxu0 0
        %10200 = vmatpush1.bf16.msra.mxu0 0
        %10201 = vmatprep.subr.bf16.mxu0 0
        %10202 = vmatpush1.bf16.msra.mxu0 0
        %10203 = vmatprep.subr.bf16.mxu0 0
        %10204 = vmatpush1.bf16.msra.mxu0 0
        %10205 = vmatprep.subr.bf16.mxu0 0
        %10206 = vmatpush1.bf16.msra.mxu0 0
        %10207 = vmatprep.subr.bf16.mxu0 0
        %10208 = vmatpush1.bf16.msra.mxu0 0
        %10209 = vmatprep.subr.bf16.mxu0 0
        %10210 = vmatpush1.bf16.msra.mxu0 0
        %10211 = vmatprep.subr.bf16.mxu0 0
        %10212 = vmatpush1.bf16.msra.mxu0 0
        %10213 = vmatprep.subr.bf16.mxu0 0
        %10214 = vmatpush1.bf16.msra.mxu0 0
        %10215 = vmatprep.subr.bf16.mxu0 0
        %10216 = vmatpush1.bf16.msra.mxu0 0
        %10217 = vmatprep.mubr.bf16.mxu0 0
        %10218 = vmatmul.mubr.bf16.gmra.mrb[0].mxu0 %v10180
        %v10219 = vpop.f32.mrb[0].mxu0
        %v10220 = vadd.f32 0.0, %v10219
        %v10221 = vpop.f32.mrb[0].mxu0
        %v10222 = vadd.f32 0.0, %v10221
        %v10223 = vpop.f32.mrb[0].mxu0
        %v10224 = vadd.f32 0.0, %v10223
        %v10225 = vpop.f32.mrb[0].mxu0
        %v10226 = vadd.f32 0.0, %v10225
        %10227 = vmatprep.mubr.bf16.mxu0 0
        %10228 = vmatmul.mubr.bf16.gmra.mrb[0].mxu0 %v10183
        %v10229 = vpop.f32.mrb[0].mxu0
        %v10230 = vadd.f32 0.0, %v10229
        %v10231 = vpop.f32.mrb[0].mxu0
        %v10232 = vadd.f32 0.0, %v10231
        %v10233 = vpop.f32.mrb[0].mxu0
        %v10234 = vadd.f32 0.0, %v10233
        %v10235 = vpop.f32.mrb[0].mxu0
        %v10236 = vadd.f32 0.0, %v10235
        %10237 = vdwg.mxu0
        %v10238 = vmax.f32 %v10220, 0.0
        %v10239 = vmax.f32 %v10222, 0.0
        %v10240 = vmax.f32 %v10224, 0.0
        %v10241 = vmax.f32 %v10226, 0.0
        %v10242 = vmax.f32 %v10230, 0.0
        %v10243 = vmax.f32 %v10232, 0.0
        %v10244 = vmax.f32 %v10234, 0.0
        %v10245 = vmax.f32 %v10236, 0.0
        %v10246 = vpack.c.bf16 %v10240, %v10238
        %v10247 = vpack.c.bf16 %v10241, %v10239
        %v10248 = vpack.c.bf16 %v10244, %v10242
        %v10249 = vpack.c.bf16 %v10245, %v10243
        %v10250 = vld [vmem:[%s932] sm:$0xf]
        %v10251 = vld [vmem:[%s932 + $0x4] sm:$0xf]
        %v10252 = vld [vmem:[%s932 + $0x8] sm:$0xf]
        %v10253 = vld [vmem:[%s932 + $0xc] sm:$0xf]
        %v10254 = vld [vmem:[%s932 + $0x10] sm:$0xf]
        %v10255 = vld [vmem:[%s932 + $0x14] sm:$0xf]
        %v10256 = vld [vmem:[%s932 + $0x18] sm:$0xf]
        %v10257 = vld [vmem:[%s932 + $0x1c] sm:$0xf]
        %v10258 = vld [vmem:[%s932 + $0x20] sm:$0xf]
        %v10259 = vld [vmem:[%s932 + $0x24] sm:$0xf]
        %v10260 = vld [vmem:[%s932 + $0x28] sm:$0xf]
        %v10261 = vld [vmem:[%s932 + $0x2c] sm:$0xf]
        %v10262 = vld [vmem:[%s932 + $0x30] sm:$0xf]
        %v10263 = vld [vmem:[%s932 + $0x34] sm:$0xf]
        %v10264 = vld [vmem:[%s932 + $0x38] sm:$0xf]
        %v10265 = vld [vmem:[%s932 + $0x3c] sm:$0xf]
        %v10266 = vld [vmem:[%s932 + $0x40] sm:$0xf]
        %v10267 = vld [vmem:[%s932 + $0x44] sm:$0xf]
        %v10268 = vld [vmem:[%s932 + $0x48] sm:$0xf]
        %v10269 = vld [vmem:[%s932 + $0x4c] sm:$0xf]
        %v10270 = vld [vmem:[%s932 + $0x50] sm:$0xf]
        %v10271 = vld [vmem:[%s932 + $0x54] sm:$0xf]
        %v10272 = vld [vmem:[%s932 + $0x58] sm:$0xf]
        %v10273 = vld [vmem:[%s932 + $0x5c] sm:$0xf]
        %v10274 = vld [vmem:[%s932 + $0x60] sm:$0xf]
        %v10275 = vld [vmem:[%s932 + $0x64] sm:$0xf]
        %v10276 = vld [vmem:[%s932 + $0x68] sm:$0xf]
        %v10277 = vld [vmem:[%s932 + $0x6c] sm:$0xf]
        %v10278 = vld [vmem:[%s932 + $0x70] sm:$0xf]
        %v10279 = vld [vmem:[%s932 + $0x74] sm:$0xf]
        %v10280 = vld [vmem:[%s932 + $0x78] sm:$0xf]
        %v10281 = vld [vmem:[%s932 + $0x7c] sm:$0xf]
        %v10314 = vunpack.c.l.b16 %v10250
        %v10315 = vunpack.c.l.b16 %v10251
        %v10316 = vunpack.c.l.b16 %v10252
        %v10317 = vunpack.c.l.b16 %v10253
        %v10318 = vunpack.c.l.b16 %v10254
        %v10319 = vunpack.c.l.b16 %v10255
        %v10320 = vunpack.c.l.b16 %v10256
        %v10321 = vunpack.c.l.b16 %v10257
        %v10322 = vunpack.c.l.b16 %v10258
        %v10323 = vunpack.c.l.b16 %v10259
        %v10324 = vunpack.c.l.b16 %v10260
        %v10325 = vunpack.c.l.b16 %v10261
        %v10326 = vunpack.c.l.b16 %v10262
        %v10327 = vunpack.c.l.b16 %v10263
        %v10328 = vunpack.c.l.b16 %v10264
        %v10329 = vunpack.c.l.b16 %v10265
        %v10330 = vunpack.c.l.b16 %v10266
        %v10331 = vunpack.c.l.b16 %v10267
        %v10332 = vunpack.c.l.b16 %v10268
        %v10333 = vunpack.c.l.b16 %v10269
        %v10334 = vunpack.c.l.b16 %v10270
        %v10335 = vunpack.c.l.b16 %v10271
        %v10336 = vunpack.c.l.b16 %v10272
        %v10337 = vunpack.c.l.b16 %v10273
        %v10338 = vunpack.c.l.b16 %v10274
        %v10339 = vunpack.c.l.b16 %v10275
        %v10340 = vunpack.c.l.b16 %v10276
        %v10341 = vunpack.c.l.b16 %v10277
        %v10342 = vunpack.c.l.b16 %v10278
        %v10343 = vunpack.c.l.b16 %v10279
        %v10344 = vunpack.c.l.b16 %v10280
        %v10345 = vunpack.c.l.b16 %v10281
        %v10346 = vpack.c.b16 %v10315, %v10314
        %v10347 = vpack.c.b16 %v10317, %v10316
        %v10348 = vpack.c.b16 %v10319, %v10318
        %v10349 = vpack.c.b16 %v10321, %v10320
        %v10350 = vpack.c.b16 %v10323, %v10322
        %v10351 = vpack.c.b16 %v10325, %v10324
        %v10352 = vpack.c.b16 %v10327, %v10326
        %v10353 = vpack.c.b16 %v10329, %v10328
        %v10354 = vpack.c.b16 %v10331, %v10330
        %v10355 = vpack.c.b16 %v10333, %v10332
        %v10356 = vpack.c.b16 %v10335, %v10334
        %v10357 = vpack.c.b16 %v10337, %v10336
        %v10358 = vpack.c.b16 %v10339, %v10338
        %v10359 = vpack.c.b16 %v10341, %v10340
        %v10360 = vpack.c.b16 %v10343, %v10342
        %v10361 = vpack.c.b16 %v10345, %v10344
        %10378 = vmatprep.subr.bf16.mxu0 0
        %10379 = vmatpush1.bf16.msra.mxu0 %v10346
        %10380 = vmatprep.subr.bf16.mxu0 0
        %10381 = vmatpush1.bf16.msra.mxu0 %v10347
        %10382 = vmatprep.subr.bf16.mxu0 0
        %10383 = vmatpush1.bf16.msra.mxu0 %v10348
        %10384 = vmatprep.subr.bf16.mxu0 0
        %10385 = vmatpush1.bf16.msra.mxu0 %v10349
        %10386 = vmatprep.subr.bf16.mxu0 0
        %10387 = vmatpush1.bf16.msra.mxu0 %v10350
        %10388 = vmatprep.subr.bf16.mxu0 0
        %10389 = vmatpush1.bf16.msra.mxu0 %v10351
        %10390 = vmatprep.subr.bf16.mxu0 0
        %10391 = vmatpush1.bf16.msra.mxu0 %v10352
        %10392 = vmatprep.subr.bf16.mxu0 0
        %10393 = vmatpush1.bf16.msra.mxu0 %v10353
        %10394 = vmatprep.subr.bf16.mxu0 0
        %10395 = vmatpush1.bf16.msra.mxu0 %v10354
        %10396 = vmatprep.subr.bf16.mxu0 0
        %10397 = vmatpush1.bf16.msra.mxu0 %v10355
        %10398 = vmatprep.subr.bf16.mxu0 0
        %10399 = vmatpush1.bf16.msra.mxu0 %v10356
        %10400 = vmatprep.subr.bf16.mxu0 0
        %10401 = vmatpush1.bf16.msra.mxu0 %v10357
        %10402 = vmatprep.subr.bf16.mxu0 0
        %10403 = vmatpush1.bf16.msra.mxu0 %v10358
        %10404 = vmatprep.subr.bf16.mxu0 0
        %10405 = vmatpush1.bf16.msra.mxu0 %v10359
        %10406 = vmatprep.subr.bf16.mxu0 0
        %10407 = vmatpush1.bf16.msra.mxu0 %v10360
        %10408 = vmatprep.subr.bf16.mxu0 0
        %10409 = vmatpush1.bf16.msra.mxu0 %v10361
        %10410 = vmatprep.mubr.bf16.mxu0 %v10247
        %10411 = vmatmul.mubr.bf16.gmra.mrb[0].mxu0 %v10246
        %v10412 = vpop.f32.mrb[0].mxu0
        %v10413 = vadd.f32 0.0, %v10412
        %v10414 = vpop.f32.mrb[0].mxu0
        %v10415 = vpop.f32.mrb[0].mxu0
        %v10416 = vadd.f32 0.0, %v10415
        %v10417 = vpop.f32.mrb[0].mxu0
        %10418 = vmatprep.mubr.bf16.mxu0 %v10249
        %10419 = vmatmul.mubr.bf16.gmra.mrb[0].mxu0 %v10248
        %v10420 = vpop.f32.mrb[0].mxu0
        %v10421 = vadd.f32 0.0, %v10420
        %v10422 = vpop.f32.mrb[0].mxu0
        %v10423 = vpop.f32.mrb[0].mxu0
        %v10424 = vadd.f32 0.0, %v10423
        %v10425 = vpop.f32.mrb[0].mxu0
        %10426 = vdwg.mxu0
        %v10427 = vadd.f32 %v10051, %v10413
        %v10428 = vadd.f32 %v10052, %v10416
        %v10429 = vadd.f32 %v10053, %v10421
        %v10430 = vadd.f32 %v10054, %v10424
        %10431 = vst.msk [vmem:[#allocation2] sm:$0xff] %vm960, %v10427
        %10432 = vst.msk [vmem:[#allocation2 + $0x8] sm:$0xff] %vm960, %v10428
        %10433 = vst.msk [vmem:[#allocation2 + $0x10] sm:$0xff] %vm960, %v10429
        %10434 = vst.msk [vmem:[#allocation2 + $0x18] sm:$0xff] %vm960, %v10430
        %p10435 = scmp.eq.s32.totalorder %s41, 1
        // Predicated region
        $region113: #{tpu_custom_call.1} parent=99 // pred_check
          %p10436 = pneg %p10435
        $region114: #{tpu_custom_call.1} parent=99 // pred_check_branch
          %10438 = sbr.rel (%p10436) target = $region116
        $region115: #{tpu_custom_call.1} parent=99 // pred_region
          %v10439 = vld [vmem:[%s18] sm:$0x1]
          %v10440 = vld [vmem:[%s19] sm:$0x1]
          %v10441 = vsel %vm960, %v10427, 0.0
          %10442 = vadd.xlane.f32.xlu0 %v10441
          %v10443 = vpop.xlane.xlu0 %10442
          %v10444 = vsel %vm960, %v10428, 0.0
          %10445 = vadd.xlane.f32.xlu0 %v10444
          %v10446 = vpop.xlane.xlu0 %10445
          %v10447 = vsel %vm960, %v10429, 0.0
          %10448 = vadd.xlane.f32.xlu0 %v10447
          %v10449 = vpop.xlane.xlu0 %10448
          %v10450 = vsel %vm960, %v10430, 0.0
          %10451 = vadd.xlane.f32.xlu0 %v10450
          %v10452 = vpop.xlane.xlu0 %10451
          %v10453 = vmul.f32 %v10443, %v985
          %v10454 = vmul.f32 %v10446, %v985
          %v10455 = vmul.f32 %v10449, %v985
          %v10456 = vmul.f32 %v10452, %v985
          %v10457 = vsub.f32 %v10427, %v10453
          %v10458 = vsub.f32 %v10428, %v10454
          %v10459 = vsub.f32 %v10429, %v10455
          %v10460 = vsub.f32 %v10430, %v10456
          %v10461 = vmul.f32 %v10457, %v10457
          %v10462 = vmul.f32 %v10458, %v10458
          %v10463 = vmul.f32 %v10459, %v10459
          %v10464 = vmul.f32 %v10460, %v10460
          %v10465 = vsel %vm960, %v10461, 0.0
          %10466 = vadd.xlane.f32.xlu0 %v10465
          %v10467 = vpop.xlane.xlu0 %10466
          %v10468 = vsel %vm960, %v10462, 0.0
          %10469 = vadd.xlane.f32.xlu0 %v10468
          %v10470 = vpop.xlane.xlu0 %10469
          %v10471 = vsel %vm960, %v10463, 0.0
          %10472 = vadd.xlane.f32.xlu0 %v10471
          %v10473 = vpop.xlane.xlu0 %10472
          %v10474 = vsel %vm960, %v10464, 0.0
          %10475 = vadd.xlane.f32.xlu0 %v10474
          %v10476 = vpop.xlane.xlu0 %10475
          %v10477 = vmul.f32 %v10467, %v985
          %v10478 = vmul.f32 %v10470, %v985
          %v10479 = vmul.f32 %v10473, %v985
          %v10480 = vmul.f32 %v10476, %v985
          %v10481 = vadd.f32 %v10477, 1e-05
          %v10482 = vadd.f32 %v10478, 1e-05
          %v10483 = vadd.f32 %v10479, 1e-05
          %v10484 = vadd.f32 %v10480, 1e-05
          %v10485 = vrsqrt.pop %v10481
          %v10486 = vrsqrt.pop %v10482
          %v10487 = vrsqrt.pop %v10483
          %v10488 = vrsqrt.pop %v10484
          %v10489 = vmul.f32 %v10457, %v10485
          %v10490 = vmul.f32 %v10458, %v10486
          %v10491 = vmul.f32 %v10459, %v10487
          %v10492 = vmul.f32 %v10460, %v10488
          %v10494 = vlaneseq
          %v10495 = vshrl.u32 %v10494, 7
          %v10496 = vsub.s32 0, %v10495
          %v10497 = vrot.slane %v10439, %v10496
          %v10499 = vmul.f32 %v10489, %v10497
          %v10500 = vmul.f32 %v10490, %v10497
          %v10501 = vmul.f32 %v10491, %v10497
          %v10502 = vmul.f32 %v10492, %v10497
          %v10504 = vlaneseq
          %v10505 = vshrl.u32 %v10504, 7
          %v10506 = vsub.s32 0, %v10505
          %v10507 = vrot.slane %v10440, %v10506
          %v10509 = vadd.f32 %v10499, %v10507
          %v10510 = vadd.f32 %v10500, %v10507
          %v10511 = vadd.f32 %v10501, %v10507
          %v10512 = vadd.f32 %v10502, %v10507
          %10513 = vst.msk [vmem:[#allocation8] sm:$0xff] %vm960, %v10509
          %10514 = vst.msk [vmem:[#allocation8 + $0x8] sm:$0xff] %vm960, %v10510
          %10515 = vst.msk [vmem:[#allocation8 + $0x10] sm:$0xff] %vm960, %v10511
          %10516 = vst.msk [vmem:[#allocation8 + $0x18] sm:$0xff] %vm960, %v10512
        $region116: #{tpu_custom_call.1} parent=99 // pred_fallthru
          _
        // Predicated region
        $region117: #{tpu_custom_call.1} parent=99 // pred_check
          %p10517 = pneg %p571
        $region118: #{tpu_custom_call.1} parent=99 // pred_check_branch
          %10519 = sbr.rel (%p10517) target = $region120
        $region119: #{tpu_custom_call.1} parent=99 // pred_region
          %s10520 = smul.u32 2, %s40
          %s10522 = ssub.s32 512, 512
          %10523 = vsyncadd [#allocation5], %s10522
          %s10524 = smul.addr %s10520, 2
          %s10525 = smul.addr %s10524, 128
          %s10526 = scalar_lea.hbm %s20, %s10525
          %s10527 = sshll.u32 [#allocation8], 4
          %s10528 = int_to_ptr.vmem [resolvable:$true] %s10527
          %10533 = dma.vmem_to_hbm [thread:$0]  %s10528, 512, %s10526, [#allocation5], 128, 128, 8
        $region120: #{tpu_custom_call.1} parent=99 // pred_fallthru
          _
        // Predicated region
        $region121: #{tpu_custom_call.1} parent=99 // pred_check
          %p10534 = pneg %p571
        $region122: #{tpu_custom_call.1} parent=99 // pred_check_branch
          %10536 = sbr.rel (%p10534) target = $region124
        $region123: #{tpu_custom_call.1} parent=99 // pred_region
          %10537 = dma.done [#allocation5], 512
        $region124: #{tpu_custom_call.1} parent=99 // pred_fallthru
          _
      $region100: #{tpu_custom_call.1} parent=5 // pred_fallthru
        _
      %p10538 = scmp.le.s32.totalorder 2, %s31
      // Predicated region
      $region125: #{tpu_custom_call.1} parent=5 // pred_check
        %p10539 = pneg %p10538
      $region126: #{tpu_custom_call.1} parent=5 // pred_check_branch
        %10541 = sbr.rel (%p10539) target = $region128
      $region127: #{tpu_custom_call.1} parent=5 // pred_region
        %s10542 = ssub.s32 %s31, 2
      $region128: #{tpu_custom_call.1} parent=5 // pred_fallthru
        _
    $region6: #{tpu_custom_call.1} parent=1 // loop_footer
      %s35 = sadd.s32 1, %s31
    $region7: #{tpu_custom_call.1} parent=1 // loop_footer_branch
      %30 = sbr.rel target = $region3
    $region8: #{tpu_custom_call.1} parent=1 // loop_exit
      _
    %10543 = vsyncpa [#allocation4], 1
    %s10544 = scalar_lea.sflag [#allocation4], 1
    %10545 = vsyncpa %s10544, 1
    %10546 = vsyncpa [#allocation7], 1
    %s10547 = scalar_lea.sflag [#allocation7], 1
    %10548 = vsyncpa %s10547, 1
    %10549 = vsyncpa [#allocation5], 1
    %s10550 = scalar_lea.sflag [#allocation5], 1
    %10551 = vsyncpa %s10550, 1

</llo_original>
